<compile_context>
chip_gen: v7x
topology: tpu7x:2x2x1
jax: 0.10.0
libtpu: 0.0.40
codegen_flags: <defaults>
</compile_context>

<pallas_src>
import functools

import jax
import jax.numpy as jnp
from jax.experimental import pallas as pl
from jax.experimental.pallas import tpu as pltpu

_D_IN = 2048
_D_H1 = 1024
_D_H2 = 256
_D_OUT = 2
_LANES = 128  # lane-dense padded width for the fc3 output


def _global_align_kernel(x_ref, w1_ref, b1_ref, w2_ref, b2_ref, w3_ref, b3_ref,
                         o_ref):
    # x tile: (TM, 2048) bf16; weights bf16 (full-resident in VMEM); biases f32.
    x = x_ref[...]

    # fc1 + ReLU  (bf16 MXU matmul, f32 accumulate)
    h1 = jnp.dot(x, w1_ref[...], preferred_element_type=jnp.float32) + b1_ref[...]
    h1 = jnp.maximum(h1, 0.0).astype(jnp.bfloat16)

    # fc2 + ReLU
    h2 = jnp.dot(h1, w2_ref[...], preferred_element_type=jnp.float32) + b2_ref[...]
    h2 = jnp.maximum(h2, 0.0).astype(jnp.bfloat16)

    # fc3 (lane-padded to 128 output columns) + Sigmoid.
    # exp and the approximate reciprocal both go to the (otherwise idle) EUP.
    logits = jnp.dot(h2, w3_ref[...], preferred_element_type=jnp.float32) + b3_ref[...]
    o_ref[...] = pl.reciprocal(1.0 + jnp.exp(-logits), approx=True).astype(o_ref.dtype)


@functools.partial(jax.jit, static_argnames=("tm",))
def global_align_forward(x, w1, b1, w2, b2, w3, b3, *, tm=128):
    B, d_in = x.shape
    assert d_in == _D_IN

    # Pad the batch up to a multiple of the tile (padded rows sliced off below).
    n_tiles = pl.cdiv(B, tm)
    b_pad = n_tiles * tm
    if b_pad != B:
        x = jnp.pad(x, ((0, b_pad - B), (0, 0)))

    # bf16 activations/weights, f32 biases; lane-pad the fc3 weight/bias to 128.
    x_b = x.astype(jnp.bfloat16)
    w1_b = w1.astype(jnp.bfloat16)
    w2_b = w2.astype(jnp.bfloat16)
    w3_p = jnp.pad(w3.astype(jnp.bfloat16), ((0, 0), (0, _LANES - _D_OUT)))
    b1_f = b1.astype(jnp.float32).reshape(1, _D_H1)
    b2_f = b2.astype(jnp.float32).reshape(1, _D_H2)
    b3_p = jnp.pad(b3.astype(jnp.float32).reshape(1, _D_OUT),
                   ((0, 0), (0, _LANES - _D_OUT)))

    out = pl.pallas_call(
        _global_align_kernel,
        out_shape=jax.ShapeDtypeStruct((b_pad, _LANES), jnp.float32),
        grid_spec=pltpu.PrefetchScalarGridSpec(
            num_scalar_prefetch=0,
            grid=(n_tiles,),
            in_specs=[
                pl.BlockSpec((tm, _D_IN), lambda i: (i, 0)),      # x batch tile
                pl.BlockSpec((_D_IN, _D_H1), lambda i: (0, 0)),   # W1 (resident)
                pl.BlockSpec((1, _D_H1), lambda i: (0, 0)),       # b1
                pl.BlockSpec((_D_H1, _D_H2), lambda i: (0, 0)),   # W2
                pl.BlockSpec((1, _D_H2), lambda i: (0, 0)),       # b2
                pl.BlockSpec((_D_H2, _LANES), lambda i: (0, 0)),  # W3 (lane-padded)
                pl.BlockSpec((1, _LANES), lambda i: (0, 0)),      # b3 (lane-padded)
            ],
            out_specs=pl.BlockSpec((tm, _LANES), lambda i: (i, 0)),
        ),
        compiler_params=pltpu.CompilerParams(
            dimension_semantics=("parallel",),
            vmem_limit_bytes=40 * 1024 * 1024,  # actual need ~11 MiB; <64 MiB (v7x)
        ),
    )(x_b, w1_b, b1_f, w2_b, b2_f, w3_p, b3_p)

    return out[:B, :_D_OUT]


def _init_linear(key, fan_in, fan_out):
    # Matches nn.Linear default init U(-1/sqrt(fan_in), +1/sqrt(fan_in)),
    # stored as (in_features, out_features) so the kernel computes x @ W + b.
    kw, kb = jax.random.split(key)
    bound = 1.0 / jnp.sqrt(jnp.float32(fan_in))
    w = jax.random.uniform(kw, (fan_in, fan_out), jnp.float32, -bound, bound)
    b = jax.random.uniform(kb, (1, fan_out), jnp.float32, -bound, bound)
    return w, b


if __name__ == "__main__":
    key = jax.random.PRNGKey(0)
    k_x, k1, k2, k3 = jax.random.split(key, 4)

    B = 8  # small batch; feature dim 2048 is fixed by the module
    x = jax.random.normal(k_x, (B, _D_IN), jnp.float32)

    w1, b1 = _init_linear(k1, _D_IN, _D_H1)
    w2, b2 = _init_linear(k2, _D_H1, _D_H2)
    w3, b3 = _init_linear(k3, _D_H2, _D_OUT)

    out = jax.block_until_ready(global_align_forward(x, w1, b1, w2, b2, w3, b3))
    assert out.shape == (B, _D_OUT)

    # Precision-matched reference (bf16 inputs, f32 accumulate) — mirrors kernel.
    xb, w1b, w2b, w3b = (a.astype(jnp.bfloat16) for a in (x, w1, w2, w3))
    h1 = jnp.maximum(
        jnp.dot(xb, w1b, preferred_element_type=jnp.float32) + b1, 0.0
    ).astype(jnp.bfloat16)
    h2 = jnp.maximum(
        jnp.dot(h1, w2b, preferred_element_type=jnp.float32) + b2, 0.0
    ).astype(jnp.bfloat16)
    ref_bf16 = jax.nn.sigmoid(jnp.dot(h2, w3b, preferred_element_type=jnp.float32) + b3)

    # Full-f32 module reference (GRL forward = identity, dropout = identity).
    h1f = jnp.maximum(x @ w1 + b1, 0.0)
    h2f = jnp.maximum(h1f @ w2 + b2, 0.0)
    ref_f32 = jax.nn.sigmoid(h2f @ w3 + b3)

    assert jnp.allclose(out, ref_bf16, atol=5e-3, rtol=5e-3)
    assert jnp.allclose(out, ref_f32, atol=3e-2, rtol=3e-2)
    print("KERNEL_OK")
</pallas_src>

<mosaic_0001>
module attributes {stable_mosaic.version = 11 : i64} {
  func.func @_global_align_kernel(%arg0: i32, %arg1: memref<128x2048xbf16, #tpu.memory_space<vmem>>, %arg2: memref<2048x1024xbf16, #tpu.memory_space<vmem>>, %arg3: memref<1x1024xf32, #tpu.memory_space<vmem>>, %arg4: memref<1024x256xbf16, #tpu.memory_space<vmem>>, %arg5: memref<1x256xf32, #tpu.memory_space<vmem>>, %arg6: memref<256x128xbf16, #tpu.memory_space<vmem>>, %arg7: memref<1x128xf32, #tpu.memory_space<vmem>>, %arg8: memref<128x128xf32, #tpu.memory_space<vmem>>) attributes {dimension_semantics = [#tpu.dimension_semantics<parallel>], iteration_bounds = array<i64: 1>, scalar_prefetch = 0 : i64, scratch_operands = 0 : i64, tpu.core_type = #tpu.core_type<tc>, window_params = [{transform_indices = @transform_0, window_bounds = array<i64: 128, 2048>}, {pipeline_mode = #tpu.pipeline_mode<synchronous>, transform_indices = @transform_1, window_bounds = array<i64: 2048, 1024>}, {pipeline_mode = #tpu.pipeline_mode<synchronous>, transform_indices = @transform_2, window_bounds = array<i64: 1, 1024>}, {pipeline_mode = #tpu.pipeline_mode<synchronous>, transform_indices = @transform_3, window_bounds = array<i64: 1024, 256>}, {pipeline_mode = #tpu.pipeline_mode<synchronous>, transform_indices = @transform_4, window_bounds = array<i64: 1, 256>}, {pipeline_mode = #tpu.pipeline_mode<synchronous>, transform_indices = @transform_5, window_bounds = array<i64: 256, 128>}, {pipeline_mode = #tpu.pipeline_mode<synchronous>, transform_indices = @transform_6, window_bounds = array<i64: 1, 128>}, {transform_indices = @transform_7, window_bounds = array<i64: 128, 128>}]} {
    %c0 = arith.constant 0 : index
    %c0_0 = arith.constant 0 : index
    %0 = vector.load %arg1[%c0, %c0_0] : memref<128x2048xbf16, #tpu.memory_space<vmem>>, vector<128x2048xbf16>
    %c0_1 = arith.constant 0 : index
    %c0_2 = arith.constant 0 : index
    %1 = vector.load %arg2[%c0_1, %c0_2] : memref<2048x1024xbf16, #tpu.memory_space<vmem>>, vector<2048x1024xbf16>
    %cst = arith.constant dense<0.000000e+00> : vector<128x1024xf32>
    %2 = tpu.matmul %0, %1, %cst {dimension_numbers = #tpu.dot_dimension_numbers<[1], [0], [0], [1], [0, 0, 1, 1], [], []>} : vector<128x2048xbf16>, vector<2048x1024xbf16>, vector<128x1024xf32> -> vector<128x1024xf32>
    %c0_3 = arith.constant 0 : index
    %c0_4 = arith.constant 0 : index
    %3 = vector.load %arg3[%c0_3, %c0_4] : memref<1x1024xf32, #tpu.memory_space<vmem>>, vector<1x1024xf32>
    %4 = vector.broadcast %3 : vector<1x1024xf32> to vector<128x1024xf32>
    %5 = arith.addf %2, %4 : vector<128x1024xf32>
    %cst_5 = arith.constant 0.000000e+00 : f32
    %6 = vector.broadcast %cst_5 : f32 to vector<128x1024xf32>
    %7 = arith.maximumf %5, %6 : vector<128x1024xf32>
    %8 = arith.truncf %7 : vector<128x1024xf32> to vector<128x1024xbf16>
    %c0_6 = arith.constant 0 : index
    %c0_7 = arith.constant 0 : index
    %9 = vector.load %arg4[%c0_6, %c0_7] : memref<1024x256xbf16, #tpu.memory_space<vmem>>, vector<1024x256xbf16>
    %cst_8 = arith.constant dense<0.000000e+00> : vector<128x256xf32>
    %10 = tpu.matmul %8, %9, %cst_8 {dimension_numbers = #tpu.dot_dimension_numbers<[1], [0], [0], [1], [0, 0, 1, 1], [], []>} : vector<128x1024xbf16>, vector<1024x256xbf16>, vector<128x256xf32> -> vector<128x256xf32>
    %c0_9 = arith.constant 0 : index
    %c0_10 = arith.constant 0 : index
    %11 = vector.load %arg5[%c0_9, %c0_10] : memref<1x256xf32, #tpu.memory_space<vmem>>, vector<1x256xf32>
    %12 = vector.broadcast %11 : vector<1x256xf32> to vector<128x256xf32>
    %13 = arith.addf %10, %12 : vector<128x256xf32>
    %cst_11 = arith.constant 0.000000e+00 : f32
    %14 = vector.broadcast %cst_11 : f32 to vector<128x256xf32>
    %15 = arith.maximumf %13, %14 : vector<128x256xf32>
    %16 = arith.truncf %15 : vector<128x256xf32> to vector<128x256xbf16>
    %c0_12 = arith.constant 0 : index
    %c0_13 = arith.constant 0 : index
    %17 = vector.load %arg6[%c0_12, %c0_13] : memref<256x128xbf16, #tpu.memory_space<vmem>>, vector<256x128xbf16>
    %cst_14 = arith.constant dense<0.000000e+00> : vector<128x128xf32>
    %18 = tpu.matmul %16, %17, %cst_14 {dimension_numbers = #tpu.dot_dimension_numbers<[1], [0], [0], [1], [0, 0, 1, 1], [], []>} : vector<128x256xbf16>, vector<256x128xbf16>, vector<128x128xf32> -> vector<128x128xf32>
    %c0_15 = arith.constant 0 : index
    %c0_16 = arith.constant 0 : index
    %19 = vector.load %arg7[%c0_15, %c0_16] : memref<1x128xf32, #tpu.memory_space<vmem>>, vector<1x128xf32>
    %20 = vector.broadcast %19 : vector<1x128xf32> to vector<128x128xf32>
    %21 = arith.addf %18, %20 : vector<128x128xf32>
    %cst_17 = arith.constant 0.000000e+00 : f32
    %22 = vector.broadcast %cst_17 : f32 to vector<128x128xf32>
    %23 = arith.subf %22, %21 : vector<128x128xf32>
    %24 = math.exp %23 : vector<128x128xf32>
    %cst_18 = arith.constant 1.000000e+00 : f32
    %25 = vector.broadcast %cst_18 : f32 to vector<128x128xf32>
    %26 = arith.addf %25, %24 : vector<128x128xf32>
    %27 = tpu.reciprocal %26 {approx = true} : vector<128x128xf32> -> vector<128x128xf32>
    %c0_19 = arith.constant 0 : index
    %c0_20 = arith.constant 0 : index
    %28 = vector.load %arg8[%c0_19, %c0_20] : memref<128x128xf32, #tpu.memory_space<vmem>>, vector<128x128xf32>
    tpu.vector_store %arg8[%c0_19, %c0_20], %27 {strides = array<i32>} : memref<128x128xf32, #tpu.memory_space<vmem>>, vector<128x128xf32>,
    return
  }
  func.func @transform_0(%arg0: i32) -> (i32, i32) {
    %c0_i32 = arith.constant 0 : i32
    %c0_i32_0 = arith.constant 0 : i32
    return %arg0, %c0_i32 : i32, i32
  }
  func.func @transform_1(%arg0: i32) -> (i32, i32) {
    %c0_i32 = arith.constant 0 : i32
    %c0_i32_0 = arith.constant 0 : i32
    %c0_i32_1 = arith.constant 0 : i32
    return %c0_i32, %c0_i32_0 : i32, i32
  }
  func.func @transform_2(%arg0: i32) -> (i32, i32) {
    %c0_i32 = arith.constant 0 : i32
    %c0_i32_0 = arith.constant 0 : i32
    %c0_i32_1 = arith.constant 0 : i32
    return %c0_i32, %c0_i32_0 : i32, i32
  }
  func.func @transform_3(%arg0: i32) -> (i32, i32) {
    %c0_i32 = arith.constant 0 : i32
    %c0_i32_0 = arith.constant 0 : i32
    %c0_i32_1 = arith.constant 0 : i32
    return %c0_i32, %c0_i32_0 : i32, i32
  }
  func.func @transform_4(%arg0: i32) -> (i32, i32) {
    %c0_i32 = arith.constant 0 : i32
    %c0_i32_0 = arith.constant 0 : i32
    %c0_i32_1 = arith.constant 0 : i32
    return %c0_i32, %c0_i32_0 : i32, i32
  }
  func.func @transform_5(%arg0: i32) -> (i32, i32) {
    %c0_i32 = arith.constant 0 : i32
    %c0_i32_0 = arith.constant 0 : i32
    %c0_i32_1 = arith.constant 0 : i32
    return %c0_i32, %c0_i32_0 : i32, i32
  }
  func.func @transform_6(%arg0: i32) -> (i32, i32) {
    %c0_i32 = arith.constant 0 : i32
    %c0_i32_0 = arith.constant 0 : i32
    %c0_i32_1 = arith.constant 0 : i32
    return %c0_i32, %c0_i32_0 : i32, i32
  }
  func.func @transform_7(%arg0: i32) -> (i32, i32) {
    %c0_i32 = arith.constant 0 : i32
    %c0_i32_0 = arith.constant 0 : i32
    return %arg0, %c0_i32 : i32, i32
  }
}

</mosaic_0001>

<llo_original>
// kernel: global_align_forward.1
$region0: #{global_align_forward.1}
  #allocation0 [shape = 'u32[]', space=smem, size = 0x4, offset = 0x4, fixed_abs, tag = 'smem constant byte address 0x4 - core index']
  #allocation1 [shape = 'u32[144,128]{1,0:T(1,128)}', space=vmem, size = 0x12000, scoped, tag = 'internal scratch']
  %s0 = inlined_call_operand.vmem [shape: bf16[128,2048], index: 0, kind: input, shape index: {}]
  %s1 = inlined_call_operand.vmem [shape: bf16[2048,1024], index: 1, kind: input, shape index: {}]
  %s2 = inlined_call_operand.vmem [shape: f32[1,1024], index: 2, kind: input, shape index: {}]
  %s3 = inlined_call_operand.vmem [shape: bf16[1024,256], index: 3, kind: input, shape index: {}]
  %s4 = inlined_call_operand.vmem [shape: f32[1,256], index: 4, kind: input, shape index: {}]
  %s5 = inlined_call_operand.vmem [shape: bf16[256,128], index: 5, kind: input, shape index: {}]
  %s6 = inlined_call_operand.vmem [shape: f32[1,128], index: 6, kind: input, shape index: {}]
  %s7 = inlined_call_operand.vmem [shape: f32[128,128], index: 7, kind: output, shape index: {}]
  %s8 = sld [smem:[#allocation0]]
  $region38: #{global_align_forward.1} parent=0
    _
  %s10 = ssub.s32 1, %s8
  %s11 = scalar_select 0, %s10, %s8
  // Predicated region
  $region2: #{global_align_forward.1} parent=0 // pred_check
    _
  $region3: #{global_align_forward.1} parent=0 // pred_check_branch
    %13 = sbr.rel (0) target = $region5
  $region4: #{global_align_forward.1} parent=0 // pred_region
    _
  $region5: #{global_align_forward.1} parent=0 // pred_fallthru
    _
  // Predicated region
  $region6: #{global_align_forward.1} parent=0 // pred_check
    _
  $region7: #{global_align_forward.1} parent=0 // pred_check_branch
    %15 = sbr.rel (0) target = $region9
  $region8: #{global_align_forward.1} parent=0 // pred_region
    _
  $region9: #{global_align_forward.1} parent=0 // pred_fallthru
    _
  // Predicated region
  $region10: #{global_align_forward.1} parent=0 // pred_check
    _
  $region11: #{global_align_forward.1} parent=0 // pred_check_branch
    %17 = sbr.rel (0) target = $region13
  $region12: #{global_align_forward.1} parent=0 // pred_region
    _
  $region13: #{global_align_forward.1} parent=0 // pred_fallthru
    _
  // Predicated region
  $region14: #{global_align_forward.1} parent=0 // pred_check
    _
  $region15: #{global_align_forward.1} parent=0 // pred_check_branch
    %19 = sbr.rel (0) target = $region17
  $region16: #{global_align_forward.1} parent=0 // pred_region
    _
  $region17: #{global_align_forward.1} parent=0 // pred_fallthru
    _
  // Predicated region
  $region18: #{global_align_forward.1} parent=0 // pred_check
    _
  $region19: #{global_align_forward.1} parent=0 // pred_check_branch
    %21 = sbr.rel (0) target = $region21
  $region20: #{global_align_forward.1} parent=0 // pred_region
    _
  $region21: #{global_align_forward.1} parent=0 // pred_fallthru
    _
  // Predicated region
  $region22: #{global_align_forward.1} parent=0 // pred_check
    _
  $region23: #{global_align_forward.1} parent=0 // pred_check_branch
    %23 = sbr.rel (0) target = $region25
  $region24: #{global_align_forward.1} parent=0 // pred_region
    _
  $region25: #{global_align_forward.1} parent=0 // pred_fallthru
    _
  // Predicated region
  $region26: #{global_align_forward.1} parent=0 // pred_check
    _
  $region27: #{global_align_forward.1} parent=0 // pred_check_branch
    %25 = sbr.rel (0) target = $region29
  $region28: #{global_align_forward.1} parent=0 // pred_region
    _
  $region29: #{global_align_forward.1} parent=0 // pred_fallthru
    _
  %v27 = vld [vmem:[%s0] sm:$0xff]
  %v28 = vld [vmem:[%s0 + $0x8] sm:$0xff]
  %v29 = vld [vmem:[%s0 + $0x10] sm:$0xff]
  %v30 = vld [vmem:[%s0 + $0x18] sm:$0xff]
  %v31 = vld [vmem:[%s0 + $0x20] sm:$0xff]
  %v32 = vld [vmem:[%s0 + $0x28] sm:$0xff]
  %v33 = vld [vmem:[%s0 + $0x30] sm:$0xff]
  %v34 = vld [vmem:[%s0 + $0x38] sm:$0xff]
  %v35 = vld [vmem:[%s0 + $0x40] sm:$0xff]
  %v36 = vld [vmem:[%s0 + $0x48] sm:$0xff]
  %v37 = vld [vmem:[%s0 + $0x50] sm:$0xff]
  %v38 = vld [vmem:[%s0 + $0x58] sm:$0xff]
  %v39 = vld [vmem:[%s0 + $0x60] sm:$0xff]
  %v40 = vld [vmem:[%s0 + $0x68] sm:$0xff]
  %v41 = vld [vmem:[%s0 + $0x70] sm:$0xff]
  %v42 = vld [vmem:[%s0 + $0x78] sm:$0xff]
  %v43 = vld [vmem:[%s0 + $0x80] sm:$0xff]
  %v44 = vld [vmem:[%s0 + $0x88] sm:$0xff]
  %v45 = vld [vmem:[%s0 + $0x90] sm:$0xff]
  %v46 = vld [vmem:[%s0 + $0x98] sm:$0xff]
  %v47 = vld [vmem:[%s0 + $0xa0] sm:$0xff]
  %v48 = vld [vmem:[%s0 + $0xa8] sm:$0xff]
  %v49 = vld [vmem:[%s0 + $0xb0] sm:$0xff]
  %v50 = vld [vmem:[%s0 + $0xb8] sm:$0xff]
  %v51 = vld [vmem:[%s0 + $0xc0] sm:$0xff]
  %v52 = vld [vmem:[%s0 + $0xc8] sm:$0xff]
  %v53 = vld [vmem:[%s0 + $0xd0] sm:$0xff]
  %v54 = vld [vmem:[%s0 + $0xd8] sm:$0xff]
  %v55 = vld [vmem:[%s0 + $0xe0] sm:$0xff]
  %v56 = vld [vmem:[%s0 + $0xe8] sm:$0xff]
  %v57 = vld [vmem:[%s0 + $0xf0] sm:$0xff]
  %v58 = vld [vmem:[%s0 + $0xf8] sm:$0xff]
  %v59 = vld [vmem:[%s0 + $0x100] sm:$0xff]
  %v60 = vld [vmem:[%s0 + $0x108] sm:$0xff]
  %v61 = vld [vmem:[%s0 + $0x110] sm:$0xff]
  %v62 = vld [vmem:[%s0 + $0x118] sm:$0xff]
  %v63 = vld [vmem:[%s0 + $0x120] sm:$0xff]
  %v64 = vld [vmem:[%s0 + $0x128] sm:$0xff]
  %v65 = vld [vmem:[%s0 + $0x130] sm:$0xff]
  %v66 = vld [vmem:[%s0 + $0x138] sm:$0xff]
  %v67 = vld [vmem:[%s0 + $0x140] sm:$0xff]
  %v68 = vld [vmem:[%s0 + $0x148] sm:$0xff]
  %v69 = vld [vmem:[%s0 + $0x150] sm:$0xff]
  %v70 = vld [vmem:[%s0 + $0x158] sm:$0xff]
  %v71 = vld [vmem:[%s0 + $0x160] sm:$0xff]
  %v72 = vld [vmem:[%s0 + $0x168] sm:$0xff]
  %v73 = vld [vmem:[%s0 + $0x170] sm:$0xff]
  %v74 = vld [vmem:[%s0 + $0x178] sm:$0xff]
  %v75 = vld [vmem:[%s0 + $0x180] sm:$0xff]
  %v76 = vld [vmem:[%s0 + $0x188] sm:$0xff]
  %v77 = vld [vmem:[%s0 + $0x190] sm:$0xff]
  %v78 = vld [vmem:[%s0 + $0x198] sm:$0xff]
  %v79 = vld [vmem:[%s0 + $0x1a0] sm:$0xff]
  %v80 = vld [vmem:[%s0 + $0x1a8] sm:$0xff]
  %v81 = vld [vmem:[%s0 + $0x1b0] sm:$0xff]
  %v82 = vld [vmem:[%s0 + $0x1b8] sm:$0xff]
  %v83 = vld [vmem:[%s0 + $0x1c0] sm:$0xff]
  %v84 = vld [vmem:[%s0 + $0x1c8] sm:$0xff]
  %v85 = vld [vmem:[%s0 + $0x1d0] sm:$0xff]
  %v86 = vld [vmem:[%s0 + $0x1d8] sm:$0xff]
  %v87 = vld [vmem:[%s0 + $0x1e0] sm:$0xff]
  %v88 = vld [vmem:[%s0 + $0x1e8] sm:$0xff]
  %v89 = vld [vmem:[%s0 + $0x1f0] sm:$0xff]
  %v90 = vld [vmem:[%s0 + $0x1f8] sm:$0xff]
  %v91 = vld [vmem:[%s0 + $0x200] sm:$0xff]
  %v92 = vld [vmem:[%s0 + $0x208] sm:$0xff]
  %v93 = vld [vmem:[%s0 + $0x210] sm:$0xff]
  %v94 = vld [vmem:[%s0 + $0x218] sm:$0xff]
  %v95 = vld [vmem:[%s0 + $0x220] sm:$0xff]
  %v96 = vld [vmem:[%s0 + $0x228] sm:$0xff]
  %v97 = vld [vmem:[%s0 + $0x230] sm:$0xff]
  %v98 = vld [vmem:[%s0 + $0x238] sm:$0xff]
  %v99 = vld [vmem:[%s0 + $0x240] sm:$0xff]
  %v100 = vld [vmem:[%s0 + $0x248] sm:$0xff]
  %v101 = vld [vmem:[%s0 + $0x250] sm:$0xff]
  %v102 = vld [vmem:[%s0 + $0x258] sm:$0xff]
  %v103 = vld [vmem:[%s0 + $0x260] sm:$0xff]
  %v104 = vld [vmem:[%s0 + $0x268] sm:$0xff]
  %v105 = vld [vmem:[%s0 + $0x270] sm:$0xff]
  %v106 = vld [vmem:[%s0 + $0x278] sm:$0xff]
  %v107 = vld [vmem:[%s0 + $0x280] sm:$0xff]
  %v108 = vld [vmem:[%s0 + $0x288] sm:$0xff]
  %v109 = vld [vmem:[%s0 + $0x290] sm:$0xff]
  %v110 = vld [vmem:[%s0 + $0x298] sm:$0xff]
  %v111 = vld [vmem:[%s0 + $0x2a0] sm:$0xff]
  %v112 = vld [vmem:[%s0 + $0x2a8] sm:$0xff]
  %v113 = vld [vmem:[%s0 + $0x2b0] sm:$0xff]
  %v114 = vld [vmem:[%s0 + $0x2b8] sm:$0xff]
  %v115 = vld [vmem:[%s0 + $0x2c0] sm:$0xff]
  %v116 = vld [vmem:[%s0 + $0x2c8] sm:$0xff]
  %v117 = vld [vmem:[%s0 + $0x2d0] sm:$0xff]
  %v118 = vld [vmem:[%s0 + $0x2d8] sm:$0xff]
  %v119 = vld [vmem:[%s0 + $0x2e0] sm:$0xff]
  %v120 = vld [vmem:[%s0 + $0x2e8] sm:$0xff]
  %v121 = vld [vmem:[%s0 + $0x2f0] sm:$0xff]
  %v122 = vld [vmem:[%s0 + $0x2f8] sm:$0xff]
  %v123 = vld [vmem:[%s0 + $0x300] sm:$0xff]
  %v124 = vld [vmem:[%s0 + $0x308] sm:$0xff]
  %v125 = vld [vmem:[%s0 + $0x310] sm:$0xff]
  %v126 = vld [vmem:[%s0 + $0x318] sm:$0xff]
  %v127 = vld [vmem:[%s0 + $0x320] sm:$0xff]
  %v128 = vld [vmem:[%s0 + $0x328] sm:$0xff]
  %v129 = vld [vmem:[%s0 + $0x330] sm:$0xff]
  %v130 = vld [vmem:[%s0 + $0x338] sm:$0xff]
  %v131 = vld [vmem:[%s0 + $0x340] sm:$0xff]
  %v132 = vld [vmem:[%s0 + $0x348] sm:$0xff]
  %v133 = vld [vmem:[%s0 + $0x350] sm:$0xff]
  %v134 = vld [vmem:[%s0 + $0x358] sm:$0xff]
  %v135 = vld [vmem:[%s0 + $0x360] sm:$0xff]
  %v136 = vld [vmem:[%s0 + $0x368] sm:$0xff]
  %v137 = vld [vmem:[%s0 + $0x370] sm:$0xff]
  %v138 = vld [vmem:[%s0 + $0x378] sm:$0xff]
  %v139 = vld [vmem:[%s0 + $0x380] sm:$0xff]
  %v140 = vld [vmem:[%s0 + $0x388] sm:$0xff]
  %v141 = vld [vmem:[%s0 + $0x390] sm:$0xff]
  %v142 = vld [vmem:[%s0 + $0x398] sm:$0xff]
  %v143 = vld [vmem:[%s0 + $0x3a0] sm:$0xff]
  %v144 = vld [vmem:[%s0 + $0x3a8] sm:$0xff]
  %v145 = vld [vmem:[%s0 + $0x3b0] sm:$0xff]
  %v146 = vld [vmem:[%s0 + $0x3b8] sm:$0xff]
  %v147 = vld [vmem:[%s0 + $0x3c0] sm:$0xff]
  %v148 = vld [vmem:[%s0 + $0x3c8] sm:$0xff]
  %v149 = vld [vmem:[%s0 + $0x3d0] sm:$0xff]
  %v150 = vld [vmem:[%s0 + $0x3d8] sm:$0xff]
  %v151 = vld [vmem:[%s0 + $0x3e0] sm:$0xff]
  %v152 = vld [vmem:[%s0 + $0x3e8] sm:$0xff]
  %v153 = vld [vmem:[%s0 + $0x3f0] sm:$0xff]
  %v154 = vld [vmem:[%s0 + $0x3f8] sm:$0xff]
  %v155 = vld [vmem:[%s1] sm:$0xff]
  %v156 = vld [vmem:[%s1 + $0x8] sm:$0xff]
  %v157 = vld [vmem:[%s1 + $0x10] sm:$0xff]
  %v158 = vld [vmem:[%s1 + $0x18] sm:$0xff]
  %v159 = vld [vmem:[%s1 + $0x20] sm:$0xff]
  %v160 = vld [vmem:[%s1 + $0x28] sm:$0xff]
  %v161 = vld [vmem:[%s1 + $0x30] sm:$0xff]
  %v162 = vld [vmem:[%s1 + $0x38] sm:$0xff]
  %v163 = vld [vmem:[%s1 + $0x40] sm:$0xff]
  %v164 = vld [vmem:[%s1 + $0x48] sm:$0xff]
  %v165 = vld [vmem:[%s1 + $0x50] sm:$0xff]
  %v166 = vld [vmem:[%s1 + $0x58] sm:$0xff]
  %v167 = vld [vmem:[%s1 + $0x60] sm:$0xff]
  %v168 = vld [vmem:[%s1 + $0x68] sm:$0xff]
  %v169 = vld [vmem:[%s1 + $0x70] sm:$0xff]
  %v170 = vld [vmem:[%s1 + $0x78] sm:$0xff]
  %v171 = vld [vmem:[%s1 + $0x80] sm:$0xff]
  %v172 = vld [vmem:[%s1 + $0x88] sm:$0xff]
  %v173 = vld [vmem:[%s1 + $0x90] sm:$0xff]
  %v174 = vld [vmem:[%s1 + $0x98] sm:$0xff]
  %v175 = vld [vmem:[%s1 + $0xa0] sm:$0xff]
  %v176 = vld [vmem:[%s1 + $0xa8] sm:$0xff]
  %v177 = vld [vmem:[%s1 + $0xb0] sm:$0xff]
  %v178 = vld [vmem:[%s1 + $0xb8] sm:$0xff]
  %v179 = vld [vmem:[%s1 + $0xc0] sm:$0xff]
  %v180 = vld [vmem:[%s1 + $0xc8] sm:$0xff]
  %v181 = vld [vmem:[%s1 + $0xd0] sm:$0xff]
  %v182 = vld [vmem:[%s1 + $0xd8] sm:$0xff]
  %v183 = vld [vmem:[%s1 + $0xe0] sm:$0xff]
  %v184 = vld [vmem:[%s1 + $0xe8] sm:$0xff]
  %v185 = vld [vmem:[%s1 + $0xf0] sm:$0xff]
  %v186 = vld [vmem:[%s1 + $0xf8] sm:$0xff]
  %v187 = vld [vmem:[%s1 + $0x100] sm:$0xff]
  %v188 = vld [vmem:[%s1 + $0x108] sm:$0xff]
  %v189 = vld [vmem:[%s1 + $0x110] sm:$0xff]
  %v190 = vld [vmem:[%s1 + $0x118] sm:$0xff]
  %v191 = vld [vmem:[%s1 + $0x120] sm:$0xff]
  %v192 = vld [vmem:[%s1 + $0x128] sm:$0xff]
  %v193 = vld [vmem:[%s1 + $0x130] sm:$0xff]
  %v194 = vld [vmem:[%s1 + $0x138] sm:$0xff]
  %v195 = vld [vmem:[%s1 + $0x140] sm:$0xff]
  %v196 = vld [vmem:[%s1 + $0x148] sm:$0xff]
  %v197 = vld [vmem:[%s1 + $0x150] sm:$0xff]
  %v198 = vld [vmem:[%s1 + $0x158] sm:$0xff]
  %v199 = vld [vmem:[%s1 + $0x160] sm:$0xff]
  %v200 = vld [vmem:[%s1 + $0x168] sm:$0xff]
  %v201 = vld [vmem:[%s1 + $0x170] sm:$0xff]
  %v202 = vld [vmem:[%s1 + $0x178] sm:$0xff]
  %v203 = vld [vmem:[%s1 + $0x180] sm:$0xff]
  %v204 = vld [vmem:[%s1 + $0x188] sm:$0xff]
  %v205 = vld [vmem:[%s1 + $0x190] sm:$0xff]
  %v206 = vld [vmem:[%s1 + $0x198] sm:$0xff]
  %v207 = vld [vmem:[%s1 + $0x1a0] sm:$0xff]
  %v208 = vld [vmem:[%s1 + $0x1a8] sm:$0xff]
  %v209 = vld [vmem:[%s1 + $0x1b0] sm:$0xff]
  %v210 = vld [vmem:[%s1 + $0x1b8] sm:$0xff]
  %v211 = vld [vmem:[%s1 + $0x1c0] sm:$0xff]
  %v212 = vld [vmem:[%s1 + $0x1c8] sm:$0xff]
  %v213 = vld [vmem:[%s1 + $0x1d0] sm:$0xff]
  %v214 = vld [vmem:[%s1 + $0x1d8] sm:$0xff]
  %v215 = vld [vmem:[%s1 + $0x1e0] sm:$0xff]
  %v216 = vld [vmem:[%s1 + $0x1e8] sm:$0xff]
  %v217 = vld [vmem:[%s1 + $0x1f0] sm:$0xff]
  %v218 = vld [vmem:[%s1 + $0x1f8] sm:$0xff]
  %v219 = vld [vmem:[%s1 + $0x200] sm:$0xff]
  %v220 = vld [vmem:[%s1 + $0x208] sm:$0xff]
  %v221 = vld [vmem:[%s1 + $0x210] sm:$0xff]
  %v222 = vld [vmem:[%s1 + $0x218] sm:$0xff]
  %v223 = vld [vmem:[%s1 + $0x220] sm:$0xff]
  %v224 = vld [vmem:[%s1 + $0x228] sm:$0xff]
  %v225 = vld [vmem:[%s1 + $0x230] sm:$0xff]
  %v226 = vld [vmem:[%s1 + $0x238] sm:$0xff]
  %v227 = vld [vmem:[%s1 + $0x240] sm:$0xff]
  %v228 = vld [vmem:[%s1 + $0x248] sm:$0xff]
  %v229 = vld [vmem:[%s1 + $0x250] sm:$0xff]
  %v230 = vld [vmem:[%s1 + $0x258] sm:$0xff]
  %v231 = vld [vmem:[%s1 + $0x260] sm:$0xff]
  %v232 = vld [vmem:[%s1 + $0x268] sm:$0xff]
  %v233 = vld [vmem:[%s1 + $0x270] sm:$0xff]
  %v234 = vld [vmem:[%s1 + $0x278] sm:$0xff]
  %v235 = vld [vmem:[%s1 + $0x280] sm:$0xff]
  %v236 = vld [vmem:[%s1 + $0x288] sm:$0xff]
  %v237 = vld [vmem:[%s1 + $0x290] sm:$0xff]
  %v238 = vld [vmem:[%s1 + $0x298] sm:$0xff]
  %v239 = vld [vmem:[%s1 + $0x2a0] sm:$0xff]
  %v240 = vld [vmem:[%s1 + $0x2a8] sm:$0xff]
  %v241 = vld [vmem:[%s1 + $0x2b0] sm:$0xff]
  %v242 = vld [vmem:[%s1 + $0x2b8] sm:$0xff]
  %v243 = vld [vmem:[%s1 + $0x2c0] sm:$0xff]
  %v244 = vld [vmem:[%s1 + $0x2c8] sm:$0xff]
  %v245 = vld [vmem:[%s1 + $0x2d0] sm:$0xff]
  %v246 = vld [vmem:[%s1 + $0x2d8] sm:$0xff]
  %v247 = vld [vmem:[%s1 + $0x2e0] sm:$0xff]
  %v248 = vld [vmem:[%s1 + $0x2e8] sm:$0xff]
  %v249 = vld [vmem:[%s1 + $0x2f0] sm:$0xff]
  %v250 = vld [vmem:[%s1 + $0x2f8] sm:$0xff]
  %v251 = vld [vmem:[%s1 + $0x300] sm:$0xff]
  %v252 = vld [vmem:[%s1 + $0x308] sm:$0xff]
  %v253 = vld [vmem:[%s1 + $0x310] sm:$0xff]
  %v254 = vld [vmem:[%s1 + $0x318] sm:$0xff]
  %v255 = vld [vmem:[%s1 + $0x320] sm:$0xff]
  %v256 = vld [vmem:[%s1 + $0x328] sm:$0xff]
  %v257 = vld [vmem:[%s1 + $0x330] sm:$0xff]
  %v258 = vld [vmem:[%s1 + $0x338] sm:$0xff]
  %v259 = vld [vmem:[%s1 + $0x340] sm:$0xff]
  %v260 = vld [vmem:[%s1 + $0x348] sm:$0xff]
  %v261 = vld [vmem:[%s1 + $0x350] sm:$0xff]
  %v262 = vld [vmem:[%s1 + $0x358] sm:$0xff]
  %v263 = vld [vmem:[%s1 + $0x360] sm:$0xff]
  %v264 = vld [vmem:[%s1 + $0x368] sm:$0xff]
  %v265 = vld [vmem:[%s1 + $0x370] sm:$0xff]
  %v266 = vld [vmem:[%s1 + $0x378] sm:$0xff]
  %v267 = vld [vmem:[%s1 + $0x380] sm:$0xff]
  %v268 = vld [vmem:[%s1 + $0x388] sm:$0xff]
  %v269 = vld [vmem:[%s1 + $0x390] sm:$0xff]
  %v270 = vld [vmem:[%s1 + $0x398] sm:$0xff]
  %v271 = vld [vmem:[%s1 + $0x3a0] sm:$0xff]
  %v272 = vld [vmem:[%s1 + $0x3a8] sm:$0xff]
  %v273 = vld [vmem:[%s1 + $0x3b0] sm:$0xff]
  %v274 = vld [vmem:[%s1 + $0x3b8] sm:$0xff]
  %v275 = vld [vmem:[%s1 + $0x3c0] sm:$0xff]
  %v276 = vld [vmem:[%s1 + $0x3c8] sm:$0xff]
  %v277 = vld [vmem:[%s1 + $0x3d0] sm:$0xff]
  %v278 = vld [vmem:[%s1 + $0x3d8] sm:$0xff]
  %v279 = vld [vmem:[%s1 + $0x3e0] sm:$0xff]
  %v280 = vld [vmem:[%s1 + $0x3e8] sm:$0xff]
  %v281 = vld [vmem:[%s1 + $0x3f0] sm:$0xff]
  %v282 = vld [vmem:[%s1 + $0x3f8] sm:$0xff]
  %v283 = vld [vmem:[%s1 + $0x400] sm:$0xff]
  %v284 = vld [vmem:[%s1 + $0x408] sm:$0xff]
  %v285 = vld [vmem:[%s1 + $0x410] sm:$0xff]
  %v286 = vld [vmem:[%s1 + $0x418] sm:$0xff]
  %v287 = vld [vmem:[%s1 + $0x420] sm:$0xff]
  %v288 = vld [vmem:[%s1 + $0x428] sm:$0xff]
  %v289 = vld [vmem:[%s1 + $0x430] sm:$0xff]
  %v290 = vld [vmem:[%s1 + $0x438] sm:$0xff]
  %v291 = vld [vmem:[%s1 + $0x440] sm:$0xff]
  %v292 = vld [vmem:[%s1 + $0x448] sm:$0xff]
  %v293 = vld [vmem:[%s1 + $0x450] sm:$0xff]
  %v294 = vld [vmem:[%s1 + $0x458] sm:$0xff]
  %v295 = vld [vmem:[%s1 + $0x460] sm:$0xff]
  %v296 = vld [vmem:[%s1 + $0x468] sm:$0xff]
  %v297 = vld [vmem:[%s1 + $0x470] sm:$0xff]
  %v298 = vld [vmem:[%s1 + $0x478] sm:$0xff]
  %v299 = vld [vmem:[%s1 + $0x480] sm:$0xff]
  %v300 = vld [vmem:[%s1 + $0x488] sm:$0xff]
  %v301 = vld [vmem:[%s1 + $0x490] sm:$0xff]
  %v302 = vld [vmem:[%s1 + $0x498] sm:$0xff]
  %v303 = vld [vmem:[%s1 + $0x4a0] sm:$0xff]
  %v304 = vld [vmem:[%s1 + $0x4a8] sm:$0xff]
  %v305 = vld [vmem:[%s1 + $0x4b0] sm:$0xff]
  %v306 = vld [vmem:[%s1 + $0x4b8] sm:$0xff]
  %v307 = vld [vmem:[%s1 + $0x4c0] sm:$0xff]
  %v308 = vld [vmem:[%s1 + $0x4c8] sm:$0xff]
  %v309 = vld [vmem:[%s1 + $0x4d0] sm:$0xff]
  %v310 = vld [vmem:[%s1 + $0x4d8] sm:$0xff]
  %v311 = vld [vmem:[%s1 + $0x4e0] sm:$0xff]
  %v312 = vld [vmem:[%s1 + $0x4e8] sm:$0xff]
  %v313 = vld [vmem:[%s1 + $0x4f0] sm:$0xff]
  %v314 = vld [vmem:[%s1 + $0x4f8] sm:$0xff]
  %v315 = vld [vmem:[%s1 + $0x500] sm:$0xff]
  %v316 = vld [vmem:[%s1 + $0x508] sm:$0xff]
  %v317 = vld [vmem:[%s1 + $0x510] sm:$0xff]
  %v318 = vld [vmem:[%s1 + $0x518] sm:$0xff]
  %v319 = vld [vmem:[%s1 + $0x520] sm:$0xff]
  %v320 = vld [vmem:[%s1 + $0x528] sm:$0xff]
  %v321 = vld [vmem:[%s1 + $0x530] sm:$0xff]
  %v322 = vld [vmem:[%s1 + $0x538] sm:$0xff]
  %v323 = vld [vmem:[%s1 + $0x540] sm:$0xff]
  %v324 = vld [vmem:[%s1 + $0x548] sm:$0xff]
  %v325 = vld [vmem:[%s1 + $0x550] sm:$0xff]
  %v326 = vld [vmem:[%s1 + $0x558] sm:$0xff]
  %v327 = vld [vmem:[%s1 + $0x560] sm:$0xff]
  %v328 = vld [vmem:[%s1 + $0x568] sm:$0xff]
  %v329 = vld [vmem:[%s1 + $0x570] sm:$0xff]
  %v330 = vld [vmem:[%s1 + $0x578] sm:$0xff]
  %v331 = vld [vmem:[%s1 + $0x580] sm:$0xff]
  %v332 = vld [vmem:[%s1 + $0x588] sm:$0xff]
  %v333 = vld [vmem:[%s1 + $0x590] sm:$0xff]
  %v334 = vld [vmem:[%s1 + $0x598] sm:$0xff]
  %v335 = vld [vmem:[%s1 + $0x5a0] sm:$0xff]
  %v336 = vld [vmem:[%s1 + $0x5a8] sm:$0xff]
  %v337 = vld [vmem:[%s1 + $0x5b0] sm:$0xff]
  %v338 = vld [vmem:[%s1 + $0x5b8] sm:$0xff]
  %v339 = vld [vmem:[%s1 + $0x5c0] sm:$0xff]
  %v340 = vld [vmem:[%s1 + $0x5c8] sm:$0xff]
  %v341 = vld [vmem:[%s1 + $0x5d0] sm:$0xff]
  %v342 = vld [vmem:[%s1 + $0x5d8] sm:$0xff]
  %v343 = vld [vmem:[%s1 + $0x5e0] sm:$0xff]
  %v344 = vld [vmem:[%s1 + $0x5e8] sm:$0xff]
  %v345 = vld [vmem:[%s1 + $0x5f0] sm:$0xff]
  %v346 = vld [vmem:[%s1 + $0x5f8] sm:$0xff]
  %v347 = vld [vmem:[%s1 + $0x600] sm:$0xff]
  %v348 = vld [vmem:[%s1 + $0x608] sm:$0xff]
  %v349 = vld [vmem:[%s1 + $0x610] sm:$0xff]
  %v350 = vld [vmem:[%s1 + $0x618] sm:$0xff]
  %v351 = vld [vmem:[%s1 + $0x620] sm:$0xff]
  %v352 = vld [vmem:[%s1 + $0x628] sm:$0xff]
  %v353 = vld [vmem:[%s1 + $0x630] sm:$0xff]
  %v354 = vld [vmem:[%s1 + $0x638] sm:$0xff]
  %v355 = vld [vmem:[%s1 + $0x640] sm:$0xff]
  %v356 = vld [vmem:[%s1 + $0x648] sm:$0xff]
  %v357 = vld [vmem:[%s1 + $0x650] sm:$0xff]
  %v358 = vld [vmem:[%s1 + $0x658] sm:$0xff]
  %v359 = vld [vmem:[%s1 + $0x660] sm:$0xff]
  %v360 = vld [vmem:[%s1 + $0x668] sm:$0xff]
  %v361 = vld [vmem:[%s1 + $0x670] sm:$0xff]
  %v362 = vld [vmem:[%s1 + $0x678] sm:$0xff]
  %v363 = vld [vmem:[%s1 + $0x680] sm:$0xff]
  %v364 = vld [vmem:[%s1 + $0x688] sm:$0xff]
  %v365 = vld [vmem:[%s1 + $0x690] sm:$0xff]
  %v366 = vld [vmem:[%s1 + $0x698] sm:$0xff]
  %v367 = vld [vmem:[%s1 + $0x6a0] sm:$0xff]
  %v368 = vld [vmem:[%s1 + $0x6a8] sm:$0xff]
  %v369 = vld [vmem:[%s1 + $0x6b0] sm:$0xff]
  %v370 = vld [vmem:[%s1 + $0x6b8] sm:$0xff]
  %v371 = vld [vmem:[%s1 + $0x6c0] sm:$0xff]
  %v372 = vld [vmem:[%s1 + $0x6c8] sm:$0xff]
  %v373 = vld [vmem:[%s1 + $0x6d0] sm:$0xff]
  %v374 = vld [vmem:[%s1 + $0x6d8] sm:$0xff]
  %v375 = vld [vmem:[%s1 + $0x6e0] sm:$0xff]
  %v376 = vld [vmem:[%s1 + $0x6e8] sm:$0xff]
  %v377 = vld [vmem:[%s1 + $0x6f0] sm:$0xff]
  %v378 = vld [vmem:[%s1 + $0x6f8] sm:$0xff]
  %v379 = vld [vmem:[%s1 + $0x700] sm:$0xff]
  %v380 = vld [vmem:[%s1 + $0x708] sm:$0xff]
  %v381 = vld [vmem:[%s1 + $0x710] sm:$0xff]
  %v382 = vld [vmem:[%s1 + $0x718] sm:$0xff]
  %v383 = vld [vmem:[%s1 + $0x720] sm:$0xff]
  %v384 = vld [vmem:[%s1 + $0x728] sm:$0xff]
  %v385 = vld [vmem:[%s1 + $0x730] sm:$0xff]
  %v386 = vld [vmem:[%s1 + $0x738] sm:$0xff]
  %v387 = vld [vmem:[%s1 + $0x740] sm:$0xff]
  %v388 = vld [vmem:[%s1 + $0x748] sm:$0xff]
  %v389 = vld [vmem:[%s1 + $0x750] sm:$0xff]
  %v390 = vld [vmem:[%s1 + $0x758] sm:$0xff]
  %v391 = vld [vmem:[%s1 + $0x760] sm:$0xff]
  %v392 = vld [vmem:[%s1 + $0x768] sm:$0xff]
  %v393 = vld [vmem:[%s1 + $0x770] sm:$0xff]
  %v394 = vld [vmem:[%s1 + $0x778] sm:$0xff]
  %v395 = vld [vmem:[%s1 + $0x780] sm:$0xff]
  %v396 = vld [vmem:[%s1 + $0x788] sm:$0xff]
  %v397 = vld [vmem:[%s1 + $0x790] sm:$0xff]
  %v398 = vld [vmem:[%s1 + $0x798] sm:$0xff]
  %v399 = vld [vmem:[%s1 + $0x7a0] sm:$0xff]
  %v400 = vld [vmem:[%s1 + $0x7a8] sm:$0xff]
  %v401 = vld [vmem:[%s1 + $0x7b0] sm:$0xff]
  %v402 = vld [vmem:[%s1 + $0x7b8] sm:$0xff]
  %v403 = vld [vmem:[%s1 + $0x7c0] sm:$0xff]
  %v404 = vld [vmem:[%s1 + $0x7c8] sm:$0xff]
  %v405 = vld [vmem:[%s1 + $0x7d0] sm:$0xff]
  %v406 = vld [vmem:[%s1 + $0x7d8] sm:$0xff]
  %v407 = vld [vmem:[%s1 + $0x7e0] sm:$0xff]
  %v408 = vld [vmem:[%s1 + $0x7e8] sm:$0xff]
  %v409 = vld [vmem:[%s1 + $0x7f0] sm:$0xff]
  %v410 = vld [vmem:[%s1 + $0x7f8] sm:$0xff]
  %v411 = vld [vmem:[%s1 + $0x800] sm:$0xff]
  %v412 = vld [vmem:[%s1 + $0x808] sm:$0xff]
  %v413 = vld [vmem:[%s1 + $0x810] sm:$0xff]
  %v414 = vld [vmem:[%s1 + $0x818] sm:$0xff]
  %v415 = vld [vmem:[%s1 + $0x820] sm:$0xff]
  %v416 = vld [vmem:[%s1 + $0x828] sm:$0xff]
  %v417 = vld [vmem:[%s1 + $0x830] sm:$0xff]
  %v418 = vld [vmem:[%s1 + $0x838] sm:$0xff]
  %v419 = vld [vmem:[%s1 + $0x840] sm:$0xff]
  %v420 = vld [vmem:[%s1 + $0x848] sm:$0xff]
  %v421 = vld [vmem:[%s1 + $0x850] sm:$0xff]
  %v422 = vld [vmem:[%s1 + $0x858] sm:$0xff]
  %v423 = vld [vmem:[%s1 + $0x860] sm:$0xff]
  %v424 = vld [vmem:[%s1 + $0x868] sm:$0xff]
  %v425 = vld [vmem:[%s1 + $0x870] sm:$0xff]
  %v426 = vld [vmem:[%s1 + $0x878] sm:$0xff]
  %v427 = vld [vmem:[%s1 + $0x880] sm:$0xff]
  %v428 = vld [vmem:[%s1 + $0x888] sm:$0xff]
  %v429 = vld [vmem:[%s1 + $0x890] sm:$0xff]
  %v430 = vld [vmem:[%s1 + $0x898] sm:$0xff]
  %v431 = vld [vmem:[%s1 + $0x8a0] sm:$0xff]
  %v432 = vld [vmem:[%s1 + $0x8a8] sm:$0xff]
  %v433 = vld [vmem:[%s1 + $0x8b0] sm:$0xff]
  %v434 = vld [vmem:[%s1 + $0x8b8] sm:$0xff]
  %v435 = vld [vmem:[%s1 + $0x8c0] sm:$0xff]
  %v436 = vld [vmem:[%s1 + $0x8c8] sm:$0xff]
  %v437 = vld [vmem:[%s1 + $0x8d0] sm:$0xff]
  %v438 = vld [vmem:[%s1 + $0x8d8] sm:$0xff]
  %v439 = vld [vmem:[%s1 + $0x8e0] sm:$0xff]
  %v440 = vld [vmem:[%s1 + $0x8e8] sm:$0xff]
  %v441 = vld [vmem:[%s1 + $0x8f0] sm:$0xff]
  %v442 = vld [vmem:[%s1 + $0x8f8] sm:$0xff]
  %v443 = vld [vmem:[%s1 + $0x900] sm:$0xff]
  %v444 = vld [vmem:[%s1 + $0x908] sm:$0xff]
  %v445 = vld [vmem:[%s1 + $0x910] sm:$0xff]
  %v446 = vld [vmem:[%s1 + $0x918] sm:$0xff]
  %v447 = vld [vmem:[%s1 + $0x920] sm:$0xff]
  %v448 = vld [vmem:[%s1 + $0x928] sm:$0xff]
  %v449 = vld [vmem:[%s1 + $0x930] sm:$0xff]
  %v450 = vld [vmem:[%s1 + $0x938] sm:$0xff]
  %v451 = vld [vmem:[%s1 + $0x940] sm:$0xff]
  %v452 = vld [vmem:[%s1 + $0x948] sm:$0xff]
  %v453 = vld [vmem:[%s1 + $0x950] sm:$0xff]
  %v454 = vld [vmem:[%s1 + $0x958] sm:$0xff]
  %v455 = vld [vmem:[%s1 + $0x960] sm:$0xff]
  %v456 = vld [vmem:[%s1 + $0x968] sm:$0xff]
  %v457 = vld [vmem:[%s1 + $0x970] sm:$0xff]
  %v458 = vld [vmem:[%s1 + $0x978] sm:$0xff]
  %v459 = vld [vmem:[%s1 + $0x980] sm:$0xff]
  %v460 = vld [vmem:[%s1 + $0x988] sm:$0xff]
  %v461 = vld [vmem:[%s1 + $0x990] sm:$0xff]
  %v462 = vld [vmem:[%s1 + $0x998] sm:$0xff]
  %v463 = vld [vmem:[%s1 + $0x9a0] sm:$0xff]
  %v464 = vld [vmem:[%s1 + $0x9a8] sm:$0xff]
  %v465 = vld [vmem:[%s1 + $0x9b0] sm:$0xff]
  %v466 = vld [vmem:[%s1 + $0x9b8] sm:$0xff]
  %v467 = vld [vmem:[%s1 + $0x9c0] sm:$0xff]
  %v468 = vld [vmem:[%s1 + $0x9c8] sm:$0xff]
  %v469 = vld [vmem:[%s1 + $0x9d0] sm:$0xff]
  %v470 = vld [vmem:[%s1 + $0x9d8] sm:$0xff]
  %v471 = vld [vmem:[%s1 + $0x9e0] sm:$0xff]
  %v472 = vld [vmem:[%s1 + $0x9e8] sm:$0xff]
  %v473 = vld [vmem:[%s1 + $0x9f0] sm:$0xff]
  %v474 = vld [vmem:[%s1 + $0x9f8] sm:$0xff]
  %v475 = vld [vmem:[%s1 + $0xa00] sm:$0xff]
  %v476 = vld [vmem:[%s1 + $0xa08] sm:$0xff]
  %v477 = vld [vmem:[%s1 + $0xa10] sm:$0xff]
  %v478 = vld [vmem:[%s1 + $0xa18] sm:$0xff]
  %v479 = vld [vmem:[%s1 + $0xa20] sm:$0xff]
  %v480 = vld [vmem:[%s1 + $0xa28] sm:$0xff]
  %v481 = vld [vmem:[%s1 + $0xa30] sm:$0xff]
  %v482 = vld [vmem:[%s1 + $0xa38] sm:$0xff]
  %v483 = vld [vmem:[%s1 + $0xa40] sm:$0xff]
  %v484 = vld [vmem:[%s1 + $0xa48] sm:$0xff]
  %v485 = vld [vmem:[%s1 + $0xa50] sm:$0xff]
  %v486 = vld [vmem:[%s1 + $0xa58] sm:$0xff]
  %v487 = vld [vmem:[%s1 + $0xa60] sm:$0xff]
  %v488 = vld [vmem:[%s1 + $0xa68] sm:$0xff]
  %v489 = vld [vmem:[%s1 + $0xa70] sm:$0xff]
  %v490 = vld [vmem:[%s1 + $0xa78] sm:$0xff]
  %v491 = vld [vmem:[%s1 + $0xa80] sm:$0xff]
  %v492 = vld [vmem:[%s1 + $0xa88] sm:$0xff]
  %v493 = vld [vmem:[%s1 + $0xa90] sm:$0xff]
  %v494 = vld [vmem:[%s1 + $0xa98] sm:$0xff]
  %v495 = vld [vmem:[%s1 + $0xaa0] sm:$0xff]
  %v496 = vld [vmem:[%s1 + $0xaa8] sm:$0xff]
  %v497 = vld [vmem:[%s1 + $0xab0] sm:$0xff]
  %v498 = vld [vmem:[%s1 + $0xab8] sm:$0xff]
  %v499 = vld [vmem:[%s1 + $0xac0] sm:$0xff]
  %v500 = vld [vmem:[%s1 + $0xac8] sm:$0xff]
  %v501 = vld [vmem:[%s1 + $0xad0] sm:$0xff]
  %v502 = vld [vmem:[%s1 + $0xad8] sm:$0xff]
  %v503 = vld [vmem:[%s1 + $0xae0] sm:$0xff]
  %v504 = vld [vmem:[%s1 + $0xae8] sm:$0xff]
  %v505 = vld [vmem:[%s1 + $0xaf0] sm:$0xff]
  %v506 = vld [vmem:[%s1 + $0xaf8] sm:$0xff]
  %v507 = vld [vmem:[%s1 + $0xb00] sm:$0xff]
  %v508 = vld [vmem:[%s1 + $0xb08] sm:$0xff]
  %v509 = vld [vmem:[%s1 + $0xb10] sm:$0xff]
  %v510 = vld [vmem:[%s1 + $0xb18] sm:$0xff]
  %v511 = vld [vmem:[%s1 + $0xb20] sm:$0xff]
  %v512 = vld [vmem:[%s1 + $0xb28] sm:$0xff]
  %v513 = vld [vmem:[%s1 + $0xb30] sm:$0xff]
  %v514 = vld [vmem:[%s1 + $0xb38] sm:$0xff]
  %v515 = vld [vmem:[%s1 + $0xb40] sm:$0xff]
  %v516 = vld [vmem:[%s1 + $0xb48] sm:$0xff]
  %v517 = vld [vmem:[%s1 + $0xb50] sm:$0xff]
  %v518 = vld [vmem:[%s1 + $0xb58] sm:$0xff]
  %v519 = vld [vmem:[%s1 + $0xb60] sm:$0xff]
  %v520 = vld [vmem:[%s1 + $0xb68] sm:$0xff]
  %v521 = vld [vmem:[%s1 + $0xb70] sm:$0xff]
  %v522 = vld [vmem:[%s1 + $0xb78] sm:$0xff]
  %v523 = vld [vmem:[%s1 + $0xb80] sm:$0xff]
  %v524 = vld [vmem:[%s1 + $0xb88] sm:$0xff]
  %v525 = vld [vmem:[%s1 + $0xb90] sm:$0xff]
  %v526 = vld [vmem:[%s1 + $0xb98] sm:$0xff]
  %v527 = vld [vmem:[%s1 + $0xba0] sm:$0xff]
  %v528 = vld [vmem:[%s1 + $0xba8] sm:$0xff]
  %v529 = vld [vmem:[%s1 + $0xbb0] sm:$0xff]
  %v530 = vld [vmem:[%s1 + $0xbb8] sm:$0xff]
  %v531 = vld [vmem:[%s1 + $0xbc0] sm:$0xff]
  %v532 = vld [vmem:[%s1 + $0xbc8] sm:$0xff]
  %v533 = vld [vmem:[%s1 + $0xbd0] sm:$0xff]
  %v534 = vld [vmem:[%s1 + $0xbd8] sm:$0xff]
  %v535 = vld [vmem:[%s1 + $0xbe0] sm:$0xff]
  %v536 = vld [vmem:[%s1 + $0xbe8] sm:$0xff]
  %v537 = vld [vmem:[%s1 + $0xbf0] sm:$0xff]
  %v538 = vld [vmem:[%s1 + $0xbf8] sm:$0xff]
  %v539 = vld [vmem:[%s1 + $0xc00] sm:$0xff]
  %v540 = vld [vmem:[%s1 + $0xc08] sm:$0xff]
  %v541 = vld [vmem:[%s1 + $0xc10] sm:$0xff]
  %v542 = vld [vmem:[%s1 + $0xc18] sm:$0xff]
  %v543 = vld [vmem:[%s1 + $0xc20] sm:$0xff]
  %v544 = vld [vmem:[%s1 + $0xc28] sm:$0xff]
  %v545 = vld [vmem:[%s1 + $0xc30] sm:$0xff]
  %v546 = vld [vmem:[%s1 + $0xc38] sm:$0xff]
  %v547 = vld [vmem:[%s1 + $0xc40] sm:$0xff]
  %v548 = vld [vmem:[%s1 + $0xc48] sm:$0xff]
  %v549 = vld [vmem:[%s1 + $0xc50] sm:$0xff]
  %v550 = vld [vmem:[%s1 + $0xc58] sm:$0xff]
  %v551 = vld [vmem:[%s1 + $0xc60] sm:$0xff]
  %v552 = vld [vmem:[%s1 + $0xc68] sm:$0xff]
  %v553 = vld [vmem:[%s1 + $0xc70] sm:$0xff]
  %v554 = vld [vmem:[%s1 + $0xc78] sm:$0xff]
  %v555 = vld [vmem:[%s1 + $0xc80] sm:$0xff]
  %v556 = vld [vmem:[%s1 + $0xc88] sm:$0xff]
  %v557 = vld [vmem:[%s1 + $0xc90] sm:$0xff]
  %v558 = vld [vmem:[%s1 + $0xc98] sm:$0xff]
  %v559 = vld [vmem:[%s1 + $0xca0] sm:$0xff]
  %v560 = vld [vmem:[%s1 + $0xca8] sm:$0xff]
  %v561 = vld [vmem:[%s1 + $0xcb0] sm:$0xff]
  %v562 = vld [vmem:[%s1 + $0xcb8] sm:$0xff]
  %v563 = vld [vmem:[%s1 + $0xcc0] sm:$0xff]
  %v564 = vld [vmem:[%s1 + $0xcc8] sm:$0xff]
  %v565 = vld [vmem:[%s1 + $0xcd0] sm:$0xff]
  %v566 = vld [vmem:[%s1 + $0xcd8] sm:$0xff]
  %v567 = vld [vmem:[%s1 + $0xce0] sm:$0xff]
  %v568 = vld [vmem:[%s1 + $0xce8] sm:$0xff]
  %v569 = vld [vmem:[%s1 + $0xcf0] sm:$0xff]
  %v570 = vld [vmem:[%s1 + $0xcf8] sm:$0xff]
  %v571 = vld [vmem:[%s1 + $0xd00] sm:$0xff]
  %v572 = vld [vmem:[%s1 + $0xd08] sm:$0xff]
  %v573 = vld [vmem:[%s1 + $0xd10] sm:$0xff]
  %v574 = vld [vmem:[%s1 + $0xd18] sm:$0xff]
  %v575 = vld [vmem:[%s1 + $0xd20] sm:$0xff]
  %v576 = vld [vmem:[%s1 + $0xd28] sm:$0xff]
  %v577 = vld [vmem:[%s1 + $0xd30] sm:$0xff]
  %v578 = vld [vmem:[%s1 + $0xd38] sm:$0xff]
  %v579 = vld [vmem:[%s1 + $0xd40] sm:$0xff]
  %v580 = vld [vmem:[%s1 + $0xd48] sm:$0xff]
  %v581 = vld [vmem:[%s1 + $0xd50] sm:$0xff]
  %v582 = vld [vmem:[%s1 + $0xd58] sm:$0xff]
  %v583 = vld [vmem:[%s1 + $0xd60] sm:$0xff]
  %v584 = vld [vmem:[%s1 + $0xd68] sm:$0xff]
  %v585 = vld [vmem:[%s1 + $0xd70] sm:$0xff]
  %v586 = vld [vmem:[%s1 + $0xd78] sm:$0xff]
  %v587 = vld [vmem:[%s1 + $0xd80] sm:$0xff]
  %v588 = vld [vmem:[%s1 + $0xd88] sm:$0xff]
  %v589 = vld [vmem:[%s1 + $0xd90] sm:$0xff]
  %v590 = vld [vmem:[%s1 + $0xd98] sm:$0xff]
  %v591 = vld [vmem:[%s1 + $0xda0] sm:$0xff]
  %v592 = vld [vmem:[%s1 + $0xda8] sm:$0xff]
  %v593 = vld [vmem:[%s1 + $0xdb0] sm:$0xff]
  %v594 = vld [vmem:[%s1 + $0xdb8] sm:$0xff]
  %v595 = vld [vmem:[%s1 + $0xdc0] sm:$0xff]
  %v596 = vld [vmem:[%s1 + $0xdc8] sm:$0xff]
  %v597 = vld [vmem:[%s1 + $0xdd0] sm:$0xff]
  %v598 = vld [vmem:[%s1 + $0xdd8] sm:$0xff]
  %v599 = vld [vmem:[%s1 + $0xde0] sm:$0xff]
  %v600 = vld [vmem:[%s1 + $0xde8] sm:$0xff]
  %v601 = vld [vmem:[%s1 + $0xdf0] sm:$0xff]
  %v602 = vld [vmem:[%s1 + $0xdf8] sm:$0xff]
  %v603 = vld [vmem:[%s1 + $0xe00] sm:$0xff]
  %v604 = vld [vmem:[%s1 + $0xe08] sm:$0xff]
  %v605 = vld [vmem:[%s1 + $0xe10] sm:$0xff]
  %v606 = vld [vmem:[%s1 + $0xe18] sm:$0xff]
  %v607 = vld [vmem:[%s1 + $0xe20] sm:$0xff]
  %v608 = vld [vmem:[%s1 + $0xe28] sm:$0xff]
  %v609 = vld [vmem:[%s1 + $0xe30] sm:$0xff]
  %v610 = vld [vmem:[%s1 + $0xe38] sm:$0xff]
  %v611 = vld [vmem:[%s1 + $0xe40] sm:$0xff]
  %v612 = vld [vmem:[%s1 + $0xe48] sm:$0xff]
  %v613 = vld [vmem:[%s1 + $0xe50] sm:$0xff]
  %v614 = vld [vmem:[%s1 + $0xe58] sm:$0xff]
  %v615 = vld [vmem:[%s1 + $0xe60] sm:$0xff]
  %v616 = vld [vmem:[%s1 + $0xe68] sm:$0xff]
  %v617 = vld [vmem:[%s1 + $0xe70] sm:$0xff]
  %v618 = vld [vmem:[%s1 + $0xe78] sm:$0xff]
  %v619 = vld [vmem:[%s1 + $0xe80] sm:$0xff]
  %v620 = vld [vmem:[%s1 + $0xe88] sm:$0xff]
  %v621 = vld [vmem:[%s1 + $0xe90] sm:$0xff]
  %v622 = vld [vmem:[%s1 + $0xe98] sm:$0xff]
  %v623 = vld [vmem:[%s1 + $0xea0] sm:$0xff]
  %v624 = vld [vmem:[%s1 + $0xea8] sm:$0xff]
  %v625 = vld [vmem:[%s1 + $0xeb0] sm:$0xff]
  %v626 = vld [vmem:[%s1 + $0xeb8] sm:$0xff]
  %v627 = vld [vmem:[%s1 + $0xec0] sm:$0xff]
  %v628 = vld [vmem:[%s1 + $0xec8] sm:$0xff]
  %v629 = vld [vmem:[%s1 + $0xed0] sm:$0xff]
  %v630 = vld [vmem:[%s1 + $0xed8] sm:$0xff]
  %v631 = vld [vmem:[%s1 + $0xee0] sm:$0xff]
  %v632 = vld [vmem:[%s1 + $0xee8] sm:$0xff]
  %v633 = vld [vmem:[%s1 + $0xef0] sm:$0xff]
  %v634 = vld [vmem:[%s1 + $0xef8] sm:$0xff]
  %v635 = vld [vmem:[%s1 + $0xf00] sm:$0xff]
  %v636 = vld [vmem:[%s1 + $0xf08] sm:$0xff]
  %v637 = vld [vmem:[%s1 + $0xf10] sm:$0xff]
  %v638 = vld [vmem:[%s1 + $0xf18] sm:$0xff]
  %v639 = vld [vmem:[%s1 + $0xf20] sm:$0xff]
  %v640 = vld [vmem:[%s1 + $0xf28] sm:$0xff]
  %v641 = vld [vmem:[%s1 + $0xf30] sm:$0xff]
  %v642 = vld [vmem:[%s1 + $0xf38] sm:$0xff]
  %v643 = vld [vmem:[%s1 + $0xf40] sm:$0xff]
  %v644 = vld [vmem:[%s1 + $0xf48] sm:$0xff]
  %v645 = vld [vmem:[%s1 + $0xf50] sm:$0xff]
  %v646 = vld [vmem:[%s1 + $0xf58] sm:$0xff]
  %v647 = vld [vmem:[%s1 + $0xf60] sm:$0xff]
  %v648 = vld [vmem:[%s1 + $0xf68] sm:$0xff]
  %v649 = vld [vmem:[%s1 + $0xf70] sm:$0xff]
  %v650 = vld [vmem:[%s1 + $0xf78] sm:$0xff]
  %v651 = vld [vmem:[%s1 + $0xf80] sm:$0xff]
  %v652 = vld [vmem:[%s1 + $0xf88] sm:$0xff]
  %v653 = vld [vmem:[%s1 + $0xf90] sm:$0xff]
  %v654 = vld [vmem:[%s1 + $0xf98] sm:$0xff]
  %v655 = vld [vmem:[%s1 + $0xfa0] sm:$0xff]
  %v656 = vld [vmem:[%s1 + $0xfa8] sm:$0xff]
  %v657 = vld [vmem:[%s1 + $0xfb0] sm:$0xff]
  %v658 = vld [vmem:[%s1 + $0xfb8] sm:$0xff]
  %v659 = vld [vmem:[%s1 + $0xfc0] sm:$0xff]
  %v660 = vld [vmem:[%s1 + $0xfc8] sm:$0xff]
  %v661 = vld [vmem:[%s1 + $0xfd0] sm:$0xff]
  %v662 = vld [vmem:[%s1 + $0xfd8] sm:$0xff]
  %v663 = vld [vmem:[%s1 + $0xfe0] sm:$0xff]
  %v664 = vld [vmem:[%s1 + $0xfe8] sm:$0xff]
  %v665 = vld [vmem:[%s1 + $0xff0] sm:$0xff]
  %v666 = vld [vmem:[%s1 + $0xff8] sm:$0xff]
  %v667 = vld [vmem:[%s1 + $0x1000] sm:$0xff]
  %v668 = vld [vmem:[%s1 + $0x1008] sm:$0xff]
  %v669 = vld [vmem:[%s1 + $0x1010] sm:$0xff]
  %v670 = vld [vmem:[%s1 + $0x1018] sm:$0xff]
  %v671 = vld [vmem:[%s1 + $0x1020] sm:$0xff]
  %v672 = vld [vmem:[%s1 + $0x1028] sm:$0xff]
  %v673 = vld [vmem:[%s1 + $0x1030] sm:$0xff]
  %v674 = vld [vmem:[%s1 + $0x1038] sm:$0xff]
  %v675 = vld [vmem:[%s1 + $0x1040] sm:$0xff]
  %v676 = vld [vmem:[%s1 + $0x1048] sm:$0xff]
  %v677 = vld [vmem:[%s1 + $0x1050] sm:$0xff]
  %v678 = vld [vmem:[%s1 + $0x1058] sm:$0xff]
  %v679 = vld [vmem:[%s1 + $0x1060] sm:$0xff]
  %v680 = vld [vmem:[%s1 + $0x1068] sm:$0xff]
  %v681 = vld [vmem:[%s1 + $0x1070] sm:$0xff]
  %v682 = vld [vmem:[%s1 + $0x1078] sm:$0xff]
  %v683 = vld [vmem:[%s1 + $0x1080] sm:$0xff]
  %v684 = vld [vmem:[%s1 + $0x1088] sm:$0xff]
  %v685 = vld [vmem:[%s1 + $0x1090] sm:$0xff]
  %v686 = vld [vmem:[%s1 + $0x1098] sm:$0xff]
  %v687 = vld [vmem:[%s1 + $0x10a0] sm:$0xff]
  %v688 = vld [vmem:[%s1 + $0x10a8] sm:$0xff]
  %v689 = vld [vmem:[%s1 + $0x10b0] sm:$0xff]
  %v690 = vld [vmem:[%s1 + $0x10b8] sm:$0xff]
  %v691 = vld [vmem:[%s1 + $0x10c0] sm:$0xff]
  %v692 = vld [vmem:[%s1 + $0x10c8] sm:$0xff]
  %v693 = vld [vmem:[%s1 + $0x10d0] sm:$0xff]
  %v694 = vld [vmem:[%s1 + $0x10d8] sm:$0xff]
  %v695 = vld [vmem:[%s1 + $0x10e0] sm:$0xff]
  %v696 = vld [vmem:[%s1 + $0x10e8] sm:$0xff]
  %v697 = vld [vmem:[%s1 + $0x10f0] sm:$0xff]
  %v698 = vld [vmem:[%s1 + $0x10f8] sm:$0xff]
  %v699 = vld [vmem:[%s1 + $0x1100] sm:$0xff]
  %v700 = vld [vmem:[%s1 + $0x1108] sm:$0xff]
  %v701 = vld [vmem:[%s1 + $0x1110] sm:$0xff]
  %v702 = vld [vmem:[%s1 + $0x1118] sm:$0xff]
  %v703 = vld [vmem:[%s1 + $0x1120] sm:$0xff]
  %v704 = vld [vmem:[%s1 + $0x1128] sm:$0xff]
  %v705 = vld [vmem:[%s1 + $0x1130] sm:$0xff]
  %v706 = vld [vmem:[%s1 + $0x1138] sm:$0xff]
  %v707 = vld [vmem:[%s1 + $0x1140] sm:$0xff]
  %v708 = vld [vmem:[%s1 + $0x1148] sm:$0xff]
  %v709 = vld [vmem:[%s1 + $0x1150] sm:$0xff]
  %v710 = vld [vmem:[%s1 + $0x1158] sm:$0xff]
  %v711 = vld [vmem:[%s1 + $0x1160] sm:$0xff]
  %v712 = vld [vmem:[%s1 + $0x1168] sm:$0xff]
  %v713 = vld [vmem:[%s1 + $0x1170] sm:$0xff]
  %v714 = vld [vmem:[%s1 + $0x1178] sm:$0xff]
  %v715 = vld [vmem:[%s1 + $0x1180] sm:$0xff]
  %v716 = vld [vmem:[%s1 + $0x1188] sm:$0xff]
  %v717 = vld [vmem:[%s1 + $0x1190] sm:$0xff]
  %v718 = vld [vmem:[%s1 + $0x1198] sm:$0xff]
  %v719 = vld [vmem:[%s1 + $0x11a0] sm:$0xff]
  %v720 = vld [vmem:[%s1 + $0x11a8] sm:$0xff]
  %v721 = vld [vmem:[%s1 + $0x11b0] sm:$0xff]
  %v722 = vld [vmem:[%s1 + $0x11b8] sm:$0xff]
  %v723 = vld [vmem:[%s1 + $0x11c0] sm:$0xff]
  %v724 = vld [vmem:[%s1 + $0x11c8] sm:$0xff]
  %v725 = vld [vmem:[%s1 + $0x11d0] sm:$0xff]
  %v726 = vld [vmem:[%s1 + $0x11d8] sm:$0xff]
  %v727 = vld [vmem:[%s1 + $0x11e0] sm:$0xff]
  %v728 = vld [vmem:[%s1 + $0x11e8] sm:$0xff]
  %v729 = vld [vmem:[%s1 + $0x11f0] sm:$0xff]
  %v730 = vld [vmem:[%s1 + $0x11f8] sm:$0xff]
  %v731 = vld [vmem:[%s1 + $0x1200] sm:$0xff]
  %v732 = vld [vmem:[%s1 + $0x1208] sm:$0xff]
  %v733 = vld [vmem:[%s1 + $0x1210] sm:$0xff]
  %v734 = vld [vmem:[%s1 + $0x1218] sm:$0xff]
  %v735 = vld [vmem:[%s1 + $0x1220] sm:$0xff]
  %v736 = vld [vmem:[%s1 + $0x1228] sm:$0xff]
  %v737 = vld [vmem:[%s1 + $0x1230] sm:$0xff]
  %v738 = vld [vmem:[%s1 + $0x1238] sm:$0xff]
  %v739 = vld [vmem:[%s1 + $0x1240] sm:$0xff]
  %v740 = vld [vmem:[%s1 + $0x1248] sm:$0xff]
  %v741 = vld [vmem:[%s1 + $0x1250] sm:$0xff]
  %v742 = vld [vmem:[%s1 + $0x1258] sm:$0xff]
  %v743 = vld [vmem:[%s1 + $0x1260] sm:$0xff]
  %v744 = vld [vmem:[%s1 + $0x1268] sm:$0xff]
  %v745 = vld [vmem:[%s1 + $0x1270] sm:$0xff]
  %v746 = vld [vmem:[%s1 + $0x1278] sm:$0xff]
  %v747 = vld [vmem:[%s1 + $0x1280] sm:$0xff]
  %v748 = vld [vmem:[%s1 + $0x1288] sm:$0xff]
  %v749 = vld [vmem:[%s1 + $0x1290] sm:$0xff]
  %v750 = vld [vmem:[%s1 + $0x1298] sm:$0xff]
  %v751 = vld [vmem:[%s1 + $0x12a0] sm:$0xff]
  %v752 = vld [vmem:[%s1 + $0x12a8] sm:$0xff]
  %v753 = vld [vmem:[%s1 + $0x12b0] sm:$0xff]
  %v754 = vld [vmem:[%s1 + $0x12b8] sm:$0xff]
  %v755 = vld [vmem:[%s1 + $0x12c0] sm:$0xff]
  %v756 = vld [vmem:[%s1 + $0x12c8] sm:$0xff]
  %v757 = vld [vmem:[%s1 + $0x12d0] sm:$0xff]
  %v758 = vld [vmem:[%s1 + $0x12d8] sm:$0xff]
  %v759 = vld [vmem:[%s1 + $0x12e0] sm:$0xff]
  %v760 = vld [vmem:[%s1 + $0x12e8] sm:$0xff]
  %v761 = vld [vmem:[%s1 + $0x12f0] sm:$0xff]
  %v762 = vld [vmem:[%s1 + $0x12f8] sm:$0xff]
  %v763 = vld [vmem:[%s1 + $0x1300] sm:$0xff]
  %v764 = vld [vmem:[%s1 + $0x1308] sm:$0xff]
  %v765 = vld [vmem:[%s1 + $0x1310] sm:$0xff]
  %v766 = vld [vmem:[%s1 + $0x1318] sm:$0xff]
  %v767 = vld [vmem:[%s1 + $0x1320] sm:$0xff]
  %v768 = vld [vmem:[%s1 + $0x1328] sm:$0xff]
  %v769 = vld [vmem:[%s1 + $0x1330] sm:$0xff]
  %v770 = vld [vmem:[%s1 + $0x1338] sm:$0xff]
  %v771 = vld [vmem:[%s1 + $0x1340] sm:$0xff]
  %v772 = vld [vmem:[%s1 + $0x1348] sm:$0xff]
  %v773 = vld [vmem:[%s1 + $0x1350] sm:$0xff]
  %v774 = vld [vmem:[%s1 + $0x1358] sm:$0xff]
  %v775 = vld [vmem:[%s1 + $0x1360] sm:$0xff]
  %v776 = vld [vmem:[%s1 + $0x1368] sm:$0xff]
  %v777 = vld [vmem:[%s1 + $0x1370] sm:$0xff]
  %v778 = vld [vmem:[%s1 + $0x1378] sm:$0xff]
  %v779 = vld [vmem:[%s1 + $0x1380] sm:$0xff]
  %v780 = vld [vmem:[%s1 + $0x1388] sm:$0xff]
  %v781 = vld [vmem:[%s1 + $0x1390] sm:$0xff]
  %v782 = vld [vmem:[%s1 + $0x1398] sm:$0xff]
  %v783 = vld [vmem:[%s1 + $0x13a0] sm:$0xff]
  %v784 = vld [vmem:[%s1 + $0x13a8] sm:$0xff]
  %v785 = vld [vmem:[%s1 + $0x13b0] sm:$0xff]
  %v786 = vld [vmem:[%s1 + $0x13b8] sm:$0xff]
  %v787 = vld [vmem:[%s1 + $0x13c0] sm:$0xff]
  %v788 = vld [vmem:[%s1 + $0x13c8] sm:$0xff]
  %v789 = vld [vmem:[%s1 + $0x13d0] sm:$0xff]
  %v790 = vld [vmem:[%s1 + $0x13d8] sm:$0xff]
  %v791 = vld [vmem:[%s1 + $0x13e0] sm:$0xff]
  %v792 = vld [vmem:[%s1 + $0x13e8] sm:$0xff]
  %v793 = vld [vmem:[%s1 + $0x13f0] sm:$0xff]
  %v794 = vld [vmem:[%s1 + $0x13f8] sm:$0xff]
  %v795 = vld [vmem:[%s1 + $0x1400] sm:$0xff]
  %v796 = vld [vmem:[%s1 + $0x1408] sm:$0xff]
  %v797 = vld [vmem:[%s1 + $0x1410] sm:$0xff]
  %v798 = vld [vmem:[%s1 + $0x1418] sm:$0xff]
  %v799 = vld [vmem:[%s1 + $0x1420] sm:$0xff]
  %v800 = vld [vmem:[%s1 + $0x1428] sm:$0xff]
  %v801 = vld [vmem:[%s1 + $0x1430] sm:$0xff]
  %v802 = vld [vmem:[%s1 + $0x1438] sm:$0xff]
  %v803 = vld [vmem:[%s1 + $0x1440] sm:$0xff]
  %v804 = vld [vmem:[%s1 + $0x1448] sm:$0xff]
  %v805 = vld [vmem:[%s1 + $0x1450] sm:$0xff]
  %v806 = vld [vmem:[%s1 + $0x1458] sm:$0xff]
  %v807 = vld [vmem:[%s1 + $0x1460] sm:$0xff]
  %v808 = vld [vmem:[%s1 + $0x1468] sm:$0xff]
  %v809 = vld [vmem:[%s1 + $0x1470] sm:$0xff]
  %v810 = vld [vmem:[%s1 + $0x1478] sm:$0xff]
  %v811 = vld [vmem:[%s1 + $0x1480] sm:$0xff]
  %v812 = vld [vmem:[%s1 + $0x1488] sm:$0xff]
  %v813 = vld [vmem:[%s1 + $0x1490] sm:$0xff]
  %v814 = vld [vmem:[%s1 + $0x1498] sm:$0xff]
  %v815 = vld [vmem:[%s1 + $0x14a0] sm:$0xff]
  %v816 = vld [vmem:[%s1 + $0x14a8] sm:$0xff]
  %v817 = vld [vmem:[%s1 + $0x14b0] sm:$0xff]
  %v818 = vld [vmem:[%s1 + $0x14b8] sm:$0xff]
  %v819 = vld [vmem:[%s1 + $0x14c0] sm:$0xff]
  %v820 = vld [vmem:[%s1 + $0x14c8] sm:$0xff]
  %v821 = vld [vmem:[%s1 + $0x14d0] sm:$0xff]
  %v822 = vld [vmem:[%s1 + $0x14d8] sm:$0xff]
  %v823 = vld [vmem:[%s1 + $0x14e0] sm:$0xff]
  %v824 = vld [vmem:[%s1 + $0x14e8] sm:$0xff]
  %v825 = vld [vmem:[%s1 + $0x14f0] sm:$0xff]
  %v826 = vld [vmem:[%s1 + $0x14f8] sm:$0xff]
  %v827 = vld [vmem:[%s1 + $0x1500] sm:$0xff]
  %v828 = vld [vmem:[%s1 + $0x1508] sm:$0xff]
  %v829 = vld [vmem:[%s1 + $0x1510] sm:$0xff]
  %v830 = vld [vmem:[%s1 + $0x1518] sm:$0xff]
  %v831 = vld [vmem:[%s1 + $0x1520] sm:$0xff]
  %v832 = vld [vmem:[%s1 + $0x1528] sm:$0xff]
  %v833 = vld [vmem:[%s1 + $0x1530] sm:$0xff]
  %v834 = vld [vmem:[%s1 + $0x1538] sm:$0xff]
  %v835 = vld [vmem:[%s1 + $0x1540] sm:$0xff]
  %v836 = vld [vmem:[%s1 + $0x1548] sm:$0xff]
  %v837 = vld [vmem:[%s1 + $0x1550] sm:$0xff]
  %v838 = vld [vmem:[%s1 + $0x1558] sm:$0xff]
  %v839 = vld [vmem:[%s1 + $0x1560] sm:$0xff]
  %v840 = vld [vmem:[%s1 + $0x1568] sm:$0xff]
  %v841 = vld [vmem:[%s1 + $0x1570] sm:$0xff]
  %v842 = vld [vmem:[%s1 + $0x1578] sm:$0xff]
  %v843 = vld [vmem:[%s1 + $0x1580] sm:$0xff]
  %v844 = vld [vmem:[%s1 + $0x1588] sm:$0xff]
  %v845 = vld [vmem:[%s1 + $0x1590] sm:$0xff]
  %v846 = vld [vmem:[%s1 + $0x1598] sm:$0xff]
  %v847 = vld [vmem:[%s1 + $0x15a0] sm:$0xff]
  %v848 = vld [vmem:[%s1 + $0x15a8] sm:$0xff]
  %v849 = vld [vmem:[%s1 + $0x15b0] sm:$0xff]
  %v850 = vld [vmem:[%s1 + $0x15b8] sm:$0xff]
  %v851 = vld [vmem:[%s1 + $0x15c0] sm:$0xff]
  %v852 = vld [vmem:[%s1 + $0x15c8] sm:$0xff]
  %v853 = vld [vmem:[%s1 + $0x15d0] sm:$0xff]
  %v854 = vld [vmem:[%s1 + $0x15d8] sm:$0xff]
  %v855 = vld [vmem:[%s1 + $0x15e0] sm:$0xff]
  %v856 = vld [vmem:[%s1 + $0x15e8] sm:$0xff]
  %v857 = vld [vmem:[%s1 + $0x15f0] sm:$0xff]
  %v858 = vld [vmem:[%s1 + $0x15f8] sm:$0xff]
  %v859 = vld [vmem:[%s1 + $0x1600] sm:$0xff]
  %v860 = vld [vmem:[%s1 + $0x1608] sm:$0xff]
  %v861 = vld [vmem:[%s1 + $0x1610] sm:$0xff]
  %v862 = vld [vmem:[%s1 + $0x1618] sm:$0xff]
  %v863 = vld [vmem:[%s1 + $0x1620] sm:$0xff]
  %v864 = vld [vmem:[%s1 + $0x1628] sm:$0xff]
  %v865 = vld [vmem:[%s1 + $0x1630] sm:$0xff]
  %v866 = vld [vmem:[%s1 + $0x1638] sm:$0xff]
  %v867 = vld [vmem:[%s1 + $0x1640] sm:$0xff]
  %v868 = vld [vmem:[%s1 + $0x1648] sm:$0xff]
  %v869 = vld [vmem:[%s1 + $0x1650] sm:$0xff]
  %v870 = vld [vmem:[%s1 + $0x1658] sm:$0xff]
  %v871 = vld [vmem:[%s1 + $0x1660] sm:$0xff]
  %v872 = vld [vmem:[%s1 + $0x1668] sm:$0xff]
  %v873 = vld [vmem:[%s1 + $0x1670] sm:$0xff]
  %v874 = vld [vmem:[%s1 + $0x1678] sm:$0xff]
  %v875 = vld [vmem:[%s1 + $0x1680] sm:$0xff]
  %v876 = vld [vmem:[%s1 + $0x1688] sm:$0xff]
  %v877 = vld [vmem:[%s1 + $0x1690] sm:$0xff]
  %v878 = vld [vmem:[%s1 + $0x1698] sm:$0xff]
  %v879 = vld [vmem:[%s1 + $0x16a0] sm:$0xff]
  %v880 = vld [vmem:[%s1 + $0x16a8] sm:$0xff]
  %v881 = vld [vmem:[%s1 + $0x16b0] sm:$0xff]
  %v882 = vld [vmem:[%s1 + $0x16b8] sm:$0xff]
  %v883 = vld [vmem:[%s1 + $0x16c0] sm:$0xff]
  %v884 = vld [vmem:[%s1 + $0x16c8] sm:$0xff]
  %v885 = vld [vmem:[%s1 + $0x16d0] sm:$0xff]
  %v886 = vld [vmem:[%s1 + $0x16d8] sm:$0xff]
  %v887 = vld [vmem:[%s1 + $0x16e0] sm:$0xff]
  %v888 = vld [vmem:[%s1 + $0x16e8] sm:$0xff]
  %v889 = vld [vmem:[%s1 + $0x16f0] sm:$0xff]
  %v890 = vld [vmem:[%s1 + $0x16f8] sm:$0xff]
  %v891 = vld [vmem:[%s1 + $0x1700] sm:$0xff]
  %v892 = vld [vmem:[%s1 + $0x1708] sm:$0xff]
  %v893 = vld [vmem:[%s1 + $0x1710] sm:$0xff]
  %v894 = vld [vmem:[%s1 + $0x1718] sm:$0xff]
  %v895 = vld [vmem:[%s1 + $0x1720] sm:$0xff]
  %v896 = vld [vmem:[%s1 + $0x1728] sm:$0xff]
  %v897 = vld [vmem:[%s1 + $0x1730] sm:$0xff]
  %v898 = vld [vmem:[%s1 + $0x1738] sm:$0xff]
  %v899 = vld [vmem:[%s1 + $0x1740] sm:$0xff]
  %v900 = vld [vmem:[%s1 + $0x1748] sm:$0xff]
  %v901 = vld [vmem:[%s1 + $0x1750] sm:$0xff]
  %v902 = vld [vmem:[%s1 + $0x1758] sm:$0xff]
  %v903 = vld [vmem:[%s1 + $0x1760] sm:$0xff]
  %v904 = vld [vmem:[%s1 + $0x1768] sm:$0xff]
  %v905 = vld [vmem:[%s1 + $0x1770] sm:$0xff]
  %v906 = vld [vmem:[%s1 + $0x1778] sm:$0xff]
  %v907 = vld [vmem:[%s1 + $0x1780] sm:$0xff]
  %v908 = vld [vmem:[%s1 + $0x1788] sm:$0xff]
  %v909 = vld [vmem:[%s1 + $0x1790] sm:$0xff]
  %v910 = vld [vmem:[%s1 + $0x1798] sm:$0xff]
  %v911 = vld [vmem:[%s1 + $0x17a0] sm:$0xff]
  %v912 = vld [vmem:[%s1 + $0x17a8] sm:$0xff]
  %v913 = vld [vmem:[%s1 + $0x17b0] sm:$0xff]
  %v914 = vld [vmem:[%s1 + $0x17b8] sm:$0xff]
  %v915 = vld [vmem:[%s1 + $0x17c0] sm:$0xff]
  %v916 = vld [vmem:[%s1 + $0x17c8] sm:$0xff]
  %v917 = vld [vmem:[%s1 + $0x17d0] sm:$0xff]
  %v918 = vld [vmem:[%s1 + $0x17d8] sm:$0xff]
  %v919 = vld [vmem:[%s1 + $0x17e0] sm:$0xff]
  %v920 = vld [vmem:[%s1 + $0x17e8] sm:$0xff]
  %v921 = vld [vmem:[%s1 + $0x17f0] sm:$0xff]
  %v922 = vld [vmem:[%s1 + $0x17f8] sm:$0xff]
  %v923 = vld [vmem:[%s1 + $0x1800] sm:$0xff]
  %v924 = vld [vmem:[%s1 + $0x1808] sm:$0xff]
  %v925 = vld [vmem:[%s1 + $0x1810] sm:$0xff]
  %v926 = vld [vmem:[%s1 + $0x1818] sm:$0xff]
  %v927 = vld [vmem:[%s1 + $0x1820] sm:$0xff]
  %v928 = vld [vmem:[%s1 + $0x1828] sm:$0xff]
  %v929 = vld [vmem:[%s1 + $0x1830] sm:$0xff]
  %v930 = vld [vmem:[%s1 + $0x1838] sm:$0xff]
  %v931 = vld [vmem:[%s1 + $0x1840] sm:$0xff]
  %v932 = vld [vmem:[%s1 + $0x1848] sm:$0xff]
  %v933 = vld [vmem:[%s1 + $0x1850] sm:$0xff]
  %v934 = vld [vmem:[%s1 + $0x1858] sm:$0xff]
  %v935 = vld [vmem:[%s1 + $0x1860] sm:$0xff]
  %v936 = vld [vmem:[%s1 + $0x1868] sm:$0xff]
  %v937 = vld [vmem:[%s1 + $0x1870] sm:$0xff]
  %v938 = vld [vmem:[%s1 + $0x1878] sm:$0xff]
  %v939 = vld [vmem:[%s1 + $0x1880] sm:$0xff]
  %v940 = vld [vmem:[%s1 + $0x1888] sm:$0xff]
  %v941 = vld [vmem:[%s1 + $0x1890] sm:$0xff]
  %v942 = vld [vmem:[%s1 + $0x1898] sm:$0xff]
  %v943 = vld [vmem:[%s1 + $0x18a0] sm:$0xff]
  %v944 = vld [vmem:[%s1 + $0x18a8] sm:$0xff]
  %v945 = vld [vmem:[%s1 + $0x18b0] sm:$0xff]
  %v946 = vld [vmem:[%s1 + $0x18b8] sm:$0xff]
  %v947 = vld [vmem:[%s1 + $0x18c0] sm:$0xff]
  %v948 = vld [vmem:[%s1 + $0x18c8] sm:$0xff]
  %v949 = vld [vmem:[%s1 + $0x18d0] sm:$0xff]
  %v950 = vld [vmem:[%s1 + $0x18d8] sm:$0xff]
  %v951 = vld [vmem:[%s1 + $0x18e0] sm:$0xff]
  %v952 = vld [vmem:[%s1 + $0x18e8] sm:$0xff]
  %v953 = vld [vmem:[%s1 + $0x18f0] sm:$0xff]
  %v954 = vld [vmem:[%s1 + $0x18f8] sm:$0xff]
  %v955 = vld [vmem:[%s1 + $0x1900] sm:$0xff]
  %v956 = vld [vmem:[%s1 + $0x1908] sm:$0xff]
  %v957 = vld [vmem:[%s1 + $0x1910] sm:$0xff]
  %v958 = vld [vmem:[%s1 + $0x1918] sm:$0xff]
  %v959 = vld [vmem:[%s1 + $0x1920] sm:$0xff]
  %v960 = vld [vmem:[%s1 + $0x1928] sm:$0xff]
  %v961 = vld [vmem:[%s1 + $0x1930] sm:$0xff]
  %v962 = vld [vmem:[%s1 + $0x1938] sm:$0xff]
  %v963 = vld [vmem:[%s1 + $0x1940] sm:$0xff]
  %v964 = vld [vmem:[%s1 + $0x1948] sm:$0xff]
  %v965 = vld [vmem:[%s1 + $0x1950] sm:$0xff]
  %v966 = vld [vmem:[%s1 + $0x1958] sm:$0xff]
  %v967 = vld [vmem:[%s1 + $0x1960] sm:$0xff]
  %v968 = vld [vmem:[%s1 + $0x1968] sm:$0xff]
  %v969 = vld [vmem:[%s1 + $0x1970] sm:$0xff]
  %v970 = vld [vmem:[%s1 + $0x1978] sm:$0xff]
  %v971 = vld [vmem:[%s1 + $0x1980] sm:$0xff]
  %v972 = vld [vmem:[%s1 + $0x1988] sm:$0xff]
  %v973 = vld [vmem:[%s1 + $0x1990] sm:$0xff]
  %v974 = vld [vmem:[%s1 + $0x1998] sm:$0xff]
  %v975 = vld [vmem:[%s1 + $0x19a0] sm:$0xff]
  %v976 = vld [vmem:[%s1 + $0x19a8] sm:$0xff]
  %v977 = vld [vmem:[%s1 + $0x19b0] sm:$0xff]
  %v978 = vld [vmem:[%s1 + $0x19b8] sm:$0xff]
  %v979 = vld [vmem:[%s1 + $0x19c0] sm:$0xff]
  %v980 = vld [vmem:[%s1 + $0x19c8] sm:$0xff]
  %v981 = vld [vmem:[%s1 + $0x19d0] sm:$0xff]
  %v982 = vld [vmem:[%s1 + $0x19d8] sm:$0xff]
  %v983 = vld [vmem:[%s1 + $0x19e0] sm:$0xff]
  %v984 = vld [vmem:[%s1 + $0x19e8] sm:$0xff]
  %v985 = vld [vmem:[%s1 + $0x19f0] sm:$0xff]
  %v986 = vld [vmem:[%s1 + $0x19f8] sm:$0xff]
  %v987 = vld [vmem:[%s1 + $0x1a00] sm:$0xff]
  %v988 = vld [vmem:[%s1 + $0x1a08] sm:$0xff]
  %v989 = vld [vmem:[%s1 + $0x1a10] sm:$0xff]
  %v990 = vld [vmem:[%s1 + $0x1a18] sm:$0xff]
  %v991 = vld [vmem:[%s1 + $0x1a20] sm:$0xff]
  %v992 = vld [vmem:[%s1 + $0x1a28] sm:$0xff]
  %v993 = vld [vmem:[%s1 + $0x1a30] sm:$0xff]
  %v994 = vld [vmem:[%s1 + $0x1a38] sm:$0xff]
  %v995 = vld [vmem:[%s1 + $0x1a40] sm:$0xff]
  %v996 = vld [vmem:[%s1 + $0x1a48] sm:$0xff]
  %v997 = vld [vmem:[%s1 + $0x1a50] sm:$0xff]
  %v998 = vld [vmem:[%s1 + $0x1a58] sm:$0xff]
  %v999 = vld [vmem:[%s1 + $0x1a60] sm:$0xff]
  %v1000 = vld [vmem:[%s1 + $0x1a68] sm:$0xff]
  %v1001 = vld [vmem:[%s1 + $0x1a70] sm:$0xff]
  %v1002 = vld [vmem:[%s1 + $0x1a78] sm:$0xff]
  %v1003 = vld [vmem:[%s1 + $0x1a80] sm:$0xff]
  %v1004 = vld [vmem:[%s1 + $0x1a88] sm:$0xff]
  %v1005 = vld [vmem:[%s1 + $0x1a90] sm:$0xff]
  %v1006 = vld [vmem:[%s1 + $0x1a98] sm:$0xff]
  %v1007 = vld [vmem:[%s1 + $0x1aa0] sm:$0xff]
  %v1008 = vld [vmem:[%s1 + $0x1aa8] sm:$0xff]
  %v1009 = vld [vmem:[%s1 + $0x1ab0] sm:$0xff]
  %v1010 = vld [vmem:[%s1 + $0x1ab8] sm:$0xff]
  %v1011 = vld [vmem:[%s1 + $0x1ac0] sm:$0xff]
  %v1012 = vld [vmem:[%s1 + $0x1ac8] sm:$0xff]
  %v1013 = vld [vmem:[%s1 + $0x1ad0] sm:$0xff]
  %v1014 = vld [vmem:[%s1 + $0x1ad8] sm:$0xff]
  %v1015 = vld [vmem:[%s1 + $0x1ae0] sm:$0xff]
  %v1016 = vld [vmem:[%s1 + $0x1ae8] sm:$0xff]
  %v1017 = vld [vmem:[%s1 + $0x1af0] sm:$0xff]
  %v1018 = vld [vmem:[%s1 + $0x1af8] sm:$0xff]
  %v1019 = vld [vmem:[%s1 + $0x1b00] sm:$0xff]
  %v1020 = vld [vmem:[%s1 + $0x1b08] sm:$0xff]
  %v1021 = vld [vmem:[%s1 + $0x1b10] sm:$0xff]
  %v1022 = vld [vmem:[%s1 + $0x1b18] sm:$0xff]
  %v1023 = vld [vmem:[%s1 + $0x1b20] sm:$0xff]
  %v1024 = vld [vmem:[%s1 + $0x1b28] sm:$0xff]
  %v1025 = vld [vmem:[%s1 + $0x1b30] sm:$0xff]
  %v1026 = vld [vmem:[%s1 + $0x1b38] sm:$0xff]
  %v1027 = vld [vmem:[%s1 + $0x1b40] sm:$0xff]
  %v1028 = vld [vmem:[%s1 + $0x1b48] sm:$0xff]
  %v1029 = vld [vmem:[%s1 + $0x1b50] sm:$0xff]
  %v1030 = vld [vmem:[%s1 + $0x1b58] sm:$0xff]
  %v1031 = vld [vmem:[%s1 + $0x1b60] sm:$0xff]
  %v1032 = vld [vmem:[%s1 + $0x1b68] sm:$0xff]
  %v1033 = vld [vmem:[%s1 + $0x1b70] sm:$0xff]
  %v1034 = vld [vmem:[%s1 + $0x1b78] sm:$0xff]
  %v1035 = vld [vmem:[%s1 + $0x1b80] sm:$0xff]
  %v1036 = vld [vmem:[%s1 + $0x1b88] sm:$0xff]
  %v1037 = vld [vmem:[%s1 + $0x1b90] sm:$0xff]
  %v1038 = vld [vmem:[%s1 + $0x1b98] sm:$0xff]
  %v1039 = vld [vmem:[%s1 + $0x1ba0] sm:$0xff]
  %v1040 = vld [vmem:[%s1 + $0x1ba8] sm:$0xff]
  %v1041 = vld [vmem:[%s1 + $0x1bb0] sm:$0xff]
  %v1042 = vld [vmem:[%s1 + $0x1bb8] sm:$0xff]
  %v1043 = vld [vmem:[%s1 + $0x1bc0] sm:$0xff]
  %v1044 = vld [vmem:[%s1 + $0x1bc8] sm:$0xff]
  %v1045 = vld [vmem:[%s1 + $0x1bd0] sm:$0xff]
  %v1046 = vld [vmem:[%s1 + $0x1bd8] sm:$0xff]
  %v1047 = vld [vmem:[%s1 + $0x1be0] sm:$0xff]
  %v1048 = vld [vmem:[%s1 + $0x1be8] sm:$0xff]
  %v1049 = vld [vmem:[%s1 + $0x1bf0] sm:$0xff]
  %v1050 = vld [vmem:[%s1 + $0x1bf8] sm:$0xff]
  %v1051 = vld [vmem:[%s1 + $0x1c00] sm:$0xff]
  %v1052 = vld [vmem:[%s1 + $0x1c08] sm:$0xff]
  %v1053 = vld [vmem:[%s1 + $0x1c10] sm:$0xff]
  %v1054 = vld [vmem:[%s1 + $0x1c18] sm:$0xff]
  %v1055 = vld [vmem:[%s1 + $0x1c20] sm:$0xff]
  %v1056 = vld [vmem:[%s1 + $0x1c28] sm:$0xff]
  %v1057 = vld [vmem:[%s1 + $0x1c30] sm:$0xff]
  %v1058 = vld [vmem:[%s1 + $0x1c38] sm:$0xff]
  %v1059 = vld [vmem:[%s1 + $0x1c40] sm:$0xff]
  %v1060 = vld [vmem:[%s1 + $0x1c48] sm:$0xff]
  %v1061 = vld [vmem:[%s1 + $0x1c50] sm:$0xff]
  %v1062 = vld [vmem:[%s1 + $0x1c58] sm:$0xff]
  %v1063 = vld [vmem:[%s1 + $0x1c60] sm:$0xff]
  %v1064 = vld [vmem:[%s1 + $0x1c68] sm:$0xff]
  %v1065 = vld [vmem:[%s1 + $0x1c70] sm:$0xff]
  %v1066 = vld [vmem:[%s1 + $0x1c78] sm:$0xff]
  %v1067 = vld [vmem:[%s1 + $0x1c80] sm:$0xff]
  %v1068 = vld [vmem:[%s1 + $0x1c88] sm:$0xff]
  %v1069 = vld [vmem:[%s1 + $0x1c90] sm:$0xff]
  %v1070 = vld [vmem:[%s1 + $0x1c98] sm:$0xff]
  %v1071 = vld [vmem:[%s1 + $0x1ca0] sm:$0xff]
  %v1072 = vld [vmem:[%s1 + $0x1ca8] sm:$0xff]
  %v1073 = vld [vmem:[%s1 + $0x1cb0] sm:$0xff]
  %v1074 = vld [vmem:[%s1 + $0x1cb8] sm:$0xff]
  %v1075 = vld [vmem:[%s1 + $0x1cc0] sm:$0xff]
  %v1076 = vld [vmem:[%s1 + $0x1cc8] sm:$0xff]
  %v1077 = vld [vmem:[%s1 + $0x1cd0] sm:$0xff]
  %v1078 = vld [vmem:[%s1 + $0x1cd8] sm:$0xff]
  %v1079 = vld [vmem:[%s1 + $0x1ce0] sm:$0xff]
  %v1080 = vld [vmem:[%s1 + $0x1ce8] sm:$0xff]
  %v1081 = vld [vmem:[%s1 + $0x1cf0] sm:$0xff]
  %v1082 = vld [vmem:[%s1 + $0x1cf8] sm:$0xff]
  %v1083 = vld [vmem:[%s1 + $0x1d00] sm:$0xff]
  %v1084 = vld [vmem:[%s1 + $0x1d08] sm:$0xff]
  %v1085 = vld [vmem:[%s1 + $0x1d10] sm:$0xff]
  %v1086 = vld [vmem:[%s1 + $0x1d18] sm:$0xff]
  %v1087 = vld [vmem:[%s1 + $0x1d20] sm:$0xff]
  %v1088 = vld [vmem:[%s1 + $0x1d28] sm:$0xff]
  %v1089 = vld [vmem:[%s1 + $0x1d30] sm:$0xff]
  %v1090 = vld [vmem:[%s1 + $0x1d38] sm:$0xff]
  %v1091 = vld [vmem:[%s1 + $0x1d40] sm:$0xff]
  %v1092 = vld [vmem:[%s1 + $0x1d48] sm:$0xff]
  %v1093 = vld [vmem:[%s1 + $0x1d50] sm:$0xff]
  %v1094 = vld [vmem:[%s1 + $0x1d58] sm:$0xff]
  %v1095 = vld [vmem:[%s1 + $0x1d60] sm:$0xff]
  %v1096 = vld [vmem:[%s1 + $0x1d68] sm:$0xff]
  %v1097 = vld [vmem:[%s1 + $0x1d70] sm:$0xff]
  %v1098 = vld [vmem:[%s1 + $0x1d78] sm:$0xff]
  %v1099 = vld [vmem:[%s1 + $0x1d80] sm:$0xff]
  %v1100 = vld [vmem:[%s1 + $0x1d88] sm:$0xff]
  %v1101 = vld [vmem:[%s1 + $0x1d90] sm:$0xff]
  %v1102 = vld [vmem:[%s1 + $0x1d98] sm:$0xff]
  %v1103 = vld [vmem:[%s1 + $0x1da0] sm:$0xff]
  %v1104 = vld [vmem:[%s1 + $0x1da8] sm:$0xff]
  %v1105 = vld [vmem:[%s1 + $0x1db0] sm:$0xff]
  %v1106 = vld [vmem:[%s1 + $0x1db8] sm:$0xff]
  %v1107 = vld [vmem:[%s1 + $0x1dc0] sm:$0xff]
  %v1108 = vld [vmem:[%s1 + $0x1dc8] sm:$0xff]
  %v1109 = vld [vmem:[%s1 + $0x1dd0] sm:$0xff]
  %v1110 = vld [vmem:[%s1 + $0x1dd8] sm:$0xff]
  %v1111 = vld [vmem:[%s1 + $0x1de0] sm:$0xff]
  %v1112 = vld [vmem:[%s1 + $0x1de8] sm:$0xff]
  %v1113 = vld [vmem:[%s1 + $0x1df0] sm:$0xff]
  %v1114 = vld [vmem:[%s1 + $0x1df8] sm:$0xff]
  %v1115 = vld [vmem:[%s1 + $0x1e00] sm:$0xff]
  %v1116 = vld [vmem:[%s1 + $0x1e08] sm:$0xff]
  %v1117 = vld [vmem:[%s1 + $0x1e10] sm:$0xff]
  %v1118 = vld [vmem:[%s1 + $0x1e18] sm:$0xff]
  %v1119 = vld [vmem:[%s1 + $0x1e20] sm:$0xff]
  %v1120 = vld [vmem:[%s1 + $0x1e28] sm:$0xff]
  %v1121 = vld [vmem:[%s1 + $0x1e30] sm:$0xff]
  %v1122 = vld [vmem:[%s1 + $0x1e38] sm:$0xff]
  %v1123 = vld [vmem:[%s1 + $0x1e40] sm:$0xff]
  %v1124 = vld [vmem:[%s1 + $0x1e48] sm:$0xff]
  %v1125 = vld [vmem:[%s1 + $0x1e50] sm:$0xff]
  %v1126 = vld [vmem:[%s1 + $0x1e58] sm:$0xff]
  %v1127 = vld [vmem:[%s1 + $0x1e60] sm:$0xff]
  %v1128 = vld [vmem:[%s1 + $0x1e68] sm:$0xff]
  %v1129 = vld [vmem:[%s1 + $0x1e70] sm:$0xff]
  %v1130 = vld [vmem:[%s1 + $0x1e78] sm:$0xff]
  %v1131 = vld [vmem:[%s1 + $0x1e80] sm:$0xff]
  %v1132 = vld [vmem:[%s1 + $0x1e88] sm:$0xff]
  %v1133 = vld [vmem:[%s1 + $0x1e90] sm:$0xff]
  %v1134 = vld [vmem:[%s1 + $0x1e98] sm:$0xff]
  %v1135 = vld [vmem:[%s1 + $0x1ea0] sm:$0xff]
  %v1136 = vld [vmem:[%s1 + $0x1ea8] sm:$0xff]
  %v1137 = vld [vmem:[%s1 + $0x1eb0] sm:$0xff]
  %v1138 = vld [vmem:[%s1 + $0x1eb8] sm:$0xff]
  %v1139 = vld [vmem:[%s1 + $0x1ec0] sm:$0xff]
  %v1140 = vld [vmem:[%s1 + $0x1ec8] sm:$0xff]
  %v1141 = vld [vmem:[%s1 + $0x1ed0] sm:$0xff]
  %v1142 = vld [vmem:[%s1 + $0x1ed8] sm:$0xff]
  %v1143 = vld [vmem:[%s1 + $0x1ee0] sm:$0xff]
  %v1144 = vld [vmem:[%s1 + $0x1ee8] sm:$0xff]
  %v1145 = vld [vmem:[%s1 + $0x1ef0] sm:$0xff]
  %v1146 = vld [vmem:[%s1 + $0x1ef8] sm:$0xff]
  %v1147 = vld [vmem:[%s1 + $0x1f00] sm:$0xff]
  %v1148 = vld [vmem:[%s1 + $0x1f08] sm:$0xff]
  %v1149 = vld [vmem:[%s1 + $0x1f10] sm:$0xff]
  %v1150 = vld [vmem:[%s1 + $0x1f18] sm:$0xff]
  %v1151 = vld [vmem:[%s1 + $0x1f20] sm:$0xff]
  %v1152 = vld [vmem:[%s1 + $0x1f28] sm:$0xff]
  %v1153 = vld [vmem:[%s1 + $0x1f30] sm:$0xff]
  %v1154 = vld [vmem:[%s1 + $0x1f38] sm:$0xff]
  %v1155 = vld [vmem:[%s1 + $0x1f40] sm:$0xff]
  %v1156 = vld [vmem:[%s1 + $0x1f48] sm:$0xff]
  %v1157 = vld [vmem:[%s1 + $0x1f50] sm:$0xff]
  %v1158 = vld [vmem:[%s1 + $0x1f58] sm:$0xff]
  %v1159 = vld [vmem:[%s1 + $0x1f60] sm:$0xff]
  %v1160 = vld [vmem:[%s1 + $0x1f68] sm:$0xff]
  %v1161 = vld [vmem:[%s1 + $0x1f70] sm:$0xff]
  %v1162 = vld [vmem:[%s1 + $0x1f78] sm:$0xff]
  %v1163 = vld [vmem:[%s1 + $0x1f80] sm:$0xff]
  %v1164 = vld [vmem:[%s1 + $0x1f88] sm:$0xff]
  %v1165 = vld [vmem:[%s1 + $0x1f90] sm:$0xff]
  %v1166 = vld [vmem:[%s1 + $0x1f98] sm:$0xff]
  %v1167 = vld [vmem:[%s1 + $0x1fa0] sm:$0xff]
  %v1168 = vld [vmem:[%s1 + $0x1fa8] sm:$0xff]
  %v1169 = vld [vmem:[%s1 + $0x1fb0] sm:$0xff]
  %v1170 = vld [vmem:[%s1 + $0x1fb8] sm:$0xff]
  %v1171 = vld [vmem:[%s1 + $0x1fc0] sm:$0xff]
  %v1172 = vld [vmem:[%s1 + $0x1fc8] sm:$0xff]
  %v1173 = vld [vmem:[%s1 + $0x1fd0] sm:$0xff]
  %v1174 = vld [vmem:[%s1 + $0x1fd8] sm:$0xff]
  %v1175 = vld [vmem:[%s1 + $0x1fe0] sm:$0xff]
  %v1176 = vld [vmem:[%s1 + $0x1fe8] sm:$0xff]
  %v1177 = vld [vmem:[%s1 + $0x1ff0] sm:$0xff]
  %v1178 = vld [vmem:[%s1 + $0x1ff8] sm:$0xff]
  %v1179 = vld [vmem:[%s2] sm:$0xff]
  %v1181 = vlaneseq
  %v1182 = vshrl.u32 %v1181, 7
  %v1183 = vsub.s32 0, %v1182
  %v1184 = vrot.slane %v1179, %v1183
  %v1185 = vlaneseq
  %v1186 = vshrl.u32 %v1185, 7
  %v1187 = vsub.s32 1, %v1186
  %v1188 = vrot.slane %v1179, %v1187
  %v1189 = vlaneseq
  %v1190 = vshrl.u32 %v1189, 7
  %v1191 = vsub.s32 2, %v1190
  %v1192 = vrot.slane %v1179, %v1191
  %v1193 = vlaneseq
  %v1194 = vshrl.u32 %v1193, 7
  %v1195 = vsub.s32 3, %v1194
  %v1196 = vrot.slane %v1179, %v1195
  %v1197 = vlaneseq
  %v1198 = vshrl.u32 %v1197, 7
  %v1199 = vsub.s32 4, %v1198
  %v1200 = vrot.slane %v1179, %v1199
  %v1201 = vlaneseq
  %v1202 = vshrl.u32 %v1201, 7
  %v1203 = vsub.s32 5, %v1202
  %v1204 = vrot.slane %v1179, %v1203
  %v1205 = vlaneseq
  %v1206 = vshrl.u32 %v1205, 7
  %v1207 = vsub.s32 6, %v1206
  %v1208 = vrot.slane %v1179, %v1207
  %v1209 = vlaneseq
  %v1210 = vshrl.u32 %v1209, 7
  %v1211 = vsub.s32 7, %v1210
  %v1212 = vrot.slane %v1179, %v1211
  %v1349 = vunpack.c.l.b16 %v27
  %v1350 = vunpack.c.h.b16 %v27
  %v1351 = vunpack.c.l.b16 %v28
  %v1352 = vunpack.c.h.b16 %v28
  %v1353 = vunpack.c.l.b16 %v29
  %v1354 = vunpack.c.h.b16 %v29
  %v1355 = vunpack.c.l.b16 %v30
  %v1356 = vunpack.c.h.b16 %v30
  %v1357 = vunpack.c.l.b16 %v31
  %v1358 = vunpack.c.h.b16 %v31
  %v1359 = vunpack.c.l.b16 %v32
  %v1360 = vunpack.c.h.b16 %v32
  %v1361 = vunpack.c.l.b16 %v33
  %v1362 = vunpack.c.h.b16 %v33
  %v1363 = vunpack.c.l.b16 %v34
  %v1364 = vunpack.c.h.b16 %v34
  %v1365 = vunpack.c.l.b16 %v35
  %v1366 = vunpack.c.h.b16 %v35
  %v1367 = vunpack.c.l.b16 %v36
  %v1368 = vunpack.c.h.b16 %v36
  %v1369 = vunpack.c.l.b16 %v37
  %v1370 = vunpack.c.h.b16 %v37
  %v1371 = vunpack.c.l.b16 %v38
  %v1372 = vunpack.c.h.b16 %v38
  %v1373 = vunpack.c.l.b16 %v39
  %v1374 = vunpack.c.h.b16 %v39
  %v1375 = vunpack.c.l.b16 %v40
  %v1376 = vunpack.c.h.b16 %v40
  %v1377 = vunpack.c.l.b16 %v41
  %v1378 = vunpack.c.h.b16 %v41
  %v1379 = vunpack.c.l.b16 %v42
  %v1380 = vunpack.c.h.b16 %v42
  %v1381 = vunpack.c.l.b16 %v43
  %v1382 = vunpack.c.h.b16 %v43
  %v1383 = vunpack.c.l.b16 %v44
  %v1384 = vunpack.c.h.b16 %v44
  %v1385 = vunpack.c.l.b16 %v45
  %v1386 = vunpack.c.h.b16 %v45
  %v1387 = vunpack.c.l.b16 %v46
  %v1388 = vunpack.c.h.b16 %v46
  %v1389 = vunpack.c.l.b16 %v47
  %v1390 = vunpack.c.h.b16 %v47
  %v1391 = vunpack.c.l.b16 %v48
  %v1392 = vunpack.c.h.b16 %v48
  %v1393 = vunpack.c.l.b16 %v49
  %v1394 = vunpack.c.h.b16 %v49
  %v1395 = vunpack.c.l.b16 %v50
  %v1396 = vunpack.c.h.b16 %v50
  %v1397 = vunpack.c.l.b16 %v51
  %v1398 = vunpack.c.h.b16 %v51
  %v1399 = vunpack.c.l.b16 %v52
  %v1400 = vunpack.c.h.b16 %v52
  %v1401 = vunpack.c.l.b16 %v53
  %v1402 = vunpack.c.h.b16 %v53
  %v1403 = vunpack.c.l.b16 %v54
  %v1404 = vunpack.c.h.b16 %v54
  %v1405 = vunpack.c.l.b16 %v55
  %v1406 = vunpack.c.h.b16 %v55
  %v1407 = vunpack.c.l.b16 %v56
  %v1408 = vunpack.c.h.b16 %v56
  %v1409 = vunpack.c.l.b16 %v57
  %v1410 = vunpack.c.h.b16 %v57
  %v1411 = vunpack.c.l.b16 %v58
  %v1412 = vunpack.c.h.b16 %v58
  %v1413 = vunpack.c.l.b16 %v59
  %v1414 = vunpack.c.h.b16 %v59
  %v1415 = vunpack.c.l.b16 %v60
  %v1416 = vunpack.c.h.b16 %v60
  %v1417 = vunpack.c.l.b16 %v61
  %v1418 = vunpack.c.h.b16 %v61
  %v1419 = vunpack.c.l.b16 %v62
  %v1420 = vunpack.c.h.b16 %v62
  %v1421 = vunpack.c.l.b16 %v63
  %v1422 = vunpack.c.h.b16 %v63
  %v1423 = vunpack.c.l.b16 %v64
  %v1424 = vunpack.c.h.b16 %v64
  %v1425 = vunpack.c.l.b16 %v65
  %v1426 = vunpack.c.h.b16 %v65
  %v1427 = vunpack.c.l.b16 %v66
  %v1428 = vunpack.c.h.b16 %v66
  %v1429 = vunpack.c.l.b16 %v67
  %v1430 = vunpack.c.h.b16 %v67
  %v1431 = vunpack.c.l.b16 %v68
  %v1432 = vunpack.c.h.b16 %v68
  %v1433 = vunpack.c.l.b16 %v69
  %v1434 = vunpack.c.h.b16 %v69
  %v1435 = vunpack.c.l.b16 %v70
  %v1436 = vunpack.c.h.b16 %v70
  %v1437 = vunpack.c.l.b16 %v71
  %v1438 = vunpack.c.h.b16 %v71
  %v1439 = vunpack.c.l.b16 %v72
  %v1440 = vunpack.c.h.b16 %v72
  %v1441 = vunpack.c.l.b16 %v73
  %v1442 = vunpack.c.h.b16 %v73
  %v1443 = vunpack.c.l.b16 %v74
  %v1444 = vunpack.c.h.b16 %v74
  %v1445 = vunpack.c.l.b16 %v75
  %v1446 = vunpack.c.h.b16 %v75
  %v1447 = vunpack.c.l.b16 %v76
  %v1448 = vunpack.c.h.b16 %v76
  %v1449 = vunpack.c.l.b16 %v77
  %v1450 = vunpack.c.h.b16 %v77
  %v1451 = vunpack.c.l.b16 %v78
  %v1452 = vunpack.c.h.b16 %v78
  %v1453 = vunpack.c.l.b16 %v79
  %v1454 = vunpack.c.h.b16 %v79
  %v1455 = vunpack.c.l.b16 %v80
  %v1456 = vunpack.c.h.b16 %v80
  %v1457 = vunpack.c.l.b16 %v81
  %v1458 = vunpack.c.h.b16 %v81
  %v1459 = vunpack.c.l.b16 %v82
  %v1460 = vunpack.c.h.b16 %v82
  %v1461 = vunpack.c.l.b16 %v83
  %v1462 = vunpack.c.h.b16 %v83
  %v1463 = vunpack.c.l.b16 %v84
  %v1464 = vunpack.c.h.b16 %v84
  %v1465 = vunpack.c.l.b16 %v85
  %v1466 = vunpack.c.h.b16 %v85
  %v1467 = vunpack.c.l.b16 %v86
  %v1468 = vunpack.c.h.b16 %v86
  %v1469 = vunpack.c.l.b16 %v87
  %v1470 = vunpack.c.h.b16 %v87
  %v1471 = vunpack.c.l.b16 %v88
  %v1472 = vunpack.c.h.b16 %v88
  %v1473 = vunpack.c.l.b16 %v89
  %v1474 = vunpack.c.h.b16 %v89
  %v1475 = vunpack.c.l.b16 %v90
  %v1476 = vunpack.c.h.b16 %v90
  %v1477 = vunpack.c.l.b16 %v91
  %v1478 = vunpack.c.h.b16 %v91
  %v1479 = vunpack.c.l.b16 %v92
  %v1480 = vunpack.c.h.b16 %v92
  %v1481 = vunpack.c.l.b16 %v93
  %v1482 = vunpack.c.h.b16 %v93
  %v1483 = vunpack.c.l.b16 %v94
  %v1484 = vunpack.c.h.b16 %v94
  %v1485 = vunpack.c.l.b16 %v95
  %v1486 = vunpack.c.h.b16 %v95
  %v1487 = vunpack.c.l.b16 %v96
  %v1488 = vunpack.c.h.b16 %v96
  %v1489 = vunpack.c.l.b16 %v97
  %v1490 = vunpack.c.h.b16 %v97
  %v1491 = vunpack.c.l.b16 %v98
  %v1492 = vunpack.c.h.b16 %v98
  %v1493 = vunpack.c.l.b16 %v99
  %v1494 = vunpack.c.h.b16 %v99
  %v1495 = vunpack.c.l.b16 %v100
  %v1496 = vunpack.c.h.b16 %v100
  %v1497 = vunpack.c.l.b16 %v101
  %v1498 = vunpack.c.h.b16 %v101
  %v1499 = vunpack.c.l.b16 %v102
  %v1500 = vunpack.c.h.b16 %v102
  %v1501 = vunpack.c.l.b16 %v103
  %v1502 = vunpack.c.h.b16 %v103
  %v1503 = vunpack.c.l.b16 %v104
  %v1504 = vunpack.c.h.b16 %v104
  %v1505 = vunpack.c.l.b16 %v105
  %v1506 = vunpack.c.h.b16 %v105
  %v1507 = vunpack.c.l.b16 %v106
  %v1508 = vunpack.c.h.b16 %v106
  %v1509 = vunpack.c.l.b16 %v107
  %v1510 = vunpack.c.h.b16 %v107
  %v1511 = vunpack.c.l.b16 %v108
  %v1512 = vunpack.c.h.b16 %v108
  %v1513 = vunpack.c.l.b16 %v109
  %v1514 = vunpack.c.h.b16 %v109
  %v1515 = vunpack.c.l.b16 %v110
  %v1516 = vunpack.c.h.b16 %v110
  %v1517 = vunpack.c.l.b16 %v111
  %v1518 = vunpack.c.h.b16 %v111
  %v1519 = vunpack.c.l.b16 %v112
  %v1520 = vunpack.c.h.b16 %v112
  %v1521 = vunpack.c.l.b16 %v113
  %v1522 = vunpack.c.h.b16 %v113
  %v1523 = vunpack.c.l.b16 %v114
  %v1524 = vunpack.c.h.b16 %v114
  %v1525 = vunpack.c.l.b16 %v115
  %v1526 = vunpack.c.h.b16 %v115
  %v1527 = vunpack.c.l.b16 %v116
  %v1528 = vunpack.c.h.b16 %v116
  %v1529 = vunpack.c.l.b16 %v117
  %v1530 = vunpack.c.h.b16 %v117
  %v1531 = vunpack.c.l.b16 %v118
  %v1532 = vunpack.c.h.b16 %v118
  %v1533 = vunpack.c.l.b16 %v119
  %v1534 = vunpack.c.h.b16 %v119
  %v1535 = vunpack.c.l.b16 %v120
  %v1536 = vunpack.c.h.b16 %v120
  %v1537 = vunpack.c.l.b16 %v121
  %v1538 = vunpack.c.h.b16 %v121
  %v1539 = vunpack.c.l.b16 %v122
  %v1540 = vunpack.c.h.b16 %v122
  %v1541 = vunpack.c.l.b16 %v123
  %v1542 = vunpack.c.h.b16 %v123
  %v1543 = vunpack.c.l.b16 %v124
  %v1544 = vunpack.c.h.b16 %v124
  %v1545 = vunpack.c.l.b16 %v125
  %v1546 = vunpack.c.h.b16 %v125
  %v1547 = vunpack.c.l.b16 %v126
  %v1548 = vunpack.c.h.b16 %v126
  %v1549 = vunpack.c.l.b16 %v127
  %v1550 = vunpack.c.h.b16 %v127
  %v1551 = vunpack.c.l.b16 %v128
  %v1552 = vunpack.c.h.b16 %v128
  %v1553 = vunpack.c.l.b16 %v129
  %v1554 = vunpack.c.h.b16 %v129
  %v1555 = vunpack.c.l.b16 %v130
  %v1556 = vunpack.c.h.b16 %v130
  %v1557 = vunpack.c.l.b16 %v131
  %v1558 = vunpack.c.h.b16 %v131
  %v1559 = vunpack.c.l.b16 %v132
  %v1560 = vunpack.c.h.b16 %v132
  %v1561 = vunpack.c.l.b16 %v133
  %v1562 = vunpack.c.h.b16 %v133
  %v1563 = vunpack.c.l.b16 %v134
  %v1564 = vunpack.c.h.b16 %v134
  %v1565 = vunpack.c.l.b16 %v135
  %v1566 = vunpack.c.h.b16 %v135
  %v1567 = vunpack.c.l.b16 %v136
  %v1568 = vunpack.c.h.b16 %v136
  %v1569 = vunpack.c.l.b16 %v137
  %v1570 = vunpack.c.h.b16 %v137
  %v1571 = vunpack.c.l.b16 %v138
  %v1572 = vunpack.c.h.b16 %v138
  %v1573 = vunpack.c.l.b16 %v139
  %v1574 = vunpack.c.h.b16 %v139
  %v1575 = vunpack.c.l.b16 %v140
  %v1576 = vunpack.c.h.b16 %v140
  %v1577 = vunpack.c.l.b16 %v141
  %v1578 = vunpack.c.h.b16 %v141
  %v1579 = vunpack.c.l.b16 %v142
  %v1580 = vunpack.c.h.b16 %v142
  %v1581 = vunpack.c.l.b16 %v143
  %v1582 = vunpack.c.h.b16 %v143
  %v1583 = vunpack.c.l.b16 %v144
  %v1584 = vunpack.c.h.b16 %v144
  %v1585 = vunpack.c.l.b16 %v145
  %v1586 = vunpack.c.h.b16 %v145
  %v1587 = vunpack.c.l.b16 %v146
  %v1588 = vunpack.c.h.b16 %v146
  %v1589 = vunpack.c.l.b16 %v147
  %v1590 = vunpack.c.h.b16 %v147
  %v1591 = vunpack.c.l.b16 %v148
  %v1592 = vunpack.c.h.b16 %v148
  %v1593 = vunpack.c.l.b16 %v149
  %v1594 = vunpack.c.h.b16 %v149
  %v1595 = vunpack.c.l.b16 %v150
  %v1596 = vunpack.c.h.b16 %v150
  %v1597 = vunpack.c.l.b16 %v151
  %v1598 = vunpack.c.h.b16 %v151
  %v1599 = vunpack.c.l.b16 %v152
  %v1600 = vunpack.c.h.b16 %v152
  %v1601 = vunpack.c.l.b16 %v153
  %v1602 = vunpack.c.h.b16 %v153
  %v1603 = vunpack.c.l.b16 %v154
  %v1604 = vunpack.c.h.b16 %v154
  %v1605 = vpack.c.b16 %v1365, %v1349
  %v1606 = vpack.c.b16 %v1366, %v1350
  %v1607 = vpack.c.b16 %v1367, %v1351
  %v1608 = vpack.c.b16 %v1368, %v1352
  %v1609 = vpack.c.b16 %v1369, %v1353
  %v1610 = vpack.c.b16 %v1370, %v1354
  %v1611 = vpack.c.b16 %v1371, %v1355
  %v1612 = vpack.c.b16 %v1372, %v1356
  %v1613 = vpack.c.b16 %v1373, %v1357
  %v1614 = vpack.c.b16 %v1374, %v1358
  %v1615 = vpack.c.b16 %v1375, %v1359
  %v1616 = vpack.c.b16 %v1376, %v1360
  %v1617 = vpack.c.b16 %v1377, %v1361
  %v1618 = vpack.c.b16 %v1378, %v1362
  %v1619 = vpack.c.b16 %v1379, %v1363
  %v1620 = vpack.c.b16 %v1380, %v1364
  %v1621 = vpack.c.b16 %v1397, %v1381
  %v1622 = vpack.c.b16 %v1398, %v1382
  %v1623 = vpack.c.b16 %v1399, %v1383
  %v1624 = vpack.c.b16 %v1400, %v1384
  %v1625 = vpack.c.b16 %v1401, %v1385
  %v1626 = vpack.c.b16 %v1402, %v1386
  %v1627 = vpack.c.b16 %v1403, %v1387
  %v1628 = vpack.c.b16 %v1404, %v1388
  %v1629 = vpack.c.b16 %v1405, %v1389
  %v1630 = vpack.c.b16 %v1406, %v1390
  %v1631 = vpack.c.b16 %v1407, %v1391
  %v1632 = vpack.c.b16 %v1408, %v1392
  %v1633 = vpack.c.b16 %v1409, %v1393
  %v1634 = vpack.c.b16 %v1410, %v1394
  %v1635 = vpack.c.b16 %v1411, %v1395
  %v1636 = vpack.c.b16 %v1412, %v1396
  %v1637 = vpack.c.b16 %v1429, %v1413
  %v1638 = vpack.c.b16 %v1430, %v1414
  %v1639 = vpack.c.b16 %v1431, %v1415
  %v1640 = vpack.c.b16 %v1432, %v1416
  %v1641 = vpack.c.b16 %v1433, %v1417
  %v1642 = vpack.c.b16 %v1434, %v1418
  %v1643 = vpack.c.b16 %v1435, %v1419
  %v1644 = vpack.c.b16 %v1436, %v1420
  %v1645 = vpack.c.b16 %v1437, %v1421
  %v1646 = vpack.c.b16 %v1438, %v1422
  %v1647 = vpack.c.b16 %v1439, %v1423
  %v1648 = vpack.c.b16 %v1440, %v1424
  %v1649 = vpack.c.b16 %v1441, %v1425
  %v1650 = vpack.c.b16 %v1442, %v1426
  %v1651 = vpack.c.b16 %v1443, %v1427
  %v1652 = vpack.c.b16 %v1444, %v1428
  %v1653 = vpack.c.b16 %v1461, %v1445
  %v1654 = vpack.c.b16 %v1462, %v1446
  %v1655 = vpack.c.b16 %v1463, %v1447
  %v1656 = vpack.c.b16 %v1464, %v1448
  %v1657 = vpack.c.b16 %v1465, %v1449
  %v1658 = vpack.c.b16 %v1466, %v1450
  %v1659 = vpack.c.b16 %v1467, %v1451
  %v1660 = vpack.c.b16 %v1468, %v1452
  %v1661 = vpack.c.b16 %v1469, %v1453
  %v1662 = vpack.c.b16 %v1470, %v1454
  %v1663 = vpack.c.b16 %v1471, %v1455
  %v1664 = vpack.c.b16 %v1472, %v1456
  %v1665 = vpack.c.b16 %v1473, %v1457
  %v1666 = vpack.c.b16 %v1474, %v1458
  %v1667 = vpack.c.b16 %v1475, %v1459
  %v1668 = vpack.c.b16 %v1476, %v1460
  %v1669 = vpack.c.b16 %v1493, %v1477
  %v1670 = vpack.c.b16 %v1494, %v1478
  %v1671 = vpack.c.b16 %v1495, %v1479
  %v1672 = vpack.c.b16 %v1496, %v1480
  %v1673 = vpack.c.b16 %v1497, %v1481
  %v1674 = vpack.c.b16 %v1498, %v1482
  %v1675 = vpack.c.b16 %v1499, %v1483
  %v1676 = vpack.c.b16 %v1500, %v1484
  %v1677 = vpack.c.b16 %v1501, %v1485
  %v1678 = vpack.c.b16 %v1502, %v1486
  %v1679 = vpack.c.b16 %v1503, %v1487
  %v1680 = vpack.c.b16 %v1504, %v1488
  %v1681 = vpack.c.b16 %v1505, %v1489
  %v1682 = vpack.c.b16 %v1506, %v1490
  %v1683 = vpack.c.b16 %v1507, %v1491
  %v1684 = vpack.c.b16 %v1508, %v1492
  %v1685 = vpack.c.b16 %v1525, %v1509
  %v1686 = vpack.c.b16 %v1526, %v1510
  %v1687 = vpack.c.b16 %v1527, %v1511
  %v1688 = vpack.c.b16 %v1528, %v1512
  %v1689 = vpack.c.b16 %v1529, %v1513
  %v1690 = vpack.c.b16 %v1530, %v1514
  %v1691 = vpack.c.b16 %v1531, %v1515
  %v1692 = vpack.c.b16 %v1532, %v1516
  %v1693 = vpack.c.b16 %v1533, %v1517
  %v1694 = vpack.c.b16 %v1534, %v1518
  %v1695 = vpack.c.b16 %v1535, %v1519
  %v1696 = vpack.c.b16 %v1536, %v1520
  %v1697 = vpack.c.b16 %v1537, %v1521
  %v1698 = vpack.c.b16 %v1538, %v1522
  %v1699 = vpack.c.b16 %v1539, %v1523
  %v1700 = vpack.c.b16 %v1540, %v1524
  %v1701 = vpack.c.b16 %v1557, %v1541
  %v1702 = vpack.c.b16 %v1558, %v1542
  %v1703 = vpack.c.b16 %v1559, %v1543
  %v1704 = vpack.c.b16 %v1560, %v1544
  %v1705 = vpack.c.b16 %v1561, %v1545
  %v1706 = vpack.c.b16 %v1562, %v1546
  %v1707 = vpack.c.b16 %v1563, %v1547
  %v1708 = vpack.c.b16 %v1564, %v1548
  %v1709 = vpack.c.b16 %v1565, %v1549
  %v1710 = vpack.c.b16 %v1566, %v1550
  %v1711 = vpack.c.b16 %v1567, %v1551
  %v1712 = vpack.c.b16 %v1568, %v1552
  %v1713 = vpack.c.b16 %v1569, %v1553
  %v1714 = vpack.c.b16 %v1570, %v1554
  %v1715 = vpack.c.b16 %v1571, %v1555
  %v1716 = vpack.c.b16 %v1572, %v1556
  %v1717 = vpack.c.b16 %v1589, %v1573
  %v1718 = vpack.c.b16 %v1590, %v1574
  %v1719 = vpack.c.b16 %v1591, %v1575
  %v1720 = vpack.c.b16 %v1592, %v1576
  %v1721 = vpack.c.b16 %v1593, %v1577
  %v1722 = vpack.c.b16 %v1594, %v1578
  %v1723 = vpack.c.b16 %v1595, %v1579
  %v1724 = vpack.c.b16 %v1596, %v1580
  %v1725 = vpack.c.b16 %v1597, %v1581
  %v1726 = vpack.c.b16 %v1598, %v1582
  %v1727 = vpack.c.b16 %v1599, %v1583
  %v1728 = vpack.c.b16 %v1600, %v1584
  %v1729 = vpack.c.b16 %v1601, %v1585
  %v1730 = vpack.c.b16 %v1602, %v1586
  %v1731 = vpack.c.b16 %v1603, %v1587
  %v1732 = vpack.c.b16 %v1604, %v1588
  %v2885 = vunpack.c.l.b16 %v155
  %v2886 = vunpack.c.h.b16 %v155
  %v2887 = vunpack.c.l.b16 %v156
  %v2888 = vunpack.c.h.b16 %v156
  %v2889 = vunpack.c.l.b16 %v157
  %v2890 = vunpack.c.h.b16 %v157
  %v2891 = vunpack.c.l.b16 %v158
  %v2892 = vunpack.c.h.b16 %v158
  %v2893 = vunpack.c.l.b16 %v159
  %v2894 = vunpack.c.h.b16 %v159
  %v2895 = vunpack.c.l.b16 %v160
  %v2896 = vunpack.c.h.b16 %v160
  %v2897 = vunpack.c.l.b16 %v161
  %v2898 = vunpack.c.h.b16 %v161
  %v2899 = vunpack.c.l.b16 %v162
  %v2900 = vunpack.c.h.b16 %v162
  %v2901 = vunpack.c.l.b16 %v163
  %v2902 = vunpack.c.h.b16 %v163
  %v2903 = vunpack.c.l.b16 %v164
  %v2904 = vunpack.c.h.b16 %v164
  %v2905 = vunpack.c.l.b16 %v165
  %v2906 = vunpack.c.h.b16 %v165
  %v2907 = vunpack.c.l.b16 %v166
  %v2908 = vunpack.c.h.b16 %v166
  %v2909 = vunpack.c.l.b16 %v167
  %v2910 = vunpack.c.h.b16 %v167
  %v2911 = vunpack.c.l.b16 %v168
  %v2912 = vunpack.c.h.b16 %v168
  %v2913 = vunpack.c.l.b16 %v169
  %v2914 = vunpack.c.h.b16 %v169
  %v2915 = vunpack.c.l.b16 %v170
  %v2916 = vunpack.c.h.b16 %v170
  %v2917 = vunpack.c.l.b16 %v171
  %v2918 = vunpack.c.h.b16 %v171
  %v2919 = vunpack.c.l.b16 %v172
  %v2920 = vunpack.c.h.b16 %v172
  %v2921 = vunpack.c.l.b16 %v173
  %v2922 = vunpack.c.h.b16 %v173
  %v2923 = vunpack.c.l.b16 %v174
  %v2924 = vunpack.c.h.b16 %v174
  %v2925 = vunpack.c.l.b16 %v175
  %v2926 = vunpack.c.h.b16 %v175
  %v2927 = vunpack.c.l.b16 %v176
  %v2928 = vunpack.c.h.b16 %v176
  %v2929 = vunpack.c.l.b16 %v177
  %v2930 = vunpack.c.h.b16 %v177
  %v2931 = vunpack.c.l.b16 %v178
  %v2932 = vunpack.c.h.b16 %v178
  %v2933 = vunpack.c.l.b16 %v179
  %v2934 = vunpack.c.h.b16 %v179
  %v2935 = vunpack.c.l.b16 %v180
  %v2936 = vunpack.c.h.b16 %v180
  %v2937 = vunpack.c.l.b16 %v181
  %v2938 = vunpack.c.h.b16 %v181
  %v2939 = vunpack.c.l.b16 %v182
  %v2940 = vunpack.c.h.b16 %v182
  %v2941 = vunpack.c.l.b16 %v183
  %v2942 = vunpack.c.h.b16 %v183
  %v2943 = vunpack.c.l.b16 %v184
  %v2944 = vunpack.c.h.b16 %v184
  %v2945 = vunpack.c.l.b16 %v185
  %v2946 = vunpack.c.h.b16 %v185
  %v2947 = vunpack.c.l.b16 %v186
  %v2948 = vunpack.c.h.b16 %v186
  %v2949 = vunpack.c.l.b16 %v187
  %v2950 = vunpack.c.h.b16 %v187
  %v2951 = vunpack.c.l.b16 %v188
  %v2952 = vunpack.c.h.b16 %v188
  %v2953 = vunpack.c.l.b16 %v189
  %v2954 = vunpack.c.h.b16 %v189
  %v2955 = vunpack.c.l.b16 %v190
  %v2956 = vunpack.c.h.b16 %v190
  %v2957 = vunpack.c.l.b16 %v191
  %v2958 = vunpack.c.h.b16 %v191
  %v2959 = vunpack.c.l.b16 %v192
  %v2960 = vunpack.c.h.b16 %v192
  %v2961 = vunpack.c.l.b16 %v193
  %v2962 = vunpack.c.h.b16 %v193
  %v2963 = vunpack.c.l.b16 %v194
  %v2964 = vunpack.c.h.b16 %v194
  %v2965 = vunpack.c.l.b16 %v195
  %v2966 = vunpack.c.h.b16 %v195
  %v2967 = vunpack.c.l.b16 %v196
  %v2968 = vunpack.c.h.b16 %v196
  %v2969 = vunpack.c.l.b16 %v197
  %v2970 = vunpack.c.h.b16 %v197
  %v2971 = vunpack.c.l.b16 %v198
  %v2972 = vunpack.c.h.b16 %v198
  %v2973 = vunpack.c.l.b16 %v199
  %v2974 = vunpack.c.h.b16 %v199
  %v2975 = vunpack.c.l.b16 %v200
  %v2976 = vunpack.c.h.b16 %v200
  %v2977 = vunpack.c.l.b16 %v201
  %v2978 = vunpack.c.h.b16 %v201
  %v2979 = vunpack.c.l.b16 %v202
  %v2980 = vunpack.c.h.b16 %v202
  %v2981 = vunpack.c.l.b16 %v203
  %v2982 = vunpack.c.h.b16 %v203
  %v2983 = vunpack.c.l.b16 %v204
  %v2984 = vunpack.c.h.b16 %v204
  %v2985 = vunpack.c.l.b16 %v205
  %v2986 = vunpack.c.h.b16 %v205
  %v2987 = vunpack.c.l.b16 %v206
  %v2988 = vunpack.c.h.b16 %v206
  %v2989 = vunpack.c.l.b16 %v207
  %v2990 = vunpack.c.h.b16 %v207
  %v2991 = vunpack.c.l.b16 %v208
  %v2992 = vunpack.c.h.b16 %v208
  %v2993 = vunpack.c.l.b16 %v209
  %v2994 = vunpack.c.h.b16 %v209
  %v2995 = vunpack.c.l.b16 %v210
  %v2996 = vunpack.c.h.b16 %v210
  %v2997 = vunpack.c.l.b16 %v211
  %v2998 = vunpack.c.h.b16 %v211
  %v2999 = vunpack.c.l.b16 %v212
  %v3000 = vunpack.c.h.b16 %v212
  %v3001 = vunpack.c.l.b16 %v213
  %v3002 = vunpack.c.h.b16 %v213
  %v3003 = vunpack.c.l.b16 %v214
  %v3004 = vunpack.c.h.b16 %v214
  %v3005 = vunpack.c.l.b16 %v215
  %v3006 = vunpack.c.h.b16 %v215
  %v3007 = vunpack.c.l.b16 %v216
  %v3008 = vunpack.c.h.b16 %v216
  %v3009 = vunpack.c.l.b16 %v217
  %v3010 = vunpack.c.h.b16 %v217
  %v3011 = vunpack.c.l.b16 %v218
  %v3012 = vunpack.c.h.b16 %v218
  %v3013 = vunpack.c.l.b16 %v219
  %v3014 = vunpack.c.h.b16 %v219
  %v3015 = vunpack.c.l.b16 %v220
  %v3016 = vunpack.c.h.b16 %v220
  %v3017 = vunpack.c.l.b16 %v221
  %v3018 = vunpack.c.h.b16 %v221
  %v3019 = vunpack.c.l.b16 %v222
  %v3020 = vunpack.c.h.b16 %v222
  %v3021 = vunpack.c.l.b16 %v223
  %v3022 = vunpack.c.h.b16 %v223
  %v3023 = vunpack.c.l.b16 %v224
  %v3024 = vunpack.c.h.b16 %v224
  %v3025 = vunpack.c.l.b16 %v225
  %v3026 = vunpack.c.h.b16 %v225
  %v3027 = vunpack.c.l.b16 %v226
  %v3028 = vunpack.c.h.b16 %v226
  %v3029 = vunpack.c.l.b16 %v227
  %v3030 = vunpack.c.h.b16 %v227
  %v3031 = vunpack.c.l.b16 %v228
  %v3032 = vunpack.c.h.b16 %v228
  %v3033 = vunpack.c.l.b16 %v229
  %v3034 = vunpack.c.h.b16 %v229
  %v3035 = vunpack.c.l.b16 %v230
  %v3036 = vunpack.c.h.b16 %v230
  %v3037 = vunpack.c.l.b16 %v231
  %v3038 = vunpack.c.h.b16 %v231
  %v3039 = vunpack.c.l.b16 %v232
  %v3040 = vunpack.c.h.b16 %v232
  %v3041 = vunpack.c.l.b16 %v233
  %v3042 = vunpack.c.h.b16 %v233
  %v3043 = vunpack.c.l.b16 %v234
  %v3044 = vunpack.c.h.b16 %v234
  %v3045 = vunpack.c.l.b16 %v235
  %v3046 = vunpack.c.h.b16 %v235
  %v3047 = vunpack.c.l.b16 %v236
  %v3048 = vunpack.c.h.b16 %v236
  %v3049 = vunpack.c.l.b16 %v237
  %v3050 = vunpack.c.h.b16 %v237
  %v3051 = vunpack.c.l.b16 %v238
  %v3052 = vunpack.c.h.b16 %v238
  %v3053 = vunpack.c.l.b16 %v239
  %v3054 = vunpack.c.h.b16 %v239
  %v3055 = vunpack.c.l.b16 %v240
  %v3056 = vunpack.c.h.b16 %v240
  %v3057 = vunpack.c.l.b16 %v241
  %v3058 = vunpack.c.h.b16 %v241
  %v3059 = vunpack.c.l.b16 %v242
  %v3060 = vunpack.c.h.b16 %v242
  %v3061 = vunpack.c.l.b16 %v243
  %v3062 = vunpack.c.h.b16 %v243
  %v3063 = vunpack.c.l.b16 %v244
  %v3064 = vunpack.c.h.b16 %v244
  %v3065 = vunpack.c.l.b16 %v245
  %v3066 = vunpack.c.h.b16 %v245
  %v3067 = vunpack.c.l.b16 %v246
  %v3068 = vunpack.c.h.b16 %v246
  %v3069 = vunpack.c.l.b16 %v247
  %v3070 = vunpack.c.h.b16 %v247
  %v3071 = vunpack.c.l.b16 %v248
  %v3072 = vunpack.c.h.b16 %v248
  %v3073 = vunpack.c.l.b16 %v249
  %v3074 = vunpack.c.h.b16 %v249
  %v3075 = vunpack.c.l.b16 %v250
  %v3076 = vunpack.c.h.b16 %v250
  %v3077 = vunpack.c.l.b16 %v251
  %v3078 = vunpack.c.h.b16 %v251
  %v3079 = vunpack.c.l.b16 %v252
  %v3080 = vunpack.c.h.b16 %v252
  %v3081 = vunpack.c.l.b16 %v253
  %v3082 = vunpack.c.h.b16 %v253
  %v3083 = vunpack.c.l.b16 %v254
  %v3084 = vunpack.c.h.b16 %v254
  %v3085 = vunpack.c.l.b16 %v255
  %v3086 = vunpack.c.h.b16 %v255
  %v3087 = vunpack.c.l.b16 %v256
  %v3088 = vunpack.c.h.b16 %v256
  %v3089 = vunpack.c.l.b16 %v257
  %v3090 = vunpack.c.h.b16 %v257
  %v3091 = vunpack.c.l.b16 %v258
  %v3092 = vunpack.c.h.b16 %v258
  %v3093 = vunpack.c.l.b16 %v259
  %v3094 = vunpack.c.h.b16 %v259
  %v3095 = vunpack.c.l.b16 %v260
  %v3096 = vunpack.c.h.b16 %v260
  %v3097 = vunpack.c.l.b16 %v261
  %v3098 = vunpack.c.h.b16 %v261
  %v3099 = vunpack.c.l.b16 %v262
  %v3100 = vunpack.c.h.b16 %v262
  %v3101 = vunpack.c.l.b16 %v263
  %v3102 = vunpack.c.h.b16 %v263
  %v3103 = vunpack.c.l.b16 %v264
  %v3104 = vunpack.c.h.b16 %v264
  %v3105 = vunpack.c.l.b16 %v265
  %v3106 = vunpack.c.h.b16 %v265
  %v3107 = vunpack.c.l.b16 %v266
  %v3108 = vunpack.c.h.b16 %v266
  %v3109 = vunpack.c.l.b16 %v267
  %v3110 = vunpack.c.h.b16 %v267
  %v3111 = vunpack.c.l.b16 %v268
  %v3112 = vunpack.c.h.b16 %v268
  %v3113 = vunpack.c.l.b16 %v269
  %v3114 = vunpack.c.h.b16 %v269
  %v3115 = vunpack.c.l.b16 %v270
  %v3116 = vunpack.c.h.b16 %v270
  %v3117 = vunpack.c.l.b16 %v271
  %v3118 = vunpack.c.h.b16 %v271
  %v3119 = vunpack.c.l.b16 %v272
  %v3120 = vunpack.c.h.b16 %v272
  %v3121 = vunpack.c.l.b16 %v273
  %v3122 = vunpack.c.h.b16 %v273
  %v3123 = vunpack.c.l.b16 %v274
  %v3124 = vunpack.c.h.b16 %v274
  %v3125 = vunpack.c.l.b16 %v275
  %v3126 = vunpack.c.h.b16 %v275
  %v3127 = vunpack.c.l.b16 %v276
  %v3128 = vunpack.c.h.b16 %v276
  %v3129 = vunpack.c.l.b16 %v277
  %v3130 = vunpack.c.h.b16 %v277
  %v3131 = vunpack.c.l.b16 %v278
  %v3132 = vunpack.c.h.b16 %v278
  %v3133 = vunpack.c.l.b16 %v279
  %v3134 = vunpack.c.h.b16 %v279
  %v3135 = vunpack.c.l.b16 %v280
  %v3136 = vunpack.c.h.b16 %v280
  %v3137 = vunpack.c.l.b16 %v281
  %v3138 = vunpack.c.h.b16 %v281
  %v3139 = vunpack.c.l.b16 %v282
  %v3140 = vunpack.c.h.b16 %v282
  %v3141 = vunpack.c.l.b16 %v283
  %v3142 = vunpack.c.h.b16 %v283
  %v3143 = vunpack.c.l.b16 %v284
  %v3144 = vunpack.c.h.b16 %v284
  %v3145 = vunpack.c.l.b16 %v285
  %v3146 = vunpack.c.h.b16 %v285
  %v3147 = vunpack.c.l.b16 %v286
  %v3148 = vunpack.c.h.b16 %v286
  %v3149 = vunpack.c.l.b16 %v287
  %v3150 = vunpack.c.h.b16 %v287
  %v3151 = vunpack.c.l.b16 %v288
  %v3152 = vunpack.c.h.b16 %v288
  %v3153 = vunpack.c.l.b16 %v289
  %v3154 = vunpack.c.h.b16 %v289
  %v3155 = vunpack.c.l.b16 %v290
  %v3156 = vunpack.c.h.b16 %v290
  %v3157 = vunpack.c.l.b16 %v291
  %v3158 = vunpack.c.h.b16 %v291
  %v3159 = vunpack.c.l.b16 %v292
  %v3160 = vunpack.c.h.b16 %v292
  %v3161 = vunpack.c.l.b16 %v293
  %v3162 = vunpack.c.h.b16 %v293
  %v3163 = vunpack.c.l.b16 %v294
  %v3164 = vunpack.c.h.b16 %v294
  %v3165 = vunpack.c.l.b16 %v295
  %v3166 = vunpack.c.h.b16 %v295
  %v3167 = vunpack.c.l.b16 %v296
  %v3168 = vunpack.c.h.b16 %v296
  %v3169 = vunpack.c.l.b16 %v297
  %v3170 = vunpack.c.h.b16 %v297
  %v3171 = vunpack.c.l.b16 %v298
  %v3172 = vunpack.c.h.b16 %v298
  %v3173 = vunpack.c.l.b16 %v299
  %v3174 = vunpack.c.h.b16 %v299
  %v3175 = vunpack.c.l.b16 %v300
  %v3176 = vunpack.c.h.b16 %v300
  %v3177 = vunpack.c.l.b16 %v301
  %v3178 = vunpack.c.h.b16 %v301
  %v3179 = vunpack.c.l.b16 %v302
  %v3180 = vunpack.c.h.b16 %v302
  %v3181 = vunpack.c.l.b16 %v303
  %v3182 = vunpack.c.h.b16 %v303
  %v3183 = vunpack.c.l.b16 %v304
  %v3184 = vunpack.c.h.b16 %v304
  %v3185 = vunpack.c.l.b16 %v305
  %v3186 = vunpack.c.h.b16 %v305
  %v3187 = vunpack.c.l.b16 %v306
  %v3188 = vunpack.c.h.b16 %v306
  %v3189 = vunpack.c.l.b16 %v307
  %v3190 = vunpack.c.h.b16 %v307
  %v3191 = vunpack.c.l.b16 %v308
  %v3192 = vunpack.c.h.b16 %v308
  %v3193 = vunpack.c.l.b16 %v309
  %v3194 = vunpack.c.h.b16 %v309
  %v3195 = vunpack.c.l.b16 %v310
  %v3196 = vunpack.c.h.b16 %v310
  %v3197 = vunpack.c.l.b16 %v311
  %v3198 = vunpack.c.h.b16 %v311
  %v3199 = vunpack.c.l.b16 %v312
  %v3200 = vunpack.c.h.b16 %v312
  %v3201 = vunpack.c.l.b16 %v313
  %v3202 = vunpack.c.h.b16 %v313
  %v3203 = vunpack.c.l.b16 %v314
  %v3204 = vunpack.c.h.b16 %v314
  %v3205 = vunpack.c.l.b16 %v315
  %v3206 = vunpack.c.h.b16 %v315
  %v3207 = vunpack.c.l.b16 %v316
  %v3208 = vunpack.c.h.b16 %v316
  %v3209 = vunpack.c.l.b16 %v317
  %v3210 = vunpack.c.h.b16 %v317
  %v3211 = vunpack.c.l.b16 %v318
  %v3212 = vunpack.c.h.b16 %v318
  %v3213 = vunpack.c.l.b16 %v319
  %v3214 = vunpack.c.h.b16 %v319
  %v3215 = vunpack.c.l.b16 %v320
  %v3216 = vunpack.c.h.b16 %v320
  %v3217 = vunpack.c.l.b16 %v321
  %v3218 = vunpack.c.h.b16 %v321
  %v3219 = vunpack.c.l.b16 %v322
  %v3220 = vunpack.c.h.b16 %v322
  %v3221 = vunpack.c.l.b16 %v323
  %v3222 = vunpack.c.h.b16 %v323
  %v3223 = vunpack.c.l.b16 %v324
  %v3224 = vunpack.c.h.b16 %v324
  %v3225 = vunpack.c.l.b16 %v325
  %v3226 = vunpack.c.h.b16 %v325
  %v3227 = vunpack.c.l.b16 %v326
  %v3228 = vunpack.c.h.b16 %v326
  %v3229 = vunpack.c.l.b16 %v327
  %v3230 = vunpack.c.h.b16 %v327
  %v3231 = vunpack.c.l.b16 %v328
  %v3232 = vunpack.c.h.b16 %v328
  %v3233 = vunpack.c.l.b16 %v329
  %v3234 = vunpack.c.h.b16 %v329
  %v3235 = vunpack.c.l.b16 %v330
  %v3236 = vunpack.c.h.b16 %v330
  %v3237 = vunpack.c.l.b16 %v331
  %v3238 = vunpack.c.h.b16 %v331
  %v3239 = vunpack.c.l.b16 %v332
  %v3240 = vunpack.c.h.b16 %v332
  %v3241 = vunpack.c.l.b16 %v333
  %v3242 = vunpack.c.h.b16 %v333
  %v3243 = vunpack.c.l.b16 %v334
  %v3244 = vunpack.c.h.b16 %v334
  %v3245 = vunpack.c.l.b16 %v335
  %v3246 = vunpack.c.h.b16 %v335
  %v3247 = vunpack.c.l.b16 %v336
  %v3248 = vunpack.c.h.b16 %v336
  %v3249 = vunpack.c.l.b16 %v337
  %v3250 = vunpack.c.h.b16 %v337
  %v3251 = vunpack.c.l.b16 %v338
  %v3252 = vunpack.c.h.b16 %v338
  %v3253 = vunpack.c.l.b16 %v339
  %v3254 = vunpack.c.h.b16 %v339
  %v3255 = vunpack.c.l.b16 %v340
  %v3256 = vunpack.c.h.b16 %v340
  %v3257 = vunpack.c.l.b16 %v341
  %v3258 = vunpack.c.h.b16 %v341
  %v3259 = vunpack.c.l.b16 %v342
  %v3260 = vunpack.c.h.b16 %v342
  %v3261 = vunpack.c.l.b16 %v343
  %v3262 = vunpack.c.h.b16 %v343
  %v3263 = vunpack.c.l.b16 %v344
  %v3264 = vunpack.c.h.b16 %v344
  %v3265 = vunpack.c.l.b16 %v345
  %v3266 = vunpack.c.h.b16 %v345
  %v3267 = vunpack.c.l.b16 %v346
  %v3268 = vunpack.c.h.b16 %v346
  %v3269 = vunpack.c.l.b16 %v347
  %v3270 = vunpack.c.h.b16 %v347
  %v3271 = vunpack.c.l.b16 %v348
  %v3272 = vunpack.c.h.b16 %v348
  %v3273 = vunpack.c.l.b16 %v349
  %v3274 = vunpack.c.h.b16 %v349
  %v3275 = vunpack.c.l.b16 %v350
  %v3276 = vunpack.c.h.b16 %v350
  %v3277 = vunpack.c.l.b16 %v351
  %v3278 = vunpack.c.h.b16 %v351
  %v3279 = vunpack.c.l.b16 %v352
  %v3280 = vunpack.c.h.b16 %v352
  %v3281 = vunpack.c.l.b16 %v353
  %v3282 = vunpack.c.h.b16 %v353
  %v3283 = vunpack.c.l.b16 %v354
  %v3284 = vunpack.c.h.b16 %v354
  %v3285 = vunpack.c.l.b16 %v355
  %v3286 = vunpack.c.h.b16 %v355
  %v3287 = vunpack.c.l.b16 %v356
  %v3288 = vunpack.c.h.b16 %v356
  %v3289 = vunpack.c.l.b16 %v357
  %v3290 = vunpack.c.h.b16 %v357
  %v3291 = vunpack.c.l.b16 %v358
  %v3292 = vunpack.c.h.b16 %v358
  %v3293 = vunpack.c.l.b16 %v359
  %v3294 = vunpack.c.h.b16 %v359
  %v3295 = vunpack.c.l.b16 %v360
  %v3296 = vunpack.c.h.b16 %v360
  %v3297 = vunpack.c.l.b16 %v361
  %v3298 = vunpack.c.h.b16 %v361
  %v3299 = vunpack.c.l.b16 %v362
  %v3300 = vunpack.c.h.b16 %v362
  %v3301 = vunpack.c.l.b16 %v363
  %v3302 = vunpack.c.h.b16 %v363
  %v3303 = vunpack.c.l.b16 %v364
  %v3304 = vunpack.c.h.b16 %v364
  %v3305 = vunpack.c.l.b16 %v365
  %v3306 = vunpack.c.h.b16 %v365
  %v3307 = vunpack.c.l.b16 %v366
  %v3308 = vunpack.c.h.b16 %v366
  %v3309 = vunpack.c.l.b16 %v367
  %v3310 = vunpack.c.h.b16 %v367
  %v3311 = vunpack.c.l.b16 %v368
  %v3312 = vunpack.c.h.b16 %v368
  %v3313 = vunpack.c.l.b16 %v369
  %v3314 = vunpack.c.h.b16 %v369
  %v3315 = vunpack.c.l.b16 %v370
  %v3316 = vunpack.c.h.b16 %v370
  %v3317 = vunpack.c.l.b16 %v371
  %v3318 = vunpack.c.h.b16 %v371
  %v3319 = vunpack.c.l.b16 %v372
  %v3320 = vunpack.c.h.b16 %v372
  %v3321 = vunpack.c.l.b16 %v373
  %v3322 = vunpack.c.h.b16 %v373
  %v3323 = vunpack.c.l.b16 %v374
  %v3324 = vunpack.c.h.b16 %v374
  %v3325 = vunpack.c.l.b16 %v375
  %v3326 = vunpack.c.h.b16 %v375
  %v3327 = vunpack.c.l.b16 %v376
  %v3328 = vunpack.c.h.b16 %v376
  %v3329 = vunpack.c.l.b16 %v377
  %v3330 = vunpack.c.h.b16 %v377
  %v3331 = vunpack.c.l.b16 %v378
  %v3332 = vunpack.c.h.b16 %v378
  %v3333 = vunpack.c.l.b16 %v379
  %v3334 = vunpack.c.h.b16 %v379
  %v3335 = vunpack.c.l.b16 %v380
  %v3336 = vunpack.c.h.b16 %v380
  %v3337 = vunpack.c.l.b16 %v381
  %v3338 = vunpack.c.h.b16 %v381
  %v3339 = vunpack.c.l.b16 %v382
  %v3340 = vunpack.c.h.b16 %v382
  %v3341 = vunpack.c.l.b16 %v383
  %v3342 = vunpack.c.h.b16 %v383
  %v3343 = vunpack.c.l.b16 %v384
  %v3344 = vunpack.c.h.b16 %v384
  %v3345 = vunpack.c.l.b16 %v385
  %v3346 = vunpack.c.h.b16 %v385
  %v3347 = vunpack.c.l.b16 %v386
  %v3348 = vunpack.c.h.b16 %v386
  %v3349 = vunpack.c.l.b16 %v387
  %v3350 = vunpack.c.h.b16 %v387
  %v3351 = vunpack.c.l.b16 %v388
  %v3352 = vunpack.c.h.b16 %v388
  %v3353 = vunpack.c.l.b16 %v389
  %v3354 = vunpack.c.h.b16 %v389
  %v3355 = vunpack.c.l.b16 %v390
  %v3356 = vunpack.c.h.b16 %v390
  %v3357 = vunpack.c.l.b16 %v391
  %v3358 = vunpack.c.h.b16 %v391
  %v3359 = vunpack.c.l.b16 %v392
  %v3360 = vunpack.c.h.b16 %v392
  %v3361 = vunpack.c.l.b16 %v393
  %v3362 = vunpack.c.h.b16 %v393
  %v3363 = vunpack.c.l.b16 %v394
  %v3364 = vunpack.c.h.b16 %v394
  %v3365 = vunpack.c.l.b16 %v395
  %v3366 = vunpack.c.h.b16 %v395
  %v3367 = vunpack.c.l.b16 %v396
  %v3368 = vunpack.c.h.b16 %v396
  %v3369 = vunpack.c.l.b16 %v397
  %v3370 = vunpack.c.h.b16 %v397
  %v3371 = vunpack.c.l.b16 %v398
  %v3372 = vunpack.c.h.b16 %v398
  %v3373 = vunpack.c.l.b16 %v399
  %v3374 = vunpack.c.h.b16 %v399
  %v3375 = vunpack.c.l.b16 %v400
  %v3376 = vunpack.c.h.b16 %v400
  %v3377 = vunpack.c.l.b16 %v401
  %v3378 = vunpack.c.h.b16 %v401
  %v3379 = vunpack.c.l.b16 %v402
  %v3380 = vunpack.c.h.b16 %v402
  %v3381 = vunpack.c.l.b16 %v403
  %v3382 = vunpack.c.h.b16 %v403
  %v3383 = vunpack.c.l.b16 %v404
  %v3384 = vunpack.c.h.b16 %v404
  %v3385 = vunpack.c.l.b16 %v405
  %v3386 = vunpack.c.h.b16 %v405
  %v3387 = vunpack.c.l.b16 %v406
  %v3388 = vunpack.c.h.b16 %v406
  %v3389 = vunpack.c.l.b16 %v407
  %v3390 = vunpack.c.h.b16 %v407
  %v3391 = vunpack.c.l.b16 %v408
  %v3392 = vunpack.c.h.b16 %v408
  %v3393 = vunpack.c.l.b16 %v409
  %v3394 = vunpack.c.h.b16 %v409
  %v3395 = vunpack.c.l.b16 %v410
  %v3396 = vunpack.c.h.b16 %v410
  %v3397 = vunpack.c.l.b16 %v411
  %v3398 = vunpack.c.h.b16 %v411
  %v3399 = vunpack.c.l.b16 %v412
  %v3400 = vunpack.c.h.b16 %v412
  %v3401 = vunpack.c.l.b16 %v413
  %v3402 = vunpack.c.h.b16 %v413
  %v3403 = vunpack.c.l.b16 %v414
  %v3404 = vunpack.c.h.b16 %v414
  %v3405 = vunpack.c.l.b16 %v415
  %v3406 = vunpack.c.h.b16 %v415
  %v3407 = vunpack.c.l.b16 %v416
  %v3408 = vunpack.c.h.b16 %v416
  %v3409 = vunpack.c.l.b16 %v417
  %v3410 = vunpack.c.h.b16 %v417
  %v3411 = vunpack.c.l.b16 %v418
  %v3412 = vunpack.c.h.b16 %v418
  %v3413 = vunpack.c.l.b16 %v419
  %v3414 = vunpack.c.h.b16 %v419
  %v3415 = vunpack.c.l.b16 %v420
  %v3416 = vunpack.c.h.b16 %v420
  %v3417 = vunpack.c.l.b16 %v421
  %v3418 = vunpack.c.h.b16 %v421
  %v3419 = vunpack.c.l.b16 %v422
  %v3420 = vunpack.c.h.b16 %v422
  %v3421 = vunpack.c.l.b16 %v423
  %v3422 = vunpack.c.h.b16 %v423
  %v3423 = vunpack.c.l.b16 %v424
  %v3424 = vunpack.c.h.b16 %v424
  %v3425 = vunpack.c.l.b16 %v425
  %v3426 = vunpack.c.h.b16 %v425
  %v3427 = vunpack.c.l.b16 %v426
  %v3428 = vunpack.c.h.b16 %v426
  %v3429 = vunpack.c.l.b16 %v427
  %v3430 = vunpack.c.h.b16 %v427
  %v3431 = vunpack.c.l.b16 %v428
  %v3432 = vunpack.c.h.b16 %v428
  %v3433 = vunpack.c.l.b16 %v429
  %v3434 = vunpack.c.h.b16 %v429
  %v3435 = vunpack.c.l.b16 %v430
  %v3436 = vunpack.c.h.b16 %v430
  %v3437 = vunpack.c.l.b16 %v431
  %v3438 = vunpack.c.h.b16 %v431
  %v3439 = vunpack.c.l.b16 %v432
  %v3440 = vunpack.c.h.b16 %v432
  %v3441 = vunpack.c.l.b16 %v433
  %v3442 = vunpack.c.h.b16 %v433
  %v3443 = vunpack.c.l.b16 %v434
  %v3444 = vunpack.c.h.b16 %v434
  %v3445 = vunpack.c.l.b16 %v435
  %v3446 = vunpack.c.h.b16 %v435
  %v3447 = vunpack.c.l.b16 %v436
  %v3448 = vunpack.c.h.b16 %v436
  %v3449 = vunpack.c.l.b16 %v437
  %v3450 = vunpack.c.h.b16 %v437
  %v3451 = vunpack.c.l.b16 %v438
  %v3452 = vunpack.c.h.b16 %v438
  %v3453 = vunpack.c.l.b16 %v439
  %v3454 = vunpack.c.h.b16 %v439
  %v3455 = vunpack.c.l.b16 %v440
  %v3456 = vunpack.c.h.b16 %v440
  %v3457 = vunpack.c.l.b16 %v441
  %v3458 = vunpack.c.h.b16 %v441
  %v3459 = vunpack.c.l.b16 %v442
  %v3460 = vunpack.c.h.b16 %v442
  %v3461 = vunpack.c.l.b16 %v443
  %v3462 = vunpack.c.h.b16 %v443
  %v3463 = vunpack.c.l.b16 %v444
  %v3464 = vunpack.c.h.b16 %v444
  %v3465 = vunpack.c.l.b16 %v445
  %v3466 = vunpack.c.h.b16 %v445
  %v3467 = vunpack.c.l.b16 %v446
  %v3468 = vunpack.c.h.b16 %v446
  %v3469 = vunpack.c.l.b16 %v447
  %v3470 = vunpack.c.h.b16 %v447
  %v3471 = vunpack.c.l.b16 %v448
  %v3472 = vunpack.c.h.b16 %v448
  %v3473 = vunpack.c.l.b16 %v449
  %v3474 = vunpack.c.h.b16 %v449
  %v3475 = vunpack.c.l.b16 %v450
  %v3476 = vunpack.c.h.b16 %v450
  %v3477 = vunpack.c.l.b16 %v451
  %v3478 = vunpack.c.h.b16 %v451
  %v3479 = vunpack.c.l.b16 %v452
  %v3480 = vunpack.c.h.b16 %v452
  %v3481 = vunpack.c.l.b16 %v453
  %v3482 = vunpack.c.h.b16 %v453
  %v3483 = vunpack.c.l.b16 %v454
  %v3484 = vunpack.c.h.b16 %v454
  %v3485 = vunpack.c.l.b16 %v455
  %v3486 = vunpack.c.h.b16 %v455
  %v3487 = vunpack.c.l.b16 %v456
  %v3488 = vunpack.c.h.b16 %v456
  %v3489 = vunpack.c.l.b16 %v457
  %v3490 = vunpack.c.h.b16 %v457
  %v3491 = vunpack.c.l.b16 %v458
  %v3492 = vunpack.c.h.b16 %v458
  %v3493 = vunpack.c.l.b16 %v459
  %v3494 = vunpack.c.h.b16 %v459
  %v3495 = vunpack.c.l.b16 %v460
  %v3496 = vunpack.c.h.b16 %v460
  %v3497 = vunpack.c.l.b16 %v461
  %v3498 = vunpack.c.h.b16 %v461
  %v3499 = vunpack.c.l.b16 %v462
  %v3500 = vunpack.c.h.b16 %v462
  %v3501 = vunpack.c.l.b16 %v463
  %v3502 = vunpack.c.h.b16 %v463
  %v3503 = vunpack.c.l.b16 %v464
  %v3504 = vunpack.c.h.b16 %v464
  %v3505 = vunpack.c.l.b16 %v465
  %v3506 = vunpack.c.h.b16 %v465
  %v3507 = vunpack.c.l.b16 %v466
  %v3508 = vunpack.c.h.b16 %v466
  %v3509 = vunpack.c.l.b16 %v467
  %v3510 = vunpack.c.h.b16 %v467
  %v3511 = vunpack.c.l.b16 %v468
  %v3512 = vunpack.c.h.b16 %v468
  %v3513 = vunpack.c.l.b16 %v469
  %v3514 = vunpack.c.h.b16 %v469
  %v3515 = vunpack.c.l.b16 %v470
  %v3516 = vunpack.c.h.b16 %v470
  %v3517 = vunpack.c.l.b16 %v471
  %v3518 = vunpack.c.h.b16 %v471
  %v3519 = vunpack.c.l.b16 %v472
  %v3520 = vunpack.c.h.b16 %v472
  %v3521 = vunpack.c.l.b16 %v473
  %v3522 = vunpack.c.h.b16 %v473
  %v3523 = vunpack.c.l.b16 %v474
  %v3524 = vunpack.c.h.b16 %v474
  %v3525 = vunpack.c.l.b16 %v475
  %v3526 = vunpack.c.h.b16 %v475
  %v3527 = vunpack.c.l.b16 %v476
  %v3528 = vunpack.c.h.b16 %v476
  %v3529 = vunpack.c.l.b16 %v477
  %v3530 = vunpack.c.h.b16 %v477
  %v3531 = vunpack.c.l.b16 %v478
  %v3532 = vunpack.c.h.b16 %v478
  %v3533 = vunpack.c.l.b16 %v479
  %v3534 = vunpack.c.h.b16 %v479
  %v3535 = vunpack.c.l.b16 %v480
  %v3536 = vunpack.c.h.b16 %v480
  %v3537 = vunpack.c.l.b16 %v481
  %v3538 = vunpack.c.h.b16 %v481
  %v3539 = vunpack.c.l.b16 %v482
  %v3540 = vunpack.c.h.b16 %v482
  %v3541 = vunpack.c.l.b16 %v483
  %v3542 = vunpack.c.h.b16 %v483
  %v3543 = vunpack.c.l.b16 %v484
  %v3544 = vunpack.c.h.b16 %v484
  %v3545 = vunpack.c.l.b16 %v485
  %v3546 = vunpack.c.h.b16 %v485
  %v3547 = vunpack.c.l.b16 %v486
  %v3548 = vunpack.c.h.b16 %v486
  %v3549 = vunpack.c.l.b16 %v487
  %v3550 = vunpack.c.h.b16 %v487
  %v3551 = vunpack.c.l.b16 %v488
  %v3552 = vunpack.c.h.b16 %v488
  %v3553 = vunpack.c.l.b16 %v489
  %v3554 = vunpack.c.h.b16 %v489
  %v3555 = vunpack.c.l.b16 %v490
  %v3556 = vunpack.c.h.b16 %v490
  %v3557 = vunpack.c.l.b16 %v491
  %v3558 = vunpack.c.h.b16 %v491
  %v3559 = vunpack.c.l.b16 %v492
  %v3560 = vunpack.c.h.b16 %v492
  %v3561 = vunpack.c.l.b16 %v493
  %v3562 = vunpack.c.h.b16 %v493
  %v3563 = vunpack.c.l.b16 %v494
  %v3564 = vunpack.c.h.b16 %v494
  %v3565 = vunpack.c.l.b16 %v495
  %v3566 = vunpack.c.h.b16 %v495
  %v3567 = vunpack.c.l.b16 %v496
  %v3568 = vunpack.c.h.b16 %v496
  %v3569 = vunpack.c.l.b16 %v497
  %v3570 = vunpack.c.h.b16 %v497
  %v3571 = vunpack.c.l.b16 %v498
  %v3572 = vunpack.c.h.b16 %v498
  %v3573 = vunpack.c.l.b16 %v499
  %v3574 = vunpack.c.h.b16 %v499
  %v3575 = vunpack.c.l.b16 %v500
  %v3576 = vunpack.c.h.b16 %v500
  %v3577 = vunpack.c.l.b16 %v501
  %v3578 = vunpack.c.h.b16 %v501
  %v3579 = vunpack.c.l.b16 %v502
  %v3580 = vunpack.c.h.b16 %v502
  %v3581 = vunpack.c.l.b16 %v503
  %v3582 = vunpack.c.h.b16 %v503
  %v3583 = vunpack.c.l.b16 %v504
  %v3584 = vunpack.c.h.b16 %v504
  %v3585 = vunpack.c.l.b16 %v505
  %v3586 = vunpack.c.h.b16 %v505
  %v3587 = vunpack.c.l.b16 %v506
  %v3588 = vunpack.c.h.b16 %v506
  %v3589 = vunpack.c.l.b16 %v507
  %v3590 = vunpack.c.h.b16 %v507
  %v3591 = vunpack.c.l.b16 %v508
  %v3592 = vunpack.c.h.b16 %v508
  %v3593 = vunpack.c.l.b16 %v509
  %v3594 = vunpack.c.h.b16 %v509
  %v3595 = vunpack.c.l.b16 %v510
  %v3596 = vunpack.c.h.b16 %v510
  %v3597 = vunpack.c.l.b16 %v511
  %v3598 = vunpack.c.h.b16 %v511
  %v3599 = vunpack.c.l.b16 %v512
  %v3600 = vunpack.c.h.b16 %v512
  %v3601 = vunpack.c.l.b16 %v513
  %v3602 = vunpack.c.h.b16 %v513
  %v3603 = vunpack.c.l.b16 %v514
  %v3604 = vunpack.c.h.b16 %v514
  %v3605 = vunpack.c.l.b16 %v515
  %v3606 = vunpack.c.h.b16 %v515
  %v3607 = vunpack.c.l.b16 %v516
  %v3608 = vunpack.c.h.b16 %v516
  %v3609 = vunpack.c.l.b16 %v517
  %v3610 = vunpack.c.h.b16 %v517
  %v3611 = vunpack.c.l.b16 %v518
  %v3612 = vunpack.c.h.b16 %v518
  %v3613 = vunpack.c.l.b16 %v519
  %v3614 = vunpack.c.h.b16 %v519
  %v3615 = vunpack.c.l.b16 %v520
  %v3616 = vunpack.c.h.b16 %v520
  %v3617 = vunpack.c.l.b16 %v521
  %v3618 = vunpack.c.h.b16 %v521
  %v3619 = vunpack.c.l.b16 %v522
  %v3620 = vunpack.c.h.b16 %v522
  %v3621 = vunpack.c.l.b16 %v523
  %v3622 = vunpack.c.h.b16 %v523
  %v3623 = vunpack.c.l.b16 %v524
  %v3624 = vunpack.c.h.b16 %v524
  %v3625 = vunpack.c.l.b16 %v525
  %v3626 = vunpack.c.h.b16 %v525
  %v3627 = vunpack.c.l.b16 %v526
  %v3628 = vunpack.c.h.b16 %v526
  %v3629 = vunpack.c.l.b16 %v527
  %v3630 = vunpack.c.h.b16 %v527
  %v3631 = vunpack.c.l.b16 %v528
  %v3632 = vunpack.c.h.b16 %v528
  %v3633 = vunpack.c.l.b16 %v529
  %v3634 = vunpack.c.h.b16 %v529
  %v3635 = vunpack.c.l.b16 %v530
  %v3636 = vunpack.c.h.b16 %v530
  %v3637 = vunpack.c.l.b16 %v531
  %v3638 = vunpack.c.h.b16 %v531
  %v3639 = vunpack.c.l.b16 %v532
  %v3640 = vunpack.c.h.b16 %v532
  %v3641 = vunpack.c.l.b16 %v533
  %v3642 = vunpack.c.h.b16 %v533
  %v3643 = vunpack.c.l.b16 %v534
  %v3644 = vunpack.c.h.b16 %v534
  %v3645 = vunpack.c.l.b16 %v535
  %v3646 = vunpack.c.h.b16 %v535
  %v3647 = vunpack.c.l.b16 %v536
  %v3648 = vunpack.c.h.b16 %v536
  %v3649 = vunpack.c.l.b16 %v537
  %v3650 = vunpack.c.h.b16 %v537
  %v3651 = vunpack.c.l.b16 %v538
  %v3652 = vunpack.c.h.b16 %v538
  %v3653 = vunpack.c.l.b16 %v539
  %v3654 = vunpack.c.h.b16 %v539
  %v3655 = vunpack.c.l.b16 %v540
  %v3656 = vunpack.c.h.b16 %v540
  %v3657 = vunpack.c.l.b16 %v541
  %v3658 = vunpack.c.h.b16 %v541
  %v3659 = vunpack.c.l.b16 %v542
  %v3660 = vunpack.c.h.b16 %v542
  %v3661 = vunpack.c.l.b16 %v543
  %v3662 = vunpack.c.h.b16 %v543
  %v3663 = vunpack.c.l.b16 %v544
  %v3664 = vunpack.c.h.b16 %v544
  %v3665 = vunpack.c.l.b16 %v545
  %v3666 = vunpack.c.h.b16 %v545
  %v3667 = vunpack.c.l.b16 %v546
  %v3668 = vunpack.c.h.b16 %v546
  %v3669 = vunpack.c.l.b16 %v547
  %v3670 = vunpack.c.h.b16 %v547
  %v3671 = vunpack.c.l.b16 %v548
  %v3672 = vunpack.c.h.b16 %v548
  %v3673 = vunpack.c.l.b16 %v549
  %v3674 = vunpack.c.h.b16 %v549
  %v3675 = vunpack.c.l.b16 %v550
  %v3676 = vunpack.c.h.b16 %v550
  %v3677 = vunpack.c.l.b16 %v551
  %v3678 = vunpack.c.h.b16 %v551
  %v3679 = vunpack.c.l.b16 %v552
  %v3680 = vunpack.c.h.b16 %v552
  %v3681 = vunpack.c.l.b16 %v553
  %v3682 = vunpack.c.h.b16 %v553
  %v3683 = vunpack.c.l.b16 %v554
  %v3684 = vunpack.c.h.b16 %v554
  %v3685 = vunpack.c.l.b16 %v555
  %v3686 = vunpack.c.h.b16 %v555
  %v3687 = vunpack.c.l.b16 %v556
  %v3688 = vunpack.c.h.b16 %v556
  %v3689 = vunpack.c.l.b16 %v557
  %v3690 = vunpack.c.h.b16 %v557
  %v3691 = vunpack.c.l.b16 %v558
  %v3692 = vunpack.c.h.b16 %v558
  %v3693 = vunpack.c.l.b16 %v559
  %v3694 = vunpack.c.h.b16 %v559
  %v3695 = vunpack.c.l.b16 %v560
  %v3696 = vunpack.c.h.b16 %v560
  %v3697 = vunpack.c.l.b16 %v561
  %v3698 = vunpack.c.h.b16 %v561
  %v3699 = vunpack.c.l.b16 %v562
  %v3700 = vunpack.c.h.b16 %v562
  %v3701 = vunpack.c.l.b16 %v563
  %v3702 = vunpack.c.h.b16 %v563
  %v3703 = vunpack.c.l.b16 %v564
  %v3704 = vunpack.c.h.b16 %v564
  %v3705 = vunpack.c.l.b16 %v565
  %v3706 = vunpack.c.h.b16 %v565
  %v3707 = vunpack.c.l.b16 %v566
  %v3708 = vunpack.c.h.b16 %v566
  %v3709 = vunpack.c.l.b16 %v567
  %v3710 = vunpack.c.h.b16 %v567
  %v3711 = vunpack.c.l.b16 %v568
  %v3712 = vunpack.c.h.b16 %v568
  %v3713 = vunpack.c.l.b16 %v569
  %v3714 = vunpack.c.h.b16 %v569
  %v3715 = vunpack.c.l.b16 %v570
  %v3716 = vunpack.c.h.b16 %v570
  %v3717 = vunpack.c.l.b16 %v571
  %v3718 = vunpack.c.h.b16 %v571
  %v3719 = vunpack.c.l.b16 %v572
  %v3720 = vunpack.c.h.b16 %v572
  %v3721 = vunpack.c.l.b16 %v573
  %v3722 = vunpack.c.h.b16 %v573
  %v3723 = vunpack.c.l.b16 %v574
  %v3724 = vunpack.c.h.b16 %v574
  %v3725 = vunpack.c.l.b16 %v575
  %v3726 = vunpack.c.h.b16 %v575
  %v3727 = vunpack.c.l.b16 %v576
  %v3728 = vunpack.c.h.b16 %v576
  %v3729 = vunpack.c.l.b16 %v577
  %v3730 = vunpack.c.h.b16 %v577
  %v3731 = vunpack.c.l.b16 %v578
  %v3732 = vunpack.c.h.b16 %v578
  %v3733 = vunpack.c.l.b16 %v579
  %v3734 = vunpack.c.h.b16 %v579
  %v3735 = vunpack.c.l.b16 %v580
  %v3736 = vunpack.c.h.b16 %v580
  %v3737 = vunpack.c.l.b16 %v581
  %v3738 = vunpack.c.h.b16 %v581
  %v3739 = vunpack.c.l.b16 %v582
  %v3740 = vunpack.c.h.b16 %v582
  %v3741 = vunpack.c.l.b16 %v583
  %v3742 = vunpack.c.h.b16 %v583
  %v3743 = vunpack.c.l.b16 %v584
  %v3744 = vunpack.c.h.b16 %v584
  %v3745 = vunpack.c.l.b16 %v585
  %v3746 = vunpack.c.h.b16 %v585
  %v3747 = vunpack.c.l.b16 %v586
  %v3748 = vunpack.c.h.b16 %v586
  %v3749 = vunpack.c.l.b16 %v587
  %v3750 = vunpack.c.h.b16 %v587
  %v3751 = vunpack.c.l.b16 %v588
  %v3752 = vunpack.c.h.b16 %v588
  %v3753 = vunpack.c.l.b16 %v589
  %v3754 = vunpack.c.h.b16 %v589
  %v3755 = vunpack.c.l.b16 %v590
  %v3756 = vunpack.c.h.b16 %v590
  %v3757 = vunpack.c.l.b16 %v591
  %v3758 = vunpack.c.h.b16 %v591
  %v3759 = vunpack.c.l.b16 %v592
  %v3760 = vunpack.c.h.b16 %v592
  %v3761 = vunpack.c.l.b16 %v593
  %v3762 = vunpack.c.h.b16 %v593
  %v3763 = vunpack.c.l.b16 %v594
  %v3764 = vunpack.c.h.b16 %v594
  %v3765 = vunpack.c.l.b16 %v595
  %v3766 = vunpack.c.h.b16 %v595
  %v3767 = vunpack.c.l.b16 %v596
  %v3768 = vunpack.c.h.b16 %v596
  %v3769 = vunpack.c.l.b16 %v597
  %v3770 = vunpack.c.h.b16 %v597
  %v3771 = vunpack.c.l.b16 %v598
  %v3772 = vunpack.c.h.b16 %v598
  %v3773 = vunpack.c.l.b16 %v599
  %v3774 = vunpack.c.h.b16 %v599
  %v3775 = vunpack.c.l.b16 %v600
  %v3776 = vunpack.c.h.b16 %v600
  %v3777 = vunpack.c.l.b16 %v601
  %v3778 = vunpack.c.h.b16 %v601
  %v3779 = vunpack.c.l.b16 %v602
  %v3780 = vunpack.c.h.b16 %v602
  %v3781 = vunpack.c.l.b16 %v603
  %v3782 = vunpack.c.h.b16 %v603
  %v3783 = vunpack.c.l.b16 %v604
  %v3784 = vunpack.c.h.b16 %v604
  %v3785 = vunpack.c.l.b16 %v605
  %v3786 = vunpack.c.h.b16 %v605
  %v3787 = vunpack.c.l.b16 %v606
  %v3788 = vunpack.c.h.b16 %v606
  %v3789 = vunpack.c.l.b16 %v607
  %v3790 = vunpack.c.h.b16 %v607
  %v3791 = vunpack.c.l.b16 %v608
  %v3792 = vunpack.c.h.b16 %v608
  %v3793 = vunpack.c.l.b16 %v609
  %v3794 = vunpack.c.h.b16 %v609
  %v3795 = vunpack.c.l.b16 %v610
  %v3796 = vunpack.c.h.b16 %v610
  %v3797 = vunpack.c.l.b16 %v611
  %v3798 = vunpack.c.h.b16 %v611
  %v3799 = vunpack.c.l.b16 %v612
  %v3800 = vunpack.c.h.b16 %v612
  %v3801 = vunpack.c.l.b16 %v613
  %v3802 = vunpack.c.h.b16 %v613
  %v3803 = vunpack.c.l.b16 %v614
  %v3804 = vunpack.c.h.b16 %v614
  %v3805 = vunpack.c.l.b16 %v615
  %v3806 = vunpack.c.h.b16 %v615
  %v3807 = vunpack.c.l.b16 %v616
  %v3808 = vunpack.c.h.b16 %v616
  %v3809 = vunpack.c.l.b16 %v617
  %v3810 = vunpack.c.h.b16 %v617
  %v3811 = vunpack.c.l.b16 %v618
  %v3812 = vunpack.c.h.b16 %v618
  %v3813 = vunpack.c.l.b16 %v619
  %v3814 = vunpack.c.h.b16 %v619
  %v3815 = vunpack.c.l.b16 %v620
  %v3816 = vunpack.c.h.b16 %v620
  %v3817 = vunpack.c.l.b16 %v621
  %v3818 = vunpack.c.h.b16 %v621
  %v3819 = vunpack.c.l.b16 %v622
  %v3820 = vunpack.c.h.b16 %v622
  %v3821 = vunpack.c.l.b16 %v623
  %v3822 = vunpack.c.h.b16 %v623
  %v3823 = vunpack.c.l.b16 %v624
  %v3824 = vunpack.c.h.b16 %v624
  %v3825 = vunpack.c.l.b16 %v625
  %v3826 = vunpack.c.h.b16 %v625
  %v3827 = vunpack.c.l.b16 %v626
  %v3828 = vunpack.c.h.b16 %v626
  %v3829 = vunpack.c.l.b16 %v627
  %v3830 = vunpack.c.h.b16 %v627
  %v3831 = vunpack.c.l.b16 %v628
  %v3832 = vunpack.c.h.b16 %v628
  %v3833 = vunpack.c.l.b16 %v629
  %v3834 = vunpack.c.h.b16 %v629
  %v3835 = vunpack.c.l.b16 %v630
  %v3836 = vunpack.c.h.b16 %v630
  %v3837 = vunpack.c.l.b16 %v631
  %v3838 = vunpack.c.h.b16 %v631
  %v3839 = vunpack.c.l.b16 %v632
  %v3840 = vunpack.c.h.b16 %v632
  %v3841 = vunpack.c.l.b16 %v633
  %v3842 = vunpack.c.h.b16 %v633
  %v3843 = vunpack.c.l.b16 %v634
  %v3844 = vunpack.c.h.b16 %v634
  %v3845 = vunpack.c.l.b16 %v635
  %v3846 = vunpack.c.h.b16 %v635
  %v3847 = vunpack.c.l.b16 %v636
  %v3848 = vunpack.c.h.b16 %v636
  %v3849 = vunpack.c.l.b16 %v637
  %v3850 = vunpack.c.h.b16 %v637
  %v3851 = vunpack.c.l.b16 %v638
  %v3852 = vunpack.c.h.b16 %v638
  %v3853 = vunpack.c.l.b16 %v639
  %v3854 = vunpack.c.h.b16 %v639
  %v3855 = vunpack.c.l.b16 %v640
  %v3856 = vunpack.c.h.b16 %v640
  %v3857 = vunpack.c.l.b16 %v641
  %v3858 = vunpack.c.h.b16 %v641
  %v3859 = vunpack.c.l.b16 %v642
  %v3860 = vunpack.c.h.b16 %v642
  %v3861 = vunpack.c.l.b16 %v643
  %v3862 = vunpack.c.h.b16 %v643
  %v3863 = vunpack.c.l.b16 %v644
  %v3864 = vunpack.c.h.b16 %v644
  %v3865 = vunpack.c.l.b16 %v645
  %v3866 = vunpack.c.h.b16 %v645
  %v3867 = vunpack.c.l.b16 %v646
  %v3868 = vunpack.c.h.b16 %v646
  %v3869 = vunpack.c.l.b16 %v647
  %v3870 = vunpack.c.h.b16 %v647
  %v3871 = vunpack.c.l.b16 %v648
  %v3872 = vunpack.c.h.b16 %v648
  %v3873 = vunpack.c.l.b16 %v649
  %v3874 = vunpack.c.h.b16 %v649
  %v3875 = vunpack.c.l.b16 %v650
  %v3876 = vunpack.c.h.b16 %v650
  %v3877 = vunpack.c.l.b16 %v651
  %v3878 = vunpack.c.h.b16 %v651
  %v3879 = vunpack.c.l.b16 %v652
  %v3880 = vunpack.c.h.b16 %v652
  %v3881 = vunpack.c.l.b16 %v653
  %v3882 = vunpack.c.h.b16 %v653
  %v3883 = vunpack.c.l.b16 %v654
  %v3884 = vunpack.c.h.b16 %v654
  %v3885 = vunpack.c.l.b16 %v655
  %v3886 = vunpack.c.h.b16 %v655
  %v3887 = vunpack.c.l.b16 %v656
  %v3888 = vunpack.c.h.b16 %v656
  %v3889 = vunpack.c.l.b16 %v657
  %v3890 = vunpack.c.h.b16 %v657
  %v3891 = vunpack.c.l.b16 %v658
  %v3892 = vunpack.c.h.b16 %v658
  %v3893 = vunpack.c.l.b16 %v659
  %v3894 = vunpack.c.h.b16 %v659
  %v3895 = vunpack.c.l.b16 %v660
  %v3896 = vunpack.c.h.b16 %v660
  %v3897 = vunpack.c.l.b16 %v661
  %v3898 = vunpack.c.h.b16 %v661
  %v3899 = vunpack.c.l.b16 %v662
  %v3900 = vunpack.c.h.b16 %v662
  %v3901 = vunpack.c.l.b16 %v663
  %v3902 = vunpack.c.h.b16 %v663
  %v3903 = vunpack.c.l.b16 %v664
  %v3904 = vunpack.c.h.b16 %v664
  %v3905 = vunpack.c.l.b16 %v665
  %v3906 = vunpack.c.h.b16 %v665
  %v3907 = vunpack.c.l.b16 %v666
  %v3908 = vunpack.c.h.b16 %v666
  %v3909 = vunpack.c.l.b16 %v667
  %v3910 = vunpack.c.h.b16 %v667
  %v3911 = vunpack.c.l.b16 %v668
  %v3912 = vunpack.c.h.b16 %v668
  %v3913 = vunpack.c.l.b16 %v669
  %v3914 = vunpack.c.h.b16 %v669
  %v3915 = vunpack.c.l.b16 %v670
  %v3916 = vunpack.c.h.b16 %v670
  %v3917 = vunpack.c.l.b16 %v671
  %v3918 = vunpack.c.h.b16 %v671
  %v3919 = vunpack.c.l.b16 %v672
  %v3920 = vunpack.c.h.b16 %v672
  %v3921 = vunpack.c.l.b16 %v673
  %v3922 = vunpack.c.h.b16 %v673
  %v3923 = vunpack.c.l.b16 %v674
  %v3924 = vunpack.c.h.b16 %v674
  %v3925 = vunpack.c.l.b16 %v675
  %v3926 = vunpack.c.h.b16 %v675
  %v3927 = vunpack.c.l.b16 %v676
  %v3928 = vunpack.c.h.b16 %v676
  %v3929 = vunpack.c.l.b16 %v677
  %v3930 = vunpack.c.h.b16 %v677
  %v3931 = vunpack.c.l.b16 %v678
  %v3932 = vunpack.c.h.b16 %v678
  %v3933 = vunpack.c.l.b16 %v679
  %v3934 = vunpack.c.h.b16 %v679
  %v3935 = vunpack.c.l.b16 %v680
  %v3936 = vunpack.c.h.b16 %v680
  %v3937 = vunpack.c.l.b16 %v681
  %v3938 = vunpack.c.h.b16 %v681
  %v3939 = vunpack.c.l.b16 %v682
  %v3940 = vunpack.c.h.b16 %v682
  %v3941 = vunpack.c.l.b16 %v683
  %v3942 = vunpack.c.h.b16 %v683
  %v3943 = vunpack.c.l.b16 %v684
  %v3944 = vunpack.c.h.b16 %v684
  %v3945 = vunpack.c.l.b16 %v685
  %v3946 = vunpack.c.h.b16 %v685
  %v3947 = vunpack.c.l.b16 %v686
  %v3948 = vunpack.c.h.b16 %v686
  %v3949 = vunpack.c.l.b16 %v687
  %v3950 = vunpack.c.h.b16 %v687
  %v3951 = vunpack.c.l.b16 %v688
  %v3952 = vunpack.c.h.b16 %v688
  %v3953 = vunpack.c.l.b16 %v689
  %v3954 = vunpack.c.h.b16 %v689
  %v3955 = vunpack.c.l.b16 %v690
  %v3956 = vunpack.c.h.b16 %v690
  %v3957 = vunpack.c.l.b16 %v691
  %v3958 = vunpack.c.h.b16 %v691
  %v3959 = vunpack.c.l.b16 %v692
  %v3960 = vunpack.c.h.b16 %v692
  %v3961 = vunpack.c.l.b16 %v693
  %v3962 = vunpack.c.h.b16 %v693
  %v3963 = vunpack.c.l.b16 %v694
  %v3964 = vunpack.c.h.b16 %v694
  %v3965 = vunpack.c.l.b16 %v695
  %v3966 = vunpack.c.h.b16 %v695
  %v3967 = vunpack.c.l.b16 %v696
  %v3968 = vunpack.c.h.b16 %v696
  %v3969 = vunpack.c.l.b16 %v697
  %v3970 = vunpack.c.h.b16 %v697
  %v3971 = vunpack.c.l.b16 %v698
  %v3972 = vunpack.c.h.b16 %v698
  %v3973 = vunpack.c.l.b16 %v699
  %v3974 = vunpack.c.h.b16 %v699
  %v3975 = vunpack.c.l.b16 %v700
  %v3976 = vunpack.c.h.b16 %v700
  %v3977 = vunpack.c.l.b16 %v701
  %v3978 = vunpack.c.h.b16 %v701
  %v3979 = vunpack.c.l.b16 %v702
  %v3980 = vunpack.c.h.b16 %v702
  %v3981 = vunpack.c.l.b16 %v703
  %v3982 = vunpack.c.h.b16 %v703
  %v3983 = vunpack.c.l.b16 %v704
  %v3984 = vunpack.c.h.b16 %v704
  %v3985 = vunpack.c.l.b16 %v705
  %v3986 = vunpack.c.h.b16 %v705
  %v3987 = vunpack.c.l.b16 %v706
  %v3988 = vunpack.c.h.b16 %v706
  %v3989 = vunpack.c.l.b16 %v707
  %v3990 = vunpack.c.h.b16 %v707
  %v3991 = vunpack.c.l.b16 %v708
  %v3992 = vunpack.c.h.b16 %v708
  %v3993 = vunpack.c.l.b16 %v709
  %v3994 = vunpack.c.h.b16 %v709
  %v3995 = vunpack.c.l.b16 %v710
  %v3996 = vunpack.c.h.b16 %v710
  %v3997 = vunpack.c.l.b16 %v711
  %v3998 = vunpack.c.h.b16 %v711
  %v3999 = vunpack.c.l.b16 %v712
  %v4000 = vunpack.c.h.b16 %v712
  %v4001 = vunpack.c.l.b16 %v713
  %v4002 = vunpack.c.h.b16 %v713
  %v4003 = vunpack.c.l.b16 %v714
  %v4004 = vunpack.c.h.b16 %v714
  %v4005 = vunpack.c.l.b16 %v715
  %v4006 = vunpack.c.h.b16 %v715
  %v4007 = vunpack.c.l.b16 %v716
  %v4008 = vunpack.c.h.b16 %v716
  %v4009 = vunpack.c.l.b16 %v717
  %v4010 = vunpack.c.h.b16 %v717
  %v4011 = vunpack.c.l.b16 %v718
  %v4012 = vunpack.c.h.b16 %v718
  %v4013 = vunpack.c.l.b16 %v719
  %v4014 = vunpack.c.h.b16 %v719
  %v4015 = vunpack.c.l.b16 %v720
  %v4016 = vunpack.c.h.b16 %v720
  %v4017 = vunpack.c.l.b16 %v721
  %v4018 = vunpack.c.h.b16 %v721
  %v4019 = vunpack.c.l.b16 %v722
  %v4020 = vunpack.c.h.b16 %v722
  %v4021 = vunpack.c.l.b16 %v723
  %v4022 = vunpack.c.h.b16 %v723
  %v4023 = vunpack.c.l.b16 %v724
  %v4024 = vunpack.c.h.b16 %v724
  %v4025 = vunpack.c.l.b16 %v725
  %v4026 = vunpack.c.h.b16 %v725
  %v4027 = vunpack.c.l.b16 %v726
  %v4028 = vunpack.c.h.b16 %v726
  %v4029 = vunpack.c.l.b16 %v727
  %v4030 = vunpack.c.h.b16 %v727
  %v4031 = vunpack.c.l.b16 %v728
  %v4032 = vunpack.c.h.b16 %v728
  %v4033 = vunpack.c.l.b16 %v729
  %v4034 = vunpack.c.h.b16 %v729
  %v4035 = vunpack.c.l.b16 %v730
  %v4036 = vunpack.c.h.b16 %v730
  %v4037 = vunpack.c.l.b16 %v731
  %v4038 = vunpack.c.h.b16 %v731
  %v4039 = vunpack.c.l.b16 %v732
  %v4040 = vunpack.c.h.b16 %v732
  %v4041 = vunpack.c.l.b16 %v733
  %v4042 = vunpack.c.h.b16 %v733
  %v4043 = vunpack.c.l.b16 %v734
  %v4044 = vunpack.c.h.b16 %v734
  %v4045 = vunpack.c.l.b16 %v735
  %v4046 = vunpack.c.h.b16 %v735
  %v4047 = vunpack.c.l.b16 %v736
  %v4048 = vunpack.c.h.b16 %v736
  %v4049 = vunpack.c.l.b16 %v737
  %v4050 = vunpack.c.h.b16 %v737
  %v4051 = vunpack.c.l.b16 %v738
  %v4052 = vunpack.c.h.b16 %v738
  %v4053 = vunpack.c.l.b16 %v739
  %v4054 = vunpack.c.h.b16 %v739
  %v4055 = vunpack.c.l.b16 %v740
  %v4056 = vunpack.c.h.b16 %v740
  %v4057 = vunpack.c.l.b16 %v741
  %v4058 = vunpack.c.h.b16 %v741
  %v4059 = vunpack.c.l.b16 %v742
  %v4060 = vunpack.c.h.b16 %v742
  %v4061 = vunpack.c.l.b16 %v743
  %v4062 = vunpack.c.h.b16 %v743
  %v4063 = vunpack.c.l.b16 %v744
  %v4064 = vunpack.c.h.b16 %v744
  %v4065 = vunpack.c.l.b16 %v745
  %v4066 = vunpack.c.h.b16 %v745
  %v4067 = vunpack.c.l.b16 %v746
  %v4068 = vunpack.c.h.b16 %v746
  %v4069 = vunpack.c.l.b16 %v747
  %v4070 = vunpack.c.h.b16 %v747
  %v4071 = vunpack.c.l.b16 %v748
  %v4072 = vunpack.c.h.b16 %v748
  %v4073 = vunpack.c.l.b16 %v749
  %v4074 = vunpack.c.h.b16 %v749
  %v4075 = vunpack.c.l.b16 %v750
  %v4076 = vunpack.c.h.b16 %v750
  %v4077 = vunpack.c.l.b16 %v751
  %v4078 = vunpack.c.h.b16 %v751
  %v4079 = vunpack.c.l.b16 %v752
  %v4080 = vunpack.c.h.b16 %v752
  %v4081 = vunpack.c.l.b16 %v753
  %v4082 = vunpack.c.h.b16 %v753
  %v4083 = vunpack.c.l.b16 %v754
  %v4084 = vunpack.c.h.b16 %v754
  %v4085 = vunpack.c.l.b16 %v755
  %v4086 = vunpack.c.h.b16 %v755
  %v4087 = vunpack.c.l.b16 %v756
  %v4088 = vunpack.c.h.b16 %v756
  %v4089 = vunpack.c.l.b16 %v757
  %v4090 = vunpack.c.h.b16 %v757
  %v4091 = vunpack.c.l.b16 %v758
  %v4092 = vunpack.c.h.b16 %v758
  %v4093 = vunpack.c.l.b16 %v759
  %v4094 = vunpack.c.h.b16 %v759
  %v4095 = vunpack.c.l.b16 %v760
  %v4096 = vunpack.c.h.b16 %v760
  %v4097 = vunpack.c.l.b16 %v761
  %v4098 = vunpack.c.h.b16 %v761
  %v4099 = vunpack.c.l.b16 %v762
  %v4100 = vunpack.c.h.b16 %v762
  %v4101 = vunpack.c.l.b16 %v763
  %v4102 = vunpack.c.h.b16 %v763
  %v4103 = vunpack.c.l.b16 %v764
  %v4104 = vunpack.c.h.b16 %v764
  %v4105 = vunpack.c.l.b16 %v765
  %v4106 = vunpack.c.h.b16 %v765
  %v4107 = vunpack.c.l.b16 %v766
  %v4108 = vunpack.c.h.b16 %v766
  %v4109 = vunpack.c.l.b16 %v767
  %v4110 = vunpack.c.h.b16 %v767
  %v4111 = vunpack.c.l.b16 %v768
  %v4112 = vunpack.c.h.b16 %v768
  %v4113 = vunpack.c.l.b16 %v769
  %v4114 = vunpack.c.h.b16 %v769
  %v4115 = vunpack.c.l.b16 %v770
  %v4116 = vunpack.c.h.b16 %v770
  %v4117 = vunpack.c.l.b16 %v771
  %v4118 = vunpack.c.h.b16 %v771
  %v4119 = vunpack.c.l.b16 %v772
  %v4120 = vunpack.c.h.b16 %v772
  %v4121 = vunpack.c.l.b16 %v773
  %v4122 = vunpack.c.h.b16 %v773
  %v4123 = vunpack.c.l.b16 %v774
  %v4124 = vunpack.c.h.b16 %v774
  %v4125 = vunpack.c.l.b16 %v775
  %v4126 = vunpack.c.h.b16 %v775
  %v4127 = vunpack.c.l.b16 %v776
  %v4128 = vunpack.c.h.b16 %v776
  %v4129 = vunpack.c.l.b16 %v777
  %v4130 = vunpack.c.h.b16 %v777
  %v4131 = vunpack.c.l.b16 %v778
  %v4132 = vunpack.c.h.b16 %v778
  %v4133 = vunpack.c.l.b16 %v779
  %v4134 = vunpack.c.h.b16 %v779
  %v4135 = vunpack.c.l.b16 %v780
  %v4136 = vunpack.c.h.b16 %v780
  %v4137 = vunpack.c.l.b16 %v781
  %v4138 = vunpack.c.h.b16 %v781
  %v4139 = vunpack.c.l.b16 %v782
  %v4140 = vunpack.c.h.b16 %v782
  %v4141 = vunpack.c.l.b16 %v783
  %v4142 = vunpack.c.h.b16 %v783
  %v4143 = vunpack.c.l.b16 %v784
  %v4144 = vunpack.c.h.b16 %v784
  %v4145 = vunpack.c.l.b16 %v785
  %v4146 = vunpack.c.h.b16 %v785
  %v4147 = vunpack.c.l.b16 %v786
  %v4148 = vunpack.c.h.b16 %v786
  %v4149 = vunpack.c.l.b16 %v787
  %v4150 = vunpack.c.h.b16 %v787
  %v4151 = vunpack.c.l.b16 %v788
  %v4152 = vunpack.c.h.b16 %v788
  %v4153 = vunpack.c.l.b16 %v789
  %v4154 = vunpack.c.h.b16 %v789
  %v4155 = vunpack.c.l.b16 %v790
  %v4156 = vunpack.c.h.b16 %v790
  %v4157 = vunpack.c.l.b16 %v791
  %v4158 = vunpack.c.h.b16 %v791
  %v4159 = vunpack.c.l.b16 %v792
  %v4160 = vunpack.c.h.b16 %v792
  %v4161 = vunpack.c.l.b16 %v793
  %v4162 = vunpack.c.h.b16 %v793
  %v4163 = vunpack.c.l.b16 %v794
  %v4164 = vunpack.c.h.b16 %v794
  %v4165 = vunpack.c.l.b16 %v795
  %v4166 = vunpack.c.h.b16 %v795
  %v4167 = vunpack.c.l.b16 %v796
  %v4168 = vunpack.c.h.b16 %v796
  %v4169 = vunpack.c.l.b16 %v797
  %v4170 = vunpack.c.h.b16 %v797
  %v4171 = vunpack.c.l.b16 %v798
  %v4172 = vunpack.c.h.b16 %v798
  %v4173 = vunpack.c.l.b16 %v799
  %v4174 = vunpack.c.h.b16 %v799
  %v4175 = vunpack.c.l.b16 %v800
  %v4176 = vunpack.c.h.b16 %v800
  %v4177 = vunpack.c.l.b16 %v801
  %v4178 = vunpack.c.h.b16 %v801
  %v4179 = vunpack.c.l.b16 %v802
  %v4180 = vunpack.c.h.b16 %v802
  %v4181 = vunpack.c.l.b16 %v803
  %v4182 = vunpack.c.h.b16 %v803
  %v4183 = vunpack.c.l.b16 %v804
  %v4184 = vunpack.c.h.b16 %v804
  %v4185 = vunpack.c.l.b16 %v805
  %v4186 = vunpack.c.h.b16 %v805
  %v4187 = vunpack.c.l.b16 %v806
  %v4188 = vunpack.c.h.b16 %v806
  %v4189 = vunpack.c.l.b16 %v807
  %v4190 = vunpack.c.h.b16 %v807
  %v4191 = vunpack.c.l.b16 %v808
  %v4192 = vunpack.c.h.b16 %v808
  %v4193 = vunpack.c.l.b16 %v809
  %v4194 = vunpack.c.h.b16 %v809
  %v4195 = vunpack.c.l.b16 %v810
  %v4196 = vunpack.c.h.b16 %v810
  %v4197 = vunpack.c.l.b16 %v811
  %v4198 = vunpack.c.h.b16 %v811
  %v4199 = vunpack.c.l.b16 %v812
  %v4200 = vunpack.c.h.b16 %v812
  %v4201 = vunpack.c.l.b16 %v813
  %v4202 = vunpack.c.h.b16 %v813
  %v4203 = vunpack.c.l.b16 %v814
  %v4204 = vunpack.c.h.b16 %v814
  %v4205 = vunpack.c.l.b16 %v815
  %v4206 = vunpack.c.h.b16 %v815
  %v4207 = vunpack.c.l.b16 %v816
  %v4208 = vunpack.c.h.b16 %v816
  %v4209 = vunpack.c.l.b16 %v817
  %v4210 = vunpack.c.h.b16 %v817
  %v4211 = vunpack.c.l.b16 %v818
  %v4212 = vunpack.c.h.b16 %v818
  %v4213 = vunpack.c.l.b16 %v819
  %v4214 = vunpack.c.h.b16 %v819
  %v4215 = vunpack.c.l.b16 %v820
  %v4216 = vunpack.c.h.b16 %v820
  %v4217 = vunpack.c.l.b16 %v821
  %v4218 = vunpack.c.h.b16 %v821
  %v4219 = vunpack.c.l.b16 %v822
  %v4220 = vunpack.c.h.b16 %v822
  %v4221 = vunpack.c.l.b16 %v823
  %v4222 = vunpack.c.h.b16 %v823
  %v4223 = vunpack.c.l.b16 %v824
  %v4224 = vunpack.c.h.b16 %v824
  %v4225 = vunpack.c.l.b16 %v825
  %v4226 = vunpack.c.h.b16 %v825
  %v4227 = vunpack.c.l.b16 %v826
  %v4228 = vunpack.c.h.b16 %v826
  %v4229 = vunpack.c.l.b16 %v827
  %v4230 = vunpack.c.h.b16 %v827
  %v4231 = vunpack.c.l.b16 %v828
  %v4232 = vunpack.c.h.b16 %v828
  %v4233 = vunpack.c.l.b16 %v829
  %v4234 = vunpack.c.h.b16 %v829
  %v4235 = vunpack.c.l.b16 %v830
  %v4236 = vunpack.c.h.b16 %v830
  %v4237 = vunpack.c.l.b16 %v831
  %v4238 = vunpack.c.h.b16 %v831
  %v4239 = vunpack.c.l.b16 %v832
  %v4240 = vunpack.c.h.b16 %v832
  %v4241 = vunpack.c.l.b16 %v833
  %v4242 = vunpack.c.h.b16 %v833
  %v4243 = vunpack.c.l.b16 %v834
  %v4244 = vunpack.c.h.b16 %v834
  %v4245 = vunpack.c.l.b16 %v835
  %v4246 = vunpack.c.h.b16 %v835
  %v4247 = vunpack.c.l.b16 %v836
  %v4248 = vunpack.c.h.b16 %v836
  %v4249 = vunpack.c.l.b16 %v837
  %v4250 = vunpack.c.h.b16 %v837
  %v4251 = vunpack.c.l.b16 %v838
  %v4252 = vunpack.c.h.b16 %v838
  %v4253 = vunpack.c.l.b16 %v839
  %v4254 = vunpack.c.h.b16 %v839
  %v4255 = vunpack.c.l.b16 %v840
  %v4256 = vunpack.c.h.b16 %v840
  %v4257 = vunpack.c.l.b16 %v841
  %v4258 = vunpack.c.h.b16 %v841
  %v4259 = vunpack.c.l.b16 %v842
  %v4260 = vunpack.c.h.b16 %v842
  %v4261 = vunpack.c.l.b16 %v843
  %v4262 = vunpack.c.h.b16 %v843
  %v4263 = vunpack.c.l.b16 %v844
  %v4264 = vunpack.c.h.b16 %v844
  %v4265 = vunpack.c.l.b16 %v845
  %v4266 = vunpack.c.h.b16 %v845
  %v4267 = vunpack.c.l.b16 %v846
  %v4268 = vunpack.c.h.b16 %v846
  %v4269 = vunpack.c.l.b16 %v847
  %v4270 = vunpack.c.h.b16 %v847
  %v4271 = vunpack.c.l.b16 %v848
  %v4272 = vunpack.c.h.b16 %v848
  %v4273 = vunpack.c.l.b16 %v849
  %v4274 = vunpack.c.h.b16 %v849
  %v4275 = vunpack.c.l.b16 %v850
  %v4276 = vunpack.c.h.b16 %v850
  %v4277 = vunpack.c.l.b16 %v851
  %v4278 = vunpack.c.h.b16 %v851
  %v4279 = vunpack.c.l.b16 %v852
  %v4280 = vunpack.c.h.b16 %v852
  %v4281 = vunpack.c.l.b16 %v853
  %v4282 = vunpack.c.h.b16 %v853
  %v4283 = vunpack.c.l.b16 %v854
  %v4284 = vunpack.c.h.b16 %v854
  %v4285 = vunpack.c.l.b16 %v855
  %v4286 = vunpack.c.h.b16 %v855
  %v4287 = vunpack.c.l.b16 %v856
  %v4288 = vunpack.c.h.b16 %v856
  %v4289 = vunpack.c.l.b16 %v857
  %v4290 = vunpack.c.h.b16 %v857
  %v4291 = vunpack.c.l.b16 %v858
  %v4292 = vunpack.c.h.b16 %v858
  %v4293 = vunpack.c.l.b16 %v859
  %v4294 = vunpack.c.h.b16 %v859
  %v4295 = vunpack.c.l.b16 %v860
  %v4296 = vunpack.c.h.b16 %v860
  %v4297 = vunpack.c.l.b16 %v861
  %v4298 = vunpack.c.h.b16 %v861
  %v4299 = vunpack.c.l.b16 %v862
  %v4300 = vunpack.c.h.b16 %v862
  %v4301 = vunpack.c.l.b16 %v863
  %v4302 = vunpack.c.h.b16 %v863
  %v4303 = vunpack.c.l.b16 %v864
  %v4304 = vunpack.c.h.b16 %v864
  %v4305 = vunpack.c.l.b16 %v865
  %v4306 = vunpack.c.h.b16 %v865
  %v4307 = vunpack.c.l.b16 %v866
  %v4308 = vunpack.c.h.b16 %v866
  %v4309 = vunpack.c.l.b16 %v867
  %v4310 = vunpack.c.h.b16 %v867
  %v4311 = vunpack.c.l.b16 %v868
  %v4312 = vunpack.c.h.b16 %v868
  %v4313 = vunpack.c.l.b16 %v869
  %v4314 = vunpack.c.h.b16 %v869
  %v4315 = vunpack.c.l.b16 %v870
  %v4316 = vunpack.c.h.b16 %v870
  %v4317 = vunpack.c.l.b16 %v871
  %v4318 = vunpack.c.h.b16 %v871
  %v4319 = vunpack.c.l.b16 %v872
  %v4320 = vunpack.c.h.b16 %v872
  %v4321 = vunpack.c.l.b16 %v873
  %v4322 = vunpack.c.h.b16 %v873
  %v4323 = vunpack.c.l.b16 %v874
  %v4324 = vunpack.c.h.b16 %v874
  %v4325 = vunpack.c.l.b16 %v875
  %v4326 = vunpack.c.h.b16 %v875
  %v4327 = vunpack.c.l.b16 %v876
  %v4328 = vunpack.c.h.b16 %v876
  %v4329 = vunpack.c.l.b16 %v877
  %v4330 = vunpack.c.h.b16 %v877
  %v4331 = vunpack.c.l.b16 %v878
  %v4332 = vunpack.c.h.b16 %v878
  %v4333 = vunpack.c.l.b16 %v879
  %v4334 = vunpack.c.h.b16 %v879
  %v4335 = vunpack.c.l.b16 %v880
  %v4336 = vunpack.c.h.b16 %v880
  %v4337 = vunpack.c.l.b16 %v881
  %v4338 = vunpack.c.h.b16 %v881
  %v4339 = vunpack.c.l.b16 %v882
  %v4340 = vunpack.c.h.b16 %v882
  %v4341 = vunpack.c.l.b16 %v883
  %v4342 = vunpack.c.h.b16 %v883
  %v4343 = vunpack.c.l.b16 %v884
  %v4344 = vunpack.c.h.b16 %v884
  %v4345 = vunpack.c.l.b16 %v885
  %v4346 = vunpack.c.h.b16 %v885
  %v4347 = vunpack.c.l.b16 %v886
  %v4348 = vunpack.c.h.b16 %v886
  %v4349 = vunpack.c.l.b16 %v887
  %v4350 = vunpack.c.h.b16 %v887
  %v4351 = vunpack.c.l.b16 %v888
  %v4352 = vunpack.c.h.b16 %v888
  %v4353 = vunpack.c.l.b16 %v889
  %v4354 = vunpack.c.h.b16 %v889
  %v4355 = vunpack.c.l.b16 %v890
  %v4356 = vunpack.c.h.b16 %v890
  %v4357 = vunpack.c.l.b16 %v891
  %v4358 = vunpack.c.h.b16 %v891
  %v4359 = vunpack.c.l.b16 %v892
  %v4360 = vunpack.c.h.b16 %v892
  %v4361 = vunpack.c.l.b16 %v893
  %v4362 = vunpack.c.h.b16 %v893
  %v4363 = vunpack.c.l.b16 %v894
  %v4364 = vunpack.c.h.b16 %v894
  %v4365 = vunpack.c.l.b16 %v895
  %v4366 = vunpack.c.h.b16 %v895
  %v4367 = vunpack.c.l.b16 %v896
  %v4368 = vunpack.c.h.b16 %v896
  %v4369 = vunpack.c.l.b16 %v897
  %v4370 = vunpack.c.h.b16 %v897
  %v4371 = vunpack.c.l.b16 %v898
  %v4372 = vunpack.c.h.b16 %v898
  %v4373 = vunpack.c.l.b16 %v899
  %v4374 = vunpack.c.h.b16 %v899
  %v4375 = vunpack.c.l.b16 %v900
  %v4376 = vunpack.c.h.b16 %v900
  %v4377 = vunpack.c.l.b16 %v901
  %v4378 = vunpack.c.h.b16 %v901
  %v4379 = vunpack.c.l.b16 %v902
  %v4380 = vunpack.c.h.b16 %v902
  %v4381 = vunpack.c.l.b16 %v903
  %v4382 = vunpack.c.h.b16 %v903
  %v4383 = vunpack.c.l.b16 %v904
  %v4384 = vunpack.c.h.b16 %v904
  %v4385 = vunpack.c.l.b16 %v905
  %v4386 = vunpack.c.h.b16 %v905
  %v4387 = vunpack.c.l.b16 %v906
  %v4388 = vunpack.c.h.b16 %v906
  %v4389 = vunpack.c.l.b16 %v907
  %v4390 = vunpack.c.h.b16 %v907
  %v4391 = vunpack.c.l.b16 %v908
  %v4392 = vunpack.c.h.b16 %v908
  %v4393 = vunpack.c.l.b16 %v909
  %v4394 = vunpack.c.h.b16 %v909
  %v4395 = vunpack.c.l.b16 %v910
  %v4396 = vunpack.c.h.b16 %v910
  %v4397 = vunpack.c.l.b16 %v911
  %v4398 = vunpack.c.h.b16 %v911
  %v4399 = vunpack.c.l.b16 %v912
  %v4400 = vunpack.c.h.b16 %v912
  %v4401 = vunpack.c.l.b16 %v913
  %v4402 = vunpack.c.h.b16 %v913
  %v4403 = vunpack.c.l.b16 %v914
  %v4404 = vunpack.c.h.b16 %v914
  %v4405 = vunpack.c.l.b16 %v915
  %v4406 = vunpack.c.h.b16 %v915
  %v4407 = vunpack.c.l.b16 %v916
  %v4408 = vunpack.c.h.b16 %v916
  %v4409 = vunpack.c.l.b16 %v917
  %v4410 = vunpack.c.h.b16 %v917
  %v4411 = vunpack.c.l.b16 %v918
  %v4412 = vunpack.c.h.b16 %v918
  %v4413 = vunpack.c.l.b16 %v919
  %v4414 = vunpack.c.h.b16 %v919
  %v4415 = vunpack.c.l.b16 %v920
  %v4416 = vunpack.c.h.b16 %v920
  %v4417 = vunpack.c.l.b16 %v921
  %v4418 = vunpack.c.h.b16 %v921
  %v4419 = vunpack.c.l.b16 %v922
  %v4420 = vunpack.c.h.b16 %v922
  %v4421 = vunpack.c.l.b16 %v923
  %v4422 = vunpack.c.h.b16 %v923
  %v4423 = vunpack.c.l.b16 %v924
  %v4424 = vunpack.c.h.b16 %v924
  %v4425 = vunpack.c.l.b16 %v925
  %v4426 = vunpack.c.h.b16 %v925
  %v4427 = vunpack.c.l.b16 %v926
  %v4428 = vunpack.c.h.b16 %v926
  %v4429 = vunpack.c.l.b16 %v927
  %v4430 = vunpack.c.h.b16 %v927
  %v4431 = vunpack.c.l.b16 %v928
  %v4432 = vunpack.c.h.b16 %v928
  %v4433 = vunpack.c.l.b16 %v929
  %v4434 = vunpack.c.h.b16 %v929
  %v4435 = vunpack.c.l.b16 %v930
  %v4436 = vunpack.c.h.b16 %v930
  %v4437 = vunpack.c.l.b16 %v931
  %v4438 = vunpack.c.h.b16 %v931
  %v4439 = vunpack.c.l.b16 %v932
  %v4440 = vunpack.c.h.b16 %v932
  %v4441 = vunpack.c.l.b16 %v933
  %v4442 = vunpack.c.h.b16 %v933
  %v4443 = vunpack.c.l.b16 %v934
  %v4444 = vunpack.c.h.b16 %v934
  %v4445 = vunpack.c.l.b16 %v935
  %v4446 = vunpack.c.h.b16 %v935
  %v4447 = vunpack.c.l.b16 %v936
  %v4448 = vunpack.c.h.b16 %v936
  %v4449 = vunpack.c.l.b16 %v937
  %v4450 = vunpack.c.h.b16 %v937
  %v4451 = vunpack.c.l.b16 %v938
  %v4452 = vunpack.c.h.b16 %v938
  %v4453 = vunpack.c.l.b16 %v939
  %v4454 = vunpack.c.h.b16 %v939
  %v4455 = vunpack.c.l.b16 %v940
  %v4456 = vunpack.c.h.b16 %v940
  %v4457 = vunpack.c.l.b16 %v941
  %v4458 = vunpack.c.h.b16 %v941
  %v4459 = vunpack.c.l.b16 %v942
  %v4460 = vunpack.c.h.b16 %v942
  %v4461 = vunpack.c.l.b16 %v943
  %v4462 = vunpack.c.h.b16 %v943
  %v4463 = vunpack.c.l.b16 %v944
  %v4464 = vunpack.c.h.b16 %v944
  %v4465 = vunpack.c.l.b16 %v945
  %v4466 = vunpack.c.h.b16 %v945
  %v4467 = vunpack.c.l.b16 %v946
  %v4468 = vunpack.c.h.b16 %v946
  %v4469 = vunpack.c.l.b16 %v947
  %v4470 = vunpack.c.h.b16 %v947
  %v4471 = vunpack.c.l.b16 %v948
  %v4472 = vunpack.c.h.b16 %v948
  %v4473 = vunpack.c.l.b16 %v949
  %v4474 = vunpack.c.h.b16 %v949
  %v4475 = vunpack.c.l.b16 %v950
  %v4476 = vunpack.c.h.b16 %v950
  %v4477 = vunpack.c.l.b16 %v951
  %v4478 = vunpack.c.h.b16 %v951
  %v4479 = vunpack.c.l.b16 %v952
  %v4480 = vunpack.c.h.b16 %v952
  %v4481 = vunpack.c.l.b16 %v953
  %v4482 = vunpack.c.h.b16 %v953
  %v4483 = vunpack.c.l.b16 %v954
  %v4484 = vunpack.c.h.b16 %v954
  %v4485 = vunpack.c.l.b16 %v955
  %v4486 = vunpack.c.h.b16 %v955
  %v4487 = vunpack.c.l.b16 %v956
  %v4488 = vunpack.c.h.b16 %v956
  %v4489 = vunpack.c.l.b16 %v957
  %v4490 = vunpack.c.h.b16 %v957
  %v4491 = vunpack.c.l.b16 %v958
  %v4492 = vunpack.c.h.b16 %v958
  %v4493 = vunpack.c.l.b16 %v959
  %v4494 = vunpack.c.h.b16 %v959
  %v4495 = vunpack.c.l.b16 %v960
  %v4496 = vunpack.c.h.b16 %v960
  %v4497 = vunpack.c.l.b16 %v961
  %v4498 = vunpack.c.h.b16 %v961
  %v4499 = vunpack.c.l.b16 %v962
  %v4500 = vunpack.c.h.b16 %v962
  %v4501 = vunpack.c.l.b16 %v963
  %v4502 = vunpack.c.h.b16 %v963
  %v4503 = vunpack.c.l.b16 %v964
  %v4504 = vunpack.c.h.b16 %v964
  %v4505 = vunpack.c.l.b16 %v965
  %v4506 = vunpack.c.h.b16 %v965
  %v4507 = vunpack.c.l.b16 %v966
  %v4508 = vunpack.c.h.b16 %v966
  %v4509 = vunpack.c.l.b16 %v967
  %v4510 = vunpack.c.h.b16 %v967
  %v4511 = vunpack.c.l.b16 %v968
  %v4512 = vunpack.c.h.b16 %v968
  %v4513 = vunpack.c.l.b16 %v969
  %v4514 = vunpack.c.h.b16 %v969
  %v4515 = vunpack.c.l.b16 %v970
  %v4516 = vunpack.c.h.b16 %v970
  %v4517 = vunpack.c.l.b16 %v971
  %v4518 = vunpack.c.h.b16 %v971
  %v4519 = vunpack.c.l.b16 %v972
  %v4520 = vunpack.c.h.b16 %v972
  %v4521 = vunpack.c.l.b16 %v973
  %v4522 = vunpack.c.h.b16 %v973
  %v4523 = vunpack.c.l.b16 %v974
  %v4524 = vunpack.c.h.b16 %v974
  %v4525 = vunpack.c.l.b16 %v975
  %v4526 = vunpack.c.h.b16 %v975
  %v4527 = vunpack.c.l.b16 %v976
  %v4528 = vunpack.c.h.b16 %v976
  %v4529 = vunpack.c.l.b16 %v977
  %v4530 = vunpack.c.h.b16 %v977
  %v4531 = vunpack.c.l.b16 %v978
  %v4532 = vunpack.c.h.b16 %v978
  %v4533 = vunpack.c.l.b16 %v979
  %v4534 = vunpack.c.h.b16 %v979
  %v4535 = vunpack.c.l.b16 %v980
  %v4536 = vunpack.c.h.b16 %v980
  %v4537 = vunpack.c.l.b16 %v981
  %v4538 = vunpack.c.h.b16 %v981
  %v4539 = vunpack.c.l.b16 %v982
  %v4540 = vunpack.c.h.b16 %v982
  %v4541 = vunpack.c.l.b16 %v983
  %v4542 = vunpack.c.h.b16 %v983
  %v4543 = vunpack.c.l.b16 %v984
  %v4544 = vunpack.c.h.b16 %v984
  %v4545 = vunpack.c.l.b16 %v985
  %v4546 = vunpack.c.h.b16 %v985
  %v4547 = vunpack.c.l.b16 %v986
  %v4548 = vunpack.c.h.b16 %v986
  %v4549 = vunpack.c.l.b16 %v987
  %v4550 = vunpack.c.h.b16 %v987
  %v4551 = vunpack.c.l.b16 %v988
  %v4552 = vunpack.c.h.b16 %v988
  %v4553 = vunpack.c.l.b16 %v989
  %v4554 = vunpack.c.h.b16 %v989
  %v4555 = vunpack.c.l.b16 %v990
  %v4556 = vunpack.c.h.b16 %v990
  %v4557 = vunpack.c.l.b16 %v991
  %v4558 = vunpack.c.h.b16 %v991
  %v4559 = vunpack.c.l.b16 %v992
  %v4560 = vunpack.c.h.b16 %v992
  %v4561 = vunpack.c.l.b16 %v993
  %v4562 = vunpack.c.h.b16 %v993
  %v4563 = vunpack.c.l.b16 %v994
  %v4564 = vunpack.c.h.b16 %v994
  %v4565 = vunpack.c.l.b16 %v995
  %v4566 = vunpack.c.h.b16 %v995
  %v4567 = vunpack.c.l.b16 %v996
  %v4568 = vunpack.c.h.b16 %v996
  %v4569 = vunpack.c.l.b16 %v997
  %v4570 = vunpack.c.h.b16 %v997
  %v4571 = vunpack.c.l.b16 %v998
  %v4572 = vunpack.c.h.b16 %v998
  %v4573 = vunpack.c.l.b16 %v999
  %v4574 = vunpack.c.h.b16 %v999
  %v4575 = vunpack.c.l.b16 %v1000
  %v4576 = vunpack.c.h.b16 %v1000
  %v4577 = vunpack.c.l.b16 %v1001
  %v4578 = vunpack.c.h.b16 %v1001
  %v4579 = vunpack.c.l.b16 %v1002
  %v4580 = vunpack.c.h.b16 %v1002
  %v4581 = vunpack.c.l.b16 %v1003
  %v4582 = vunpack.c.h.b16 %v1003
  %v4583 = vunpack.c.l.b16 %v1004
  %v4584 = vunpack.c.h.b16 %v1004
  %v4585 = vunpack.c.l.b16 %v1005
  %v4586 = vunpack.c.h.b16 %v1005
  %v4587 = vunpack.c.l.b16 %v1006
  %v4588 = vunpack.c.h.b16 %v1006
  %v4589 = vunpack.c.l.b16 %v1007
  %v4590 = vunpack.c.h.b16 %v1007
  %v4591 = vunpack.c.l.b16 %v1008
  %v4592 = vunpack.c.h.b16 %v1008
  %v4593 = vunpack.c.l.b16 %v1009
  %v4594 = vunpack.c.h.b16 %v1009
  %v4595 = vunpack.c.l.b16 %v1010
  %v4596 = vunpack.c.h.b16 %v1010
  %v4597 = vunpack.c.l.b16 %v1011
  %v4598 = vunpack.c.h.b16 %v1011
  %v4599 = vunpack.c.l.b16 %v1012
  %v4600 = vunpack.c.h.b16 %v1012
  %v4601 = vunpack.c.l.b16 %v1013
  %v4602 = vunpack.c.h.b16 %v1013
  %v4603 = vunpack.c.l.b16 %v1014
  %v4604 = vunpack.c.h.b16 %v1014
  %v4605 = vunpack.c.l.b16 %v1015
  %v4606 = vunpack.c.h.b16 %v1015
  %v4607 = vunpack.c.l.b16 %v1016
  %v4608 = vunpack.c.h.b16 %v1016
  %v4609 = vunpack.c.l.b16 %v1017
  %v4610 = vunpack.c.h.b16 %v1017
  %v4611 = vunpack.c.l.b16 %v1018
  %v4612 = vunpack.c.h.b16 %v1018
  %v4613 = vunpack.c.l.b16 %v1019
  %v4614 = vunpack.c.h.b16 %v1019
  %v4615 = vunpack.c.l.b16 %v1020
  %v4616 = vunpack.c.h.b16 %v1020
  %v4617 = vunpack.c.l.b16 %v1021
  %v4618 = vunpack.c.h.b16 %v1021
  %v4619 = vunpack.c.l.b16 %v1022
  %v4620 = vunpack.c.h.b16 %v1022
  %v4621 = vunpack.c.l.b16 %v1023
  %v4622 = vunpack.c.h.b16 %v1023
  %v4623 = vunpack.c.l.b16 %v1024
  %v4624 = vunpack.c.h.b16 %v1024
  %v4625 = vunpack.c.l.b16 %v1025
  %v4626 = vunpack.c.h.b16 %v1025
  %v4627 = vunpack.c.l.b16 %v1026
  %v4628 = vunpack.c.h.b16 %v1026
  %v4629 = vunpack.c.l.b16 %v1027
  %v4630 = vunpack.c.h.b16 %v1027
  %v4631 = vunpack.c.l.b16 %v1028
  %v4632 = vunpack.c.h.b16 %v1028
  %v4633 = vunpack.c.l.b16 %v1029
  %v4634 = vunpack.c.h.b16 %v1029
  %v4635 = vunpack.c.l.b16 %v1030
  %v4636 = vunpack.c.h.b16 %v1030
  %v4637 = vunpack.c.l.b16 %v1031
  %v4638 = vunpack.c.h.b16 %v1031
  %v4639 = vunpack.c.l.b16 %v1032
  %v4640 = vunpack.c.h.b16 %v1032
  %v4641 = vunpack.c.l.b16 %v1033
  %v4642 = vunpack.c.h.b16 %v1033
  %v4643 = vunpack.c.l.b16 %v1034
  %v4644 = vunpack.c.h.b16 %v1034
  %v4645 = vunpack.c.l.b16 %v1035
  %v4646 = vunpack.c.h.b16 %v1035
  %v4647 = vunpack.c.l.b16 %v1036
  %v4648 = vunpack.c.h.b16 %v1036
  %v4649 = vunpack.c.l.b16 %v1037
  %v4650 = vunpack.c.h.b16 %v1037
  %v4651 = vunpack.c.l.b16 %v1038
  %v4652 = vunpack.c.h.b16 %v1038
  %v4653 = vunpack.c.l.b16 %v1039
  %v4654 = vunpack.c.h.b16 %v1039
  %v4655 = vunpack.c.l.b16 %v1040
  %v4656 = vunpack.c.h.b16 %v1040
  %v4657 = vunpack.c.l.b16 %v1041
  %v4658 = vunpack.c.h.b16 %v1041
  %v4659 = vunpack.c.l.b16 %v1042
  %v4660 = vunpack.c.h.b16 %v1042
  %v4661 = vunpack.c.l.b16 %v1043
  %v4662 = vunpack.c.h.b16 %v1043
  %v4663 = vunpack.c.l.b16 %v1044
  %v4664 = vunpack.c.h.b16 %v1044
  %v4665 = vunpack.c.l.b16 %v1045
  %v4666 = vunpack.c.h.b16 %v1045
  %v4667 = vunpack.c.l.b16 %v1046
  %v4668 = vunpack.c.h.b16 %v1046
  %v4669 = vunpack.c.l.b16 %v1047
  %v4670 = vunpack.c.h.b16 %v1047
  %v4671 = vunpack.c.l.b16 %v1048
  %v4672 = vunpack.c.h.b16 %v1048
  %v4673 = vunpack.c.l.b16 %v1049
  %v4674 = vunpack.c.h.b16 %v1049
  %v4675 = vunpack.c.l.b16 %v1050
  %v4676 = vunpack.c.h.b16 %v1050
  %v4677 = vunpack.c.l.b16 %v1051
  %v4678 = vunpack.c.h.b16 %v1051
  %v4679 = vunpack.c.l.b16 %v1052
  %v4680 = vunpack.c.h.b16 %v1052
  %v4681 = vunpack.c.l.b16 %v1053
  %v4682 = vunpack.c.h.b16 %v1053
  %v4683 = vunpack.c.l.b16 %v1054
  %v4684 = vunpack.c.h.b16 %v1054
  %v4685 = vunpack.c.l.b16 %v1055
  %v4686 = vunpack.c.h.b16 %v1055
  %v4687 = vunpack.c.l.b16 %v1056
  %v4688 = vunpack.c.h.b16 %v1056
  %v4689 = vunpack.c.l.b16 %v1057
  %v4690 = vunpack.c.h.b16 %v1057
  %v4691 = vunpack.c.l.b16 %v1058
  %v4692 = vunpack.c.h.b16 %v1058
  %v4693 = vunpack.c.l.b16 %v1059
  %v4694 = vunpack.c.h.b16 %v1059
  %v4695 = vunpack.c.l.b16 %v1060
  %v4696 = vunpack.c.h.b16 %v1060
  %v4697 = vunpack.c.l.b16 %v1061
  %v4698 = vunpack.c.h.b16 %v1061
  %v4699 = vunpack.c.l.b16 %v1062
  %v4700 = vunpack.c.h.b16 %v1062
  %v4701 = vunpack.c.l.b16 %v1063
  %v4702 = vunpack.c.h.b16 %v1063
  %v4703 = vunpack.c.l.b16 %v1064
  %v4704 = vunpack.c.h.b16 %v1064
  %v4705 = vunpack.c.l.b16 %v1065
  %v4706 = vunpack.c.h.b16 %v1065
  %v4707 = vunpack.c.l.b16 %v1066
  %v4708 = vunpack.c.h.b16 %v1066
  %v4709 = vunpack.c.l.b16 %v1067
  %v4710 = vunpack.c.h.b16 %v1067
  %v4711 = vunpack.c.l.b16 %v1068
  %v4712 = vunpack.c.h.b16 %v1068
  %v4713 = vunpack.c.l.b16 %v1069
  %v4714 = vunpack.c.h.b16 %v1069
  %v4715 = vunpack.c.l.b16 %v1070
  %v4716 = vunpack.c.h.b16 %v1070
  %v4717 = vunpack.c.l.b16 %v1071
  %v4718 = vunpack.c.h.b16 %v1071
  %v4719 = vunpack.c.l.b16 %v1072
  %v4720 = vunpack.c.h.b16 %v1072
  %v4721 = vunpack.c.l.b16 %v1073
  %v4722 = vunpack.c.h.b16 %v1073
  %v4723 = vunpack.c.l.b16 %v1074
  %v4724 = vunpack.c.h.b16 %v1074
  %v4725 = vunpack.c.l.b16 %v1075
  %v4726 = vunpack.c.h.b16 %v1075
  %v4727 = vunpack.c.l.b16 %v1076
  %v4728 = vunpack.c.h.b16 %v1076
  %v4729 = vunpack.c.l.b16 %v1077
  %v4730 = vunpack.c.h.b16 %v1077
  %v4731 = vunpack.c.l.b16 %v1078
  %v4732 = vunpack.c.h.b16 %v1078
  %v4733 = vunpack.c.l.b16 %v1079
  %v4734 = vunpack.c.h.b16 %v1079
  %v4735 = vunpack.c.l.b16 %v1080
  %v4736 = vunpack.c.h.b16 %v1080
  %v4737 = vunpack.c.l.b16 %v1081
  %v4738 = vunpack.c.h.b16 %v1081
  %v4739 = vunpack.c.l.b16 %v1082
  %v4740 = vunpack.c.h.b16 %v1082
  %v4741 = vunpack.c.l.b16 %v1083
  %v4742 = vunpack.c.h.b16 %v1083
  %v4743 = vunpack.c.l.b16 %v1084
  %v4744 = vunpack.c.h.b16 %v1084
  %v4745 = vunpack.c.l.b16 %v1085
  %v4746 = vunpack.c.h.b16 %v1085
  %v4747 = vunpack.c.l.b16 %v1086
  %v4748 = vunpack.c.h.b16 %v1086
  %v4749 = vunpack.c.l.b16 %v1087
  %v4750 = vunpack.c.h.b16 %v1087
  %v4751 = vunpack.c.l.b16 %v1088
  %v4752 = vunpack.c.h.b16 %v1088
  %v4753 = vunpack.c.l.b16 %v1089
  %v4754 = vunpack.c.h.b16 %v1089
  %v4755 = vunpack.c.l.b16 %v1090
  %v4756 = vunpack.c.h.b16 %v1090
  %v4757 = vunpack.c.l.b16 %v1091
  %v4758 = vunpack.c.h.b16 %v1091
  %v4759 = vunpack.c.l.b16 %v1092
  %v4760 = vunpack.c.h.b16 %v1092
  %v4761 = vunpack.c.l.b16 %v1093
  %v4762 = vunpack.c.h.b16 %v1093
  %v4763 = vunpack.c.l.b16 %v1094
  %v4764 = vunpack.c.h.b16 %v1094
  %v4765 = vunpack.c.l.b16 %v1095
  %v4766 = vunpack.c.h.b16 %v1095
  %v4767 = vunpack.c.l.b16 %v1096
  %v4768 = vunpack.c.h.b16 %v1096
  %v4769 = vunpack.c.l.b16 %v1097
  %v4770 = vunpack.c.h.b16 %v1097
  %v4771 = vunpack.c.l.b16 %v1098
  %v4772 = vunpack.c.h.b16 %v1098
  %v4773 = vunpack.c.l.b16 %v1099
  %v4774 = vunpack.c.h.b16 %v1099
  %v4775 = vunpack.c.l.b16 %v1100
  %v4776 = vunpack.c.h.b16 %v1100
  %v4777 = vunpack.c.l.b16 %v1101
  %v4778 = vunpack.c.h.b16 %v1101
  %v4779 = vunpack.c.l.b16 %v1102
  %v4780 = vunpack.c.h.b16 %v1102
  %v4781 = vunpack.c.l.b16 %v1103
  %v4782 = vunpack.c.h.b16 %v1103
  %v4783 = vunpack.c.l.b16 %v1104
  %v4784 = vunpack.c.h.b16 %v1104
  %v4785 = vunpack.c.l.b16 %v1105
  %v4786 = vunpack.c.h.b16 %v1105
  %v4787 = vunpack.c.l.b16 %v1106
  %v4788 = vunpack.c.h.b16 %v1106
  %v4789 = vunpack.c.l.b16 %v1107
  %v4790 = vunpack.c.h.b16 %v1107
  %v4791 = vunpack.c.l.b16 %v1108
  %v4792 = vunpack.c.h.b16 %v1108
  %v4793 = vunpack.c.l.b16 %v1109
  %v4794 = vunpack.c.h.b16 %v1109
  %v4795 = vunpack.c.l.b16 %v1110
  %v4796 = vunpack.c.h.b16 %v1110
  %v4797 = vunpack.c.l.b16 %v1111
  %v4798 = vunpack.c.h.b16 %v1111
  %v4799 = vunpack.c.l.b16 %v1112
  %v4800 = vunpack.c.h.b16 %v1112
  %v4801 = vunpack.c.l.b16 %v1113
  %v4802 = vunpack.c.h.b16 %v1113
  %v4803 = vunpack.c.l.b16 %v1114
  %v4804 = vunpack.c.h.b16 %v1114
  %v4805 = vunpack.c.l.b16 %v1115
  %v4806 = vunpack.c.h.b16 %v1115
  %v4807 = vunpack.c.l.b16 %v1116
  %v4808 = vunpack.c.h.b16 %v1116
  %v4809 = vunpack.c.l.b16 %v1117
  %v4810 = vunpack.c.h.b16 %v1117
  %v4811 = vunpack.c.l.b16 %v1118
  %v4812 = vunpack.c.h.b16 %v1118
  %v4813 = vunpack.c.l.b16 %v1119
  %v4814 = vunpack.c.h.b16 %v1119
  %v4815 = vunpack.c.l.b16 %v1120
  %v4816 = vunpack.c.h.b16 %v1120
  %v4817 = vunpack.c.l.b16 %v1121
  %v4818 = vunpack.c.h.b16 %v1121
  %v4819 = vunpack.c.l.b16 %v1122
  %v4820 = vunpack.c.h.b16 %v1122
  %v4821 = vunpack.c.l.b16 %v1123
  %v4822 = vunpack.c.h.b16 %v1123
  %v4823 = vunpack.c.l.b16 %v1124
  %v4824 = vunpack.c.h.b16 %v1124
  %v4825 = vunpack.c.l.b16 %v1125
  %v4826 = vunpack.c.h.b16 %v1125
  %v4827 = vunpack.c.l.b16 %v1126
  %v4828 = vunpack.c.h.b16 %v1126
  %v4829 = vunpack.c.l.b16 %v1127
  %v4830 = vunpack.c.h.b16 %v1127
  %v4831 = vunpack.c.l.b16 %v1128
  %v4832 = vunpack.c.h.b16 %v1128
  %v4833 = vunpack.c.l.b16 %v1129
  %v4834 = vunpack.c.h.b16 %v1129
  %v4835 = vunpack.c.l.b16 %v1130
  %v4836 = vunpack.c.h.b16 %v1130
  %v4837 = vunpack.c.l.b16 %v1131
  %v4838 = vunpack.c.h.b16 %v1131
  %v4839 = vunpack.c.l.b16 %v1132
  %v4840 = vunpack.c.h.b16 %v1132
  %v4841 = vunpack.c.l.b16 %v1133
  %v4842 = vunpack.c.h.b16 %v1133
  %v4843 = vunpack.c.l.b16 %v1134
  %v4844 = vunpack.c.h.b16 %v1134
  %v4845 = vunpack.c.l.b16 %v1135
  %v4846 = vunpack.c.h.b16 %v1135
  %v4847 = vunpack.c.l.b16 %v1136
  %v4848 = vunpack.c.h.b16 %v1136
  %v4849 = vunpack.c.l.b16 %v1137
  %v4850 = vunpack.c.h.b16 %v1137
  %v4851 = vunpack.c.l.b16 %v1138
  %v4852 = vunpack.c.h.b16 %v1138
  %v4853 = vunpack.c.l.b16 %v1139
  %v4854 = vunpack.c.h.b16 %v1139
  %v4855 = vunpack.c.l.b16 %v1140
  %v4856 = vunpack.c.h.b16 %v1140
  %v4857 = vunpack.c.l.b16 %v1141
  %v4858 = vunpack.c.h.b16 %v1141
  %v4859 = vunpack.c.l.b16 %v1142
  %v4860 = vunpack.c.h.b16 %v1142
  %v4861 = vunpack.c.l.b16 %v1143
  %v4862 = vunpack.c.h.b16 %v1143
  %v4863 = vunpack.c.l.b16 %v1144
  %v4864 = vunpack.c.h.b16 %v1144
  %v4865 = vunpack.c.l.b16 %v1145
  %v4866 = vunpack.c.h.b16 %v1145
  %v4867 = vunpack.c.l.b16 %v1146
  %v4868 = vunpack.c.h.b16 %v1146
  %v4869 = vunpack.c.l.b16 %v1147
  %v4870 = vunpack.c.h.b16 %v1147
  %v4871 = vunpack.c.l.b16 %v1148
  %v4872 = vunpack.c.h.b16 %v1148
  %v4873 = vunpack.c.l.b16 %v1149
  %v4874 = vunpack.c.h.b16 %v1149
  %v4875 = vunpack.c.l.b16 %v1150
  %v4876 = vunpack.c.h.b16 %v1150
  %v4877 = vunpack.c.l.b16 %v1151
  %v4878 = vunpack.c.h.b16 %v1151
  %v4879 = vunpack.c.l.b16 %v1152
  %v4880 = vunpack.c.h.b16 %v1152
  %v4881 = vunpack.c.l.b16 %v1153
  %v4882 = vunpack.c.h.b16 %v1153
  %v4883 = vunpack.c.l.b16 %v1154
  %v4884 = vunpack.c.h.b16 %v1154
  %v4885 = vunpack.c.l.b16 %v1155
  %v4886 = vunpack.c.h.b16 %v1155
  %v4887 = vunpack.c.l.b16 %v1156
  %v4888 = vunpack.c.h.b16 %v1156
  %v4889 = vunpack.c.l.b16 %v1157
  %v4890 = vunpack.c.h.b16 %v1157
  %v4891 = vunpack.c.l.b16 %v1158
  %v4892 = vunpack.c.h.b16 %v1158
  %v4893 = vunpack.c.l.b16 %v1159
  %v4894 = vunpack.c.h.b16 %v1159
  %v4895 = vunpack.c.l.b16 %v1160
  %v4896 = vunpack.c.h.b16 %v1160
  %v4897 = vunpack.c.l.b16 %v1161
  %v4898 = vunpack.c.h.b16 %v1161
  %v4899 = vunpack.c.l.b16 %v1162
  %v4900 = vunpack.c.h.b16 %v1162
  %v4901 = vunpack.c.l.b16 %v1163
  %v4902 = vunpack.c.h.b16 %v1163
  %v4903 = vunpack.c.l.b16 %v1164
  %v4904 = vunpack.c.h.b16 %v1164
  %v4905 = vunpack.c.l.b16 %v1165
  %v4906 = vunpack.c.h.b16 %v1165
  %v4907 = vunpack.c.l.b16 %v1166
  %v4908 = vunpack.c.h.b16 %v1166
  %v4909 = vunpack.c.l.b16 %v1167
  %v4910 = vunpack.c.h.b16 %v1167
  %v4911 = vunpack.c.l.b16 %v1168
  %v4912 = vunpack.c.h.b16 %v1168
  %v4913 = vunpack.c.l.b16 %v1169
  %v4914 = vunpack.c.h.b16 %v1169
  %v4915 = vunpack.c.l.b16 %v1170
  %v4916 = vunpack.c.h.b16 %v1170
  %v4917 = vunpack.c.l.b16 %v1171
  %v4918 = vunpack.c.h.b16 %v1171
  %v4919 = vunpack.c.l.b16 %v1172
  %v4920 = vunpack.c.h.b16 %v1172
  %v4921 = vunpack.c.l.b16 %v1173
  %v4922 = vunpack.c.h.b16 %v1173
  %v4923 = vunpack.c.l.b16 %v1174
  %v4924 = vunpack.c.h.b16 %v1174
  %v4925 = vunpack.c.l.b16 %v1175
  %v4926 = vunpack.c.h.b16 %v1175
  %v4927 = vunpack.c.l.b16 %v1176
  %v4928 = vunpack.c.h.b16 %v1176
  %v4929 = vunpack.c.l.b16 %v1177
  %v4930 = vunpack.c.h.b16 %v1177
  %v4931 = vunpack.c.l.b16 %v1178
  %v4932 = vunpack.c.h.b16 %v1178
  %v4933 = vpack.c.b16 %v2893, %v2885
  %v4934 = vpack.c.b16 %v2894, %v2886
  %v4935 = vpack.c.b16 %v2895, %v2887
  %v4936 = vpack.c.b16 %v2896, %v2888
  %v4937 = vpack.c.b16 %v2897, %v2889
  %v4938 = vpack.c.b16 %v2898, %v2890
  %v4939 = vpack.c.b16 %v2899, %v2891
  %v4940 = vpack.c.b16 %v2900, %v2892
  %v4941 = vpack.c.b16 %v2909, %v2901
  %v4942 = vpack.c.b16 %v2910, %v2902
  %v4943 = vpack.c.b16 %v2911, %v2903
  %v4944 = vpack.c.b16 %v2912, %v2904
  %v4945 = vpack.c.b16 %v2913, %v2905
  %v4946 = vpack.c.b16 %v2914, %v2906
  %v4947 = vpack.c.b16 %v2915, %v2907
  %v4948 = vpack.c.b16 %v2916, %v2908
  %v4949 = vpack.c.b16 %v2925, %v2917
  %v4950 = vpack.c.b16 %v2926, %v2918
  %v4951 = vpack.c.b16 %v2927, %v2919
  %v4952 = vpack.c.b16 %v2928, %v2920
  %v4953 = vpack.c.b16 %v2929, %v2921
  %v4954 = vpack.c.b16 %v2930, %v2922
  %v4955 = vpack.c.b16 %v2931, %v2923
  %v4956 = vpack.c.b16 %v2932, %v2924
  %v4957 = vpack.c.b16 %v2941, %v2933
  %v4958 = vpack.c.b16 %v2942, %v2934
  %v4959 = vpack.c.b16 %v2943, %v2935
  %v4960 = vpack.c.b16 %v2944, %v2936
  %v4961 = vpack.c.b16 %v2945, %v2937
  %v4962 = vpack.c.b16 %v2946, %v2938
  %v4963 = vpack.c.b16 %v2947, %v2939
  %v4964 = vpack.c.b16 %v2948, %v2940
  %v4965 = vpack.c.b16 %v2957, %v2949
  %v4966 = vpack.c.b16 %v2958, %v2950
  %v4967 = vpack.c.b16 %v2959, %v2951
  %v4968 = vpack.c.b16 %v2960, %v2952
  %v4969 = vpack.c.b16 %v2961, %v2953
  %v4970 = vpack.c.b16 %v2962, %v2954
  %v4971 = vpack.c.b16 %v2963, %v2955
  %v4972 = vpack.c.b16 %v2964, %v2956
  %v4973 = vpack.c.b16 %v2973, %v2965
  %v4974 = vpack.c.b16 %v2974, %v2966
  %v4975 = vpack.c.b16 %v2975, %v2967
  %v4976 = vpack.c.b16 %v2976, %v2968
  %v4977 = vpack.c.b16 %v2977, %v2969
  %v4978 = vpack.c.b16 %v2978, %v2970
  %v4979 = vpack.c.b16 %v2979, %v2971
  %v4980 = vpack.c.b16 %v2980, %v2972
  %v4981 = vpack.c.b16 %v2989, %v2981
  %v4982 = vpack.c.b16 %v2990, %v2982
  %v4983 = vpack.c.b16 %v2991, %v2983
  %v4984 = vpack.c.b16 %v2992, %v2984
  %v4985 = vpack.c.b16 %v2993, %v2985
  %v4986 = vpack.c.b16 %v2994, %v2986
  %v4987 = vpack.c.b16 %v2995, %v2987
  %v4988 = vpack.c.b16 %v2996, %v2988
  %v4989 = vpack.c.b16 %v3005, %v2997
  %v4990 = vpack.c.b16 %v3006, %v2998
  %v4991 = vpack.c.b16 %v3007, %v2999
  %v4992 = vpack.c.b16 %v3008, %v3000
  %v4993 = vpack.c.b16 %v3009, %v3001
  %v4994 = vpack.c.b16 %v3010, %v3002
  %v4995 = vpack.c.b16 %v3011, %v3003
  %v4996 = vpack.c.b16 %v3012, %v3004
  %v4997 = vpack.c.b16 %v3021, %v3013
  %v4998 = vpack.c.b16 %v3022, %v3014
  %v4999 = vpack.c.b16 %v3023, %v3015
  %v5000 = vpack.c.b16 %v3024, %v3016
  %v5001 = vpack.c.b16 %v3025, %v3017
  %v5002 = vpack.c.b16 %v3026, %v3018
  %v5003 = vpack.c.b16 %v3027, %v3019
  %v5004 = vpack.c.b16 %v3028, %v3020
  %v5005 = vpack.c.b16 %v3037, %v3029
  %v5006 = vpack.c.b16 %v3038, %v3030
  %v5007 = vpack.c.b16 %v3039, %v3031
  %v5008 = vpack.c.b16 %v3040, %v3032
  %v5009 = vpack.c.b16 %v3041, %v3033
  %v5010 = vpack.c.b16 %v3042, %v3034
  %v5011 = vpack.c.b16 %v3043, %v3035
  %v5012 = vpack.c.b16 %v3044, %v3036
  %v5013 = vpack.c.b16 %v3053, %v3045
  %v5014 = vpack.c.b16 %v3054, %v3046
  %v5015 = vpack.c.b16 %v3055, %v3047
  %v5016 = vpack.c.b16 %v3056, %v3048
  %v5017 = vpack.c.b16 %v3057, %v3049
  %v5018 = vpack.c.b16 %v3058, %v3050
  %v5019 = vpack.c.b16 %v3059, %v3051
  %v5020 = vpack.c.b16 %v3060, %v3052
  %v5021 = vpack.c.b16 %v3069, %v3061
  %v5022 = vpack.c.b16 %v3070, %v3062
  %v5023 = vpack.c.b16 %v3071, %v3063
  %v5024 = vpack.c.b16 %v3072, %v3064
  %v5025 = vpack.c.b16 %v3073, %v3065
  %v5026 = vpack.c.b16 %v3074, %v3066
  %v5027 = vpack.c.b16 %v3075, %v3067
  %v5028 = vpack.c.b16 %v3076, %v3068
  %v5029 = vpack.c.b16 %v3085, %v3077
  %v5030 = vpack.c.b16 %v3086, %v3078
  %v5031 = vpack.c.b16 %v3087, %v3079
  %v5032 = vpack.c.b16 %v3088, %v3080
  %v5033 = vpack.c.b16 %v3089, %v3081
  %v5034 = vpack.c.b16 %v3090, %v3082
  %v5035 = vpack.c.b16 %v3091, %v3083
  %v5036 = vpack.c.b16 %v3092, %v3084
  %v5037 = vpack.c.b16 %v3101, %v3093
  %v5038 = vpack.c.b16 %v3102, %v3094
  %v5039 = vpack.c.b16 %v3103, %v3095
  %v5040 = vpack.c.b16 %v3104, %v3096
  %v5041 = vpack.c.b16 %v3105, %v3097
  %v5042 = vpack.c.b16 %v3106, %v3098
  %v5043 = vpack.c.b16 %v3107, %v3099
  %v5044 = vpack.c.b16 %v3108, %v3100
  %v5045 = vpack.c.b16 %v3117, %v3109
  %v5046 = vpack.c.b16 %v3118, %v3110
  %v5047 = vpack.c.b16 %v3119, %v3111
  %v5048 = vpack.c.b16 %v3120, %v3112
  %v5049 = vpack.c.b16 %v3121, %v3113
  %v5050 = vpack.c.b16 %v3122, %v3114
  %v5051 = vpack.c.b16 %v3123, %v3115
  %v5052 = vpack.c.b16 %v3124, %v3116
  %v5053 = vpack.c.b16 %v3133, %v3125
  %v5054 = vpack.c.b16 %v3134, %v3126
  %v5055 = vpack.c.b16 %v3135, %v3127
  %v5056 = vpack.c.b16 %v3136, %v3128
  %v5057 = vpack.c.b16 %v3137, %v3129
  %v5058 = vpack.c.b16 %v3138, %v3130
  %v5059 = vpack.c.b16 %v3139, %v3131
  %v5060 = vpack.c.b16 %v3140, %v3132
  %v5061 = vpack.c.b16 %v3149, %v3141
  %v5062 = vpack.c.b16 %v3150, %v3142
  %v5063 = vpack.c.b16 %v3151, %v3143
  %v5064 = vpack.c.b16 %v3152, %v3144
  %v5065 = vpack.c.b16 %v3153, %v3145
  %v5066 = vpack.c.b16 %v3154, %v3146
  %v5067 = vpack.c.b16 %v3155, %v3147
  %v5068 = vpack.c.b16 %v3156, %v3148
  %v5069 = vpack.c.b16 %v3165, %v3157
  %v5070 = vpack.c.b16 %v3166, %v3158
  %v5071 = vpack.c.b16 %v3167, %v3159
  %v5072 = vpack.c.b16 %v3168, %v3160
  %v5073 = vpack.c.b16 %v3169, %v3161
  %v5074 = vpack.c.b16 %v3170, %v3162
  %v5075 = vpack.c.b16 %v3171, %v3163
  %v5076 = vpack.c.b16 %v3172, %v3164
  %v5077 = vpack.c.b16 %v3181, %v3173
  %v5078 = vpack.c.b16 %v3182, %v3174
  %v5079 = vpack.c.b16 %v3183, %v3175
  %v5080 = vpack.c.b16 %v3184, %v3176
  %v5081 = vpack.c.b16 %v3185, %v3177
  %v5082 = vpack.c.b16 %v3186, %v3178
  %v5083 = vpack.c.b16 %v3187, %v3179
  %v5084 = vpack.c.b16 %v3188, %v3180
  %v5085 = vpack.c.b16 %v3197, %v3189
  %v5086 = vpack.c.b16 %v3198, %v3190
  %v5087 = vpack.c.b16 %v3199, %v3191
  %v5088 = vpack.c.b16 %v3200, %v3192
  %v5089 = vpack.c.b16 %v3201, %v3193
  %v5090 = vpack.c.b16 %v3202, %v3194
  %v5091 = vpack.c.b16 %v3203, %v3195
  %v5092 = vpack.c.b16 %v3204, %v3196
  %v5093 = vpack.c.b16 %v3213, %v3205
  %v5094 = vpack.c.b16 %v3214, %v3206
  %v5095 = vpack.c.b16 %v3215, %v3207
  %v5096 = vpack.c.b16 %v3216, %v3208
  %v5097 = vpack.c.b16 %v3217, %v3209
  %v5098 = vpack.c.b16 %v3218, %v3210
  %v5099 = vpack.c.b16 %v3219, %v3211
  %v5100 = vpack.c.b16 %v3220, %v3212
  %v5101 = vpack.c.b16 %v3229, %v3221
  %v5102 = vpack.c.b16 %v3230, %v3222
  %v5103 = vpack.c.b16 %v3231, %v3223
  %v5104 = vpack.c.b16 %v3232, %v3224
  %v5105 = vpack.c.b16 %v3233, %v3225
  %v5106 = vpack.c.b16 %v3234, %v3226
  %v5107 = vpack.c.b16 %v3235, %v3227
  %v5108 = vpack.c.b16 %v3236, %v3228
  %v5109 = vpack.c.b16 %v3245, %v3237
  %v5110 = vpack.c.b16 %v3246, %v3238
  %v5111 = vpack.c.b16 %v3247, %v3239
  %v5112 = vpack.c.b16 %v3248, %v3240
  %v5113 = vpack.c.b16 %v3249, %v3241
  %v5114 = vpack.c.b16 %v3250, %v3242
  %v5115 = vpack.c.b16 %v3251, %v3243
  %v5116 = vpack.c.b16 %v3252, %v3244
  %v5117 = vpack.c.b16 %v3261, %v3253
  %v5118 = vpack.c.b16 %v3262, %v3254
  %v5119 = vpack.c.b16 %v3263, %v3255
  %v5120 = vpack.c.b16 %v3264, %v3256
  %v5121 = vpack.c.b16 %v3265, %v3257
  %v5122 = vpack.c.b16 %v3266, %v3258
  %v5123 = vpack.c.b16 %v3267, %v3259
  %v5124 = vpack.c.b16 %v3268, %v3260
  %v5125 = vpack.c.b16 %v3277, %v3269
  %v5126 = vpack.c.b16 %v3278, %v3270
  %v5127 = vpack.c.b16 %v3279, %v3271
  %v5128 = vpack.c.b16 %v3280, %v3272
  %v5129 = vpack.c.b16 %v3281, %v3273
  %v5130 = vpack.c.b16 %v3282, %v3274
  %v5131 = vpack.c.b16 %v3283, %v3275
  %v5132 = vpack.c.b16 %v3284, %v3276
  %v5133 = vpack.c.b16 %v3293, %v3285
  %v5134 = vpack.c.b16 %v3294, %v3286
  %v5135 = vpack.c.b16 %v3295, %v3287
  %v5136 = vpack.c.b16 %v3296, %v3288
  %v5137 = vpack.c.b16 %v3297, %v3289
  %v5138 = vpack.c.b16 %v3298, %v3290
  %v5139 = vpack.c.b16 %v3299, %v3291
  %v5140 = vpack.c.b16 %v3300, %v3292
  %v5141 = vpack.c.b16 %v3309, %v3301
  %v5142 = vpack.c.b16 %v3310, %v3302
  %v5143 = vpack.c.b16 %v3311, %v3303
  %v5144 = vpack.c.b16 %v3312, %v3304
  %v5145 = vpack.c.b16 %v3313, %v3305
  %v5146 = vpack.c.b16 %v3314, %v3306
  %v5147 = vpack.c.b16 %v3315, %v3307
  %v5148 = vpack.c.b16 %v3316, %v3308
  %v5149 = vpack.c.b16 %v3325, %v3317
  %v5150 = vpack.c.b16 %v3326, %v3318
  %v5151 = vpack.c.b16 %v3327, %v3319
  %v5152 = vpack.c.b16 %v3328, %v3320
  %v5153 = vpack.c.b16 %v3329, %v3321
  %v5154 = vpack.c.b16 %v3330, %v3322
  %v5155 = vpack.c.b16 %v3331, %v3323
  %v5156 = vpack.c.b16 %v3332, %v3324
  %v5157 = vpack.c.b16 %v3341, %v3333
  %v5158 = vpack.c.b16 %v3342, %v3334
  %v5159 = vpack.c.b16 %v3343, %v3335
  %v5160 = vpack.c.b16 %v3344, %v3336
  %v5161 = vpack.c.b16 %v3345, %v3337
  %v5162 = vpack.c.b16 %v3346, %v3338
  %v5163 = vpack.c.b16 %v3347, %v3339
  %v5164 = vpack.c.b16 %v3348, %v3340
  %v5165 = vpack.c.b16 %v3357, %v3349
  %v5166 = vpack.c.b16 %v3358, %v3350
  %v5167 = vpack.c.b16 %v3359, %v3351
  %v5168 = vpack.c.b16 %v3360, %v3352
  %v5169 = vpack.c.b16 %v3361, %v3353
  %v5170 = vpack.c.b16 %v3362, %v3354
  %v5171 = vpack.c.b16 %v3363, %v3355
  %v5172 = vpack.c.b16 %v3364, %v3356
  %v5173 = vpack.c.b16 %v3373, %v3365
  %v5174 = vpack.c.b16 %v3374, %v3366
  %v5175 = vpack.c.b16 %v3375, %v3367
  %v5176 = vpack.c.b16 %v3376, %v3368
  %v5177 = vpack.c.b16 %v3377, %v3369
  %v5178 = vpack.c.b16 %v3378, %v3370
  %v5179 = vpack.c.b16 %v3379, %v3371
  %v5180 = vpack.c.b16 %v3380, %v3372
  %v5181 = vpack.c.b16 %v3389, %v3381
  %v5182 = vpack.c.b16 %v3390, %v3382
  %v5183 = vpack.c.b16 %v3391, %v3383
  %v5184 = vpack.c.b16 %v3392, %v3384
  %v5185 = vpack.c.b16 %v3393, %v3385
  %v5186 = vpack.c.b16 %v3394, %v3386
  %v5187 = vpack.c.b16 %v3395, %v3387
  %v5188 = vpack.c.b16 %v3396, %v3388
  %v5189 = vpack.c.b16 %v3405, %v3397
  %v5190 = vpack.c.b16 %v3406, %v3398
  %v5191 = vpack.c.b16 %v3407, %v3399
  %v5192 = vpack.c.b16 %v3408, %v3400
  %v5193 = vpack.c.b16 %v3409, %v3401
  %v5194 = vpack.c.b16 %v3410, %v3402
  %v5195 = vpack.c.b16 %v3411, %v3403
  %v5196 = vpack.c.b16 %v3412, %v3404
  %v5197 = vpack.c.b16 %v3421, %v3413
  %v5198 = vpack.c.b16 %v3422, %v3414
  %v5199 = vpack.c.b16 %v3423, %v3415
  %v5200 = vpack.c.b16 %v3424, %v3416
  %v5201 = vpack.c.b16 %v3425, %v3417
  %v5202 = vpack.c.b16 %v3426, %v3418
  %v5203 = vpack.c.b16 %v3427, %v3419
  %v5204 = vpack.c.b16 %v3428, %v3420
  %v5205 = vpack.c.b16 %v3437, %v3429
  %v5206 = vpack.c.b16 %v3438, %v3430
  %v5207 = vpack.c.b16 %v3439, %v3431
  %v5208 = vpack.c.b16 %v3440, %v3432
  %v5209 = vpack.c.b16 %v3441, %v3433
  %v5210 = vpack.c.b16 %v3442, %v3434
  %v5211 = vpack.c.b16 %v3443, %v3435
  %v5212 = vpack.c.b16 %v3444, %v3436
  %v5213 = vpack.c.b16 %v3453, %v3445
  %v5214 = vpack.c.b16 %v3454, %v3446
  %v5215 = vpack.c.b16 %v3455, %v3447
  %v5216 = vpack.c.b16 %v3456, %v3448
  %v5217 = vpack.c.b16 %v3457, %v3449
  %v5218 = vpack.c.b16 %v3458, %v3450
  %v5219 = vpack.c.b16 %v3459, %v3451
  %v5220 = vpack.c.b16 %v3460, %v3452
  %v5221 = vpack.c.b16 %v3469, %v3461
  %v5222 = vpack.c.b16 %v3470, %v3462
  %v5223 = vpack.c.b16 %v3471, %v3463
  %v5224 = vpack.c.b16 %v3472, %v3464
  %v5225 = vpack.c.b16 %v3473, %v3465
  %v5226 = vpack.c.b16 %v3474, %v3466
  %v5227 = vpack.c.b16 %v3475, %v3467
  %v5228 = vpack.c.b16 %v3476, %v3468
  %v5229 = vpack.c.b16 %v3485, %v3477
  %v5230 = vpack.c.b16 %v3486, %v3478
  %v5231 = vpack.c.b16 %v3487, %v3479
  %v5232 = vpack.c.b16 %v3488, %v3480
  %v5233 = vpack.c.b16 %v3489, %v3481
  %v5234 = vpack.c.b16 %v3490, %v3482
  %v5235 = vpack.c.b16 %v3491, %v3483
  %v5236 = vpack.c.b16 %v3492, %v3484
  %v5237 = vpack.c.b16 %v3501, %v3493
  %v5238 = vpack.c.b16 %v3502, %v3494
  %v5239 = vpack.c.b16 %v3503, %v3495
  %v5240 = vpack.c.b16 %v3504, %v3496
  %v5241 = vpack.c.b16 %v3505, %v3497
  %v5242 = vpack.c.b16 %v3506, %v3498
  %v5243 = vpack.c.b16 %v3507, %v3499
  %v5244 = vpack.c.b16 %v3508, %v3500
  %v5245 = vpack.c.b16 %v3517, %v3509
  %v5246 = vpack.c.b16 %v3518, %v3510
  %v5247 = vpack.c.b16 %v3519, %v3511
  %v5248 = vpack.c.b16 %v3520, %v3512
  %v5249 = vpack.c.b16 %v3521, %v3513
  %v5250 = vpack.c.b16 %v3522, %v3514
  %v5251 = vpack.c.b16 %v3523, %v3515
  %v5252 = vpack.c.b16 %v3524, %v3516
  %v5253 = vpack.c.b16 %v3533, %v3525
  %v5254 = vpack.c.b16 %v3534, %v3526
  %v5255 = vpack.c.b16 %v3535, %v3527
  %v5256 = vpack.c.b16 %v3536, %v3528
  %v5257 = vpack.c.b16 %v3537, %v3529
  %v5258 = vpack.c.b16 %v3538, %v3530
  %v5259 = vpack.c.b16 %v3539, %v3531
  %v5260 = vpack.c.b16 %v3540, %v3532
  %v5261 = vpack.c.b16 %v3549, %v3541
  %v5262 = vpack.c.b16 %v3550, %v3542
  %v5263 = vpack.c.b16 %v3551, %v3543
  %v5264 = vpack.c.b16 %v3552, %v3544
  %v5265 = vpack.c.b16 %v3553, %v3545
  %v5266 = vpack.c.b16 %v3554, %v3546
  %v5267 = vpack.c.b16 %v3555, %v3547
  %v5268 = vpack.c.b16 %v3556, %v3548
  %v5269 = vpack.c.b16 %v3565, %v3557
  %v5270 = vpack.c.b16 %v3566, %v3558
  %v5271 = vpack.c.b16 %v3567, %v3559
  %v5272 = vpack.c.b16 %v3568, %v3560
  %v5273 = vpack.c.b16 %v3569, %v3561
  %v5274 = vpack.c.b16 %v3570, %v3562
  %v5275 = vpack.c.b16 %v3571, %v3563
  %v5276 = vpack.c.b16 %v3572, %v3564
  %v5277 = vpack.c.b16 %v3581, %v3573
  %v5278 = vpack.c.b16 %v3582, %v3574
  %v5279 = vpack.c.b16 %v3583, %v3575
  %v5280 = vpack.c.b16 %v3584, %v3576
  %v5281 = vpack.c.b16 %v3585, %v3577
  %v5282 = vpack.c.b16 %v3586, %v3578
  %v5283 = vpack.c.b16 %v3587, %v3579
  %v5284 = vpack.c.b16 %v3588, %v3580
  %v5285 = vpack.c.b16 %v3597, %v3589
  %v5286 = vpack.c.b16 %v3598, %v3590
  %v5287 = vpack.c.b16 %v3599, %v3591
  %v5288 = vpack.c.b16 %v3600, %v3592
  %v5289 = vpack.c.b16 %v3601, %v3593
  %v5290 = vpack.c.b16 %v3602, %v3594
  %v5291 = vpack.c.b16 %v3603, %v3595
  %v5292 = vpack.c.b16 %v3604, %v3596
  %v5293 = vpack.c.b16 %v3613, %v3605
  %v5294 = vpack.c.b16 %v3614, %v3606
  %v5295 = vpack.c.b16 %v3615, %v3607
  %v5296 = vpack.c.b16 %v3616, %v3608
  %v5297 = vpack.c.b16 %v3617, %v3609
  %v5298 = vpack.c.b16 %v3618, %v3610
  %v5299 = vpack.c.b16 %v3619, %v3611
  %v5300 = vpack.c.b16 %v3620, %v3612
  %v5301 = vpack.c.b16 %v3629, %v3621
  %v5302 = vpack.c.b16 %v3630, %v3622
  %v5303 = vpack.c.b16 %v3631, %v3623
  %v5304 = vpack.c.b16 %v3632, %v3624
  %v5305 = vpack.c.b16 %v3633, %v3625
  %v5306 = vpack.c.b16 %v3634, %v3626
  %v5307 = vpack.c.b16 %v3635, %v3627
  %v5308 = vpack.c.b16 %v3636, %v3628
  %v5309 = vpack.c.b16 %v3645, %v3637
  %v5310 = vpack.c.b16 %v3646, %v3638
  %v5311 = vpack.c.b16 %v3647, %v3639
  %v5312 = vpack.c.b16 %v3648, %v3640
  %v5313 = vpack.c.b16 %v3649, %v3641
  %v5314 = vpack.c.b16 %v3650, %v3642
  %v5315 = vpack.c.b16 %v3651, %v3643
  %v5316 = vpack.c.b16 %v3652, %v3644
  %v5317 = vpack.c.b16 %v3661, %v3653
  %v5318 = vpack.c.b16 %v3662, %v3654
  %v5319 = vpack.c.b16 %v3663, %v3655
  %v5320 = vpack.c.b16 %v3664, %v3656
  %v5321 = vpack.c.b16 %v3665, %v3657
  %v5322 = vpack.c.b16 %v3666, %v3658
  %v5323 = vpack.c.b16 %v3667, %v3659
  %v5324 = vpack.c.b16 %v3668, %v3660
  %v5325 = vpack.c.b16 %v3677, %v3669
  %v5326 = vpack.c.b16 %v3678, %v3670
  %v5327 = vpack.c.b16 %v3679, %v3671
  %v5328 = vpack.c.b16 %v3680, %v3672
  %v5329 = vpack.c.b16 %v3681, %v3673
  %v5330 = vpack.c.b16 %v3682, %v3674
  %v5331 = vpack.c.b16 %v3683, %v3675
  %v5332 = vpack.c.b16 %v3684, %v3676
  %v5333 = vpack.c.b16 %v3693, %v3685
  %v5334 = vpack.c.b16 %v3694, %v3686
  %v5335 = vpack.c.b16 %v3695, %v3687
  %v5336 = vpack.c.b16 %v3696, %v3688
  %v5337 = vpack.c.b16 %v3697, %v3689
  %v5338 = vpack.c.b16 %v3698, %v3690
  %v5339 = vpack.c.b16 %v3699, %v3691
  %v5340 = vpack.c.b16 %v3700, %v3692
  %v5341 = vpack.c.b16 %v3709, %v3701
  %v5342 = vpack.c.b16 %v3710, %v3702
  %v5343 = vpack.c.b16 %v3711, %v3703
  %v5344 = vpack.c.b16 %v3712, %v3704
  %v5345 = vpack.c.b16 %v3713, %v3705
  %v5346 = vpack.c.b16 %v3714, %v3706
  %v5347 = vpack.c.b16 %v3715, %v3707
  %v5348 = vpack.c.b16 %v3716, %v3708
  %v5349 = vpack.c.b16 %v3725, %v3717
  %v5350 = vpack.c.b16 %v3726, %v3718
  %v5351 = vpack.c.b16 %v3727, %v3719
  %v5352 = vpack.c.b16 %v3728, %v3720
  %v5353 = vpack.c.b16 %v3729, %v3721
  %v5354 = vpack.c.b16 %v3730, %v3722
  %v5355 = vpack.c.b16 %v3731, %v3723
  %v5356 = vpack.c.b16 %v3732, %v3724
  %v5357 = vpack.c.b16 %v3741, %v3733
  %v5358 = vpack.c.b16 %v3742, %v3734
  %v5359 = vpack.c.b16 %v3743, %v3735
  %v5360 = vpack.c.b16 %v3744, %v3736
  %v5361 = vpack.c.b16 %v3745, %v3737
  %v5362 = vpack.c.b16 %v3746, %v3738
  %v5363 = vpack.c.b16 %v3747, %v3739
  %v5364 = vpack.c.b16 %v3748, %v3740
  %v5365 = vpack.c.b16 %v3757, %v3749
  %v5366 = vpack.c.b16 %v3758, %v3750
  %v5367 = vpack.c.b16 %v3759, %v3751
  %v5368 = vpack.c.b16 %v3760, %v3752
  %v5369 = vpack.c.b16 %v3761, %v3753
  %v5370 = vpack.c.b16 %v3762, %v3754
  %v5371 = vpack.c.b16 %v3763, %v3755
  %v5372 = vpack.c.b16 %v3764, %v3756
  %v5373 = vpack.c.b16 %v3773, %v3765
  %v5374 = vpack.c.b16 %v3774, %v3766
  %v5375 = vpack.c.b16 %v3775, %v3767
  %v5376 = vpack.c.b16 %v3776, %v3768
  %v5377 = vpack.c.b16 %v3777, %v3769
  %v5378 = vpack.c.b16 %v3778, %v3770
  %v5379 = vpack.c.b16 %v3779, %v3771
  %v5380 = vpack.c.b16 %v3780, %v3772
  %v5381 = vpack.c.b16 %v3789, %v3781
  %v5382 = vpack.c.b16 %v3790, %v3782
  %v5383 = vpack.c.b16 %v3791, %v3783
  %v5384 = vpack.c.b16 %v3792, %v3784
  %v5385 = vpack.c.b16 %v3793, %v3785
  %v5386 = vpack.c.b16 %v3794, %v3786
  %v5387 = vpack.c.b16 %v3795, %v3787
  %v5388 = vpack.c.b16 %v3796, %v3788
  %v5389 = vpack.c.b16 %v3805, %v3797
  %v5390 = vpack.c.b16 %v3806, %v3798
  %v5391 = vpack.c.b16 %v3807, %v3799
  %v5392 = vpack.c.b16 %v3808, %v3800
  %v5393 = vpack.c.b16 %v3809, %v3801
  %v5394 = vpack.c.b16 %v3810, %v3802
  %v5395 = vpack.c.b16 %v3811, %v3803
  %v5396 = vpack.c.b16 %v3812, %v3804
  %v5397 = vpack.c.b16 %v3821, %v3813
  %v5398 = vpack.c.b16 %v3822, %v3814
  %v5399 = vpack.c.b16 %v3823, %v3815
  %v5400 = vpack.c.b16 %v3824, %v3816
  %v5401 = vpack.c.b16 %v3825, %v3817
  %v5402 = vpack.c.b16 %v3826, %v3818
  %v5403 = vpack.c.b16 %v3827, %v3819
  %v5404 = vpack.c.b16 %v3828, %v3820
  %v5405 = vpack.c.b16 %v3837, %v3829
  %v5406 = vpack.c.b16 %v3838, %v3830
  %v5407 = vpack.c.b16 %v3839, %v3831
  %v5408 = vpack.c.b16 %v3840, %v3832
  %v5409 = vpack.c.b16 %v3841, %v3833
  %v5410 = vpack.c.b16 %v3842, %v3834
  %v5411 = vpack.c.b16 %v3843, %v3835
  %v5412 = vpack.c.b16 %v3844, %v3836
  %v5413 = vpack.c.b16 %v3853, %v3845
  %v5414 = vpack.c.b16 %v3854, %v3846
  %v5415 = vpack.c.b16 %v3855, %v3847
  %v5416 = vpack.c.b16 %v3856, %v3848
  %v5417 = vpack.c.b16 %v3857, %v3849
  %v5418 = vpack.c.b16 %v3858, %v3850
  %v5419 = vpack.c.b16 %v3859, %v3851
  %v5420 = vpack.c.b16 %v3860, %v3852
  %v5421 = vpack.c.b16 %v3869, %v3861
  %v5422 = vpack.c.b16 %v3870, %v3862
  %v5423 = vpack.c.b16 %v3871, %v3863
  %v5424 = vpack.c.b16 %v3872, %v3864
  %v5425 = vpack.c.b16 %v3873, %v3865
  %v5426 = vpack.c.b16 %v3874, %v3866
  %v5427 = vpack.c.b16 %v3875, %v3867
  %v5428 = vpack.c.b16 %v3876, %v3868
  %v5429 = vpack.c.b16 %v3885, %v3877
  %v5430 = vpack.c.b16 %v3886, %v3878
  %v5431 = vpack.c.b16 %v3887, %v3879
  %v5432 = vpack.c.b16 %v3888, %v3880
  %v5433 = vpack.c.b16 %v3889, %v3881
  %v5434 = vpack.c.b16 %v3890, %v3882
  %v5435 = vpack.c.b16 %v3891, %v3883
  %v5436 = vpack.c.b16 %v3892, %v3884
  %v5437 = vpack.c.b16 %v3901, %v3893
  %v5438 = vpack.c.b16 %v3902, %v3894
  %v5439 = vpack.c.b16 %v3903, %v3895
  %v5440 = vpack.c.b16 %v3904, %v3896
  %v5441 = vpack.c.b16 %v3905, %v3897
  %v5442 = vpack.c.b16 %v3906, %v3898
  %v5443 = vpack.c.b16 %v3907, %v3899
  %v5444 = vpack.c.b16 %v3908, %v3900
  %v5445 = vpack.c.b16 %v3917, %v3909
  %v5446 = vpack.c.b16 %v3918, %v3910
  %v5447 = vpack.c.b16 %v3919, %v3911
  %v5448 = vpack.c.b16 %v3920, %v3912
  %v5449 = vpack.c.b16 %v3921, %v3913
  %v5450 = vpack.c.b16 %v3922, %v3914
  %v5451 = vpack.c.b16 %v3923, %v3915
  %v5452 = vpack.c.b16 %v3924, %v3916
  %v5453 = vpack.c.b16 %v3933, %v3925
  %v5454 = vpack.c.b16 %v3934, %v3926
  %v5455 = vpack.c.b16 %v3935, %v3927
  %v5456 = vpack.c.b16 %v3936, %v3928
  %v5457 = vpack.c.b16 %v3937, %v3929
  %v5458 = vpack.c.b16 %v3938, %v3930
  %v5459 = vpack.c.b16 %v3939, %v3931
  %v5460 = vpack.c.b16 %v3940, %v3932
  %v5461 = vpack.c.b16 %v3949, %v3941
  %v5462 = vpack.c.b16 %v3950, %v3942
  %v5463 = vpack.c.b16 %v3951, %v3943
  %v5464 = vpack.c.b16 %v3952, %v3944
  %v5465 = vpack.c.b16 %v3953, %v3945
  %v5466 = vpack.c.b16 %v3954, %v3946
  %v5467 = vpack.c.b16 %v3955, %v3947
  %v5468 = vpack.c.b16 %v3956, %v3948
  %v5469 = vpack.c.b16 %v3965, %v3957
  %v5470 = vpack.c.b16 %v3966, %v3958
  %v5471 = vpack.c.b16 %v3967, %v3959
  %v5472 = vpack.c.b16 %v3968, %v3960
  %v5473 = vpack.c.b16 %v3969, %v3961
  %v5474 = vpack.c.b16 %v3970, %v3962
  %v5475 = vpack.c.b16 %v3971, %v3963
  %v5476 = vpack.c.b16 %v3972, %v3964
  %v5477 = vpack.c.b16 %v3981, %v3973
  %v5478 = vpack.c.b16 %v3982, %v3974
  %v5479 = vpack.c.b16 %v3983, %v3975
  %v5480 = vpack.c.b16 %v3984, %v3976
  %v5481 = vpack.c.b16 %v3985, %v3977
  %v5482 = vpack.c.b16 %v3986, %v3978
  %v5483 = vpack.c.b16 %v3987, %v3979
  %v5484 = vpack.c.b16 %v3988, %v3980
  %v5485 = vpack.c.b16 %v3997, %v3989
  %v5486 = vpack.c.b16 %v3998, %v3990
  %v5487 = vpack.c.b16 %v3999, %v3991
  %v5488 = vpack.c.b16 %v4000, %v3992
  %v5489 = vpack.c.b16 %v4001, %v3993
  %v5490 = vpack.c.b16 %v4002, %v3994
  %v5491 = vpack.c.b16 %v4003, %v3995
  %v5492 = vpack.c.b16 %v4004, %v3996
  %v5493 = vpack.c.b16 %v4013, %v4005
  %v5494 = vpack.c.b16 %v4014, %v4006
  %v5495 = vpack.c.b16 %v4015, %v4007
  %v5496 = vpack.c.b16 %v4016, %v4008
  %v5497 = vpack.c.b16 %v4017, %v4009
  %v5498 = vpack.c.b16 %v4018, %v4010
  %v5499 = vpack.c.b16 %v4019, %v4011
  %v5500 = vpack.c.b16 %v4020, %v4012
  %v5501 = vpack.c.b16 %v4029, %v4021
  %v5502 = vpack.c.b16 %v4030, %v4022
  %v5503 = vpack.c.b16 %v4031, %v4023
  %v5504 = vpack.c.b16 %v4032, %v4024
  %v5505 = vpack.c.b16 %v4033, %v4025
  %v5506 = vpack.c.b16 %v4034, %v4026
  %v5507 = vpack.c.b16 %v4035, %v4027
  %v5508 = vpack.c.b16 %v4036, %v4028
  %v5509 = vpack.c.b16 %v4045, %v4037
  %v5510 = vpack.c.b16 %v4046, %v4038
  %v5511 = vpack.c.b16 %v4047, %v4039
  %v5512 = vpack.c.b16 %v4048, %v4040
  %v5513 = vpack.c.b16 %v4049, %v4041
  %v5514 = vpack.c.b16 %v4050, %v4042
  %v5515 = vpack.c.b16 %v4051, %v4043
  %v5516 = vpack.c.b16 %v4052, %v4044
  %v5517 = vpack.c.b16 %v4061, %v4053
  %v5518 = vpack.c.b16 %v4062, %v4054
  %v5519 = vpack.c.b16 %v4063, %v4055
  %v5520 = vpack.c.b16 %v4064, %v4056
  %v5521 = vpack.c.b16 %v4065, %v4057
  %v5522 = vpack.c.b16 %v4066, %v4058
  %v5523 = vpack.c.b16 %v4067, %v4059
  %v5524 = vpack.c.b16 %v4068, %v4060
  %v5525 = vpack.c.b16 %v4077, %v4069
  %v5526 = vpack.c.b16 %v4078, %v4070
  %v5527 = vpack.c.b16 %v4079, %v4071
  %v5528 = vpack.c.b16 %v4080, %v4072
  %v5529 = vpack.c.b16 %v4081, %v4073
  %v5530 = vpack.c.b16 %v4082, %v4074
  %v5531 = vpack.c.b16 %v4083, %v4075
  %v5532 = vpack.c.b16 %v4084, %v4076
  %v5533 = vpack.c.b16 %v4093, %v4085
  %v5534 = vpack.c.b16 %v4094, %v4086
  %v5535 = vpack.c.b16 %v4095, %v4087
  %v5536 = vpack.c.b16 %v4096, %v4088
  %v5537 = vpack.c.b16 %v4097, %v4089
  %v5538 = vpack.c.b16 %v4098, %v4090
  %v5539 = vpack.c.b16 %v4099, %v4091
  %v5540 = vpack.c.b16 %v4100, %v4092
  %v5541 = vpack.c.b16 %v4109, %v4101
  %v5542 = vpack.c.b16 %v4110, %v4102
  %v5543 = vpack.c.b16 %v4111, %v4103
  %v5544 = vpack.c.b16 %v4112, %v4104
  %v5545 = vpack.c.b16 %v4113, %v4105
  %v5546 = vpack.c.b16 %v4114, %v4106
  %v5547 = vpack.c.b16 %v4115, %v4107
  %v5548 = vpack.c.b16 %v4116, %v4108
  %v5549 = vpack.c.b16 %v4125, %v4117
  %v5550 = vpack.c.b16 %v4126, %v4118
  %v5551 = vpack.c.b16 %v4127, %v4119
  %v5552 = vpack.c.b16 %v4128, %v4120
  %v5553 = vpack.c.b16 %v4129, %v4121
  %v5554 = vpack.c.b16 %v4130, %v4122
  %v5555 = vpack.c.b16 %v4131, %v4123
  %v5556 = vpack.c.b16 %v4132, %v4124
  %v5557 = vpack.c.b16 %v4141, %v4133
  %v5558 = vpack.c.b16 %v4142, %v4134
  %v5559 = vpack.c.b16 %v4143, %v4135
  %v5560 = vpack.c.b16 %v4144, %v4136
  %v5561 = vpack.c.b16 %v4145, %v4137
  %v5562 = vpack.c.b16 %v4146, %v4138
  %v5563 = vpack.c.b16 %v4147, %v4139
  %v5564 = vpack.c.b16 %v4148, %v4140
  %v5565 = vpack.c.b16 %v4157, %v4149
  %v5566 = vpack.c.b16 %v4158, %v4150
  %v5567 = vpack.c.b16 %v4159, %v4151
  %v5568 = vpack.c.b16 %v4160, %v4152
  %v5569 = vpack.c.b16 %v4161, %v4153
  %v5570 = vpack.c.b16 %v4162, %v4154
  %v5571 = vpack.c.b16 %v4163, %v4155
  %v5572 = vpack.c.b16 %v4164, %v4156
  %v5573 = vpack.c.b16 %v4173, %v4165
  %v5574 = vpack.c.b16 %v4174, %v4166
  %v5575 = vpack.c.b16 %v4175, %v4167
  %v5576 = vpack.c.b16 %v4176, %v4168
  %v5577 = vpack.c.b16 %v4177, %v4169
  %v5578 = vpack.c.b16 %v4178, %v4170
  %v5579 = vpack.c.b16 %v4179, %v4171
  %v5580 = vpack.c.b16 %v4180, %v4172
  %v5581 = vpack.c.b16 %v4189, %v4181
  %v5582 = vpack.c.b16 %v4190, %v4182
  %v5583 = vpack.c.b16 %v4191, %v4183
  %v5584 = vpack.c.b16 %v4192, %v4184
  %v5585 = vpack.c.b16 %v4193, %v4185
  %v5586 = vpack.c.b16 %v4194, %v4186
  %v5587 = vpack.c.b16 %v4195, %v4187
  %v5588 = vpack.c.b16 %v4196, %v4188
  %v5589 = vpack.c.b16 %v4205, %v4197
  %v5590 = vpack.c.b16 %v4206, %v4198
  %v5591 = vpack.c.b16 %v4207, %v4199
  %v5592 = vpack.c.b16 %v4208, %v4200
  %v5593 = vpack.c.b16 %v4209, %v4201
  %v5594 = vpack.c.b16 %v4210, %v4202
  %v5595 = vpack.c.b16 %v4211, %v4203
  %v5596 = vpack.c.b16 %v4212, %v4204
  %v5597 = vpack.c.b16 %v4221, %v4213
  %v5598 = vpack.c.b16 %v4222, %v4214
  %v5599 = vpack.c.b16 %v4223, %v4215
  %v5600 = vpack.c.b16 %v4224, %v4216
  %v5601 = vpack.c.b16 %v4225, %v4217
  %v5602 = vpack.c.b16 %v4226, %v4218
  %v5603 = vpack.c.b16 %v4227, %v4219
  %v5604 = vpack.c.b16 %v4228, %v4220
  %v5605 = vpack.c.b16 %v4237, %v4229
  %v5606 = vpack.c.b16 %v4238, %v4230
  %v5607 = vpack.c.b16 %v4239, %v4231
  %v5608 = vpack.c.b16 %v4240, %v4232
  %v5609 = vpack.c.b16 %v4241, %v4233
  %v5610 = vpack.c.b16 %v4242, %v4234
  %v5611 = vpack.c.b16 %v4243, %v4235
  %v5612 = vpack.c.b16 %v4244, %v4236
  %v5613 = vpack.c.b16 %v4253, %v4245
  %v5614 = vpack.c.b16 %v4254, %v4246
  %v5615 = vpack.c.b16 %v4255, %v4247
  %v5616 = vpack.c.b16 %v4256, %v4248
  %v5617 = vpack.c.b16 %v4257, %v4249
  %v5618 = vpack.c.b16 %v4258, %v4250
  %v5619 = vpack.c.b16 %v4259, %v4251
  %v5620 = vpack.c.b16 %v4260, %v4252
  %v5621 = vpack.c.b16 %v4269, %v4261
  %v5622 = vpack.c.b16 %v4270, %v4262
  %v5623 = vpack.c.b16 %v4271, %v4263
  %v5624 = vpack.c.b16 %v4272, %v4264
  %v5625 = vpack.c.b16 %v4273, %v4265
  %v5626 = vpack.c.b16 %v4274, %v4266
  %v5627 = vpack.c.b16 %v4275, %v4267
  %v5628 = vpack.c.b16 %v4276, %v4268
  %v5629 = vpack.c.b16 %v4285, %v4277
  %v5630 = vpack.c.b16 %v4286, %v4278
  %v5631 = vpack.c.b16 %v4287, %v4279
  %v5632 = vpack.c.b16 %v4288, %v4280
  %v5633 = vpack.c.b16 %v4289, %v4281
  %v5634 = vpack.c.b16 %v4290, %v4282
  %v5635 = vpack.c.b16 %v4291, %v4283
  %v5636 = vpack.c.b16 %v4292, %v4284
  %v5637 = vpack.c.b16 %v4301, %v4293
  %v5638 = vpack.c.b16 %v4302, %v4294
  %v5639 = vpack.c.b16 %v4303, %v4295
  %v5640 = vpack.c.b16 %v4304, %v4296
  %v5641 = vpack.c.b16 %v4305, %v4297
  %v5642 = vpack.c.b16 %v4306, %v4298
  %v5643 = vpack.c.b16 %v4307, %v4299
  %v5644 = vpack.c.b16 %v4308, %v4300
  %v5645 = vpack.c.b16 %v4317, %v4309
  %v5646 = vpack.c.b16 %v4318, %v4310
  %v5647 = vpack.c.b16 %v4319, %v4311
  %v5648 = vpack.c.b16 %v4320, %v4312
  %v5649 = vpack.c.b16 %v4321, %v4313
  %v5650 = vpack.c.b16 %v4322, %v4314
  %v5651 = vpack.c.b16 %v4323, %v4315
  %v5652 = vpack.c.b16 %v4324, %v4316
  %v5653 = vpack.c.b16 %v4333, %v4325
  %v5654 = vpack.c.b16 %v4334, %v4326
  %v5655 = vpack.c.b16 %v4335, %v4327
  %v5656 = vpack.c.b16 %v4336, %v4328
  %v5657 = vpack.c.b16 %v4337, %v4329
  %v5658 = vpack.c.b16 %v4338, %v4330
  %v5659 = vpack.c.b16 %v4339, %v4331
  %v5660 = vpack.c.b16 %v4340, %v4332
  %v5661 = vpack.c.b16 %v4349, %v4341
  %v5662 = vpack.c.b16 %v4350, %v4342
  %v5663 = vpack.c.b16 %v4351, %v4343
  %v5664 = vpack.c.b16 %v4352, %v4344
  %v5665 = vpack.c.b16 %v4353, %v4345
  %v5666 = vpack.c.b16 %v4354, %v4346
  %v5667 = vpack.c.b16 %v4355, %v4347
  %v5668 = vpack.c.b16 %v4356, %v4348
  %v5669 = vpack.c.b16 %v4365, %v4357
  %v5670 = vpack.c.b16 %v4366, %v4358
  %v5671 = vpack.c.b16 %v4367, %v4359
  %v5672 = vpack.c.b16 %v4368, %v4360
  %v5673 = vpack.c.b16 %v4369, %v4361
  %v5674 = vpack.c.b16 %v4370, %v4362
  %v5675 = vpack.c.b16 %v4371, %v4363
  %v5676 = vpack.c.b16 %v4372, %v4364
  %v5677 = vpack.c.b16 %v4381, %v4373
  %v5678 = vpack.c.b16 %v4382, %v4374
  %v5679 = vpack.c.b16 %v4383, %v4375
  %v5680 = vpack.c.b16 %v4384, %v4376
  %v5681 = vpack.c.b16 %v4385, %v4377
  %v5682 = vpack.c.b16 %v4386, %v4378
  %v5683 = vpack.c.b16 %v4387, %v4379
  %v5684 = vpack.c.b16 %v4388, %v4380
  %v5685 = vpack.c.b16 %v4397, %v4389
  %v5686 = vpack.c.b16 %v4398, %v4390
  %v5687 = vpack.c.b16 %v4399, %v4391
  %v5688 = vpack.c.b16 %v4400, %v4392
  %v5689 = vpack.c.b16 %v4401, %v4393
  %v5690 = vpack.c.b16 %v4402, %v4394
  %v5691 = vpack.c.b16 %v4403, %v4395
  %v5692 = vpack.c.b16 %v4404, %v4396
  %v5693 = vpack.c.b16 %v4413, %v4405
  %v5694 = vpack.c.b16 %v4414, %v4406
  %v5695 = vpack.c.b16 %v4415, %v4407
  %v5696 = vpack.c.b16 %v4416, %v4408
  %v5697 = vpack.c.b16 %v4417, %v4409
  %v5698 = vpack.c.b16 %v4418, %v4410
  %v5699 = vpack.c.b16 %v4419, %v4411
  %v5700 = vpack.c.b16 %v4420, %v4412
  %v5701 = vpack.c.b16 %v4429, %v4421
  %v5702 = vpack.c.b16 %v4430, %v4422
  %v5703 = vpack.c.b16 %v4431, %v4423
  %v5704 = vpack.c.b16 %v4432, %v4424
  %v5705 = vpack.c.b16 %v4433, %v4425
  %v5706 = vpack.c.b16 %v4434, %v4426
  %v5707 = vpack.c.b16 %v4435, %v4427
  %v5708 = vpack.c.b16 %v4436, %v4428
  %v5709 = vpack.c.b16 %v4445, %v4437
  %v5710 = vpack.c.b16 %v4446, %v4438
  %v5711 = vpack.c.b16 %v4447, %v4439
  %v5712 = vpack.c.b16 %v4448, %v4440
  %v5713 = vpack.c.b16 %v4449, %v4441
  %v5714 = vpack.c.b16 %v4450, %v4442
  %v5715 = vpack.c.b16 %v4451, %v4443
  %v5716 = vpack.c.b16 %v4452, %v4444
  %v5717 = vpack.c.b16 %v4461, %v4453
  %v5718 = vpack.c.b16 %v4462, %v4454
  %v5719 = vpack.c.b16 %v4463, %v4455
  %v5720 = vpack.c.b16 %v4464, %v4456
  %v5721 = vpack.c.b16 %v4465, %v4457
  %v5722 = vpack.c.b16 %v4466, %v4458
  %v5723 = vpack.c.b16 %v4467, %v4459
  %v5724 = vpack.c.b16 %v4468, %v4460
  %v5725 = vpack.c.b16 %v4477, %v4469
  %v5726 = vpack.c.b16 %v4478, %v4470
  %v5727 = vpack.c.b16 %v4479, %v4471
  %v5728 = vpack.c.b16 %v4480, %v4472
  %v5729 = vpack.c.b16 %v4481, %v4473
  %v5730 = vpack.c.b16 %v4482, %v4474
  %v5731 = vpack.c.b16 %v4483, %v4475
  %v5732 = vpack.c.b16 %v4484, %v4476
  %v5733 = vpack.c.b16 %v4493, %v4485
  %v5734 = vpack.c.b16 %v4494, %v4486
  %v5735 = vpack.c.b16 %v4495, %v4487
  %v5736 = vpack.c.b16 %v4496, %v4488
  %v5737 = vpack.c.b16 %v4497, %v4489
  %v5738 = vpack.c.b16 %v4498, %v4490
  %v5739 = vpack.c.b16 %v4499, %v4491
  %v5740 = vpack.c.b16 %v4500, %v4492
  %v5741 = vpack.c.b16 %v4509, %v4501
  %v5742 = vpack.c.b16 %v4510, %v4502
  %v5743 = vpack.c.b16 %v4511, %v4503
  %v5744 = vpack.c.b16 %v4512, %v4504
  %v5745 = vpack.c.b16 %v4513, %v4505
  %v5746 = vpack.c.b16 %v4514, %v4506
  %v5747 = vpack.c.b16 %v4515, %v4507
  %v5748 = vpack.c.b16 %v4516, %v4508
  %v5749 = vpack.c.b16 %v4525, %v4517
  %v5750 = vpack.c.b16 %v4526, %v4518
  %v5751 = vpack.c.b16 %v4527, %v4519
  %v5752 = vpack.c.b16 %v4528, %v4520
  %v5753 = vpack.c.b16 %v4529, %v4521
  %v5754 = vpack.c.b16 %v4530, %v4522
  %v5755 = vpack.c.b16 %v4531, %v4523
  %v5756 = vpack.c.b16 %v4532, %v4524
  %v5757 = vpack.c.b16 %v4541, %v4533
  %v5758 = vpack.c.b16 %v4542, %v4534
  %v5759 = vpack.c.b16 %v4543, %v4535
  %v5760 = vpack.c.b16 %v4544, %v4536
  %v5761 = vpack.c.b16 %v4545, %v4537
  %v5762 = vpack.c.b16 %v4546, %v4538
  %v5763 = vpack.c.b16 %v4547, %v4539
  %v5764 = vpack.c.b16 %v4548, %v4540
  %v5765 = vpack.c.b16 %v4557, %v4549
  %v5766 = vpack.c.b16 %v4558, %v4550
  %v5767 = vpack.c.b16 %v4559, %v4551
  %v5768 = vpack.c.b16 %v4560, %v4552
  %v5769 = vpack.c.b16 %v4561, %v4553
  %v5770 = vpack.c.b16 %v4562, %v4554
  %v5771 = vpack.c.b16 %v4563, %v4555
  %v5772 = vpack.c.b16 %v4564, %v4556
  %v5773 = vpack.c.b16 %v4573, %v4565
  %v5774 = vpack.c.b16 %v4574, %v4566
  %v5775 = vpack.c.b16 %v4575, %v4567
  %v5776 = vpack.c.b16 %v4576, %v4568
  %v5777 = vpack.c.b16 %v4577, %v4569
  %v5778 = vpack.c.b16 %v4578, %v4570
  %v5779 = vpack.c.b16 %v4579, %v4571
  %v5780 = vpack.c.b16 %v4580, %v4572
  %v5781 = vpack.c.b16 %v4589, %v4581
  %v5782 = vpack.c.b16 %v4590, %v4582
  %v5783 = vpack.c.b16 %v4591, %v4583
  %v5784 = vpack.c.b16 %v4592, %v4584
  %v5785 = vpack.c.b16 %v4593, %v4585
  %v5786 = vpack.c.b16 %v4594, %v4586
  %v5787 = vpack.c.b16 %v4595, %v4587
  %v5788 = vpack.c.b16 %v4596, %v4588
  %v5789 = vpack.c.b16 %v4605, %v4597
  %v5790 = vpack.c.b16 %v4606, %v4598
  %v5791 = vpack.c.b16 %v4607, %v4599
  %v5792 = vpack.c.b16 %v4608, %v4600
  %v5793 = vpack.c.b16 %v4609, %v4601
  %v5794 = vpack.c.b16 %v4610, %v4602
  %v5795 = vpack.c.b16 %v4611, %v4603
  %v5796 = vpack.c.b16 %v4612, %v4604
  %v5797 = vpack.c.b16 %v4621, %v4613
  %v5798 = vpack.c.b16 %v4622, %v4614
  %v5799 = vpack.c.b16 %v4623, %v4615
  %v5800 = vpack.c.b16 %v4624, %v4616
  %v5801 = vpack.c.b16 %v4625, %v4617
  %v5802 = vpack.c.b16 %v4626, %v4618
  %v5803 = vpack.c.b16 %v4627, %v4619
  %v5804 = vpack.c.b16 %v4628, %v4620
  %v5805 = vpack.c.b16 %v4637, %v4629
  %v5806 = vpack.c.b16 %v4638, %v4630
  %v5807 = vpack.c.b16 %v4639, %v4631
  %v5808 = vpack.c.b16 %v4640, %v4632
  %v5809 = vpack.c.b16 %v4641, %v4633
  %v5810 = vpack.c.b16 %v4642, %v4634
  %v5811 = vpack.c.b16 %v4643, %v4635
  %v5812 = vpack.c.b16 %v4644, %v4636
  %v5813 = vpack.c.b16 %v4653, %v4645
  %v5814 = vpack.c.b16 %v4654, %v4646
  %v5815 = vpack.c.b16 %v4655, %v4647
  %v5816 = vpack.c.b16 %v4656, %v4648
  %v5817 = vpack.c.b16 %v4657, %v4649
  %v5818 = vpack.c.b16 %v4658, %v4650
  %v5819 = vpack.c.b16 %v4659, %v4651
  %v5820 = vpack.c.b16 %v4660, %v4652
  %v5821 = vpack.c.b16 %v4669, %v4661
  %v5822 = vpack.c.b16 %v4670, %v4662
  %v5823 = vpack.c.b16 %v4671, %v4663
  %v5824 = vpack.c.b16 %v4672, %v4664
  %v5825 = vpack.c.b16 %v4673, %v4665
  %v5826 = vpack.c.b16 %v4674, %v4666
  %v5827 = vpack.c.b16 %v4675, %v4667
  %v5828 = vpack.c.b16 %v4676, %v4668
  %v5829 = vpack.c.b16 %v4685, %v4677
  %v5830 = vpack.c.b16 %v4686, %v4678
  %v5831 = vpack.c.b16 %v4687, %v4679
  %v5832 = vpack.c.b16 %v4688, %v4680
  %v5833 = vpack.c.b16 %v4689, %v4681
  %v5834 = vpack.c.b16 %v4690, %v4682
  %v5835 = vpack.c.b16 %v4691, %v4683
  %v5836 = vpack.c.b16 %v4692, %v4684
  %v5837 = vpack.c.b16 %v4701, %v4693
  %v5838 = vpack.c.b16 %v4702, %v4694
  %v5839 = vpack.c.b16 %v4703, %v4695
  %v5840 = vpack.c.b16 %v4704, %v4696
  %v5841 = vpack.c.b16 %v4705, %v4697
  %v5842 = vpack.c.b16 %v4706, %v4698
  %v5843 = vpack.c.b16 %v4707, %v4699
  %v5844 = vpack.c.b16 %v4708, %v4700
  %v5845 = vpack.c.b16 %v4717, %v4709
  %v5846 = vpack.c.b16 %v4718, %v4710
  %v5847 = vpack.c.b16 %v4719, %v4711
  %v5848 = vpack.c.b16 %v4720, %v4712
  %v5849 = vpack.c.b16 %v4721, %v4713
  %v5850 = vpack.c.b16 %v4722, %v4714
  %v5851 = vpack.c.b16 %v4723, %v4715
  %v5852 = vpack.c.b16 %v4724, %v4716
  %v5853 = vpack.c.b16 %v4733, %v4725
  %v5854 = vpack.c.b16 %v4734, %v4726
  %v5855 = vpack.c.b16 %v4735, %v4727
  %v5856 = vpack.c.b16 %v4736, %v4728
  %v5857 = vpack.c.b16 %v4737, %v4729
  %v5858 = vpack.c.b16 %v4738, %v4730
  %v5859 = vpack.c.b16 %v4739, %v4731
  %v5860 = vpack.c.b16 %v4740, %v4732
  %v5861 = vpack.c.b16 %v4749, %v4741
  %v5862 = vpack.c.b16 %v4750, %v4742
  %v5863 = vpack.c.b16 %v4751, %v4743
  %v5864 = vpack.c.b16 %v4752, %v4744
  %v5865 = vpack.c.b16 %v4753, %v4745
  %v5866 = vpack.c.b16 %v4754, %v4746
  %v5867 = vpack.c.b16 %v4755, %v4747
  %v5868 = vpack.c.b16 %v4756, %v4748
  %v5869 = vpack.c.b16 %v4765, %v4757
  %v5870 = vpack.c.b16 %v4766, %v4758
  %v5871 = vpack.c.b16 %v4767, %v4759
  %v5872 = vpack.c.b16 %v4768, %v4760
  %v5873 = vpack.c.b16 %v4769, %v4761
  %v5874 = vpack.c.b16 %v4770, %v4762
  %v5875 = vpack.c.b16 %v4771, %v4763
  %v5876 = vpack.c.b16 %v4772, %v4764
  %v5877 = vpack.c.b16 %v4781, %v4773
  %v5878 = vpack.c.b16 %v4782, %v4774
  %v5879 = vpack.c.b16 %v4783, %v4775
  %v5880 = vpack.c.b16 %v4784, %v4776
  %v5881 = vpack.c.b16 %v4785, %v4777
  %v5882 = vpack.c.b16 %v4786, %v4778
  %v5883 = vpack.c.b16 %v4787, %v4779
  %v5884 = vpack.c.b16 %v4788, %v4780
  %v5885 = vpack.c.b16 %v4797, %v4789
  %v5886 = vpack.c.b16 %v4798, %v4790
  %v5887 = vpack.c.b16 %v4799, %v4791
  %v5888 = vpack.c.b16 %v4800, %v4792
  %v5889 = vpack.c.b16 %v4801, %v4793
  %v5890 = vpack.c.b16 %v4802, %v4794
  %v5891 = vpack.c.b16 %v4803, %v4795
  %v5892 = vpack.c.b16 %v4804, %v4796
  %v5893 = vpack.c.b16 %v4813, %v4805
  %v5894 = vpack.c.b16 %v4814, %v4806
  %v5895 = vpack.c.b16 %v4815, %v4807
  %v5896 = vpack.c.b16 %v4816, %v4808
  %v5897 = vpack.c.b16 %v4817, %v4809
  %v5898 = vpack.c.b16 %v4818, %v4810
  %v5899 = vpack.c.b16 %v4819, %v4811
  %v5900 = vpack.c.b16 %v4820, %v4812
  %v5901 = vpack.c.b16 %v4829, %v4821
  %v5902 = vpack.c.b16 %v4830, %v4822
  %v5903 = vpack.c.b16 %v4831, %v4823
  %v5904 = vpack.c.b16 %v4832, %v4824
  %v5905 = vpack.c.b16 %v4833, %v4825
  %v5906 = vpack.c.b16 %v4834, %v4826
  %v5907 = vpack.c.b16 %v4835, %v4827
  %v5908 = vpack.c.b16 %v4836, %v4828
  %v5909 = vpack.c.b16 %v4845, %v4837
  %v5910 = vpack.c.b16 %v4846, %v4838
  %v5911 = vpack.c.b16 %v4847, %v4839
  %v5912 = vpack.c.b16 %v4848, %v4840
  %v5913 = vpack.c.b16 %v4849, %v4841
  %v5914 = vpack.c.b16 %v4850, %v4842
  %v5915 = vpack.c.b16 %v4851, %v4843
  %v5916 = vpack.c.b16 %v4852, %v4844
  %v5917 = vpack.c.b16 %v4861, %v4853
  %v5918 = vpack.c.b16 %v4862, %v4854
  %v5919 = vpack.c.b16 %v4863, %v4855
  %v5920 = vpack.c.b16 %v4864, %v4856
  %v5921 = vpack.c.b16 %v4865, %v4857
  %v5922 = vpack.c.b16 %v4866, %v4858
  %v5923 = vpack.c.b16 %v4867, %v4859
  %v5924 = vpack.c.b16 %v4868, %v4860
  %v5925 = vpack.c.b16 %v4877, %v4869
  %v5926 = vpack.c.b16 %v4878, %v4870
  %v5927 = vpack.c.b16 %v4879, %v4871
  %v5928 = vpack.c.b16 %v4880, %v4872
  %v5929 = vpack.c.b16 %v4881, %v4873
  %v5930 = vpack.c.b16 %v4882, %v4874
  %v5931 = vpack.c.b16 %v4883, %v4875
  %v5932 = vpack.c.b16 %v4884, %v4876
  %v5933 = vpack.c.b16 %v4893, %v4885
  %v5934 = vpack.c.b16 %v4894, %v4886
  %v5935 = vpack.c.b16 %v4895, %v4887
  %v5936 = vpack.c.b16 %v4896, %v4888
  %v5937 = vpack.c.b16 %v4897, %v4889
  %v5938 = vpack.c.b16 %v4898, %v4890
  %v5939 = vpack.c.b16 %v4899, %v4891
  %v5940 = vpack.c.b16 %v4900, %v4892
  %v5941 = vpack.c.b16 %v4909, %v4901
  %v5942 = vpack.c.b16 %v4910, %v4902
  %v5943 = vpack.c.b16 %v4911, %v4903
  %v5944 = vpack.c.b16 %v4912, %v4904
  %v5945 = vpack.c.b16 %v4913, %v4905
  %v5946 = vpack.c.b16 %v4914, %v4906
  %v5947 = vpack.c.b16 %v4915, %v4907
  %v5948 = vpack.c.b16 %v4916, %v4908
  %v5949 = vpack.c.b16 %v4925, %v4917
  %v5950 = vpack.c.b16 %v4926, %v4918
  %v5951 = vpack.c.b16 %v4927, %v4919
  %v5952 = vpack.c.b16 %v4928, %v4920
  %v5953 = vpack.c.b16 %v4929, %v4921
  %v5954 = vpack.c.b16 %v4930, %v4922
  %v5955 = vpack.c.b16 %v4931, %v4923
  %v5956 = vpack.c.b16 %v4932, %v4924
  %6981 = vmatprep.subr.bf16.mxu0 %v4934
  %6982 = vmatpush1.bf16.msra.mxu0 %v4933
  %6983 = vmatprep.subr.bf16.mxu0 %v4942
  %6984 = vmatpush1.bf16.msra.mxu0 %v4941
  %6985 = vmatprep.subr.bf16.mxu0 %v4950
  %6986 = vmatpush1.bf16.msra.mxu0 %v4949
  %6987 = vmatprep.subr.bf16.mxu0 %v4958
  %6988 = vmatpush1.bf16.msra.mxu0 %v4957
  %6989 = vmatprep.subr.bf16.mxu0 %v4966
  %6990 = vmatpush1.bf16.msra.mxu0 %v4965
  %6991 = vmatprep.subr.bf16.mxu0 %v4974
  %6992 = vmatpush1.bf16.msra.mxu0 %v4973
  %6993 = vmatprep.subr.bf16.mxu0 %v4982
  %6994 = vmatpush1.bf16.msra.mxu0 %v4981
  %6995 = vmatprep.subr.bf16.mxu0 %v4990
  %6996 = vmatpush1.bf16.msra.mxu0 %v4989
  %6997 = vmatprep.subr.bf16.mxu0 %v4998
  %6998 = vmatpush1.bf16.msra.mxu0 %v4997
  %6999 = vmatprep.subr.bf16.mxu0 %v5006
  %7000 = vmatpush1.bf16.msra.mxu0 %v5005
  %7001 = vmatprep.subr.bf16.mxu0 %v5014
  %7002 = vmatpush1.bf16.msra.mxu0 %v5013
  %7003 = vmatprep.subr.bf16.mxu0 %v5022
  %7004 = vmatpush1.bf16.msra.mxu0 %v5021
  %7005 = vmatprep.subr.bf16.mxu0 %v5030
  %7006 = vmatpush1.bf16.msra.mxu0 %v5029
  %7007 = vmatprep.subr.bf16.mxu0 %v5038
  %7008 = vmatpush1.bf16.msra.mxu0 %v5037
  %7009 = vmatprep.subr.bf16.mxu0 %v5046
  %7010 = vmatpush1.bf16.msra.mxu0 %v5045
  %7011 = vmatprep.subr.bf16.mxu0 %v5054
  %7012 = vmatpush1.bf16.msra.mxu0 %v5053
  %7013 = vmatprep.mubr.bf16.mxu0 %v1606
  %7014 = vmatmul.mubr.bf16.gmra.mrb[0].mxu0 %v1605
  %v7015 = vpop.f32.mrb[0].mxu0
  %v7016 = vadd.f32 %v1184, %v7015
  %v7017 = vpop.f32.mrb[0].mxu0
  %v7018 = vadd.f32 %v1188, %v7017
  %v7019 = vpop.f32.mrb[0].mxu0
  %v7020 = vadd.f32 %v1184, %v7019
  %v7021 = vpop.f32.mrb[0].mxu0
  %v7022 = vadd.f32 %v1188, %v7021
  %7023 = vmatprep.mubr.bf16.mxu0 %v1622
  %7024 = vmatmul.mubr.bf16.gmra.mrb[0].mxu0 %v1621
  %v7025 = vpop.f32.mrb[0].mxu0
  %v7026 = vadd.f32 %v1184, %v7025
  %v7027 = vpop.f32.mrb[0].mxu0
  %v7028 = vadd.f32 %v1188, %v7027
  %v7029 = vpop.f32.mrb[0].mxu0
  %v7030 = vadd.f32 %v1184, %v7029
  %v7031 = vpop.f32.mrb[0].mxu0
  %v7032 = vadd.f32 %v1188, %v7031
  %7033 = vmatprep.mubr.bf16.mxu0 %v1638
  %7034 = vmatmul.mubr.bf16.gmra.mrb[0].mxu0 %v1637
  %v7035 = vpop.f32.mrb[0].mxu0
  %v7036 = vadd.f32 %v1184, %v7035
  %v7037 = vpop.f32.mrb[0].mxu0
  %v7038 = vadd.f32 %v1188, %v7037
  %v7039 = vpop.f32.mrb[0].mxu0
  %v7040 = vadd.f32 %v1184, %v7039
  %v7041 = vpop.f32.mrb[0].mxu0
  %v7042 = vadd.f32 %v1188, %v7041
  %7043 = vmatprep.mubr.bf16.mxu0 %v1654
  %7044 = vmatmul.mubr.bf16.gmra.mrb[0].mxu0 %v1653
  %v7045 = vpop.f32.mrb[0].mxu0
  %v7046 = vadd.f32 %v1184, %v7045
  %v7047 = vpop.f32.mrb[0].mxu0
  %v7048 = vadd.f32 %v1188, %v7047
  %v7049 = vpop.f32.mrb[0].mxu0
  %v7050 = vadd.f32 %v1184, %v7049
  %v7051 = vpop.f32.mrb[0].mxu0
  %v7052 = vadd.f32 %v1188, %v7051
  %7053 = vmatprep.mubr.bf16.mxu0 %v1670
  %7054 = vmatmul.mubr.bf16.gmra.mrb[0].mxu0 %v1669
  %v7055 = vpop.f32.mrb[0].mxu0
  %v7056 = vadd.f32 %v1184, %v7055
  %v7057 = vpop.f32.mrb[0].mxu0
  %v7058 = vadd.f32 %v1188, %v7057
  %v7059 = vpop.f32.mrb[0].mxu0
  %v7060 = vadd.f32 %v1184, %v7059
  %v7061 = vpop.f32.mrb[0].mxu0
  %v7062 = vadd.f32 %v1188, %v7061
  %7063 = vmatprep.mubr.bf16.mxu0 %v1686
  %7064 = vmatmul.mubr.bf16.gmra.mrb[0].mxu0 %v1685
  %v7065 = vpop.f32.mrb[0].mxu0
  %v7066 = vadd.f32 %v1184, %v7065
  %v7067 = vpop.f32.mrb[0].mxu0
  %v7068 = vadd.f32 %v1188, %v7067
  %v7069 = vpop.f32.mrb[0].mxu0
  %v7070 = vadd.f32 %v1184, %v7069
  %v7071 = vpop.f32.mrb[0].mxu0
  %v7072 = vadd.f32 %v1188, %v7071
  %7073 = vmatprep.mubr.bf16.mxu0 %v1702
  %7074 = vmatmul.mubr.bf16.gmra.mrb[0].mxu0 %v1701
  %v7075 = vpop.f32.mrb[0].mxu0
  %v7076 = vadd.f32 %v1184, %v7075
  %v7077 = vpop.f32.mrb[0].mxu0
  %v7078 = vadd.f32 %v1188, %v7077
  %v7079 = vpop.f32.mrb[0].mxu0
  %v7080 = vadd.f32 %v1184, %v7079
  %v7081 = vpop.f32.mrb[0].mxu0
  %v7082 = vadd.f32 %v1188, %v7081
  %7083 = vmatprep.mubr.bf16.mxu0 %v1718
  %7084 = vmatmul.mubr.bf16.gmra.mrb[0].mxu0 %v1717
  %v7085 = vpop.f32.mrb[0].mxu0
  %v7086 = vadd.f32 %v1184, %v7085
  %v7087 = vpop.f32.mrb[0].mxu0
  %v7088 = vadd.f32 %v1188, %v7087
  %v7089 = vpop.f32.mrb[0].mxu0
  %v7090 = vadd.f32 %v1184, %v7089
  %v7091 = vpop.f32.mrb[0].mxu0
  %v7092 = vadd.f32 %v1188, %v7091
  %7093 = vdwg.mxu0
  %7094 = vmatprep.subr.bf16.mxu0 %v5062
  %7095 = vmatpush1.bf16.msra.mxu0 %v5061
  %7096 = vmatprep.subr.bf16.mxu0 %v5070
  %7097 = vmatpush1.bf16.msra.mxu0 %v5069
  %7098 = vmatprep.subr.bf16.mxu0 %v5078
  %7099 = vmatpush1.bf16.msra.mxu0 %v5077
  %7100 = vmatprep.subr.bf16.mxu0 %v5086
  %7101 = vmatpush1.bf16.msra.mxu0 %v5085
  %7102 = vmatprep.subr.bf16.mxu0 %v5094
  %7103 = vmatpush1.bf16.msra.mxu0 %v5093
  %7104 = vmatprep.subr.bf16.mxu0 %v5102
  %7105 = vmatpush1.bf16.msra.mxu0 %v5101
  %7106 = vmatprep.subr.bf16.mxu0 %v5110
  %7107 = vmatpush1.bf16.msra.mxu0 %v5109
  %7108 = vmatprep.subr.bf16.mxu0 %v5118
  %7109 = vmatpush1.bf16.msra.mxu0 %v5117
  %7110 = vmatprep.subr.bf16.mxu0 %v5126
  %7111 = vmatpush1.bf16.msra.mxu0 %v5125
  %7112 = vmatprep.subr.bf16.mxu0 %v5134
  %7113 = vmatpush1.bf16.msra.mxu0 %v5133
  %7114 = vmatprep.subr.bf16.mxu0 %v5142
  %7115 = vmatpush1.bf16.msra.mxu0 %v5141
  %7116 = vmatprep.subr.bf16.mxu0 %v5150
  %7117 = vmatpush1.bf16.msra.mxu0 %v5149
  %7118 = vmatprep.subr.bf16.mxu0 %v5158
  %7119 = vmatpush1.bf16.msra.mxu0 %v5157
  %7120 = vmatprep.subr.bf16.mxu0 %v5166
  %7121 = vmatpush1.bf16.msra.mxu0 %v5165
  %7122 = vmatprep.subr.bf16.mxu0 %v5174
  %7123 = vmatpush1.bf16.msra.mxu0 %v5173
  %7124 = vmatprep.subr.bf16.mxu0 %v5182
  %7125 = vmatpush1.bf16.msra.mxu0 %v5181
  %7126 = vmatprep.mubr.bf16.mxu0 %v1608
  %7127 = vmatmul.mubr.bf16.gmra.mrb[0].mxu0 %v1607
  %v7128 = vpop.f32.mrb[0].mxu0
  %v7129 = vadd.f32 %v7016, %v7128
  %v7130 = vpop.f32.mrb[0].mxu0
  %v7131 = vadd.f32 %v7018, %v7130
  %v7132 = vpop.f32.mrb[0].mxu0
  %v7133 = vadd.f32 %v7020, %v7132
  %v7134 = vpop.f32.mrb[0].mxu0
  %v7135 = vadd.f32 %v7022, %v7134
  %7136 = vmatprep.mubr.bf16.mxu0 %v1624
  %7137 = vmatmul.mubr.bf16.gmra.mrb[0].mxu0 %v1623
  %v7138 = vpop.f32.mrb[0].mxu0
  %v7139 = vadd.f32 %v7026, %v7138
  %v7140 = vpop.f32.mrb[0].mxu0
  %v7141 = vadd.f32 %v7028, %v7140
  %v7142 = vpop.f32.mrb[0].mxu0
  %v7143 = vadd.f32 %v7030, %v7142
  %v7144 = vpop.f32.mrb[0].mxu0
  %v7145 = vadd.f32 %v7032, %v7144
  %7146 = vmatprep.mubr.bf16.mxu0 %v1640
  %7147 = vmatmul.mubr.bf16.gmra.mrb[0].mxu0 %v1639
  %v7148 = vpop.f32.mrb[0].mxu0
  %v7149 = vadd.f32 %v7036, %v7148
  %v7150 = vpop.f32.mrb[0].mxu0
  %v7151 = vadd.f32 %v7038, %v7150
  %v7152 = vpop.f32.mrb[0].mxu0
  %v7153 = vadd.f32 %v7040, %v7152
  %v7154 = vpop.f32.mrb[0].mxu0
  %v7155 = vadd.f32 %v7042, %v7154
  %7156 = vmatprep.mubr.bf16.mxu0 %v1656
  %7157 = vmatmul.mubr.bf16.gmra.mrb[0].mxu0 %v1655
  %v7158 = vpop.f32.mrb[0].mxu0
  %v7159 = vadd.f32 %v7046, %v7158
  %v7160 = vpop.f32.mrb[0].mxu0
  %v7161 = vadd.f32 %v7048, %v7160
  %v7162 = vpop.f32.mrb[0].mxu0
  %v7163 = vadd.f32 %v7050, %v7162
  %v7164 = vpop.f32.mrb[0].mxu0
  %v7165 = vadd.f32 %v7052, %v7164
  %7166 = vmatprep.mubr.bf16.mxu0 %v1672
  %7167 = vmatmul.mubr.bf16.gmra.mrb[0].mxu0 %v1671
  %v7168 = vpop.f32.mrb[0].mxu0
  %v7169 = vadd.f32 %v7056, %v7168
  %v7170 = vpop.f32.mrb[0].mxu0
  %v7171 = vadd.f32 %v7058, %v7170
  %v7172 = vpop.f32.mrb[0].mxu0
  %v7173 = vadd.f32 %v7060, %v7172
  %v7174 = vpop.f32.mrb[0].mxu0
  %v7175 = vadd.f32 %v7062, %v7174
  %7176 = vmatprep.mubr.bf16.mxu0 %v1688
  %7177 = vmatmul.mubr.bf16.gmra.mrb[0].mxu0 %v1687
  %v7178 = vpop.f32.mrb[0].mxu0
  %v7179 = vadd.f32 %v7066, %v7178
  %v7180 = vpop.f32.mrb[0].mxu0
  %v7181 = vadd.f32 %v7068, %v7180
  %v7182 = vpop.f32.mrb[0].mxu0
  %v7183 = vadd.f32 %v7070, %v7182
  %v7184 = vpop.f32.mrb[0].mxu0
  %v7185 = vadd.f32 %v7072, %v7184
  %7186 = vmatprep.mubr.bf16.mxu0 %v1704
  %7187 = vmatmul.mubr.bf16.gmra.mrb[0].mxu0 %v1703
  %v7188 = vpop.f32.mrb[0].mxu0
  %v7189 = vadd.f32 %v7076, %v7188
  %v7190 = vpop.f32.mrb[0].mxu0
  %v7191 = vadd.f32 %v7078, %v7190
  %v7192 = vpop.f32.mrb[0].mxu0
  %v7193 = vadd.f32 %v7080, %v7192
  %v7194 = vpop.f32.mrb[0].mxu0
  %v7195 = vadd.f32 %v7082, %v7194
  %7196 = vmatprep.mubr.bf16.mxu0 %v1720
  %7197 = vmatmul.mubr.bf16.gmra.mrb[0].mxu0 %v1719
  %v7198 = vpop.f32.mrb[0].mxu0
  %v7199 = vadd.f32 %v7086, %v7198
  %v7200 = vpop.f32.mrb[0].mxu0
  %v7201 = vadd.f32 %v7088, %v7200
  %v7202 = vpop.f32.mrb[0].mxu0
  %v7203 = vadd.f32 %v7090, %v7202
  %v7204 = vpop.f32.mrb[0].mxu0
  %v7205 = vadd.f32 %v7092, %v7204
  %7206 = vdwg.mxu0
  %7207 = vmatprep.subr.bf16.mxu0 %v5190
  %7208 = vmatpush1.bf16.msra.mxu0 %v5189
  %7209 = vmatprep.subr.bf16.mxu0 %v5198
  %7210 = vmatpush1.bf16.msra.mxu0 %v5197
  %7211 = vmatprep.subr.bf16.mxu0 %v5206
  %7212 = vmatpush1.bf16.msra.mxu0 %v5205
  %7213 = vmatprep.subr.bf16.mxu0 %v5214
  %7214 = vmatpush1.bf16.msra.mxu0 %v5213
  %7215 = vmatprep.subr.bf16.mxu0 %v5222
  %7216 = vmatpush1.bf16.msra.mxu0 %v5221
  %7217 = vmatprep.subr.bf16.mxu0 %v5230
  %7218 = vmatpush1.bf16.msra.mxu0 %v5229
  %7219 = vmatprep.subr.bf16.mxu0 %v5238
  %7220 = vmatpush1.bf16.msra.mxu0 %v5237
  %7221 = vmatprep.subr.bf16.mxu0 %v5246
  %7222 = vmatpush1.bf16.msra.mxu0 %v5245
  %7223 = vmatprep.subr.bf16.mxu0 %v5254
  %7224 = vmatpush1.bf16.msra.mxu0 %v5253
  %7225 = vmatprep.subr.bf16.mxu0 %v5262
  %7226 = vmatpush1.bf16.msra.mxu0 %v5261
  %7227 = vmatprep.subr.bf16.mxu0 %v5270
  %7228 = vmatpush1.bf16.msra.mxu0 %v5269
  %7229 = vmatprep.subr.bf16.mxu0 %v5278
  %7230 = vmatpush1.bf16.msra.mxu0 %v5277
  %7231 = vmatprep.subr.bf16.mxu0 %v5286
  %7232 = vmatpush1.bf16.msra.mxu0 %v5285
  %7233 = vmatprep.subr.bf16.mxu0 %v5294
  %7234 = vmatpush1.bf16.msra.mxu0 %v5293
  %7235 = vmatprep.subr.bf16.mxu0 %v5302
  %7236 = vmatpush1.bf16.msra.mxu0 %v5301
  %7237 = vmatprep.subr.bf16.mxu0 %v5310
  %7238 = vmatpush1.bf16.msra.mxu0 %v5309
  %7239 = vmatprep.mubr.bf16.mxu0 %v1610
  %7240 = vmatmul.mubr.bf16.gmra.mrb[0].mxu0 %v1609
  %v7241 = vpop.f32.mrb[0].mxu0
  %v7242 = vadd.f32 %v7129, %v7241
  %v7243 = vpop.f32.mrb[0].mxu0
  %v7244 = vadd.f32 %v7131, %v7243
  %v7245 = vpop.f32.mrb[0].mxu0
  %v7246 = vadd.f32 %v7133, %v7245
  %v7247 = vpop.f32.mrb[0].mxu0
  %v7248 = vadd.f32 %v7135, %v7247
  %7249 = vmatprep.mubr.bf16.mxu0 %v1626
  %7250 = vmatmul.mubr.bf16.gmra.mrb[0].mxu0 %v1625
  %v7251 = vpop.f32.mrb[0].mxu0
  %v7252 = vadd.f32 %v7139, %v7251
  %v7253 = vpop.f32.mrb[0].mxu0
  %v7254 = vadd.f32 %v7141, %v7253
  %v7255 = vpop.f32.mrb[0].mxu0
  %v7256 = vadd.f32 %v7143, %v7255
  %v7257 = vpop.f32.mrb[0].mxu0
  %v7258 = vadd.f32 %v7145, %v7257
  %7259 = vmatprep.mubr.bf16.mxu0 %v1642
  %7260 = vmatmul.mubr.bf16.gmra.mrb[0].mxu0 %v1641
  %v7261 = vpop.f32.mrb[0].mxu0
  %v7262 = vadd.f32 %v7149, %v7261
  %v7263 = vpop.f32.mrb[0].mxu0
  %v7264 = vadd.f32 %v7151, %v7263
  %v7265 = vpop.f32.mrb[0].mxu0
  %v7266 = vadd.f32 %v7153, %v7265
  %v7267 = vpop.f32.mrb[0].mxu0
  %v7268 = vadd.f32 %v7155, %v7267
  %7269 = vmatprep.mubr.bf16.mxu0 %v1658
  %7270 = vmatmul.mubr.bf16.gmra.mrb[0].mxu0 %v1657
  %v7271 = vpop.f32.mrb[0].mxu0
  %v7272 = vadd.f32 %v7159, %v7271
  %v7273 = vpop.f32.mrb[0].mxu0
  %v7274 = vadd.f32 %v7161, %v7273
  %v7275 = vpop.f32.mrb[0].mxu0
  %v7276 = vadd.f32 %v7163, %v7275
  %v7277 = vpop.f32.mrb[0].mxu0
  %v7278 = vadd.f32 %v7165, %v7277
  %7279 = vmatprep.mubr.bf16.mxu0 %v1674
  %7280 = vmatmul.mubr.bf16.gmra.mrb[0].mxu0 %v1673
  %v7281 = vpop.f32.mrb[0].mxu0
  %v7282 = vadd.f32 %v7169, %v7281
  %v7283 = vpop.f32.mrb[0].mxu0
  %v7284 = vadd.f32 %v7171, %v7283
  %v7285 = vpop.f32.mrb[0].mxu0
  %v7286 = vadd.f32 %v7173, %v7285
  %v7287 = vpop.f32.mrb[0].mxu0
  %v7288 = vadd.f32 %v7175, %v7287
  %7289 = vmatprep.mubr.bf16.mxu0 %v1690
  %7290 = vmatmul.mubr.bf16.gmra.mrb[0].mxu0 %v1689
  %v7291 = vpop.f32.mrb[0].mxu0
  %v7292 = vadd.f32 %v7179, %v7291
  %v7293 = vpop.f32.mrb[0].mxu0
  %v7294 = vadd.f32 %v7181, %v7293
  %v7295 = vpop.f32.mrb[0].mxu0
  %v7296 = vadd.f32 %v7183, %v7295
  %v7297 = vpop.f32.mrb[0].mxu0
  %v7298 = vadd.f32 %v7185, %v7297
  %7299 = vmatprep.mubr.bf16.mxu0 %v1706
  %7300 = vmatmul.mubr.bf16.gmra.mrb[0].mxu0 %v1705
  %v7301 = vpop.f32.mrb[0].mxu0
  %v7302 = vadd.f32 %v7189, %v7301
  %v7303 = vpop.f32.mrb[0].mxu0
  %v7304 = vadd.f32 %v7191, %v7303
  %v7305 = vpop.f32.mrb[0].mxu0
  %v7306 = vadd.f32 %v7193, %v7305
  %v7307 = vpop.f32.mrb[0].mxu0
  %v7308 = vadd.f32 %v7195, %v7307
  %7309 = vmatprep.mubr.bf16.mxu0 %v1722
  %7310 = vmatmul.mubr.bf16.gmra.mrb[0].mxu0 %v1721
  %v7311 = vpop.f32.mrb[0].mxu0
  %v7312 = vadd.f32 %v7199, %v7311
  %v7313 = vpop.f32.mrb[0].mxu0
  %v7314 = vadd.f32 %v7201, %v7313
  %v7315 = vpop.f32.mrb[0].mxu0
  %v7316 = vadd.f32 %v7203, %v7315
  %v7317 = vpop.f32.mrb[0].mxu0
  %v7318 = vadd.f32 %v7205, %v7317
  %7319 = vdwg.mxu0
  %7320 = vmatprep.subr.bf16.mxu0 %v5318
  %7321 = vmatpush1.bf16.msra.mxu0 %v5317
  %7322 = vmatprep.subr.bf16.mxu0 %v5326
  %7323 = vmatpush1.bf16.msra.mxu0 %v5325
  %7324 = vmatprep.subr.bf16.mxu0 %v5334
  %7325 = vmatpush1.bf16.msra.mxu0 %v5333
  %7326 = vmatprep.subr.bf16.mxu0 %v5342
  %7327 = vmatpush1.bf16.msra.mxu0 %v5341
  %7328 = vmatprep.subr.bf16.mxu0 %v5350
  %7329 = vmatpush1.bf16.msra.mxu0 %v5349
  %7330 = vmatprep.subr.bf16.mxu0 %v5358
  %7331 = vmatpush1.bf16.msra.mxu0 %v5357
  %7332 = vmatprep.subr.bf16.mxu0 %v5366
  %7333 = vmatpush1.bf16.msra.mxu0 %v5365
  %7334 = vmatprep.subr.bf16.mxu0 %v5374
  %7335 = vmatpush1.bf16.msra.mxu0 %v5373
  %7336 = vmatprep.subr.bf16.mxu0 %v5382
  %7337 = vmatpush1.bf16.msra.mxu0 %v5381
  %7338 = vmatprep.subr.bf16.mxu0 %v5390
  %7339 = vmatpush1.bf16.msra.mxu0 %v5389
  %7340 = vmatprep.subr.bf16.mxu0 %v5398
  %7341 = vmatpush1.bf16.msra.mxu0 %v5397
  %7342 = vmatprep.subr.bf16.mxu0 %v5406
  %7343 = vmatpush1.bf16.msra.mxu0 %v5405
  %7344 = vmatprep.subr.bf16.mxu0 %v5414
  %7345 = vmatpush1.bf16.msra.mxu0 %v5413
  %7346 = vmatprep.subr.bf16.mxu0 %v5422
  %7347 = vmatpush1.bf16.msra.mxu0 %v5421
  %7348 = vmatprep.subr.bf16.mxu0 %v5430
  %7349 = vmatpush1.bf16.msra.mxu0 %v5429
  %7350 = vmatprep.subr.bf16.mxu0 %v5438
  %7351 = vmatpush1.bf16.msra.mxu0 %v5437
  %7352 = vmatprep.mubr.bf16.mxu0 %v1612
  %7353 = vmatmul.mubr.bf16.gmra.mrb[0].mxu0 %v1611
  %v7354 = vpop.f32.mrb[0].mxu0
  %v7355 = vadd.f32 %v7242, %v7354
  %v7356 = vpop.f32.mrb[0].mxu0
  %v7357 = vadd.f32 %v7244, %v7356
  %v7358 = vpop.f32.mrb[0].mxu0
  %v7359 = vadd.f32 %v7246, %v7358
  %v7360 = vpop.f32.mrb[0].mxu0
  %v7361 = vadd.f32 %v7248, %v7360
  %7362 = vmatprep.mubr.bf16.mxu0 %v1628
  %7363 = vmatmul.mubr.bf16.gmra.mrb[0].mxu0 %v1627
  %v7364 = vpop.f32.mrb[0].mxu0
  %v7365 = vadd.f32 %v7252, %v7364
  %v7366 = vpop.f32.mrb[0].mxu0
  %v7367 = vadd.f32 %v7254, %v7366
  %v7368 = vpop.f32.mrb[0].mxu0
  %v7369 = vadd.f32 %v7256, %v7368
  %v7370 = vpop.f32.mrb[0].mxu0
  %v7371 = vadd.f32 %v7258, %v7370
  %7372 = vmatprep.mubr.bf16.mxu0 %v1644
  %7373 = vmatmul.mubr.bf16.gmra.mrb[0].mxu0 %v1643
  %v7374 = vpop.f32.mrb[0].mxu0
  %v7375 = vadd.f32 %v7262, %v7374
  %v7376 = vpop.f32.mrb[0].mxu0
  %v7377 = vadd.f32 %v7264, %v7376
  %v7378 = vpop.f32.mrb[0].mxu0
  %v7379 = vadd.f32 %v7266, %v7378
  %v7380 = vpop.f32.mrb[0].mxu0
  %v7381 = vadd.f32 %v7268, %v7380
  %7382 = vmatprep.mubr.bf16.mxu0 %v1660
  %7383 = vmatmul.mubr.bf16.gmra.mrb[0].mxu0 %v1659
  %v7384 = vpop.f32.mrb[0].mxu0
  %v7385 = vadd.f32 %v7272, %v7384
  %v7386 = vpop.f32.mrb[0].mxu0
  %v7387 = vadd.f32 %v7274, %v7386
  %v7388 = vpop.f32.mrb[0].mxu0
  %v7389 = vadd.f32 %v7276, %v7388
  %v7390 = vpop.f32.mrb[0].mxu0
  %v7391 = vadd.f32 %v7278, %v7390
  %7392 = vmatprep.mubr.bf16.mxu0 %v1676
  %7393 = vmatmul.mubr.bf16.gmra.mrb[0].mxu0 %v1675
  %v7394 = vpop.f32.mrb[0].mxu0
  %v7395 = vadd.f32 %v7282, %v7394
  %v7396 = vpop.f32.mrb[0].mxu0
  %v7397 = vadd.f32 %v7284, %v7396
  %v7398 = vpop.f32.mrb[0].mxu0
  %v7399 = vadd.f32 %v7286, %v7398
  %v7400 = vpop.f32.mrb[0].mxu0
  %v7401 = vadd.f32 %v7288, %v7400
  %7402 = vmatprep.mubr.bf16.mxu0 %v1692
  %7403 = vmatmul.mubr.bf16.gmra.mrb[0].mxu0 %v1691
  %v7404 = vpop.f32.mrb[0].mxu0
  %v7405 = vadd.f32 %v7292, %v7404
  %v7406 = vpop.f32.mrb[0].mxu0
  %v7407 = vadd.f32 %v7294, %v7406
  %v7408 = vpop.f32.mrb[0].mxu0
  %v7409 = vadd.f32 %v7296, %v7408
  %v7410 = vpop.f32.mrb[0].mxu0
  %v7411 = vadd.f32 %v7298, %v7410
  %7412 = vmatprep.mubr.bf16.mxu0 %v1708
  %7413 = vmatmul.mubr.bf16.gmra.mrb[0].mxu0 %v1707
  %v7414 = vpop.f32.mrb[0].mxu0
  %v7415 = vadd.f32 %v7302, %v7414
  %v7416 = vpop.f32.mrb[0].mxu0
  %v7417 = vadd.f32 %v7304, %v7416
  %v7418 = vpop.f32.mrb[0].mxu0
  %v7419 = vadd.f32 %v7306, %v7418
  %v7420 = vpop.f32.mrb[0].mxu0
  %v7421 = vadd.f32 %v7308, %v7420
  %7422 = vmatprep.mubr.bf16.mxu0 %v1724
  %7423 = vmatmul.mubr.bf16.gmra.mrb[0].mxu0 %v1723
  %v7424 = vpop.f32.mrb[0].mxu0
  %v7425 = vadd.f32 %v7312, %v7424
  %v7426 = vpop.f32.mrb[0].mxu0
  %v7427 = vadd.f32 %v7314, %v7426
  %v7428 = vpop.f32.mrb[0].mxu0
  %v7429 = vadd.f32 %v7316, %v7428
  %v7430 = vpop.f32.mrb[0].mxu0
  %v7431 = vadd.f32 %v7318, %v7430
  %7432 = vdwg.mxu0
  %7433 = vmatprep.subr.bf16.mxu0 %v5446
  %7434 = vmatpush1.bf16.msra.mxu0 %v5445
  %7435 = vmatprep.subr.bf16.mxu0 %v5454
  %7436 = vmatpush1.bf16.msra.mxu0 %v5453
  %7437 = vmatprep.subr.bf16.mxu0 %v5462
  %7438 = vmatpush1.bf16.msra.mxu0 %v5461
  %7439 = vmatprep.subr.bf16.mxu0 %v5470
  %7440 = vmatpush1.bf16.msra.mxu0 %v5469
  %7441 = vmatprep.subr.bf16.mxu0 %v5478
  %7442 = vmatpush1.bf16.msra.mxu0 %v5477
  %7443 = vmatprep.subr.bf16.mxu0 %v5486
  %7444 = vmatpush1.bf16.msra.mxu0 %v5485
  %7445 = vmatprep.subr.bf16.mxu0 %v5494
  %7446 = vmatpush1.bf16.msra.mxu0 %v5493
  %7447 = vmatprep.subr.bf16.mxu0 %v5502
  %7448 = vmatpush1.bf16.msra.mxu0 %v5501
  %7449 = vmatprep.subr.bf16.mxu0 %v5510
  %7450 = vmatpush1.bf16.msra.mxu0 %v5509
  %7451 = vmatprep.subr.bf16.mxu0 %v5518
  %7452 = vmatpush1.bf16.msra.mxu0 %v5517
  %7453 = vmatprep.subr.bf16.mxu0 %v5526
  %7454 = vmatpush1.bf16.msra.mxu0 %v5525
  %7455 = vmatprep.subr.bf16.mxu0 %v5534
  %7456 = vmatpush1.bf16.msra.mxu0 %v5533
  %7457 = vmatprep.subr.bf16.mxu0 %v5542
  %7458 = vmatpush1.bf16.msra.mxu0 %v5541
  %7459 = vmatprep.subr.bf16.mxu0 %v5550
  %7460 = vmatpush1.bf16.msra.mxu0 %v5549
  %7461 = vmatprep.subr.bf16.mxu0 %v5558
  %7462 = vmatpush1.bf16.msra.mxu0 %v5557
  %7463 = vmatprep.subr.bf16.mxu0 %v5566
  %7464 = vmatpush1.bf16.msra.mxu0 %v5565
  %7465 = vmatprep.mubr.bf16.mxu0 %v1614
  %7466 = vmatmul.mubr.bf16.gmra.mrb[0].mxu0 %v1613
  %v7467 = vpop.f32.mrb[0].mxu0
  %v7468 = vadd.f32 %v7355, %v7467
  %v7469 = vpop.f32.mrb[0].mxu0
  %v7470 = vadd.f32 %v7357, %v7469
  %v7471 = vpop.f32.mrb[0].mxu0
  %v7472 = vadd.f32 %v7359, %v7471
  %v7473 = vpop.f32.mrb[0].mxu0
  %v7474 = vadd.f32 %v7361, %v7473
  %7475 = vmatprep.mubr.bf16.mxu0 %v1630
  %7476 = vmatmul.mubr.bf16.gmra.mrb[0].mxu0 %v1629
  %v7477 = vpop.f32.mrb[0].mxu0
  %v7478 = vadd.f32 %v7365, %v7477
  %v7479 = vpop.f32.mrb[0].mxu0
  %v7480 = vadd.f32 %v7367, %v7479
  %v7481 = vpop.f32.mrb[0].mxu0
  %v7482 = vadd.f32 %v7369, %v7481
  %v7483 = vpop.f32.mrb[0].mxu0
  %v7484 = vadd.f32 %v7371, %v7483
  %7485 = vmatprep.mubr.bf16.mxu0 %v1646
  %7486 = vmatmul.mubr.bf16.gmra.mrb[0].mxu0 %v1645
  %v7487 = vpop.f32.mrb[0].mxu0
  %v7488 = vadd.f32 %v7375, %v7487
  %v7489 = vpop.f32.mrb[0].mxu0
  %v7490 = vadd.f32 %v7377, %v7489
  %v7491 = vpop.f32.mrb[0].mxu0
  %v7492 = vadd.f32 %v7379, %v7491
  %v7493 = vpop.f32.mrb[0].mxu0
  %v7494 = vadd.f32 %v7381, %v7493
  %7495 = vmatprep.mubr.bf16.mxu0 %v1662
  %7496 = vmatmul.mubr.bf16.gmra.mrb[0].mxu0 %v1661
  %v7497 = vpop.f32.mrb[0].mxu0
  %v7498 = vadd.f32 %v7385, %v7497
  %v7499 = vpop.f32.mrb[0].mxu0
  %v7500 = vadd.f32 %v7387, %v7499
  %v7501 = vpop.f32.mrb[0].mxu0
  %v7502 = vadd.f32 %v7389, %v7501
  %v7503 = vpop.f32.mrb[0].mxu0
  %v7504 = vadd.f32 %v7391, %v7503
  %7505 = vmatprep.mubr.bf16.mxu0 %v1678
  %7506 = vmatmul.mubr.bf16.gmra.mrb[0].mxu0 %v1677
  %v7507 = vpop.f32.mrb[0].mxu0
  %v7508 = vadd.f32 %v7395, %v7507
  %v7509 = vpop.f32.mrb[0].mxu0
  %v7510 = vadd.f32 %v7397, %v7509
  %v7511 = vpop.f32.mrb[0].mxu0
  %v7512 = vadd.f32 %v7399, %v7511
  %v7513 = vpop.f32.mrb[0].mxu0
  %v7514 = vadd.f32 %v7401, %v7513
  %7515 = vmatprep.mubr.bf16.mxu0 %v1694
  %7516 = vmatmul.mubr.bf16.gmra.mrb[0].mxu0 %v1693
  %v7517 = vpop.f32.mrb[0].mxu0
  %v7518 = vadd.f32 %v7405, %v7517
  %v7519 = vpop.f32.mrb[0].mxu0
  %v7520 = vadd.f32 %v7407, %v7519
  %v7521 = vpop.f32.mrb[0].mxu0
  %v7522 = vadd.f32 %v7409, %v7521
  %v7523 = vpop.f32.mrb[0].mxu0
  %v7524 = vadd.f32 %v7411, %v7523
  %7525 = vmatprep.mubr.bf16.mxu0 %v1710
  %7526 = vmatmul.mubr.bf16.gmra.mrb[0].mxu0 %v1709
  %v7527 = vpop.f32.mrb[0].mxu0
  %v7528 = vadd.f32 %v7415, %v7527
  %v7529 = vpop.f32.mrb[0].mxu0
  %v7530 = vadd.f32 %v7417, %v7529
  %v7531 = vpop.f32.mrb[0].mxu0
  %v7532 = vadd.f32 %v7419, %v7531
  %v7533 = vpop.f32.mrb[0].mxu0
  %v7534 = vadd.f32 %v7421, %v7533
  %7535 = vmatprep.mubr.bf16.mxu0 %v1726
  %7536 = vmatmul.mubr.bf16.gmra.mrb[0].mxu0 %v1725
  %v7537 = vpop.f32.mrb[0].mxu0
  %v7538 = vadd.f32 %v7425, %v7537
  %v7539 = vpop.f32.mrb[0].mxu0
  %v7540 = vadd.f32 %v7427, %v7539
  %v7541 = vpop.f32.mrb[0].mxu0
  %v7542 = vadd.f32 %v7429, %v7541
  %v7543 = vpop.f32.mrb[0].mxu0
  %v7544 = vadd.f32 %v7431, %v7543
  %7545 = vdwg.mxu0
  %7546 = vmatprep.subr.bf16.mxu0 %v5574
  %7547 = vmatpush1.bf16.msra.mxu0 %v5573
  %7548 = vmatprep.subr.bf16.mxu0 %v5582
  %7549 = vmatpush1.bf16.msra.mxu0 %v5581
  %7550 = vmatprep.subr.bf16.mxu0 %v5590
  %7551 = vmatpush1.bf16.msra.mxu0 %v5589
  %7552 = vmatprep.subr.bf16.mxu0 %v5598
  %7553 = vmatpush1.bf16.msra.mxu0 %v5597
  %7554 = vmatprep.subr.bf16.mxu0 %v5606
  %7555 = vmatpush1.bf16.msra.mxu0 %v5605
  %7556 = vmatprep.subr.bf16.mxu0 %v5614
  %7557 = vmatpush1.bf16.msra.mxu0 %v5613
  %7558 = vmatprep.subr.bf16.mxu0 %v5622
  %7559 = vmatpush1.bf16.msra.mxu0 %v5621
  %7560 = vmatprep.subr.bf16.mxu0 %v5630
  %7561 = vmatpush1.bf16.msra.mxu0 %v5629
  %7562 = vmatprep.subr.bf16.mxu0 %v5638
  %7563 = vmatpush1.bf16.msra.mxu0 %v5637
  %7564 = vmatprep.subr.bf16.mxu0 %v5646
  %7565 = vmatpush1.bf16.msra.mxu0 %v5645
  %7566 = vmatprep.subr.bf16.mxu0 %v5654
  %7567 = vmatpush1.bf16.msra.mxu0 %v5653
  %7568 = vmatprep.subr.bf16.mxu0 %v5662
  %7569 = vmatpush1.bf16.msra.mxu0 %v5661
  %7570 = vmatprep.subr.bf16.mxu0 %v5670
  %7571 = vmatpush1.bf16.msra.mxu0 %v5669
  %7572 = vmatprep.subr.bf16.mxu0 %v5678
  %7573 = vmatpush1.bf16.msra.mxu0 %v5677
  %7574 = vmatprep.subr.bf16.mxu0 %v5686
  %7575 = vmatpush1.bf16.msra.mxu0 %v5685
  %7576 = vmatprep.subr.bf16.mxu0 %v5694
  %7577 = vmatpush1.bf16.msra.mxu0 %v5693
  %7578 = vmatprep.mubr.bf16.mxu0 %v1616
  %7579 = vmatmul.mubr.bf16.gmra.mrb[0].mxu0 %v1615
  %v7580 = vpop.f32.mrb[0].mxu0
  %v7581 = vadd.f32 %v7468, %v7580
  %v7582 = vpop.f32.mrb[0].mxu0
  %v7583 = vadd.f32 %v7470, %v7582
  %v7584 = vpop.f32.mrb[0].mxu0
  %v7585 = vadd.f32 %v7472, %v7584
  %v7586 = vpop.f32.mrb[0].mxu0
  %v7587 = vadd.f32 %v7474, %v7586
  %7588 = vmatprep.mubr.bf16.mxu0 %v1632
  %7589 = vmatmul.mubr.bf16.gmra.mrb[0].mxu0 %v1631
  %v7590 = vpop.f32.mrb[0].mxu0
  %v7591 = vadd.f32 %v7478, %v7590
  %v7592 = vpop.f32.mrb[0].mxu0
  %v7593 = vadd.f32 %v7480, %v7592
  %v7594 = vpop.f32.mrb[0].mxu0
  %v7595 = vadd.f32 %v7482, %v7594
  %v7596 = vpop.f32.mrb[0].mxu0
  %v7597 = vadd.f32 %v7484, %v7596
  %7598 = vmatprep.mubr.bf16.mxu0 %v1648
  %7599 = vmatmul.mubr.bf16.gmra.mrb[0].mxu0 %v1647
  %v7600 = vpop.f32.mrb[0].mxu0
  %v7601 = vadd.f32 %v7488, %v7600
  %v7602 = vpop.f32.mrb[0].mxu0
  %v7603 = vadd.f32 %v7490, %v7602
  %v7604 = vpop.f32.mrb[0].mxu0
  %v7605 = vadd.f32 %v7492, %v7604
  %v7606 = vpop.f32.mrb[0].mxu0
  %v7607 = vadd.f32 %v7494, %v7606
  %7608 = vmatprep.mubr.bf16.mxu0 %v1664
  %7609 = vmatmul.mubr.bf16.gmra.mrb[0].mxu0 %v1663
  %v7610 = vpop.f32.mrb[0].mxu0
  %v7611 = vadd.f32 %v7498, %v7610
  %v7612 = vpop.f32.mrb[0].mxu0
  %v7613 = vadd.f32 %v7500, %v7612
  %v7614 = vpop.f32.mrb[0].mxu0
  %v7615 = vadd.f32 %v7502, %v7614
  %v7616 = vpop.f32.mrb[0].mxu0
  %v7617 = vadd.f32 %v7504, %v7616
  %7618 = vmatprep.mubr.bf16.mxu0 %v1680
  %7619 = vmatmul.mubr.bf16.gmra.mrb[0].mxu0 %v1679
  %v7620 = vpop.f32.mrb[0].mxu0
  %v7621 = vadd.f32 %v7508, %v7620
  %v7622 = vpop.f32.mrb[0].mxu0
  %v7623 = vadd.f32 %v7510, %v7622
  %v7624 = vpop.f32.mrb[0].mxu0
  %v7625 = vadd.f32 %v7512, %v7624
  %v7626 = vpop.f32.mrb[0].mxu0
  %v7627 = vadd.f32 %v7514, %v7626
  %7628 = vmatprep.mubr.bf16.mxu0 %v1696
  %7629 = vmatmul.mubr.bf16.gmra.mrb[0].mxu0 %v1695
  %v7630 = vpop.f32.mrb[0].mxu0
  %v7631 = vadd.f32 %v7518, %v7630
  %v7632 = vpop.f32.mrb[0].mxu0
  %v7633 = vadd.f32 %v7520, %v7632
  %v7634 = vpop.f32.mrb[0].mxu0
  %v7635 = vadd.f32 %v7522, %v7634
  %v7636 = vpop.f32.mrb[0].mxu0
  %v7637 = vadd.f32 %v7524, %v7636
  %7638 = vmatprep.mubr.bf16.mxu0 %v1712
  %7639 = vmatmul.mubr.bf16.gmra.mrb[0].mxu0 %v1711
  %v7640 = vpop.f32.mrb[0].mxu0
  %v7641 = vadd.f32 %v7528, %v7640
  %v7642 = vpop.f32.mrb[0].mxu0
  %v7643 = vadd.f32 %v7530, %v7642
  %v7644 = vpop.f32.mrb[0].mxu0
  %v7645 = vadd.f32 %v7532, %v7644
  %v7646 = vpop.f32.mrb[0].mxu0
  %v7647 = vadd.f32 %v7534, %v7646
  %7648 = vmatprep.mubr.bf16.mxu0 %v1728
  %7649 = vmatmul.mubr.bf16.gmra.mrb[0].mxu0 %v1727
  %v7650 = vpop.f32.mrb[0].mxu0
  %v7651 = vadd.f32 %v7538, %v7650
  %v7652 = vpop.f32.mrb[0].mxu0
  %v7653 = vadd.f32 %v7540, %v7652
  %v7654 = vpop.f32.mrb[0].mxu0
  %v7655 = vadd.f32 %v7542, %v7654
  %v7656 = vpop.f32.mrb[0].mxu0
  %v7657 = vadd.f32 %v7544, %v7656
  %7658 = vdwg.mxu0
  %7659 = vmatprep.subr.bf16.mxu0 %v5702
  %7660 = vmatpush1.bf16.msra.mxu0 %v5701
  %7661 = vmatprep.subr.bf16.mxu0 %v5710
  %7662 = vmatpush1.bf16.msra.mxu0 %v5709
  %7663 = vmatprep.subr.bf16.mxu0 %v5718
  %7664 = vmatpush1.bf16.msra.mxu0 %v5717
  %7665 = vmatprep.subr.bf16.mxu0 %v5726
  %7666 = vmatpush1.bf16.msra.mxu0 %v5725
  %7667 = vmatprep.subr.bf16.mxu0 %v5734
  %7668 = vmatpush1.bf16.msra.mxu0 %v5733
  %7669 = vmatprep.subr.bf16.mxu0 %v5742
  %7670 = vmatpush1.bf16.msra.mxu0 %v5741
  %7671 = vmatprep.subr.bf16.mxu0 %v5750
  %7672 = vmatpush1.bf16.msra.mxu0 %v5749
  %7673 = vmatprep.subr.bf16.mxu0 %v5758
  %7674 = vmatpush1.bf16.msra.mxu0 %v5757
  %7675 = vmatprep.subr.bf16.mxu0 %v5766
  %7676 = vmatpush1.bf16.msra.mxu0 %v5765
  %7677 = vmatprep.subr.bf16.mxu0 %v5774
  %7678 = vmatpush1.bf16.msra.mxu0 %v5773
  %7679 = vmatprep.subr.bf16.mxu0 %v5782
  %7680 = vmatpush1.bf16.msra.mxu0 %v5781
  %7681 = vmatprep.subr.bf16.mxu0 %v5790
  %7682 = vmatpush1.bf16.msra.mxu0 %v5789
  %7683 = vmatprep.subr.bf16.mxu0 %v5798
  %7684 = vmatpush1.bf16.msra.mxu0 %v5797
  %7685 = vmatprep.subr.bf16.mxu0 %v5806
  %7686 = vmatpush1.bf16.msra.mxu0 %v5805
  %7687 = vmatprep.subr.bf16.mxu0 %v5814
  %7688 = vmatpush1.bf16.msra.mxu0 %v5813
  %7689 = vmatprep.subr.bf16.mxu0 %v5822
  %7690 = vmatpush1.bf16.msra.mxu0 %v5821
  %7691 = vmatprep.mubr.bf16.mxu0 %v1618
  %7692 = vmatmul.mubr.bf16.gmra.mrb[0].mxu0 %v1617
  %v7693 = vpop.f32.mrb[0].mxu0
  %v7694 = vadd.f32 %v7581, %v7693
  %v7695 = vpop.f32.mrb[0].mxu0
  %v7696 = vadd.f32 %v7583, %v7695
  %v7697 = vpop.f32.mrb[0].mxu0
  %v7698 = vadd.f32 %v7585, %v7697
  %v7699 = vpop.f32.mrb[0].mxu0
  %v7700 = vadd.f32 %v7587, %v7699
  %7701 = vmatprep.mubr.bf16.mxu0 %v1634
  %7702 = vmatmul.mubr.bf16.gmra.mrb[0].mxu0 %v1633
  %v7703 = vpop.f32.mrb[0].mxu0
  %v7704 = vadd.f32 %v7591, %v7703
  %v7705 = vpop.f32.mrb[0].mxu0
  %v7706 = vadd.f32 %v7593, %v7705
  %v7707 = vpop.f32.mrb[0].mxu0
  %v7708 = vadd.f32 %v7595, %v7707
  %v7709 = vpop.f32.mrb[0].mxu0
  %v7710 = vadd.f32 %v7597, %v7709
  %7711 = vmatprep.mubr.bf16.mxu0 %v1650
  %7712 = vmatmul.mubr.bf16.gmra.mrb[0].mxu0 %v1649
  %v7713 = vpop.f32.mrb[0].mxu0
  %v7714 = vadd.f32 %v7601, %v7713
  %v7715 = vpop.f32.mrb[0].mxu0
  %v7716 = vadd.f32 %v7603, %v7715
  %v7717 = vpop.f32.mrb[0].mxu0
  %v7718 = vadd.f32 %v7605, %v7717
  %v7719 = vpop.f32.mrb[0].mxu0
  %v7720 = vadd.f32 %v7607, %v7719
  %7721 = vmatprep.mubr.bf16.mxu0 %v1666
  %7722 = vmatmul.mubr.bf16.gmra.mrb[0].mxu0 %v1665
  %v7723 = vpop.f32.mrb[0].mxu0
  %v7724 = vadd.f32 %v7611, %v7723
  %v7725 = vpop.f32.mrb[0].mxu0
  %v7726 = vadd.f32 %v7613, %v7725
  %v7727 = vpop.f32.mrb[0].mxu0
  %v7728 = vadd.f32 %v7615, %v7727
  %v7729 = vpop.f32.mrb[0].mxu0
  %v7730 = vadd.f32 %v7617, %v7729
  %7731 = vmatprep.mubr.bf16.mxu0 %v1682
  %7732 = vmatmul.mubr.bf16.gmra.mrb[0].mxu0 %v1681
  %v7733 = vpop.f32.mrb[0].mxu0
  %v7734 = vadd.f32 %v7621, %v7733
  %v7735 = vpop.f32.mrb[0].mxu0
  %v7736 = vadd.f32 %v7623, %v7735
  %v7737 = vpop.f32.mrb[0].mxu0
  %v7738 = vadd.f32 %v7625, %v7737
  %v7739 = vpop.f32.mrb[0].mxu0
  %v7740 = vadd.f32 %v7627, %v7739
  %7741 = vmatprep.mubr.bf16.mxu0 %v1698
  %7742 = vmatmul.mubr.bf16.gmra.mrb[0].mxu0 %v1697
  %v7743 = vpop.f32.mrb[0].mxu0
  %v7744 = vadd.f32 %v7631, %v7743
  %v7745 = vpop.f32.mrb[0].mxu0
  %v7746 = vadd.f32 %v7633, %v7745
  %v7747 = vpop.f32.mrb[0].mxu0
  %v7748 = vadd.f32 %v7635, %v7747
  %v7749 = vpop.f32.mrb[0].mxu0
  %v7750 = vadd.f32 %v7637, %v7749
  %7751 = vmatprep.mubr.bf16.mxu0 %v1714
  %7752 = vmatmul.mubr.bf16.gmra.mrb[0].mxu0 %v1713
  %v7753 = vpop.f32.mrb[0].mxu0
  %v7754 = vadd.f32 %v7641, %v7753
  %v7755 = vpop.f32.mrb[0].mxu0
  %v7756 = vadd.f32 %v7643, %v7755
  %v7757 = vpop.f32.mrb[0].mxu0
  %v7758 = vadd.f32 %v7645, %v7757
  %v7759 = vpop.f32.mrb[0].mxu0
  %v7760 = vadd.f32 %v7647, %v7759
  %7761 = vmatprep.mubr.bf16.mxu0 %v1730
  %7762 = vmatmul.mubr.bf16.gmra.mrb[0].mxu0 %v1729
  %v7763 = vpop.f32.mrb[0].mxu0
  %v7764 = vadd.f32 %v7651, %v7763
  %v7765 = vpop.f32.mrb[0].mxu0
  %v7766 = vadd.f32 %v7653, %v7765
  %v7767 = vpop.f32.mrb[0].mxu0
  %v7768 = vadd.f32 %v7655, %v7767
  %v7769 = vpop.f32.mrb[0].mxu0
  %v7770 = vadd.f32 %v7657, %v7769
  %7771 = vdwg.mxu0
  %7772 = vmatprep.subr.bf16.mxu0 %v5830
  %7773 = vmatpush1.bf16.msra.mxu0 %v5829
  %7774 = vmatprep.subr.bf16.mxu0 %v5838
  %7775 = vmatpush1.bf16.msra.mxu0 %v5837
  %7776 = vmatprep.subr.bf16.mxu0 %v5846
  %7777 = vmatpush1.bf16.msra.mxu0 %v5845
  %7778 = vmatprep.subr.bf16.mxu0 %v5854
  %7779 = vmatpush1.bf16.msra.mxu0 %v5853
  %7780 = vmatprep.subr.bf16.mxu0 %v5862
  %7781 = vmatpush1.bf16.msra.mxu0 %v5861
  %7782 = vmatprep.subr.bf16.mxu0 %v5870
  %7783 = vmatpush1.bf16.msra.mxu0 %v5869
  %7784 = vmatprep.subr.bf16.mxu0 %v5878
  %7785 = vmatpush1.bf16.msra.mxu0 %v5877
  %7786 = vmatprep.subr.bf16.mxu0 %v5886
  %7787 = vmatpush1.bf16.msra.mxu0 %v5885
  %7788 = vmatprep.subr.bf16.mxu0 %v5894
  %7789 = vmatpush1.bf16.msra.mxu0 %v5893
  %7790 = vmatprep.subr.bf16.mxu0 %v5902
  %7791 = vmatpush1.bf16.msra.mxu0 %v5901
  %7792 = vmatprep.subr.bf16.mxu0 %v5910
  %7793 = vmatpush1.bf16.msra.mxu0 %v5909
  %7794 = vmatprep.subr.bf16.mxu0 %v5918
  %7795 = vmatpush1.bf16.msra.mxu0 %v5917
  %7796 = vmatprep.subr.bf16.mxu0 %v5926
  %7797 = vmatpush1.bf16.msra.mxu0 %v5925
  %7798 = vmatprep.subr.bf16.mxu0 %v5934
  %7799 = vmatpush1.bf16.msra.mxu0 %v5933
  %7800 = vmatprep.subr.bf16.mxu0 %v5942
  %7801 = vmatpush1.bf16.msra.mxu0 %v5941
  %7802 = vmatprep.subr.bf16.mxu0 %v5950
  %7803 = vmatpush1.bf16.msra.mxu0 %v5949
  %7804 = vmatprep.mubr.bf16.mxu0 %v1620
  %7805 = vmatmul.mubr.bf16.gmra.mrb[0].mxu0 %v1619
  %v7806 = vpop.f32.mrb[0].mxu0
  %v7807 = vadd.f32 %v7694, %v7806
  %v7808 = vpop.f32.mrb[0].mxu0
  %v7809 = vadd.f32 %v7696, %v7808
  %v7810 = vpop.f32.mrb[0].mxu0
  %v7811 = vadd.f32 %v7698, %v7810
  %v7812 = vpop.f32.mrb[0].mxu0
  %v7813 = vadd.f32 %v7700, %v7812
  %7814 = vmatprep.mubr.bf16.mxu0 %v1636
  %7815 = vmatmul.mubr.bf16.gmra.mrb[0].mxu0 %v1635
  %v7816 = vpop.f32.mrb[0].mxu0
  %v7817 = vadd.f32 %v7704, %v7816
  %v7818 = vpop.f32.mrb[0].mxu0
  %v7819 = vadd.f32 %v7706, %v7818
  %v7820 = vpop.f32.mrb[0].mxu0
  %v7821 = vadd.f32 %v7708, %v7820
  %v7822 = vpop.f32.mrb[0].mxu0
  %v7823 = vadd.f32 %v7710, %v7822
  %7824 = vmatprep.mubr.bf16.mxu0 %v1652
  %7825 = vmatmul.mubr.bf16.gmra.mrb[0].mxu0 %v1651
  %v7826 = vpop.f32.mrb[0].mxu0
  %v7827 = vadd.f32 %v7714, %v7826
  %v7828 = vpop.f32.mrb[0].mxu0
  %v7829 = vadd.f32 %v7716, %v7828
  %v7830 = vpop.f32.mrb[0].mxu0
  %v7831 = vadd.f32 %v7718, %v7830
  %v7832 = vpop.f32.mrb[0].mxu0
  %v7833 = vadd.f32 %v7720, %v7832
  %7834 = vmatprep.mubr.bf16.mxu0 %v1668
  %7835 = vmatmul.mubr.bf16.gmra.mrb[0].mxu0 %v1667
  %v7836 = vpop.f32.mrb[0].mxu0
  %v7837 = vadd.f32 %v7724, %v7836
  %v7838 = vpop.f32.mrb[0].mxu0
  %v7839 = vadd.f32 %v7726, %v7838
  %v7840 = vpop.f32.mrb[0].mxu0
  %v7841 = vadd.f32 %v7728, %v7840
  %v7842 = vpop.f32.mrb[0].mxu0
  %v7843 = vadd.f32 %v7730, %v7842
  %7844 = vmatprep.mubr.bf16.mxu0 %v1684
  %7845 = vmatmul.mubr.bf16.gmra.mrb[0].mxu0 %v1683
  %v7846 = vpop.f32.mrb[0].mxu0
  %v7847 = vadd.f32 %v7734, %v7846
  %v7848 = vpop.f32.mrb[0].mxu0
  %v7849 = vadd.f32 %v7736, %v7848
  %v7850 = vpop.f32.mrb[0].mxu0
  %v7851 = vadd.f32 %v7738, %v7850
  %v7852 = vpop.f32.mrb[0].mxu0
  %v7853 = vadd.f32 %v7740, %v7852
  %7854 = vmatprep.mubr.bf16.mxu0 %v1700
  %7855 = vmatmul.mubr.bf16.gmra.mrb[0].mxu0 %v1699
  %v7856 = vpop.f32.mrb[0].mxu0
  %v7857 = vadd.f32 %v7744, %v7856
  %v7858 = vpop.f32.mrb[0].mxu0
  %v7859 = vadd.f32 %v7746, %v7858
  %v7860 = vpop.f32.mrb[0].mxu0
  %v7861 = vadd.f32 %v7748, %v7860
  %v7862 = vpop.f32.mrb[0].mxu0
  %v7863 = vadd.f32 %v7750, %v7862
  %7864 = vmatprep.mubr.bf16.mxu0 %v1716
  %7865 = vmatmul.mubr.bf16.gmra.mrb[0].mxu0 %v1715
  %v7866 = vpop.f32.mrb[0].mxu0
  %v7867 = vadd.f32 %v7754, %v7866
  %v7868 = vpop.f32.mrb[0].mxu0
  %v7869 = vadd.f32 %v7756, %v7868
  %v7870 = vpop.f32.mrb[0].mxu0
  %v7871 = vadd.f32 %v7758, %v7870
  %v7872 = vpop.f32.mrb[0].mxu0
  %v7873 = vadd.f32 %v7760, %v7872
  %7874 = vmatprep.mubr.bf16.mxu0 %v1732
  %7875 = vmatmul.mubr.bf16.gmra.mrb[0].mxu0 %v1731
  %v7876 = vpop.f32.mrb[0].mxu0
  %v7877 = vadd.f32 %v7764, %v7876
  %v7878 = vpop.f32.mrb[0].mxu0
  %v7879 = vadd.f32 %v7766, %v7878
  %v7880 = vpop.f32.mrb[0].mxu0
  %v7881 = vadd.f32 %v7768, %v7880
  %v7882 = vpop.f32.mrb[0].mxu0
  %v7883 = vadd.f32 %v7770, %v7882
  %7884 = vdwg.mxu0
  %7885 = vmatprep.subr.bf16.mxu0 %v4936
  %7886 = vmatpush1.bf16.msra.mxu0 %v4935
  %7887 = vmatprep.subr.bf16.mxu0 %v4944
  %7888 = vmatpush1.bf16.msra.mxu0 %v4943
  %7889 = vmatprep.subr.bf16.mxu0 %v4952
  %7890 = vmatpush1.bf16.msra.mxu0 %v4951
  %7891 = vmatprep.subr.bf16.mxu0 %v4960
  %7892 = vmatpush1.bf16.msra.mxu0 %v4959
  %7893 = vmatprep.subr.bf16.mxu0 %v4968
  %7894 = vmatpush1.bf16.msra.mxu0 %v4967
  %7895 = vmatprep.subr.bf16.mxu0 %v4976
  %7896 = vmatpush1.bf16.msra.mxu0 %v4975
  %7897 = vmatprep.subr.bf16.mxu0 %v4984
  %7898 = vmatpush1.bf16.msra.mxu0 %v4983
  %7899 = vmatprep.subr.bf16.mxu0 %v4992
  %7900 = vmatpush1.bf16.msra.mxu0 %v4991
  %7901 = vmatprep.subr.bf16.mxu0 %v5000
  %7902 = vmatpush1.bf16.msra.mxu0 %v4999
  %7903 = vmatprep.subr.bf16.mxu0 %v5008
  %7904 = vmatpush1.bf16.msra.mxu0 %v5007
  %7905 = vmatprep.subr.bf16.mxu0 %v5016
  %7906 = vmatpush1.bf16.msra.mxu0 %v5015
  %7907 = vmatprep.subr.bf16.mxu0 %v5024
  %7908 = vmatpush1.bf16.msra.mxu0 %v5023
  %7909 = vmatprep.subr.bf16.mxu0 %v5032
  %7910 = vmatpush1.bf16.msra.mxu0 %v5031
  %7911 = vmatprep.subr.bf16.mxu0 %v5040
  %7912 = vmatpush1.bf16.msra.mxu0 %v5039
  %7913 = vmatprep.subr.bf16.mxu0 %v5048
  %7914 = vmatpush1.bf16.msra.mxu0 %v5047
  %7915 = vmatprep.subr.bf16.mxu0 %v5056
  %7916 = vmatpush1.bf16.msra.mxu0 %v5055
  %7917 = vmatprep.mubr.bf16.mxu0 %v1606
  %7918 = vmatmul.mubr.bf16.gmra.mrb[0].mxu0 %v1605
  %v7919 = vpop.f32.mrb[0].mxu0
  %v7920 = vadd.f32 %v1192, %v7919
  %v7921 = vpop.f32.mrb[0].mxu0
  %v7922 = vadd.f32 %v1196, %v7921
  %v7923 = vpop.f32.mrb[0].mxu0
  %v7924 = vadd.f32 %v1192, %v7923
  %v7925 = vpop.f32.mrb[0].mxu0
  %v7926 = vadd.f32 %v1196, %v7925
  %7927 = vmatprep.mubr.bf16.mxu0 %v1622
  %7928 = vmatmul.mubr.bf16.gmra.mrb[0].mxu0 %v1621
  %v7929 = vpop.f32.mrb[0].mxu0
  %v7930 = vadd.f32 %v1192, %v7929
  %v7931 = vpop.f32.mrb[0].mxu0
  %v7932 = vadd.f32 %v1196, %v7931
  %v7933 = vpop.f32.mrb[0].mxu0
  %v7934 = vadd.f32 %v1192, %v7933
  %v7935 = vpop.f32.mrb[0].mxu0
  %v7936 = vadd.f32 %v1196, %v7935
  %7937 = vmatprep.mubr.bf16.mxu0 %v1638
  %7938 = vmatmul.mubr.bf16.gmra.mrb[0].mxu0 %v1637
  %v7939 = vpop.f32.mrb[0].mxu0
  %v7940 = vadd.f32 %v1192, %v7939
  %v7941 = vpop.f32.mrb[0].mxu0
  %v7942 = vadd.f32 %v1196, %v7941
  %v7943 = vpop.f32.mrb[0].mxu0
  %v7944 = vadd.f32 %v1192, %v7943
  %v7945 = vpop.f32.mrb[0].mxu0
  %v7946 = vadd.f32 %v1196, %v7945
  %7947 = vmatprep.mubr.bf16.mxu0 %v1654
  %7948 = vmatmul.mubr.bf16.gmra.mrb[0].mxu0 %v1653
  %v7949 = vpop.f32.mrb[0].mxu0
  %v7950 = vadd.f32 %v1192, %v7949
  %v7951 = vpop.f32.mrb[0].mxu0
  %v7952 = vadd.f32 %v1196, %v7951
  %v7953 = vpop.f32.mrb[0].mxu0
  %v7954 = vadd.f32 %v1192, %v7953
  %v7955 = vpop.f32.mrb[0].mxu0
  %v7956 = vadd.f32 %v1196, %v7955
  %7957 = vmatprep.mubr.bf16.mxu0 %v1670
  %7958 = vmatmul.mubr.bf16.gmra.mrb[0].mxu0 %v1669
  %v7959 = vpop.f32.mrb[0].mxu0
  %v7960 = vadd.f32 %v1192, %v7959
  %v7961 = vpop.f32.mrb[0].mxu0
  %v7962 = vadd.f32 %v1196, %v7961
  %v7963 = vpop.f32.mrb[0].mxu0
  %v7964 = vadd.f32 %v1192, %v7963
  %v7965 = vpop.f32.mrb[0].mxu0
  %v7966 = vadd.f32 %v1196, %v7965
  %7967 = vmatprep.mubr.bf16.mxu0 %v1686
  %7968 = vmatmul.mubr.bf16.gmra.mrb[0].mxu0 %v1685
  %v7969 = vpop.f32.mrb[0].mxu0
  %v7970 = vadd.f32 %v1192, %v7969
  %v7971 = vpop.f32.mrb[0].mxu0
  %v7972 = vadd.f32 %v1196, %v7971
  %v7973 = vpop.f32.mrb[0].mxu0
  %v7974 = vadd.f32 %v1192, %v7973
  %v7975 = vpop.f32.mrb[0].mxu0
  %v7976 = vadd.f32 %v1196, %v7975
  %7977 = vmatprep.mubr.bf16.mxu0 %v1702
  %7978 = vmatmul.mubr.bf16.gmra.mrb[0].mxu0 %v1701
  %v7979 = vpop.f32.mrb[0].mxu0
  %v7980 = vadd.f32 %v1192, %v7979
  %v7981 = vpop.f32.mrb[0].mxu0
  %v7982 = vadd.f32 %v1196, %v7981
  %v7983 = vpop.f32.mrb[0].mxu0
  %v7984 = vadd.f32 %v1192, %v7983
  %v7985 = vpop.f32.mrb[0].mxu0
  %v7986 = vadd.f32 %v1196, %v7985
  %7987 = vmatprep.mubr.bf16.mxu0 %v1718
  %7988 = vmatmul.mubr.bf16.gmra.mrb[0].mxu0 %v1717
  %v7989 = vpop.f32.mrb[0].mxu0
  %v7990 = vadd.f32 %v1192, %v7989
  %v7991 = vpop.f32.mrb[0].mxu0
  %v7992 = vadd.f32 %v1196, %v7991
  %v7993 = vpop.f32.mrb[0].mxu0
  %v7994 = vadd.f32 %v1192, %v7993
  %v7995 = vpop.f32.mrb[0].mxu0
  %v7996 = vadd.f32 %v1196, %v7995
  %7997 = vdwg.mxu0
  %7998 = vmatprep.subr.bf16.mxu0 %v5064
  %7999 = vmatpush1.bf16.msra.mxu0 %v5063
  %8000 = vmatprep.subr.bf16.mxu0 %v5072
  %8001 = vmatpush1.bf16.msra.mxu0 %v5071
  %8002 = vmatprep.subr.bf16.mxu0 %v5080
  %8003 = vmatpush1.bf16.msra.mxu0 %v5079
  %8004 = vmatprep.subr.bf16.mxu0 %v5088
  %8005 = vmatpush1.bf16.msra.mxu0 %v5087
  %8006 = vmatprep.subr.bf16.mxu0 %v5096
  %8007 = vmatpush1.bf16.msra.mxu0 %v5095
  %8008 = vmatprep.subr.bf16.mxu0 %v5104
  %8009 = vmatpush1.bf16.msra.mxu0 %v5103
  %8010 = vmatprep.subr.bf16.mxu0 %v5112
  %8011 = vmatpush1.bf16.msra.mxu0 %v5111
  %8012 = vmatprep.subr.bf16.mxu0 %v5120
  %8013 = vmatpush1.bf16.msra.mxu0 %v5119
  %8014 = vmatprep.subr.bf16.mxu0 %v5128
  %8015 = vmatpush1.bf16.msra.mxu0 %v5127
  %8016 = vmatprep.subr.bf16.mxu0 %v5136
  %8017 = vmatpush1.bf16.msra.mxu0 %v5135
  %8018 = vmatprep.subr.bf16.mxu0 %v5144
  %8019 = vmatpush1.bf16.msra.mxu0 %v5143
  %8020 = vmatprep.subr.bf16.mxu0 %v5152
  %8021 = vmatpush1.bf16.msra.mxu0 %v5151
  %8022 = vmatprep.subr.bf16.mxu0 %v5160
  %8023 = vmatpush1.bf16.msra.mxu0 %v5159
  %8024 = vmatprep.subr.bf16.mxu0 %v5168
  %8025 = vmatpush1.bf16.msra.mxu0 %v5167
  %8026 = vmatprep.subr.bf16.mxu0 %v5176
  %8027 = vmatpush1.bf16.msra.mxu0 %v5175
  %8028 = vmatprep.subr.bf16.mxu0 %v5184
  %8029 = vmatpush1.bf16.msra.mxu0 %v5183
  %8030 = vmatprep.mubr.bf16.mxu0 %v1608
  %8031 = vmatmul.mubr.bf16.gmra.mrb[0].mxu0 %v1607
  %v8032 = vpop.f32.mrb[0].mxu0
  %v8033 = vadd.f32 %v7920, %v8032
  %v8034 = vpop.f32.mrb[0].mxu0
  %v8035 = vadd.f32 %v7922, %v8034
  %v8036 = vpop.f32.mrb[0].mxu0
  %v8037 = vadd.f32 %v7924, %v8036
  %v8038 = vpop.f32.mrb[0].mxu0
  %v8039 = vadd.f32 %v7926, %v8038
  %8040 = vmatprep.mubr.bf16.mxu0 %v1624
  %8041 = vmatmul.mubr.bf16.gmra.mrb[0].mxu0 %v1623
  %v8042 = vpop.f32.mrb[0].mxu0
  %v8043 = vadd.f32 %v7930, %v8042
  %v8044 = vpop.f32.mrb[0].mxu0
  %v8045 = vadd.f32 %v7932, %v8044
  %v8046 = vpop.f32.mrb[0].mxu0
  %v8047 = vadd.f32 %v7934, %v8046
  %v8048 = vpop.f32.mrb[0].mxu0
  %v8049 = vadd.f32 %v7936, %v8048
  %8050 = vmatprep.mubr.bf16.mxu0 %v1640
  %8051 = vmatmul.mubr.bf16.gmra.mrb[0].mxu0 %v1639
  %v8052 = vpop.f32.mrb[0].mxu0
  %v8053 = vadd.f32 %v7940, %v8052
  %v8054 = vpop.f32.mrb[0].mxu0
  %v8055 = vadd.f32 %v7942, %v8054
  %v8056 = vpop.f32.mrb[0].mxu0
  %v8057 = vadd.f32 %v7944, %v8056
  %v8058 = vpop.f32.mrb[0].mxu0
  %v8059 = vadd.f32 %v7946, %v8058
  %8060 = vmatprep.mubr.bf16.mxu0 %v1656
  %8061 = vmatmul.mubr.bf16.gmra.mrb[0].mxu0 %v1655
  %v8062 = vpop.f32.mrb[0].mxu0
  %v8063 = vadd.f32 %v7950, %v8062
  %v8064 = vpop.f32.mrb[0].mxu0
  %v8065 = vadd.f32 %v7952, %v8064
  %v8066 = vpop.f32.mrb[0].mxu0
  %v8067 = vadd.f32 %v7954, %v8066
  %v8068 = vpop.f32.mrb[0].mxu0
  %v8069 = vadd.f32 %v7956, %v8068
  %8070 = vmatprep.mubr.bf16.mxu0 %v1672
  %8071 = vmatmul.mubr.bf16.gmra.mrb[0].mxu0 %v1671
  %v8072 = vpop.f32.mrb[0].mxu0
  %v8073 = vadd.f32 %v7960, %v8072
  %v8074 = vpop.f32.mrb[0].mxu0
  %v8075 = vadd.f32 %v7962, %v8074
  %v8076 = vpop.f32.mrb[0].mxu0
  %v8077 = vadd.f32 %v7964, %v8076
  %v8078 = vpop.f32.mrb[0].mxu0
  %v8079 = vadd.f32 %v7966, %v8078
  %8080 = vmatprep.mubr.bf16.mxu0 %v1688
  %8081 = vmatmul.mubr.bf16.gmra.mrb[0].mxu0 %v1687
  %v8082 = vpop.f32.mrb[0].mxu0
  %v8083 = vadd.f32 %v7970, %v8082
  %v8084 = vpop.f32.mrb[0].mxu0
  %v8085 = vadd.f32 %v7972, %v8084
  %v8086 = vpop.f32.mrb[0].mxu0
  %v8087 = vadd.f32 %v7974, %v8086
  %v8088 = vpop.f32.mrb[0].mxu0
  %v8089 = vadd.f32 %v7976, %v8088
  %8090 = vmatprep.mubr.bf16.mxu0 %v1704
  %8091 = vmatmul.mubr.bf16.gmra.mrb[0].mxu0 %v1703
  %v8092 = vpop.f32.mrb[0].mxu0
  %v8093 = vadd.f32 %v7980, %v8092
  %v8094 = vpop.f32.mrb[0].mxu0
  %v8095 = vadd.f32 %v7982, %v8094
  %v8096 = vpop.f32.mrb[0].mxu0
  %v8097 = vadd.f32 %v7984, %v8096
  %v8098 = vpop.f32.mrb[0].mxu0
  %v8099 = vadd.f32 %v7986, %v8098
  %8100 = vmatprep.mubr.bf16.mxu0 %v1720
  %8101 = vmatmul.mubr.bf16.gmra.mrb[0].mxu0 %v1719
  %v8102 = vpop.f32.mrb[0].mxu0
  %v8103 = vadd.f32 %v7990, %v8102
  %v8104 = vpop.f32.mrb[0].mxu0
  %v8105 = vadd.f32 %v7992, %v8104
  %v8106 = vpop.f32.mrb[0].mxu0
  %v8107 = vadd.f32 %v7994, %v8106
  %v8108 = vpop.f32.mrb[0].mxu0
  %v8109 = vadd.f32 %v7996, %v8108
  %8110 = vdwg.mxu0
  %8111 = vmatprep.subr.bf16.mxu0 %v5192
  %8112 = vmatpush1.bf16.msra.mxu0 %v5191
  %8113 = vmatprep.subr.bf16.mxu0 %v5200
  %8114 = vmatpush1.bf16.msra.mxu0 %v5199
  %8115 = vmatprep.subr.bf16.mxu0 %v5208
  %8116 = vmatpush1.bf16.msra.mxu0 %v5207
  %8117 = vmatprep.subr.bf16.mxu0 %v5216
  %8118 = vmatpush1.bf16.msra.mxu0 %v5215
  %8119 = vmatprep.subr.bf16.mxu0 %v5224
  %8120 = vmatpush1.bf16.msra.mxu0 %v5223
  %8121 = vmatprep.subr.bf16.mxu0 %v5232
  %8122 = vmatpush1.bf16.msra.mxu0 %v5231
  %8123 = vmatprep.subr.bf16.mxu0 %v5240
  %8124 = vmatpush1.bf16.msra.mxu0 %v5239
  %8125 = vmatprep.subr.bf16.mxu0 %v5248
  %8126 = vmatpush1.bf16.msra.mxu0 %v5247
  %8127 = vmatprep.subr.bf16.mxu0 %v5256
  %8128 = vmatpush1.bf16.msra.mxu0 %v5255
  %8129 = vmatprep.subr.bf16.mxu0 %v5264
  %8130 = vmatpush1.bf16.msra.mxu0 %v5263
  %8131 = vmatprep.subr.bf16.mxu0 %v5272
  %8132 = vmatpush1.bf16.msra.mxu0 %v5271
  %8133 = vmatprep.subr.bf16.mxu0 %v5280
  %8134 = vmatpush1.bf16.msra.mxu0 %v5279
  %8135 = vmatprep.subr.bf16.mxu0 %v5288
  %8136 = vmatpush1.bf16.msra.mxu0 %v5287
  %8137 = vmatprep.subr.bf16.mxu0 %v5296
  %8138 = vmatpush1.bf16.msra.mxu0 %v5295
  %8139 = vmatprep.subr.bf16.mxu0 %v5304
  %8140 = vmatpush1.bf16.msra.mxu0 %v5303
  %8141 = vmatprep.subr.bf16.mxu0 %v5312
  %8142 = vmatpush1.bf16.msra.mxu0 %v5311
  %8143 = vmatprep.mubr.bf16.mxu0 %v1610
  %8144 = vmatmul.mubr.bf16.gmra.mrb[0].mxu0 %v1609
  %v8145 = vpop.f32.mrb[0].mxu0
  %v8146 = vadd.f32 %v8033, %v8145
  %v8147 = vpop.f32.mrb[0].mxu0
  %v8148 = vadd.f32 %v8035, %v8147
  %v8149 = vpop.f32.mrb[0].mxu0
  %v8150 = vadd.f32 %v8037, %v8149
  %v8151 = vpop.f32.mrb[0].mxu0
  %v8152 = vadd.f32 %v8039, %v8151
  %8153 = vmatprep.mubr.bf16.mxu0 %v1626
  %8154 = vmatmul.mubr.bf16.gmra.mrb[0].mxu0 %v1625
  %v8155 = vpop.f32.mrb[0].mxu0
  %v8156 = vadd.f32 %v8043, %v8155
  %v8157 = vpop.f32.mrb[0].mxu0
  %v8158 = vadd.f32 %v8045, %v8157
  %v8159 = vpop.f32.mrb[0].mxu0
  %v8160 = vadd.f32 %v8047, %v8159
  %v8161 = vpop.f32.mrb[0].mxu0
  %v8162 = vadd.f32 %v8049, %v8161
  %8163 = vmatprep.mubr.bf16.mxu0 %v1642
  %8164 = vmatmul.mubr.bf16.gmra.mrb[0].mxu0 %v1641
  %v8165 = vpop.f32.mrb[0].mxu0
  %v8166 = vadd.f32 %v8053, %v8165
  %v8167 = vpop.f32.mrb[0].mxu0
  %v8168 = vadd.f32 %v8055, %v8167
  %v8169 = vpop.f32.mrb[0].mxu0
  %v8170 = vadd.f32 %v8057, %v8169
  %v8171 = vpop.f32.mrb[0].mxu0
  %v8172 = vadd.f32 %v8059, %v8171
  %8173 = vmatprep.mubr.bf16.mxu0 %v1658
  %8174 = vmatmul.mubr.bf16.gmra.mrb[0].mxu0 %v1657
  %v8175 = vpop.f32.mrb[0].mxu0
  %v8176 = vadd.f32 %v8063, %v8175
  %v8177 = vpop.f32.mrb[0].mxu0
  %v8178 = vadd.f32 %v8065, %v8177
  %v8179 = vpop.f32.mrb[0].mxu0
  %v8180 = vadd.f32 %v8067, %v8179
  %v8181 = vpop.f32.mrb[0].mxu0
  %v8182 = vadd.f32 %v8069, %v8181
  %8183 = vmatprep.mubr.bf16.mxu0 %v1674
  %8184 = vmatmul.mubr.bf16.gmra.mrb[0].mxu0 %v1673
  %v8185 = vpop.f32.mrb[0].mxu0
  %v8186 = vadd.f32 %v8073, %v8185
  %v8187 = vpop.f32.mrb[0].mxu0
  %v8188 = vadd.f32 %v8075, %v8187
  %v8189 = vpop.f32.mrb[0].mxu0
  %v8190 = vadd.f32 %v8077, %v8189
  %v8191 = vpop.f32.mrb[0].mxu0
  %v8192 = vadd.f32 %v8079, %v8191
  %8193 = vmatprep.mubr.bf16.mxu0 %v1690
  %8194 = vmatmul.mubr.bf16.gmra.mrb[0].mxu0 %v1689
  %v8195 = vpop.f32.mrb[0].mxu0
  %v8196 = vadd.f32 %v8083, %v8195
  %v8197 = vpop.f32.mrb[0].mxu0
  %v8198 = vadd.f32 %v8085, %v8197
  %v8199 = vpop.f32.mrb[0].mxu0
  %v8200 = vadd.f32 %v8087, %v8199
  %v8201 = vpop.f32.mrb[0].mxu0
  %v8202 = vadd.f32 %v8089, %v8201
  %8203 = vmatprep.mubr.bf16.mxu0 %v1706
  %8204 = vmatmul.mubr.bf16.gmra.mrb[0].mxu0 %v1705
  %v8205 = vpop.f32.mrb[0].mxu0
  %v8206 = vadd.f32 %v8093, %v8205
  %v8207 = vpop.f32.mrb[0].mxu0
  %v8208 = vadd.f32 %v8095, %v8207
  %v8209 = vpop.f32.mrb[0].mxu0
  %v8210 = vadd.f32 %v8097, %v8209
  %v8211 = vpop.f32.mrb[0].mxu0
  %v8212 = vadd.f32 %v8099, %v8211
  %8213 = vmatprep.mubr.bf16.mxu0 %v1722
  %8214 = vmatmul.mubr.bf16.gmra.mrb[0].mxu0 %v1721
  %v8215 = vpop.f32.mrb[0].mxu0
  %v8216 = vadd.f32 %v8103, %v8215
  %v8217 = vpop.f32.mrb[0].mxu0
  %v8218 = vadd.f32 %v8105, %v8217
  %v8219 = vpop.f32.mrb[0].mxu0
  %v8220 = vadd.f32 %v8107, %v8219
  %v8221 = vpop.f32.mrb[0].mxu0
  %v8222 = vadd.f32 %v8109, %v8221
  %8223 = vdwg.mxu0
  %8224 = vmatprep.subr.bf16.mxu0 %v5320
  %8225 = vmatpush1.bf16.msra.mxu0 %v5319
  %8226 = vmatprep.subr.bf16.mxu0 %v5328
  %8227 = vmatpush1.bf16.msra.mxu0 %v5327
  %8228 = vmatprep.subr.bf16.mxu0 %v5336
  %8229 = vmatpush1.bf16.msra.mxu0 %v5335
  %8230 = vmatprep.subr.bf16.mxu0 %v5344
  %8231 = vmatpush1.bf16.msra.mxu0 %v5343
  %8232 = vmatprep.subr.bf16.mxu0 %v5352
  %8233 = vmatpush1.bf16.msra.mxu0 %v5351
  %8234 = vmatprep.subr.bf16.mxu0 %v5360
  %8235 = vmatpush1.bf16.msra.mxu0 %v5359
  %8236 = vmatprep.subr.bf16.mxu0 %v5368
  %8237 = vmatpush1.bf16.msra.mxu0 %v5367
  %8238 = vmatprep.subr.bf16.mxu0 %v5376
  %8239 = vmatpush1.bf16.msra.mxu0 %v5375
  %8240 = vmatprep.subr.bf16.mxu0 %v5384
  %8241 = vmatpush1.bf16.msra.mxu0 %v5383
  %8242 = vmatprep.subr.bf16.mxu0 %v5392
  %8243 = vmatpush1.bf16.msra.mxu0 %v5391
  %8244 = vmatprep.subr.bf16.mxu0 %v5400
  %8245 = vmatpush1.bf16.msra.mxu0 %v5399
  %8246 = vmatprep.subr.bf16.mxu0 %v5408
  %8247 = vmatpush1.bf16.msra.mxu0 %v5407
  %8248 = vmatprep.subr.bf16.mxu0 %v5416
  %8249 = vmatpush1.bf16.msra.mxu0 %v5415
  %8250 = vmatprep.subr.bf16.mxu0 %v5424
  %8251 = vmatpush1.bf16.msra.mxu0 %v5423
  %8252 = vmatprep.subr.bf16.mxu0 %v5432
  %8253 = vmatpush1.bf16.msra.mxu0 %v5431
  %8254 = vmatprep.subr.bf16.mxu0 %v5440
  %8255 = vmatpush1.bf16.msra.mxu0 %v5439
  %8256 = vmatprep.mubr.bf16.mxu0 %v1612
  %8257 = vmatmul.mubr.bf16.gmra.mrb[0].mxu0 %v1611
  %v8258 = vpop.f32.mrb[0].mxu0
  %v8259 = vadd.f32 %v8146, %v8258
  %v8260 = vpop.f32.mrb[0].mxu0
  %v8261 = vadd.f32 %v8148, %v8260
  %v8262 = vpop.f32.mrb[0].mxu0
  %v8263 = vadd.f32 %v8150, %v8262
  %v8264 = vpop.f32.mrb[0].mxu0
  %v8265 = vadd.f32 %v8152, %v8264
  %8266 = vmatprep.mubr.bf16.mxu0 %v1628
  %8267 = vmatmul.mubr.bf16.gmra.mrb[0].mxu0 %v1627
  %v8268 = vpop.f32.mrb[0].mxu0
  %v8269 = vadd.f32 %v8156, %v8268
  %v8270 = vpop.f32.mrb[0].mxu0
  %v8271 = vadd.f32 %v8158, %v8270
  %v8272 = vpop.f32.mrb[0].mxu0
  %v8273 = vadd.f32 %v8160, %v8272
  %v8274 = vpop.f32.mrb[0].mxu0
  %v8275 = vadd.f32 %v8162, %v8274
  %8276 = vmatprep.mubr.bf16.mxu0 %v1644
  %8277 = vmatmul.mubr.bf16.gmra.mrb[0].mxu0 %v1643
  %v8278 = vpop.f32.mrb[0].mxu0
  %v8279 = vadd.f32 %v8166, %v8278
  %v8280 = vpop.f32.mrb[0].mxu0
  %v8281 = vadd.f32 %v8168, %v8280
  %v8282 = vpop.f32.mrb[0].mxu0
  %v8283 = vadd.f32 %v8170, %v8282
  %v8284 = vpop.f32.mrb[0].mxu0
  %v8285 = vadd.f32 %v8172, %v8284
  %8286 = vmatprep.mubr.bf16.mxu0 %v1660
  %8287 = vmatmul.mubr.bf16.gmra.mrb[0].mxu0 %v1659
  %v8288 = vpop.f32.mrb[0].mxu0
  %v8289 = vadd.f32 %v8176, %v8288
  %v8290 = vpop.f32.mrb[0].mxu0
  %v8291 = vadd.f32 %v8178, %v8290
  %v8292 = vpop.f32.mrb[0].mxu0
  %v8293 = vadd.f32 %v8180, %v8292
  %v8294 = vpop.f32.mrb[0].mxu0
  %v8295 = vadd.f32 %v8182, %v8294
  %8296 = vmatprep.mubr.bf16.mxu0 %v1676
  %8297 = vmatmul.mubr.bf16.gmra.mrb[0].mxu0 %v1675
  %v8298 = vpop.f32.mrb[0].mxu0
  %v8299 = vadd.f32 %v8186, %v8298
  %v8300 = vpop.f32.mrb[0].mxu0
  %v8301 = vadd.f32 %v8188, %v8300
  %v8302 = vpop.f32.mrb[0].mxu0
  %v8303 = vadd.f32 %v8190, %v8302
  %v8304 = vpop.f32.mrb[0].mxu0
  %v8305 = vadd.f32 %v8192, %v8304
  %8306 = vmatprep.mubr.bf16.mxu0 %v1692
  %8307 = vmatmul.mubr.bf16.gmra.mrb[0].mxu0 %v1691
  %v8308 = vpop.f32.mrb[0].mxu0
  %v8309 = vadd.f32 %v8196, %v8308
  %v8310 = vpop.f32.mrb[0].mxu0
  %v8311 = vadd.f32 %v8198, %v8310
  %v8312 = vpop.f32.mrb[0].mxu0
  %v8313 = vadd.f32 %v8200, %v8312
  %v8314 = vpop.f32.mrb[0].mxu0
  %v8315 = vadd.f32 %v8202, %v8314
  %8316 = vmatprep.mubr.bf16.mxu0 %v1708
  %8317 = vmatmul.mubr.bf16.gmra.mrb[0].mxu0 %v1707
  %v8318 = vpop.f32.mrb[0].mxu0
  %v8319 = vadd.f32 %v8206, %v8318
  %v8320 = vpop.f32.mrb[0].mxu0
  %v8321 = vadd.f32 %v8208, %v8320
  %v8322 = vpop.f32.mrb[0].mxu0
  %v8323 = vadd.f32 %v8210, %v8322
  %v8324 = vpop.f32.mrb[0].mxu0
  %v8325 = vadd.f32 %v8212, %v8324
  %8326 = vmatprep.mubr.bf16.mxu0 %v1724
  %8327 = vmatmul.mubr.bf16.gmra.mrb[0].mxu0 %v1723
  %v8328 = vpop.f32.mrb[0].mxu0
  %v8329 = vadd.f32 %v8216, %v8328
  %v8330 = vpop.f32.mrb[0].mxu0
  %v8331 = vadd.f32 %v8218, %v8330
  %v8332 = vpop.f32.mrb[0].mxu0
  %v8333 = vadd.f32 %v8220, %v8332
  %v8334 = vpop.f32.mrb[0].mxu0
  %v8335 = vadd.f32 %v8222, %v8334
  %8336 = vdwg.mxu0
  %8337 = vmatprep.subr.bf16.mxu0 %v5448
  %8338 = vmatpush1.bf16.msra.mxu0 %v5447
  %8339 = vmatprep.subr.bf16.mxu0 %v5456
  %8340 = vmatpush1.bf16.msra.mxu0 %v5455
  %8341 = vmatprep.subr.bf16.mxu0 %v5464
  %8342 = vmatpush1.bf16.msra.mxu0 %v5463
  %8343 = vmatprep.subr.bf16.mxu0 %v5472
  %8344 = vmatpush1.bf16.msra.mxu0 %v5471
  %8345 = vmatprep.subr.bf16.mxu0 %v5480
  %8346 = vmatpush1.bf16.msra.mxu0 %v5479
  %8347 = vmatprep.subr.bf16.mxu0 %v5488
  %8348 = vmatpush1.bf16.msra.mxu0 %v5487
  %8349 = vmatprep.subr.bf16.mxu0 %v5496
  %8350 = vmatpush1.bf16.msra.mxu0 %v5495
  %8351 = vmatprep.subr.bf16.mxu0 %v5504
  %8352 = vmatpush1.bf16.msra.mxu0 %v5503
  %8353 = vmatprep.subr.bf16.mxu0 %v5512
  %8354 = vmatpush1.bf16.msra.mxu0 %v5511
  %8355 = vmatprep.subr.bf16.mxu0 %v5520
  %8356 = vmatpush1.bf16.msra.mxu0 %v5519
  %8357 = vmatprep.subr.bf16.mxu0 %v5528
  %8358 = vmatpush1.bf16.msra.mxu0 %v5527
  %8359 = vmatprep.subr.bf16.mxu0 %v5536
  %8360 = vmatpush1.bf16.msra.mxu0 %v5535
  %8361 = vmatprep.subr.bf16.mxu0 %v5544
  %8362 = vmatpush1.bf16.msra.mxu0 %v5543
  %8363 = vmatprep.subr.bf16.mxu0 %v5552
  %8364 = vmatpush1.bf16.msra.mxu0 %v5551
  %8365 = vmatprep.subr.bf16.mxu0 %v5560
  %8366 = vmatpush1.bf16.msra.mxu0 %v5559
  %8367 = vmatprep.subr.bf16.mxu0 %v5568
  %8368 = vmatpush1.bf16.msra.mxu0 %v5567
  %8369 = vmatprep.mubr.bf16.mxu0 %v1614
  %8370 = vmatmul.mubr.bf16.gmra.mrb[0].mxu0 %v1613
  %v8371 = vpop.f32.mrb[0].mxu0
  %v8372 = vadd.f32 %v8259, %v8371
  %v8373 = vpop.f32.mrb[0].mxu0
  %v8374 = vadd.f32 %v8261, %v8373
  %v8375 = vpop.f32.mrb[0].mxu0
  %v8376 = vadd.f32 %v8263, %v8375
  %v8377 = vpop.f32.mrb[0].mxu0
  %v8378 = vadd.f32 %v8265, %v8377
  %8379 = vmatprep.mubr.bf16.mxu0 %v1630
  %8380 = vmatmul.mubr.bf16.gmra.mrb[0].mxu0 %v1629
  %v8381 = vpop.f32.mrb[0].mxu0
  %v8382 = vadd.f32 %v8269, %v8381
  %v8383 = vpop.f32.mrb[0].mxu0
  %v8384 = vadd.f32 %v8271, %v8383
  %v8385 = vpop.f32.mrb[0].mxu0
  %v8386 = vadd.f32 %v8273, %v8385
  %v8387 = vpop.f32.mrb[0].mxu0
  %v8388 = vadd.f32 %v8275, %v8387
  %8389 = vmatprep.mubr.bf16.mxu0 %v1646
  %8390 = vmatmul.mubr.bf16.gmra.mrb[0].mxu0 %v1645
  %v8391 = vpop.f32.mrb[0].mxu0
  %v8392 = vadd.f32 %v8279, %v8391
  %v8393 = vpop.f32.mrb[0].mxu0
  %v8394 = vadd.f32 %v8281, %v8393
  %v8395 = vpop.f32.mrb[0].mxu0
  %v8396 = vadd.f32 %v8283, %v8395
  %v8397 = vpop.f32.mrb[0].mxu0
  %v8398 = vadd.f32 %v8285, %v8397
  %8399 = vmatprep.mubr.bf16.mxu0 %v1662
  %8400 = vmatmul.mubr.bf16.gmra.mrb[0].mxu0 %v1661
  %v8401 = vpop.f32.mrb[0].mxu0
  %v8402 = vadd.f32 %v8289, %v8401
  %v8403 = vpop.f32.mrb[0].mxu0
  %v8404 = vadd.f32 %v8291, %v8403
  %v8405 = vpop.f32.mrb[0].mxu0
  %v8406 = vadd.f32 %v8293, %v8405
  %v8407 = vpop.f32.mrb[0].mxu0
  %v8408 = vadd.f32 %v8295, %v8407
  %8409 = vmatprep.mubr.bf16.mxu0 %v1678
  %8410 = vmatmul.mubr.bf16.gmra.mrb[0].mxu0 %v1677
  %v8411 = vpop.f32.mrb[0].mxu0
  %v8412 = vadd.f32 %v8299, %v8411
  %v8413 = vpop.f32.mrb[0].mxu0
  %v8414 = vadd.f32 %v8301, %v8413
  %v8415 = vpop.f32.mrb[0].mxu0
  %v8416 = vadd.f32 %v8303, %v8415
  %v8417 = vpop.f32.mrb[0].mxu0
  %v8418 = vadd.f32 %v8305, %v8417
  %8419 = vmatprep.mubr.bf16.mxu0 %v1694
  %8420 = vmatmul.mubr.bf16.gmra.mrb[0].mxu0 %v1693
  %v8421 = vpop.f32.mrb[0].mxu0
  %v8422 = vadd.f32 %v8309, %v8421
  %v8423 = vpop.f32.mrb[0].mxu0
  %v8424 = vadd.f32 %v8311, %v8423
  %v8425 = vpop.f32.mrb[0].mxu0
  %v8426 = vadd.f32 %v8313, %v8425
  %v8427 = vpop.f32.mrb[0].mxu0
  %v8428 = vadd.f32 %v8315, %v8427
  %8429 = vmatprep.mubr.bf16.mxu0 %v1710
  %8430 = vmatmul.mubr.bf16.gmra.mrb[0].mxu0 %v1709
  %v8431 = vpop.f32.mrb[0].mxu0
  %v8432 = vadd.f32 %v8319, %v8431
  %v8433 = vpop.f32.mrb[0].mxu0
  %v8434 = vadd.f32 %v8321, %v8433
  %v8435 = vpop.f32.mrb[0].mxu0
  %v8436 = vadd.f32 %v8323, %v8435
  %v8437 = vpop.f32.mrb[0].mxu0
  %v8438 = vadd.f32 %v8325, %v8437
  %8439 = vmatprep.mubr.bf16.mxu0 %v1726
  %8440 = vmatmul.mubr.bf16.gmra.mrb[0].mxu0 %v1725
  %v8441 = vpop.f32.mrb[0].mxu0
  %v8442 = vadd.f32 %v8329, %v8441
  %v8443 = vpop.f32.mrb[0].mxu0
  %v8444 = vadd.f32 %v8331, %v8443
  %v8445 = vpop.f32.mrb[0].mxu0
  %v8446 = vadd.f32 %v8333, %v8445
  %v8447 = vpop.f32.mrb[0].mxu0
  %v8448 = vadd.f32 %v8335, %v8447
  %8449 = vdwg.mxu0
  %8450 = vmatprep.subr.bf16.mxu0 %v5576
  %8451 = vmatpush1.bf16.msra.mxu0 %v5575
  %8452 = vmatprep.subr.bf16.mxu0 %v5584
  %8453 = vmatpush1.bf16.msra.mxu0 %v5583
  %8454 = vmatprep.subr.bf16.mxu0 %v5592
  %8455 = vmatpush1.bf16.msra.mxu0 %v5591
  %8456 = vmatprep.subr.bf16.mxu0 %v5600
  %8457 = vmatpush1.bf16.msra.mxu0 %v5599
  %8458 = vmatprep.subr.bf16.mxu0 %v5608
  %8459 = vmatpush1.bf16.msra.mxu0 %v5607
  %8460 = vmatprep.subr.bf16.mxu0 %v5616
  %8461 = vmatpush1.bf16.msra.mxu0 %v5615
  %8462 = vmatprep.subr.bf16.mxu0 %v5624
  %8463 = vmatpush1.bf16.msra.mxu0 %v5623
  %8464 = vmatprep.subr.bf16.mxu0 %v5632
  %8465 = vmatpush1.bf16.msra.mxu0 %v5631
  %8466 = vmatprep.subr.bf16.mxu0 %v5640
  %8467 = vmatpush1.bf16.msra.mxu0 %v5639
  %8468 = vmatprep.subr.bf16.mxu0 %v5648
  %8469 = vmatpush1.bf16.msra.mxu0 %v5647
  %8470 = vmatprep.subr.bf16.mxu0 %v5656
  %8471 = vmatpush1.bf16.msra.mxu0 %v5655
  %8472 = vmatprep.subr.bf16.mxu0 %v5664
  %8473 = vmatpush1.bf16.msra.mxu0 %v5663
  %8474 = vmatprep.subr.bf16.mxu0 %v5672
  %8475 = vmatpush1.bf16.msra.mxu0 %v5671
  %8476 = vmatprep.subr.bf16.mxu0 %v5680
  %8477 = vmatpush1.bf16.msra.mxu0 %v5679
  %8478 = vmatprep.subr.bf16.mxu0 %v5688
  %8479 = vmatpush1.bf16.msra.mxu0 %v5687
  %8480 = vmatprep.subr.bf16.mxu0 %v5696
  %8481 = vmatpush1.bf16.msra.mxu0 %v5695
  %8482 = vmatprep.mubr.bf16.mxu0 %v1616
  %8483 = vmatmul.mubr.bf16.gmra.mrb[0].mxu0 %v1615
  %v8484 = vpop.f32.mrb[0].mxu0
  %v8485 = vadd.f32 %v8372, %v8484
  %v8486 = vpop.f32.mrb[0].mxu0
  %v8487 = vadd.f32 %v8374, %v8486
  %v8488 = vpop.f32.mrb[0].mxu0
  %v8489 = vadd.f32 %v8376, %v8488
  %v8490 = vpop.f32.mrb[0].mxu0
  %v8491 = vadd.f32 %v8378, %v8490
  %8492 = vmatprep.mubr.bf16.mxu0 %v1632
  %8493 = vmatmul.mubr.bf16.gmra.mrb[0].mxu0 %v1631
  %v8494 = vpop.f32.mrb[0].mxu0
  %v8495 = vadd.f32 %v8382, %v8494
  %v8496 = vpop.f32.mrb[0].mxu0
  %v8497 = vadd.f32 %v8384, %v8496
  %v8498 = vpop.f32.mrb[0].mxu0
  %v8499 = vadd.f32 %v8386, %v8498
  %v8500 = vpop.f32.mrb[0].mxu0
  %v8501 = vadd.f32 %v8388, %v8500
  %8502 = vmatprep.mubr.bf16.mxu0 %v1648
  %8503 = vmatmul.mubr.bf16.gmra.mrb[0].mxu0 %v1647
  %v8504 = vpop.f32.mrb[0].mxu0
  %v8505 = vadd.f32 %v8392, %v8504
  %v8506 = vpop.f32.mrb[0].mxu0
  %v8507 = vadd.f32 %v8394, %v8506
  %v8508 = vpop.f32.mrb[0].mxu0
  %v8509 = vadd.f32 %v8396, %v8508
  %v8510 = vpop.f32.mrb[0].mxu0
  %v8511 = vadd.f32 %v8398, %v8510
  %8512 = vmatprep.mubr.bf16.mxu0 %v1664
  %8513 = vmatmul.mubr.bf16.gmra.mrb[0].mxu0 %v1663
  %v8514 = vpop.f32.mrb[0].mxu0
  %v8515 = vadd.f32 %v8402, %v8514
  %v8516 = vpop.f32.mrb[0].mxu0
  %v8517 = vadd.f32 %v8404, %v8516
  %v8518 = vpop.f32.mrb[0].mxu0
  %v8519 = vadd.f32 %v8406, %v8518
  %v8520 = vpop.f32.mrb[0].mxu0
  %v8521 = vadd.f32 %v8408, %v8520
  %8522 = vmatprep.mubr.bf16.mxu0 %v1680
  %8523 = vmatmul.mubr.bf16.gmra.mrb[0].mxu0 %v1679
  %v8524 = vpop.f32.mrb[0].mxu0
  %v8525 = vadd.f32 %v8412, %v8524
  %v8526 = vpop.f32.mrb[0].mxu0
  %v8527 = vadd.f32 %v8414, %v8526
  %v8528 = vpop.f32.mrb[0].mxu0
  %v8529 = vadd.f32 %v8416, %v8528
  %v8530 = vpop.f32.mrb[0].mxu0
  %v8531 = vadd.f32 %v8418, %v8530
  %8532 = vmatprep.mubr.bf16.mxu0 %v1696
  %8533 = vmatmul.mubr.bf16.gmra.mrb[0].mxu0 %v1695
  %v8534 = vpop.f32.mrb[0].mxu0
  %v8535 = vadd.f32 %v8422, %v8534
  %v8536 = vpop.f32.mrb[0].mxu0
  %v8537 = vadd.f32 %v8424, %v8536
  %v8538 = vpop.f32.mrb[0].mxu0
  %v8539 = vadd.f32 %v8426, %v8538
  %v8540 = vpop.f32.mrb[0].mxu0
  %v8541 = vadd.f32 %v8428, %v8540
  %8542 = vmatprep.mubr.bf16.mxu0 %v1712
  %8543 = vmatmul.mubr.bf16.gmra.mrb[0].mxu0 %v1711
  %v8544 = vpop.f32.mrb[0].mxu0
  %v8545 = vadd.f32 %v8432, %v8544
  %v8546 = vpop.f32.mrb[0].mxu0
  %v8547 = vadd.f32 %v8434, %v8546
  %v8548 = vpop.f32.mrb[0].mxu0
  %v8549 = vadd.f32 %v8436, %v8548
  %v8550 = vpop.f32.mrb[0].mxu0
  %v8551 = vadd.f32 %v8438, %v8550
  %8552 = vmatprep.mubr.bf16.mxu0 %v1728
  %8553 = vmatmul.mubr.bf16.gmra.mrb[0].mxu0 %v1727
  %v8554 = vpop.f32.mrb[0].mxu0
  %v8555 = vadd.f32 %v8442, %v8554
  %v8556 = vpop.f32.mrb[0].mxu0
  %v8557 = vadd.f32 %v8444, %v8556
  %v8558 = vpop.f32.mrb[0].mxu0
  %v8559 = vadd.f32 %v8446, %v8558
  %v8560 = vpop.f32.mrb[0].mxu0
  %v8561 = vadd.f32 %v8448, %v8560
  %8562 = vdwg.mxu0
  %8563 = vmatprep.subr.bf16.mxu0 %v5704
  %8564 = vmatpush1.bf16.msra.mxu0 %v5703
  %8565 = vmatprep.subr.bf16.mxu0 %v5712
  %8566 = vmatpush1.bf16.msra.mxu0 %v5711
  %8567 = vmatprep.subr.bf16.mxu0 %v5720
  %8568 = vmatpush1.bf16.msra.mxu0 %v5719
  %8569 = vmatprep.subr.bf16.mxu0 %v5728
  %8570 = vmatpush1.bf16.msra.mxu0 %v5727
  %8571 = vmatprep.subr.bf16.mxu0 %v5736
  %8572 = vmatpush1.bf16.msra.mxu0 %v5735
  %8573 = vmatprep.subr.bf16.mxu0 %v5744
  %8574 = vmatpush1.bf16.msra.mxu0 %v5743
  %8575 = vmatprep.subr.bf16.mxu0 %v5752
  %8576 = vmatpush1.bf16.msra.mxu0 %v5751
  %8577 = vmatprep.subr.bf16.mxu0 %v5760
  %8578 = vmatpush1.bf16.msra.mxu0 %v5759
  %8579 = vmatprep.subr.bf16.mxu0 %v5768
  %8580 = vmatpush1.bf16.msra.mxu0 %v5767
  %8581 = vmatprep.subr.bf16.mxu0 %v5776
  %8582 = vmatpush1.bf16.msra.mxu0 %v5775
  %8583 = vmatprep.subr.bf16.mxu0 %v5784
  %8584 = vmatpush1.bf16.msra.mxu0 %v5783
  %8585 = vmatprep.subr.bf16.mxu0 %v5792
  %8586 = vmatpush1.bf16.msra.mxu0 %v5791
  %8587 = vmatprep.subr.bf16.mxu0 %v5800
  %8588 = vmatpush1.bf16.msra.mxu0 %v5799
  %8589 = vmatprep.subr.bf16.mxu0 %v5808
  %8590 = vmatpush1.bf16.msra.mxu0 %v5807
  %8591 = vmatprep.subr.bf16.mxu0 %v5816
  %8592 = vmatpush1.bf16.msra.mxu0 %v5815
  %8593 = vmatprep.subr.bf16.mxu0 %v5824
  %8594 = vmatpush1.bf16.msra.mxu0 %v5823
  %8595 = vmatprep.mubr.bf16.mxu0 %v1618
  %8596 = vmatmul.mubr.bf16.gmra.mrb[0].mxu0 %v1617
  %v8597 = vpop.f32.mrb[0].mxu0
  %v8598 = vadd.f32 %v8485, %v8597
  %v8599 = vpop.f32.mrb[0].mxu0
  %v8600 = vadd.f32 %v8487, %v8599
  %v8601 = vpop.f32.mrb[0].mxu0
  %v8602 = vadd.f32 %v8489, %v8601
  %v8603 = vpop.f32.mrb[0].mxu0
  %v8604 = vadd.f32 %v8491, %v8603
  %8605 = vmatprep.mubr.bf16.mxu0 %v1634
  %8606 = vmatmul.mubr.bf16.gmra.mrb[0].mxu0 %v1633
  %v8607 = vpop.f32.mrb[0].mxu0
  %v8608 = vadd.f32 %v8495, %v8607
  %v8609 = vpop.f32.mrb[0].mxu0
  %v8610 = vadd.f32 %v8497, %v8609
  %v8611 = vpop.f32.mrb[0].mxu0
  %v8612 = vadd.f32 %v8499, %v8611
  %v8613 = vpop.f32.mrb[0].mxu0
  %v8614 = vadd.f32 %v8501, %v8613
  %8615 = vmatprep.mubr.bf16.mxu0 %v1650
  %8616 = vmatmul.mubr.bf16.gmra.mrb[0].mxu0 %v1649
  %v8617 = vpop.f32.mrb[0].mxu0
  %v8618 = vadd.f32 %v8505, %v8617
  %v8619 = vpop.f32.mrb[0].mxu0
  %v8620 = vadd.f32 %v8507, %v8619
  %v8621 = vpop.f32.mrb[0].mxu0
  %v8622 = vadd.f32 %v8509, %v8621
  %v8623 = vpop.f32.mrb[0].mxu0
  %v8624 = vadd.f32 %v8511, %v8623
  %8625 = vmatprep.mubr.bf16.mxu0 %v1666
  %8626 = vmatmul.mubr.bf16.gmra.mrb[0].mxu0 %v1665
  %v8627 = vpop.f32.mrb[0].mxu0
  %v8628 = vadd.f32 %v8515, %v8627
  %v8629 = vpop.f32.mrb[0].mxu0
  %v8630 = vadd.f32 %v8517, %v8629
  %v8631 = vpop.f32.mrb[0].mxu0
  %v8632 = vadd.f32 %v8519, %v8631
  %v8633 = vpop.f32.mrb[0].mxu0
  %v8634 = vadd.f32 %v8521, %v8633
  %8635 = vmatprep.mubr.bf16.mxu0 %v1682
  %8636 = vmatmul.mubr.bf16.gmra.mrb[0].mxu0 %v1681
  %v8637 = vpop.f32.mrb[0].mxu0
  %v8638 = vadd.f32 %v8525, %v8637
  %v8639 = vpop.f32.mrb[0].mxu0
  %v8640 = vadd.f32 %v8527, %v8639
  %v8641 = vpop.f32.mrb[0].mxu0
  %v8642 = vadd.f32 %v8529, %v8641
  %v8643 = vpop.f32.mrb[0].mxu0
  %v8644 = vadd.f32 %v8531, %v8643
  %8645 = vmatprep.mubr.bf16.mxu0 %v1698
  %8646 = vmatmul.mubr.bf16.gmra.mrb[0].mxu0 %v1697
  %v8647 = vpop.f32.mrb[0].mxu0
  %v8648 = vadd.f32 %v8535, %v8647
  %v8649 = vpop.f32.mrb[0].mxu0
  %v8650 = vadd.f32 %v8537, %v8649
  %v8651 = vpop.f32.mrb[0].mxu0
  %v8652 = vadd.f32 %v8539, %v8651
  %v8653 = vpop.f32.mrb[0].mxu0
  %v8654 = vadd.f32 %v8541, %v8653
  %8655 = vmatprep.mubr.bf16.mxu0 %v1714
  %8656 = vmatmul.mubr.bf16.gmra.mrb[0].mxu0 %v1713
  %v8657 = vpop.f32.mrb[0].mxu0
  %v8658 = vadd.f32 %v8545, %v8657
  %v8659 = vpop.f32.mrb[0].mxu0
  %v8660 = vadd.f32 %v8547, %v8659
  %v8661 = vpop.f32.mrb[0].mxu0
  %v8662 = vadd.f32 %v8549, %v8661
  %v8663 = vpop.f32.mrb[0].mxu0
  %v8664 = vadd.f32 %v8551, %v8663
  %8665 = vmatprep.mubr.bf16.mxu0 %v1730
  %8666 = vmatmul.mubr.bf16.gmra.mrb[0].mxu0 %v1729
  %v8667 = vpop.f32.mrb[0].mxu0
  %v8668 = vadd.f32 %v8555, %v8667
  %v8669 = vpop.f32.mrb[0].mxu0
  %v8670 = vadd.f32 %v8557, %v8669
  %v8671 = vpop.f32.mrb[0].mxu0
  %v8672 = vadd.f32 %v8559, %v8671
  %v8673 = vpop.f32.mrb[0].mxu0
  %v8674 = vadd.f32 %v8561, %v8673
  %8675 = vdwg.mxu0
  %8676 = vmatprep.subr.bf16.mxu0 %v5832
  %8677 = vmatpush1.bf16.msra.mxu0 %v5831
  %8678 = vmatprep.subr.bf16.mxu0 %v5840
  %8679 = vmatpush1.bf16.msra.mxu0 %v5839
  %8680 = vmatprep.subr.bf16.mxu0 %v5848
  %8681 = vmatpush1.bf16.msra.mxu0 %v5847
  %8682 = vmatprep.subr.bf16.mxu0 %v5856
  %8683 = vmatpush1.bf16.msra.mxu0 %v5855
  %8684 = vmatprep.subr.bf16.mxu0 %v5864
  %8685 = vmatpush1.bf16.msra.mxu0 %v5863
  %8686 = vmatprep.subr.bf16.mxu0 %v5872
  %8687 = vmatpush1.bf16.msra.mxu0 %v5871
  %8688 = vmatprep.subr.bf16.mxu0 %v5880
  %8689 = vmatpush1.bf16.msra.mxu0 %v5879
  %8690 = vmatprep.subr.bf16.mxu0 %v5888
  %8691 = vmatpush1.bf16.msra.mxu0 %v5887
  %8692 = vmatprep.subr.bf16.mxu0 %v5896
  %8693 = vmatpush1.bf16.msra.mxu0 %v5895
  %8694 = vmatprep.subr.bf16.mxu0 %v5904
  %8695 = vmatpush1.bf16.msra.mxu0 %v5903
  %8696 = vmatprep.subr.bf16.mxu0 %v5912
  %8697 = vmatpush1.bf16.msra.mxu0 %v5911
  %8698 = vmatprep.subr.bf16.mxu0 %v5920
  %8699 = vmatpush1.bf16.msra.mxu0 %v5919
  %8700 = vmatprep.subr.bf16.mxu0 %v5928
  %8701 = vmatpush1.bf16.msra.mxu0 %v5927
  %8702 = vmatprep.subr.bf16.mxu0 %v5936
  %8703 = vmatpush1.bf16.msra.mxu0 %v5935
  %8704 = vmatprep.subr.bf16.mxu0 %v5944
  %8705 = vmatpush1.bf16.msra.mxu0 %v5943
  %8706 = vmatprep.subr.bf16.mxu0 %v5952
  %8707 = vmatpush1.bf16.msra.mxu0 %v5951
  %8708 = vmatprep.mubr.bf16.mxu0 %v1620
  %8709 = vmatmul.mubr.bf16.gmra.mrb[0].mxu0 %v1619
  %v8710 = vpop.f32.mrb[0].mxu0
  %v8711 = vadd.f32 %v8598, %v8710
  %v8712 = vpop.f32.mrb[0].mxu0
  %v8713 = vadd.f32 %v8600, %v8712
  %v8714 = vpop.f32.mrb[0].mxu0
  %v8715 = vadd.f32 %v8602, %v8714
  %v8716 = vpop.f32.mrb[0].mxu0
  %v8717 = vadd.f32 %v8604, %v8716
  %8718 = vmatprep.mubr.bf16.mxu0 %v1636
  %8719 = vmatmul.mubr.bf16.gmra.mrb[0].mxu0 %v1635
  %v8720 = vpop.f32.mrb[0].mxu0
  %v8721 = vadd.f32 %v8608, %v8720
  %v8722 = vpop.f32.mrb[0].mxu0
  %v8723 = vadd.f32 %v8610, %v8722
  %v8724 = vpop.f32.mrb[0].mxu0
  %v8725 = vadd.f32 %v8612, %v8724
  %v8726 = vpop.f32.mrb[0].mxu0
  %v8727 = vadd.f32 %v8614, %v8726
  %8728 = vmatprep.mubr.bf16.mxu0 %v1652
  %8729 = vmatmul.mubr.bf16.gmra.mrb[0].mxu0 %v1651
  %v8730 = vpop.f32.mrb[0].mxu0
  %v8731 = vadd.f32 %v8618, %v8730
  %v8732 = vpop.f32.mrb[0].mxu0
  %v8733 = vadd.f32 %v8620, %v8732
  %v8734 = vpop.f32.mrb[0].mxu0
  %v8735 = vadd.f32 %v8622, %v8734
  %v8736 = vpop.f32.mrb[0].mxu0
  %v8737 = vadd.f32 %v8624, %v8736
  %8738 = vmatprep.mubr.bf16.mxu0 %v1668
  %8739 = vmatmul.mubr.bf16.gmra.mrb[0].mxu0 %v1667
  %v8740 = vpop.f32.mrb[0].mxu0
  %v8741 = vadd.f32 %v8628, %v8740
  %v8742 = vpop.f32.mrb[0].mxu0
  %v8743 = vadd.f32 %v8630, %v8742
  %v8744 = vpop.f32.mrb[0].mxu0
  %v8745 = vadd.f32 %v8632, %v8744
  %v8746 = vpop.f32.mrb[0].mxu0
  %v8747 = vadd.f32 %v8634, %v8746
  %8748 = vmatprep.mubr.bf16.mxu0 %v1684
  %8749 = vmatmul.mubr.bf16.gmra.mrb[0].mxu0 %v1683
  %v8750 = vpop.f32.mrb[0].mxu0
  %v8751 = vadd.f32 %v8638, %v8750
  %v8752 = vpop.f32.mrb[0].mxu0
  %v8753 = vadd.f32 %v8640, %v8752
  %v8754 = vpop.f32.mrb[0].mxu0
  %v8755 = vadd.f32 %v8642, %v8754
  %v8756 = vpop.f32.mrb[0].mxu0
  %v8757 = vadd.f32 %v8644, %v8756
  %8758 = vmatprep.mubr.bf16.mxu0 %v1700
  %8759 = vmatmul.mubr.bf16.gmra.mrb[0].mxu0 %v1699
  %v8760 = vpop.f32.mrb[0].mxu0
  %v8761 = vadd.f32 %v8648, %v8760
  %v8762 = vpop.f32.mrb[0].mxu0
  %v8763 = vadd.f32 %v8650, %v8762
  %v8764 = vpop.f32.mrb[0].mxu0
  %v8765 = vadd.f32 %v8652, %v8764
  %v8766 = vpop.f32.mrb[0].mxu0
  %v8767 = vadd.f32 %v8654, %v8766
  %8768 = vmatprep.mubr.bf16.mxu0 %v1716
  %8769 = vmatmul.mubr.bf16.gmra.mrb[0].mxu0 %v1715
  %v8770 = vpop.f32.mrb[0].mxu0
  %v8771 = vadd.f32 %v8658, %v8770
  %v8772 = vpop.f32.mrb[0].mxu0
  %v8773 = vadd.f32 %v8660, %v8772
  %v8774 = vpop.f32.mrb[0].mxu0
  %v8775 = vadd.f32 %v8662, %v8774
  %v8776 = vpop.f32.mrb[0].mxu0
  %v8777 = vadd.f32 %v8664, %v8776
  %8778 = vmatprep.mubr.bf16.mxu0 %v1732
  %8779 = vmatmul.mubr.bf16.gmra.mrb[0].mxu0 %v1731
  %v8780 = vpop.f32.mrb[0].mxu0
  %v8781 = vadd.f32 %v8668, %v8780
  %v8782 = vpop.f32.mrb[0].mxu0
  %v8783 = vadd.f32 %v8670, %v8782
  %v8784 = vpop.f32.mrb[0].mxu0
  %v8785 = vadd.f32 %v8672, %v8784
  %v8786 = vpop.f32.mrb[0].mxu0
  %v8787 = vadd.f32 %v8674, %v8786
  %8788 = vdwg.mxu0
  %8789 = vmatprep.subr.bf16.mxu0 %v4938
  %8790 = vmatpush1.bf16.msra.mxu0 %v4937
  %8791 = vmatprep.subr.bf16.mxu0 %v4946
  %8792 = vmatpush1.bf16.msra.mxu0 %v4945
  %8793 = vmatprep.subr.bf16.mxu0 %v4954
  %8794 = vmatpush1.bf16.msra.mxu0 %v4953
  %8795 = vmatprep.subr.bf16.mxu0 %v4962
  %8796 = vmatpush1.bf16.msra.mxu0 %v4961
  %8797 = vmatprep.subr.bf16.mxu0 %v4970
  %8798 = vmatpush1.bf16.msra.mxu0 %v4969
  %8799 = vmatprep.subr.bf16.mxu0 %v4978
  %8800 = vmatpush1.bf16.msra.mxu0 %v4977
  %8801 = vmatprep.subr.bf16.mxu0 %v4986
  %8802 = vmatpush1.bf16.msra.mxu0 %v4985
  %8803 = vmatprep.subr.bf16.mxu0 %v4994
  %8804 = vmatpush1.bf16.msra.mxu0 %v4993
  %8805 = vmatprep.subr.bf16.mxu0 %v5002
  %8806 = vmatpush1.bf16.msra.mxu0 %v5001
  %8807 = vmatprep.subr.bf16.mxu0 %v5010
  %8808 = vmatpush1.bf16.msra.mxu0 %v5009
  %8809 = vmatprep.subr.bf16.mxu0 %v5018
  %8810 = vmatpush1.bf16.msra.mxu0 %v5017
  %8811 = vmatprep.subr.bf16.mxu0 %v5026
  %8812 = vmatpush1.bf16.msra.mxu0 %v5025
  %8813 = vmatprep.subr.bf16.mxu0 %v5034
  %8814 = vmatpush1.bf16.msra.mxu0 %v5033
  %8815 = vmatprep.subr.bf16.mxu0 %v5042
  %8816 = vmatpush1.bf16.msra.mxu0 %v5041
  %8817 = vmatprep.subr.bf16.mxu0 %v5050
  %8818 = vmatpush1.bf16.msra.mxu0 %v5049
  %8819 = vmatprep.subr.bf16.mxu0 %v5058
  %8820 = vmatpush1.bf16.msra.mxu0 %v5057
  %8821 = vmatprep.mubr.bf16.mxu0 %v1606
  %8822 = vmatmul.mubr.bf16.gmra.mrb[0].mxu0 %v1605
  %v8823 = vpop.f32.mrb[0].mxu0
  %v8824 = vadd.f32 %v1200, %v8823
  %v8825 = vpop.f32.mrb[0].mxu0
  %v8826 = vadd.f32 %v1204, %v8825
  %v8827 = vpop.f32.mrb[0].mxu0
  %v8828 = vadd.f32 %v1200, %v8827
  %v8829 = vpop.f32.mrb[0].mxu0
  %v8830 = vadd.f32 %v1204, %v8829
  %8831 = vmatprep.mubr.bf16.mxu0 %v1622
  %8832 = vmatmul.mubr.bf16.gmra.mrb[0].mxu0 %v1621
  %v8833 = vpop.f32.mrb[0].mxu0
  %v8834 = vadd.f32 %v1200, %v8833
  %v8835 = vpop.f32.mrb[0].mxu0
  %v8836 = vadd.f32 %v1204, %v8835
  %v8837 = vpop.f32.mrb[0].mxu0
  %v8838 = vadd.f32 %v1200, %v8837
  %v8839 = vpop.f32.mrb[0].mxu0
  %v8840 = vadd.f32 %v1204, %v8839
  %8841 = vmatprep.mubr.bf16.mxu0 %v1638
  %8842 = vmatmul.mubr.bf16.gmra.mrb[0].mxu0 %v1637
  %v8843 = vpop.f32.mrb[0].mxu0
  %v8844 = vadd.f32 %v1200, %v8843
  %v8845 = vpop.f32.mrb[0].mxu0
  %v8846 = vadd.f32 %v1204, %v8845
  %v8847 = vpop.f32.mrb[0].mxu0
  %v8848 = vadd.f32 %v1200, %v8847
  %v8849 = vpop.f32.mrb[0].mxu0
  %v8850 = vadd.f32 %v1204, %v8849
  %8851 = vmatprep.mubr.bf16.mxu0 %v1654
  %8852 = vmatmul.mubr.bf16.gmra.mrb[0].mxu0 %v1653
  %v8853 = vpop.f32.mrb[0].mxu0
  %v8854 = vadd.f32 %v1200, %v8853
  %v8855 = vpop.f32.mrb[0].mxu0
  %v8856 = vadd.f32 %v1204, %v8855
  %v8857 = vpop.f32.mrb[0].mxu0
  %v8858 = vadd.f32 %v1200, %v8857
  %v8859 = vpop.f32.mrb[0].mxu0
  %v8860 = vadd.f32 %v1204, %v8859
  %8861 = vmatprep.mubr.bf16.mxu0 %v1670
  %8862 = vmatmul.mubr.bf16.gmra.mrb[0].mxu0 %v1669
  %v8863 = vpop.f32.mrb[0].mxu0
  %v8864 = vadd.f32 %v1200, %v8863
  %v8865 = vpop.f32.mrb[0].mxu0
  %v8866 = vadd.f32 %v1204, %v8865
  %v8867 = vpop.f32.mrb[0].mxu0
  %v8868 = vadd.f32 %v1200, %v8867
  %v8869 = vpop.f32.mrb[0].mxu0
  %v8870 = vadd.f32 %v1204, %v8869
  %8871 = vmatprep.mubr.bf16.mxu0 %v1686
  %8872 = vmatmul.mubr.bf16.gmra.mrb[0].mxu0 %v1685
  %v8873 = vpop.f32.mrb[0].mxu0
  %v8874 = vadd.f32 %v1200, %v8873
  %v8875 = vpop.f32.mrb[0].mxu0
  %v8876 = vadd.f32 %v1204, %v8875
  %v8877 = vpop.f32.mrb[0].mxu0
  %v8878 = vadd.f32 %v1200, %v8877
  %v8879 = vpop.f32.mrb[0].mxu0
  %v8880 = vadd.f32 %v1204, %v8879
  %8881 = vmatprep.mubr.bf16.mxu0 %v1702
  %8882 = vmatmul.mubr.bf16.gmra.mrb[0].mxu0 %v1701
  %v8883 = vpop.f32.mrb[0].mxu0
  %v8884 = vadd.f32 %v1200, %v8883
  %v8885 = vpop.f32.mrb[0].mxu0
  %v8886 = vadd.f32 %v1204, %v8885
  %v8887 = vpop.f32.mrb[0].mxu0
  %v8888 = vadd.f32 %v1200, %v8887
  %v8889 = vpop.f32.mrb[0].mxu0
  %v8890 = vadd.f32 %v1204, %v8889
  %8891 = vmatprep.mubr.bf16.mxu0 %v1718
  %8892 = vmatmul.mubr.bf16.gmra.mrb[0].mxu0 %v1717
  %v8893 = vpop.f32.mrb[0].mxu0
  %v8894 = vadd.f32 %v1200, %v8893
  %v8895 = vpop.f32.mrb[0].mxu0
  %v8896 = vadd.f32 %v1204, %v8895
  %v8897 = vpop.f32.mrb[0].mxu0
  %v8898 = vadd.f32 %v1200, %v8897
  %v8899 = vpop.f32.mrb[0].mxu0
  %v8900 = vadd.f32 %v1204, %v8899
  %8901 = vdwg.mxu0
  %8902 = vmatprep.subr.bf16.mxu0 %v5066
  %8903 = vmatpush1.bf16.msra.mxu0 %v5065
  %8904 = vmatprep.subr.bf16.mxu0 %v5074
  %8905 = vmatpush1.bf16.msra.mxu0 %v5073
  %8906 = vmatprep.subr.bf16.mxu0 %v5082
  %8907 = vmatpush1.bf16.msra.mxu0 %v5081
  %8908 = vmatprep.subr.bf16.mxu0 %v5090
  %8909 = vmatpush1.bf16.msra.mxu0 %v5089
  %8910 = vmatprep.subr.bf16.mxu0 %v5098
  %8911 = vmatpush1.bf16.msra.mxu0 %v5097
  %8912 = vmatprep.subr.bf16.mxu0 %v5106
  %8913 = vmatpush1.bf16.msra.mxu0 %v5105
  %8914 = vmatprep.subr.bf16.mxu0 %v5114
  %8915 = vmatpush1.bf16.msra.mxu0 %v5113
  %8916 = vmatprep.subr.bf16.mxu0 %v5122
  %8917 = vmatpush1.bf16.msra.mxu0 %v5121
  %8918 = vmatprep.subr.bf16.mxu0 %v5130
  %8919 = vmatpush1.bf16.msra.mxu0 %v5129
  %8920 = vmatprep.subr.bf16.mxu0 %v5138
  %8921 = vmatpush1.bf16.msra.mxu0 %v5137
  %8922 = vmatprep.subr.bf16.mxu0 %v5146
  %8923 = vmatpush1.bf16.msra.mxu0 %v5145
  %8924 = vmatprep.subr.bf16.mxu0 %v5154
  %8925 = vmatpush1.bf16.msra.mxu0 %v5153
  %8926 = vmatprep.subr.bf16.mxu0 %v5162
  %8927 = vmatpush1.bf16.msra.mxu0 %v5161
  %8928 = vmatprep.subr.bf16.mxu0 %v5170
  %8929 = vmatpush1.bf16.msra.mxu0 %v5169
  %8930 = vmatprep.subr.bf16.mxu0 %v5178
  %8931 = vmatpush1.bf16.msra.mxu0 %v5177
  %8932 = vmatprep.subr.bf16.mxu0 %v5186
  %8933 = vmatpush1.bf16.msra.mxu0 %v5185
  %8934 = vmatprep.mubr.bf16.mxu0 %v1608
  %8935 = vmatmul.mubr.bf16.gmra.mrb[0].mxu0 %v1607
  %v8936 = vpop.f32.mrb[0].mxu0
  %v8937 = vadd.f32 %v8824, %v8936
  %v8938 = vpop.f32.mrb[0].mxu0
  %v8939 = vadd.f32 %v8826, %v8938
  %v8940 = vpop.f32.mrb[0].mxu0
  %v8941 = vadd.f32 %v8828, %v8940
  %v8942 = vpop.f32.mrb[0].mxu0
  %v8943 = vadd.f32 %v8830, %v8942
  %8944 = vmatprep.mubr.bf16.mxu0 %v1624
  %8945 = vmatmul.mubr.bf16.gmra.mrb[0].mxu0 %v1623
  %v8946 = vpop.f32.mrb[0].mxu0
  %v8947 = vadd.f32 %v8834, %v8946
  %v8948 = vpop.f32.mrb[0].mxu0
  %v8949 = vadd.f32 %v8836, %v8948
  %v8950 = vpop.f32.mrb[0].mxu0
  %v8951 = vadd.f32 %v8838, %v8950
  %v8952 = vpop.f32.mrb[0].mxu0
  %v8953 = vadd.f32 %v8840, %v8952
  %8954 = vmatprep.mubr.bf16.mxu0 %v1640
  %8955 = vmatmul.mubr.bf16.gmra.mrb[0].mxu0 %v1639
  %v8956 = vpop.f32.mrb[0].mxu0
  %v8957 = vadd.f32 %v8844, %v8956
  %v8958 = vpop.f32.mrb[0].mxu0
  %v8959 = vadd.f32 %v8846, %v8958
  %v8960 = vpop.f32.mrb[0].mxu0
  %v8961 = vadd.f32 %v8848, %v8960
  %v8962 = vpop.f32.mrb[0].mxu0
  %v8963 = vadd.f32 %v8850, %v8962
  %8964 = vmatprep.mubr.bf16.mxu0 %v1656
  %8965 = vmatmul.mubr.bf16.gmra.mrb[0].mxu0 %v1655
  %v8966 = vpop.f32.mrb[0].mxu0
  %v8967 = vadd.f32 %v8854, %v8966
  %v8968 = vpop.f32.mrb[0].mxu0
  %v8969 = vadd.f32 %v8856, %v8968
  %v8970 = vpop.f32.mrb[0].mxu0
  %v8971 = vadd.f32 %v8858, %v8970
  %v8972 = vpop.f32.mrb[0].mxu0
  %v8973 = vadd.f32 %v8860, %v8972
  %8974 = vmatprep.mubr.bf16.mxu0 %v1672
  %8975 = vmatmul.mubr.bf16.gmra.mrb[0].mxu0 %v1671
  %v8976 = vpop.f32.mrb[0].mxu0
  %v8977 = vadd.f32 %v8864, %v8976
  %v8978 = vpop.f32.mrb[0].mxu0
  %v8979 = vadd.f32 %v8866, %v8978
  %v8980 = vpop.f32.mrb[0].mxu0
  %v8981 = vadd.f32 %v8868, %v8980
  %v8982 = vpop.f32.mrb[0].mxu0
  %v8983 = vadd.f32 %v8870, %v8982
  %8984 = vmatprep.mubr.bf16.mxu0 %v1688
  %8985 = vmatmul.mubr.bf16.gmra.mrb[0].mxu0 %v1687
  %v8986 = vpop.f32.mrb[0].mxu0
  %v8987 = vadd.f32 %v8874, %v8986
  %v8988 = vpop.f32.mrb[0].mxu0
  %v8989 = vadd.f32 %v8876, %v8988
  %v8990 = vpop.f32.mrb[0].mxu0
  %v8991 = vadd.f32 %v8878, %v8990
  %v8992 = vpop.f32.mrb[0].mxu0
  %v8993 = vadd.f32 %v8880, %v8992
  %8994 = vmatprep.mubr.bf16.mxu0 %v1704
  %8995 = vmatmul.mubr.bf16.gmra.mrb[0].mxu0 %v1703
  %v8996 = vpop.f32.mrb[0].mxu0
  %v8997 = vadd.f32 %v8884, %v8996
  %v8998 = vpop.f32.mrb[0].mxu0
  %v8999 = vadd.f32 %v8886, %v8998
  %v9000 = vpop.f32.mrb[0].mxu0
  %v9001 = vadd.f32 %v8888, %v9000
  %v9002 = vpop.f32.mrb[0].mxu0
  %v9003 = vadd.f32 %v8890, %v9002
  %9004 = vmatprep.mubr.bf16.mxu0 %v1720
  %9005 = vmatmul.mubr.bf16.gmra.mrb[0].mxu0 %v1719
  %v9006 = vpop.f32.mrb[0].mxu0
  %v9007 = vadd.f32 %v8894, %v9006
  %v9008 = vpop.f32.mrb[0].mxu0
  %v9009 = vadd.f32 %v8896, %v9008
  %v9010 = vpop.f32.mrb[0].mxu0
  %v9011 = vadd.f32 %v8898, %v9010
  %v9012 = vpop.f32.mrb[0].mxu0
  %v9013 = vadd.f32 %v8900, %v9012
  %9014 = vdwg.mxu0
  %9015 = vmatprep.subr.bf16.mxu0 %v5194
  %9016 = vmatpush1.bf16.msra.mxu0 %v5193
  %9017 = vmatprep.subr.bf16.mxu0 %v5202
  %9018 = vmatpush1.bf16.msra.mxu0 %v5201
  %9019 = vmatprep.subr.bf16.mxu0 %v5210
  %9020 = vmatpush1.bf16.msra.mxu0 %v5209
  %9021 = vmatprep.subr.bf16.mxu0 %v5218
  %9022 = vmatpush1.bf16.msra.mxu0 %v5217
  %9023 = vmatprep.subr.bf16.mxu0 %v5226
  %9024 = vmatpush1.bf16.msra.mxu0 %v5225
  %9025 = vmatprep.subr.bf16.mxu0 %v5234
  %9026 = vmatpush1.bf16.msra.mxu0 %v5233
  %9027 = vmatprep.subr.bf16.mxu0 %v5242
  %9028 = vmatpush1.bf16.msra.mxu0 %v5241
  %9029 = vmatprep.subr.bf16.mxu0 %v5250
  %9030 = vmatpush1.bf16.msra.mxu0 %v5249
  %9031 = vmatprep.subr.bf16.mxu0 %v5258
  %9032 = vmatpush1.bf16.msra.mxu0 %v5257
  %9033 = vmatprep.subr.bf16.mxu0 %v5266
  %9034 = vmatpush1.bf16.msra.mxu0 %v5265
  %9035 = vmatprep.subr.bf16.mxu0 %v5274
  %9036 = vmatpush1.bf16.msra.mxu0 %v5273
  %9037 = vmatprep.subr.bf16.mxu0 %v5282
  %9038 = vmatpush1.bf16.msra.mxu0 %v5281
  %9039 = vmatprep.subr.bf16.mxu0 %v5290
  %9040 = vmatpush1.bf16.msra.mxu0 %v5289
  %9041 = vmatprep.subr.bf16.mxu0 %v5298
  %9042 = vmatpush1.bf16.msra.mxu0 %v5297
  %9043 = vmatprep.subr.bf16.mxu0 %v5306
  %9044 = vmatpush1.bf16.msra.mxu0 %v5305
  %9045 = vmatprep.subr.bf16.mxu0 %v5314
  %9046 = vmatpush1.bf16.msra.mxu0 %v5313
  %9047 = vmatprep.mubr.bf16.mxu0 %v1610
  %9048 = vmatmul.mubr.bf16.gmra.mrb[0].mxu0 %v1609
  %v9049 = vpop.f32.mrb[0].mxu0
  %v9050 = vadd.f32 %v8937, %v9049
  %v9051 = vpop.f32.mrb[0].mxu0
  %v9052 = vadd.f32 %v8939, %v9051
  %v9053 = vpop.f32.mrb[0].mxu0
  %v9054 = vadd.f32 %v8941, %v9053
  %v9055 = vpop.f32.mrb[0].mxu0
  %v9056 = vadd.f32 %v8943, %v9055
  %9057 = vmatprep.mubr.bf16.mxu0 %v1626
  %9058 = vmatmul.mubr.bf16.gmra.mrb[0].mxu0 %v1625
  %v9059 = vpop.f32.mrb[0].mxu0
  %v9060 = vadd.f32 %v8947, %v9059
  %v9061 = vpop.f32.mrb[0].mxu0
  %v9062 = vadd.f32 %v8949, %v9061
  %v9063 = vpop.f32.mrb[0].mxu0
  %v9064 = vadd.f32 %v8951, %v9063
  %v9065 = vpop.f32.mrb[0].mxu0
  %v9066 = vadd.f32 %v8953, %v9065
  %9067 = vmatprep.mubr.bf16.mxu0 %v1642
  %9068 = vmatmul.mubr.bf16.gmra.mrb[0].mxu0 %v1641
  %v9069 = vpop.f32.mrb[0].mxu0
  %v9070 = vadd.f32 %v8957, %v9069
  %v9071 = vpop.f32.mrb[0].mxu0
  %v9072 = vadd.f32 %v8959, %v9071
  %v9073 = vpop.f32.mrb[0].mxu0
  %v9074 = vadd.f32 %v8961, %v9073
  %v9075 = vpop.f32.mrb[0].mxu0
  %v9076 = vadd.f32 %v8963, %v9075
  %9077 = vmatprep.mubr.bf16.mxu0 %v1658
  %9078 = vmatmul.mubr.bf16.gmra.mrb[0].mxu0 %v1657
  %v9079 = vpop.f32.mrb[0].mxu0
  %v9080 = vadd.f32 %v8967, %v9079
  %v9081 = vpop.f32.mrb[0].mxu0
  %v9082 = vadd.f32 %v8969, %v9081
  %v9083 = vpop.f32.mrb[0].mxu0
  %v9084 = vadd.f32 %v8971, %v9083
  %v9085 = vpop.f32.mrb[0].mxu0
  %v9086 = vadd.f32 %v8973, %v9085
  %9087 = vmatprep.mubr.bf16.mxu0 %v1674
  %9088 = vmatmul.mubr.bf16.gmra.mrb[0].mxu0 %v1673
  %v9089 = vpop.f32.mrb[0].mxu0
  %v9090 = vadd.f32 %v8977, %v9089
  %v9091 = vpop.f32.mrb[0].mxu0
  %v9092 = vadd.f32 %v8979, %v9091
  %v9093 = vpop.f32.mrb[0].mxu0
  %v9094 = vadd.f32 %v8981, %v9093
  %v9095 = vpop.f32.mrb[0].mxu0
  %v9096 = vadd.f32 %v8983, %v9095
  %9097 = vmatprep.mubr.bf16.mxu0 %v1690
  %9098 = vmatmul.mubr.bf16.gmra.mrb[0].mxu0 %v1689
  %v9099 = vpop.f32.mrb[0].mxu0
  %v9100 = vadd.f32 %v8987, %v9099
  %v9101 = vpop.f32.mrb[0].mxu0
  %v9102 = vadd.f32 %v8989, %v9101
  %v9103 = vpop.f32.mrb[0].mxu0
  %v9104 = vadd.f32 %v8991, %v9103
  %v9105 = vpop.f32.mrb[0].mxu0
  %v9106 = vadd.f32 %v8993, %v9105
  %9107 = vmatprep.mubr.bf16.mxu0 %v1706
  %9108 = vmatmul.mubr.bf16.gmra.mrb[0].mxu0 %v1705
  %v9109 = vpop.f32.mrb[0].mxu0
  %v9110 = vadd.f32 %v8997, %v9109
  %v9111 = vpop.f32.mrb[0].mxu0
  %v9112 = vadd.f32 %v8999, %v9111
  %v9113 = vpop.f32.mrb[0].mxu0
  %v9114 = vadd.f32 %v9001, %v9113
  %v9115 = vpop.f32.mrb[0].mxu0
  %v9116 = vadd.f32 %v9003, %v9115
  %9117 = vmatprep.mubr.bf16.mxu0 %v1722
  %9118 = vmatmul.mubr.bf16.gmra.mrb[0].mxu0 %v1721
  %v9119 = vpop.f32.mrb[0].mxu0
  %v9120 = vadd.f32 %v9007, %v9119
  %v9121 = vpop.f32.mrb[0].mxu0
  %v9122 = vadd.f32 %v9009, %v9121
  %v9123 = vpop.f32.mrb[0].mxu0
  %v9124 = vadd.f32 %v9011, %v9123
  %v9125 = vpop.f32.mrb[0].mxu0
  %v9126 = vadd.f32 %v9013, %v9125
  %9127 = vdwg.mxu0
  %9128 = vmatprep.subr.bf16.mxu0 %v5322
  %9129 = vmatpush1.bf16.msra.mxu0 %v5321
  %9130 = vmatprep.subr.bf16.mxu0 %v5330
  %9131 = vmatpush1.bf16.msra.mxu0 %v5329
  %9132 = vmatprep.subr.bf16.mxu0 %v5338
  %9133 = vmatpush1.bf16.msra.mxu0 %v5337
  %9134 = vmatprep.subr.bf16.mxu0 %v5346
  %9135 = vmatpush1.bf16.msra.mxu0 %v5345
  %9136 = vmatprep.subr.bf16.mxu0 %v5354
  %9137 = vmatpush1.bf16.msra.mxu0 %v5353
  %9138 = vmatprep.subr.bf16.mxu0 %v5362
  %9139 = vmatpush1.bf16.msra.mxu0 %v5361
  %9140 = vmatprep.subr.bf16.mxu0 %v5370
  %9141 = vmatpush1.bf16.msra.mxu0 %v5369
  %9142 = vmatprep.subr.bf16.mxu0 %v5378
  %9143 = vmatpush1.bf16.msra.mxu0 %v5377
  %9144 = vmatprep.subr.bf16.mxu0 %v5386
  %9145 = vmatpush1.bf16.msra.mxu0 %v5385
  %9146 = vmatprep.subr.bf16.mxu0 %v5394
  %9147 = vmatpush1.bf16.msra.mxu0 %v5393
  %9148 = vmatprep.subr.bf16.mxu0 %v5402
  %9149 = vmatpush1.bf16.msra.mxu0 %v5401
  %9150 = vmatprep.subr.bf16.mxu0 %v5410
  %9151 = vmatpush1.bf16.msra.mxu0 %v5409
  %9152 = vmatprep.subr.bf16.mxu0 %v5418
  %9153 = vmatpush1.bf16.msra.mxu0 %v5417
  %9154 = vmatprep.subr.bf16.mxu0 %v5426
  %9155 = vmatpush1.bf16.msra.mxu0 %v5425
  %9156 = vmatprep.subr.bf16.mxu0 %v5434
  %9157 = vmatpush1.bf16.msra.mxu0 %v5433
  %9158 = vmatprep.subr.bf16.mxu0 %v5442
  %9159 = vmatpush1.bf16.msra.mxu0 %v5441
  %9160 = vmatprep.mubr.bf16.mxu0 %v1612
  %9161 = vmatmul.mubr.bf16.gmra.mrb[0].mxu0 %v1611
  %v9162 = vpop.f32.mrb[0].mxu0
  %v9163 = vadd.f32 %v9050, %v9162
  %v9164 = vpop.f32.mrb[0].mxu0
  %v9165 = vadd.f32 %v9052, %v9164
  %v9166 = vpop.f32.mrb[0].mxu0
  %v9167 = vadd.f32 %v9054, %v9166
  %v9168 = vpop.f32.mrb[0].mxu0
  %v9169 = vadd.f32 %v9056, %v9168
  %9170 = vmatprep.mubr.bf16.mxu0 %v1628
  %9171 = vmatmul.mubr.bf16.gmra.mrb[0].mxu0 %v1627
  %v9172 = vpop.f32.mrb[0].mxu0
  %v9173 = vadd.f32 %v9060, %v9172
  %v9174 = vpop.f32.mrb[0].mxu0
  %v9175 = vadd.f32 %v9062, %v9174
  %v9176 = vpop.f32.mrb[0].mxu0
  %v9177 = vadd.f32 %v9064, %v9176
  %v9178 = vpop.f32.mrb[0].mxu0
  %v9179 = vadd.f32 %v9066, %v9178
  %9180 = vmatprep.mubr.bf16.mxu0 %v1644
  %9181 = vmatmul.mubr.bf16.gmra.mrb[0].mxu0 %v1643
  %v9182 = vpop.f32.mrb[0].mxu0
  %v9183 = vadd.f32 %v9070, %v9182
  %v9184 = vpop.f32.mrb[0].mxu0
  %v9185 = vadd.f32 %v9072, %v9184
  %v9186 = vpop.f32.mrb[0].mxu0
  %v9187 = vadd.f32 %v9074, %v9186
  %v9188 = vpop.f32.mrb[0].mxu0
  %v9189 = vadd.f32 %v9076, %v9188
  %9190 = vmatprep.mubr.bf16.mxu0 %v1660
  %9191 = vmatmul.mubr.bf16.gmra.mrb[0].mxu0 %v1659
  %v9192 = vpop.f32.mrb[0].mxu0
  %v9193 = vadd.f32 %v9080, %v9192
  %v9194 = vpop.f32.mrb[0].mxu0
  %v9195 = vadd.f32 %v9082, %v9194
  %v9196 = vpop.f32.mrb[0].mxu0
  %v9197 = vadd.f32 %v9084, %v9196
  %v9198 = vpop.f32.mrb[0].mxu0
  %v9199 = vadd.f32 %v9086, %v9198
  %9200 = vmatprep.mubr.bf16.mxu0 %v1676
  %9201 = vmatmul.mubr.bf16.gmra.mrb[0].mxu0 %v1675
  %v9202 = vpop.f32.mrb[0].mxu0
  %v9203 = vadd.f32 %v9090, %v9202
  %v9204 = vpop.f32.mrb[0].mxu0
  %v9205 = vadd.f32 %v9092, %v9204
  %v9206 = vpop.f32.mrb[0].mxu0
  %v9207 = vadd.f32 %v9094, %v9206
  %v9208 = vpop.f32.mrb[0].mxu0
  %v9209 = vadd.f32 %v9096, %v9208
  %9210 = vmatprep.mubr.bf16.mxu0 %v1692
  %9211 = vmatmul.mubr.bf16.gmra.mrb[0].mxu0 %v1691
  %v9212 = vpop.f32.mrb[0].mxu0
  %v9213 = vadd.f32 %v9100, %v9212
  %v9214 = vpop.f32.mrb[0].mxu0
  %v9215 = vadd.f32 %v9102, %v9214
  %v9216 = vpop.f32.mrb[0].mxu0
  %v9217 = vadd.f32 %v9104, %v9216
  %v9218 = vpop.f32.mrb[0].mxu0
  %v9219 = vadd.f32 %v9106, %v9218
  %9220 = vmatprep.mubr.bf16.mxu0 %v1708
  %9221 = vmatmul.mubr.bf16.gmra.mrb[0].mxu0 %v1707
  %v9222 = vpop.f32.mrb[0].mxu0
  %v9223 = vadd.f32 %v9110, %v9222
  %v9224 = vpop.f32.mrb[0].mxu0
  %v9225 = vadd.f32 %v9112, %v9224
  %v9226 = vpop.f32.mrb[0].mxu0
  %v9227 = vadd.f32 %v9114, %v9226
  %v9228 = vpop.f32.mrb[0].mxu0
  %v9229 = vadd.f32 %v9116, %v9228
  %9230 = vmatprep.mubr.bf16.mxu0 %v1724
  %9231 = vmatmul.mubr.bf16.gmra.mrb[0].mxu0 %v1723
  %v9232 = vpop.f32.mrb[0].mxu0
  %v9233 = vadd.f32 %v9120, %v9232
  %v9234 = vpop.f32.mrb[0].mxu0
  %v9235 = vadd.f32 %v9122, %v9234
  %v9236 = vpop.f32.mrb[0].mxu0
  %v9237 = vadd.f32 %v9124, %v9236
  %v9238 = vpop.f32.mrb[0].mxu0
  %v9239 = vadd.f32 %v9126, %v9238
  %9240 = vdwg.mxu0
  %9241 = vmatprep.subr.bf16.mxu0 %v5450
  %9242 = vmatpush1.bf16.msra.mxu0 %v5449
  %9243 = vmatprep.subr.bf16.mxu0 %v5458
  %9244 = vmatpush1.bf16.msra.mxu0 %v5457
  %9245 = vmatprep.subr.bf16.mxu0 %v5466
  %9246 = vmatpush1.bf16.msra.mxu0 %v5465
  %9247 = vmatprep.subr.bf16.mxu0 %v5474
  %9248 = vmatpush1.bf16.msra.mxu0 %v5473
  %9249 = vmatprep.subr.bf16.mxu0 %v5482
  %9250 = vmatpush1.bf16.msra.mxu0 %v5481
  %9251 = vmatprep.subr.bf16.mxu0 %v5490
  %9252 = vmatpush1.bf16.msra.mxu0 %v5489
  %9253 = vmatprep.subr.bf16.mxu0 %v5498
  %9254 = vmatpush1.bf16.msra.mxu0 %v5497
  %9255 = vmatprep.subr.bf16.mxu0 %v5506
  %9256 = vmatpush1.bf16.msra.mxu0 %v5505
  %9257 = vmatprep.subr.bf16.mxu0 %v5514
  %9258 = vmatpush1.bf16.msra.mxu0 %v5513
  %9259 = vmatprep.subr.bf16.mxu0 %v5522
  %9260 = vmatpush1.bf16.msra.mxu0 %v5521
  %9261 = vmatprep.subr.bf16.mxu0 %v5530
  %9262 = vmatpush1.bf16.msra.mxu0 %v5529
  %9263 = vmatprep.subr.bf16.mxu0 %v5538
  %9264 = vmatpush1.bf16.msra.mxu0 %v5537
  %9265 = vmatprep.subr.bf16.mxu0 %v5546
  %9266 = vmatpush1.bf16.msra.mxu0 %v5545
  %9267 = vmatprep.subr.bf16.mxu0 %v5554
  %9268 = vmatpush1.bf16.msra.mxu0 %v5553
  %9269 = vmatprep.subr.bf16.mxu0 %v5562
  %9270 = vmatpush1.bf16.msra.mxu0 %v5561
  %9271 = vmatprep.subr.bf16.mxu0 %v5570
  %9272 = vmatpush1.bf16.msra.mxu0 %v5569
  %9273 = vmatprep.mubr.bf16.mxu0 %v1614
  %9274 = vmatmul.mubr.bf16.gmra.mrb[0].mxu0 %v1613
  %v9275 = vpop.f32.mrb[0].mxu0
  %v9276 = vadd.f32 %v9163, %v9275
  %v9277 = vpop.f32.mrb[0].mxu0
  %v9278 = vadd.f32 %v9165, %v9277
  %v9279 = vpop.f32.mrb[0].mxu0
  %v9280 = vadd.f32 %v9167, %v9279
  %v9281 = vpop.f32.mrb[0].mxu0
  %v9282 = vadd.f32 %v9169, %v9281
  %9283 = vmatprep.mubr.bf16.mxu0 %v1630
  %9284 = vmatmul.mubr.bf16.gmra.mrb[0].mxu0 %v1629
  %v9285 = vpop.f32.mrb[0].mxu0
  %v9286 = vadd.f32 %v9173, %v9285
  %v9287 = vpop.f32.mrb[0].mxu0
  %v9288 = vadd.f32 %v9175, %v9287
  %v9289 = vpop.f32.mrb[0].mxu0
  %v9290 = vadd.f32 %v9177, %v9289
  %v9291 = vpop.f32.mrb[0].mxu0
  %v9292 = vadd.f32 %v9179, %v9291
  %9293 = vmatprep.mubr.bf16.mxu0 %v1646
  %9294 = vmatmul.mubr.bf16.gmra.mrb[0].mxu0 %v1645
  %v9295 = vpop.f32.mrb[0].mxu0
  %v9296 = vadd.f32 %v9183, %v9295
  %v9297 = vpop.f32.mrb[0].mxu0
  %v9298 = vadd.f32 %v9185, %v9297
  %v9299 = vpop.f32.mrb[0].mxu0
  %v9300 = vadd.f32 %v9187, %v9299
  %v9301 = vpop.f32.mrb[0].mxu0
  %v9302 = vadd.f32 %v9189, %v9301
  %9303 = vmatprep.mubr.bf16.mxu0 %v1662
  %9304 = vmatmul.mubr.bf16.gmra.mrb[0].mxu0 %v1661
  %v9305 = vpop.f32.mrb[0].mxu0
  %v9306 = vadd.f32 %v9193, %v9305
  %v9307 = vpop.f32.mrb[0].mxu0
  %v9308 = vadd.f32 %v9195, %v9307
  %v9309 = vpop.f32.mrb[0].mxu0
  %v9310 = vadd.f32 %v9197, %v9309
  %v9311 = vpop.f32.mrb[0].mxu0
  %v9312 = vadd.f32 %v9199, %v9311
  %9313 = vmatprep.mubr.bf16.mxu0 %v1678
  %9314 = vmatmul.mubr.bf16.gmra.mrb[0].mxu0 %v1677
  %v9315 = vpop.f32.mrb[0].mxu0
  %v9316 = vadd.f32 %v9203, %v9315
  %v9317 = vpop.f32.mrb[0].mxu0
  %v9318 = vadd.f32 %v9205, %v9317
  %v9319 = vpop.f32.mrb[0].mxu0
  %v9320 = vadd.f32 %v9207, %v9319
  %v9321 = vpop.f32.mrb[0].mxu0
  %v9322 = vadd.f32 %v9209, %v9321
  %9323 = vmatprep.mubr.bf16.mxu0 %v1694
  %9324 = vmatmul.mubr.bf16.gmra.mrb[0].mxu0 %v1693
  %v9325 = vpop.f32.mrb[0].mxu0
  %v9326 = vadd.f32 %v9213, %v9325
  %v9327 = vpop.f32.mrb[0].mxu0
  %v9328 = vadd.f32 %v9215, %v9327
  %v9329 = vpop.f32.mrb[0].mxu0
  %v9330 = vadd.f32 %v9217, %v9329
  %v9331 = vpop.f32.mrb[0].mxu0
  %v9332 = vadd.f32 %v9219, %v9331
  %9333 = vmatprep.mubr.bf16.mxu0 %v1710
  %9334 = vmatmul.mubr.bf16.gmra.mrb[0].mxu0 %v1709
  %v9335 = vpop.f32.mrb[0].mxu0
  %v9336 = vadd.f32 %v9223, %v9335
  %v9337 = vpop.f32.mrb[0].mxu0
  %v9338 = vadd.f32 %v9225, %v9337
  %v9339 = vpop.f32.mrb[0].mxu0
  %v9340 = vadd.f32 %v9227, %v9339
  %v9341 = vpop.f32.mrb[0].mxu0
  %v9342 = vadd.f32 %v9229, %v9341
  %9343 = vmatprep.mubr.bf16.mxu0 %v1726
  %9344 = vmatmul.mubr.bf16.gmra.mrb[0].mxu0 %v1725
  %v9345 = vpop.f32.mrb[0].mxu0
  %v9346 = vadd.f32 %v9233, %v9345
  %v9347 = vpop.f32.mrb[0].mxu0
  %v9348 = vadd.f32 %v9235, %v9347
  %v9349 = vpop.f32.mrb[0].mxu0
  %v9350 = vadd.f32 %v9237, %v9349
  %v9351 = vpop.f32.mrb[0].mxu0
  %v9352 = vadd.f32 %v9239, %v9351
  %9353 = vdwg.mxu0
  %9354 = vmatprep.subr.bf16.mxu0 %v5578
  %9355 = vmatpush1.bf16.msra.mxu0 %v5577
  %9356 = vmatprep.subr.bf16.mxu0 %v5586
  %9357 = vmatpush1.bf16.msra.mxu0 %v5585
  %9358 = vmatprep.subr.bf16.mxu0 %v5594
  %9359 = vmatpush1.bf16.msra.mxu0 %v5593
  %9360 = vmatprep.subr.bf16.mxu0 %v5602
  %9361 = vmatpush1.bf16.msra.mxu0 %v5601
  %9362 = vmatprep.subr.bf16.mxu0 %v5610
  %9363 = vmatpush1.bf16.msra.mxu0 %v5609
  %9364 = vmatprep.subr.bf16.mxu0 %v5618
  %9365 = vmatpush1.bf16.msra.mxu0 %v5617
  %9366 = vmatprep.subr.bf16.mxu0 %v5626
  %9367 = vmatpush1.bf16.msra.mxu0 %v5625
  %9368 = vmatprep.subr.bf16.mxu0 %v5634
  %9369 = vmatpush1.bf16.msra.mxu0 %v5633
  %9370 = vmatprep.subr.bf16.mxu0 %v5642
  %9371 = vmatpush1.bf16.msra.mxu0 %v5641
  %9372 = vmatprep.subr.bf16.mxu0 %v5650
  %9373 = vmatpush1.bf16.msra.mxu0 %v5649
  %9374 = vmatprep.subr.bf16.mxu0 %v5658
  %9375 = vmatpush1.bf16.msra.mxu0 %v5657
  %9376 = vmatprep.subr.bf16.mxu0 %v5666
  %9377 = vmatpush1.bf16.msra.mxu0 %v5665
  %9378 = vmatprep.subr.bf16.mxu0 %v5674
  %9379 = vmatpush1.bf16.msra.mxu0 %v5673
  %9380 = vmatprep.subr.bf16.mxu0 %v5682
  %9381 = vmatpush1.bf16.msra.mxu0 %v5681
  %9382 = vmatprep.subr.bf16.mxu0 %v5690
  %9383 = vmatpush1.bf16.msra.mxu0 %v5689
  %9384 = vmatprep.subr.bf16.mxu0 %v5698
  %9385 = vmatpush1.bf16.msra.mxu0 %v5697
  %9386 = vmatprep.mubr.bf16.mxu0 %v1616
  %9387 = vmatmul.mubr.bf16.gmra.mrb[0].mxu0 %v1615
  %v9388 = vpop.f32.mrb[0].mxu0
  %v9389 = vadd.f32 %v9276, %v9388
  %v9390 = vpop.f32.mrb[0].mxu0
  %v9391 = vadd.f32 %v9278, %v9390
  %v9392 = vpop.f32.mrb[0].mxu0
  %v9393 = vadd.f32 %v9280, %v9392
  %v9394 = vpop.f32.mrb[0].mxu0
  %v9395 = vadd.f32 %v9282, %v9394
  %9396 = vmatprep.mubr.bf16.mxu0 %v1632
  %9397 = vmatmul.mubr.bf16.gmra.mrb[0].mxu0 %v1631
  %v9398 = vpop.f32.mrb[0].mxu0
  %v9399 = vadd.f32 %v9286, %v9398
  %v9400 = vpop.f32.mrb[0].mxu0
  %v9401 = vadd.f32 %v9288, %v9400
  %v9402 = vpop.f32.mrb[0].mxu0
  %v9403 = vadd.f32 %v9290, %v9402
  %v9404 = vpop.f32.mrb[0].mxu0
  %v9405 = vadd.f32 %v9292, %v9404
  %9406 = vmatprep.mubr.bf16.mxu0 %v1648
  %9407 = vmatmul.mubr.bf16.gmra.mrb[0].mxu0 %v1647
  %v9408 = vpop.f32.mrb[0].mxu0
  %v9409 = vadd.f32 %v9296, %v9408
  %v9410 = vpop.f32.mrb[0].mxu0
  %v9411 = vadd.f32 %v9298, %v9410
  %v9412 = vpop.f32.mrb[0].mxu0
  %v9413 = vadd.f32 %v9300, %v9412
  %v9414 = vpop.f32.mrb[0].mxu0
  %v9415 = vadd.f32 %v9302, %v9414
  %9416 = vmatprep.mubr.bf16.mxu0 %v1664
  %9417 = vmatmul.mubr.bf16.gmra.mrb[0].mxu0 %v1663
  %v9418 = vpop.f32.mrb[0].mxu0
  %v9419 = vadd.f32 %v9306, %v9418
  %v9420 = vpop.f32.mrb[0].mxu0
  %v9421 = vadd.f32 %v9308, %v9420
  %v9422 = vpop.f32.mrb[0].mxu0
  %v9423 = vadd.f32 %v9310, %v9422
  %v9424 = vpop.f32.mrb[0].mxu0
  %v9425 = vadd.f32 %v9312, %v9424
  %9426 = vmatprep.mubr.bf16.mxu0 %v1680
  %9427 = vmatmul.mubr.bf16.gmra.mrb[0].mxu0 %v1679
  %v9428 = vpop.f32.mrb[0].mxu0
  %v9429 = vadd.f32 %v9316, %v9428
  %v9430 = vpop.f32.mrb[0].mxu0
  %v9431 = vadd.f32 %v9318, %v9430
  %v9432 = vpop.f32.mrb[0].mxu0
  %v9433 = vadd.f32 %v9320, %v9432
  %v9434 = vpop.f32.mrb[0].mxu0
  %v9435 = vadd.f32 %v9322, %v9434
  %9436 = vmatprep.mubr.bf16.mxu0 %v1696
  %9437 = vmatmul.mubr.bf16.gmra.mrb[0].mxu0 %v1695
  %v9438 = vpop.f32.mrb[0].mxu0
  %v9439 = vadd.f32 %v9326, %v9438
  %v9440 = vpop.f32.mrb[0].mxu0
  %v9441 = vadd.f32 %v9328, %v9440
  %v9442 = vpop.f32.mrb[0].mxu0
  %v9443 = vadd.f32 %v9330, %v9442
  %v9444 = vpop.f32.mrb[0].mxu0
  %v9445 = vadd.f32 %v9332, %v9444
  %9446 = vmatprep.mubr.bf16.mxu0 %v1712
  %9447 = vmatmul.mubr.bf16.gmra.mrb[0].mxu0 %v1711
  %v9448 = vpop.f32.mrb[0].mxu0
  %v9449 = vadd.f32 %v9336, %v9448
  %v9450 = vpop.f32.mrb[0].mxu0
  %v9451 = vadd.f32 %v9338, %v9450
  %v9452 = vpop.f32.mrb[0].mxu0
  %v9453 = vadd.f32 %v9340, %v9452
  %v9454 = vpop.f32.mrb[0].mxu0
  %v9455 = vadd.f32 %v9342, %v9454
  %9456 = vmatprep.mubr.bf16.mxu0 %v1728
  %9457 = vmatmul.mubr.bf16.gmra.mrb[0].mxu0 %v1727
  %v9458 = vpop.f32.mrb[0].mxu0
  %v9459 = vadd.f32 %v9346, %v9458
  %v9460 = vpop.f32.mrb[0].mxu0
  %v9461 = vadd.f32 %v9348, %v9460
  %v9462 = vpop.f32.mrb[0].mxu0
  %v9463 = vadd.f32 %v9350, %v9462
  %v9464 = vpop.f32.mrb[0].mxu0
  %v9465 = vadd.f32 %v9352, %v9464
  %9466 = vdwg.mxu0
  %9467 = vmatprep.subr.bf16.mxu0 %v5706
  %9468 = vmatpush1.bf16.msra.mxu0 %v5705
  %9469 = vmatprep.subr.bf16.mxu0 %v5714
  %9470 = vmatpush1.bf16.msra.mxu0 %v5713
  %9471 = vmatprep.subr.bf16.mxu0 %v5722
  %9472 = vmatpush1.bf16.msra.mxu0 %v5721
  %9473 = vmatprep.subr.bf16.mxu0 %v5730
  %9474 = vmatpush1.bf16.msra.mxu0 %v5729
  %9475 = vmatprep.subr.bf16.mxu0 %v5738
  %9476 = vmatpush1.bf16.msra.mxu0 %v5737
  %9477 = vmatprep.subr.bf16.mxu0 %v5746
  %9478 = vmatpush1.bf16.msra.mxu0 %v5745
  %9479 = vmatprep.subr.bf16.mxu0 %v5754
  %9480 = vmatpush1.bf16.msra.mxu0 %v5753
  %9481 = vmatprep.subr.bf16.mxu0 %v5762
  %9482 = vmatpush1.bf16.msra.mxu0 %v5761
  %9483 = vmatprep.subr.bf16.mxu0 %v5770
  %9484 = vmatpush1.bf16.msra.mxu0 %v5769
  %9485 = vmatprep.subr.bf16.mxu0 %v5778
  %9486 = vmatpush1.bf16.msra.mxu0 %v5777
  %9487 = vmatprep.subr.bf16.mxu0 %v5786
  %9488 = vmatpush1.bf16.msra.mxu0 %v5785
  %9489 = vmatprep.subr.bf16.mxu0 %v5794
  %9490 = vmatpush1.bf16.msra.mxu0 %v5793
  %9491 = vmatprep.subr.bf16.mxu0 %v5802
  %9492 = vmatpush1.bf16.msra.mxu0 %v5801
  %9493 = vmatprep.subr.bf16.mxu0 %v5810
  %9494 = vmatpush1.bf16.msra.mxu0 %v5809
  %9495 = vmatprep.subr.bf16.mxu0 %v5818
  %9496 = vmatpush1.bf16.msra.mxu0 %v5817
  %9497 = vmatprep.subr.bf16.mxu0 %v5826
  %9498 = vmatpush1.bf16.msra.mxu0 %v5825
  %9499 = vmatprep.mubr.bf16.mxu0 %v1618
  %9500 = vmatmul.mubr.bf16.gmra.mrb[0].mxu0 %v1617
  %v9501 = vpop.f32.mrb[0].mxu0
  %v9502 = vadd.f32 %v9389, %v9501
  %v9503 = vpop.f32.mrb[0].mxu0
  %v9504 = vadd.f32 %v9391, %v9503
  %v9505 = vpop.f32.mrb[0].mxu0
  %v9506 = vadd.f32 %v9393, %v9505
  %v9507 = vpop.f32.mrb[0].mxu0
  %v9508 = vadd.f32 %v9395, %v9507
  %9509 = vmatprep.mubr.bf16.mxu0 %v1634
  %9510 = vmatmul.mubr.bf16.gmra.mrb[0].mxu0 %v1633
  %v9511 = vpop.f32.mrb[0].mxu0
  %v9512 = vadd.f32 %v9399, %v9511
  %v9513 = vpop.f32.mrb[0].mxu0
  %v9514 = vadd.f32 %v9401, %v9513
  %v9515 = vpop.f32.mrb[0].mxu0
  %v9516 = vadd.f32 %v9403, %v9515
  %v9517 = vpop.f32.mrb[0].mxu0
  %v9518 = vadd.f32 %v9405, %v9517
  %9519 = vmatprep.mubr.bf16.mxu0 %v1650
  %9520 = vmatmul.mubr.bf16.gmra.mrb[0].mxu0 %v1649
  %v9521 = vpop.f32.mrb[0].mxu0
  %v9522 = vadd.f32 %v9409, %v9521
  %v9523 = vpop.f32.mrb[0].mxu0
  %v9524 = vadd.f32 %v9411, %v9523
  %v9525 = vpop.f32.mrb[0].mxu0
  %v9526 = vadd.f32 %v9413, %v9525
  %v9527 = vpop.f32.mrb[0].mxu0
  %v9528 = vadd.f32 %v9415, %v9527
  %9529 = vmatprep.mubr.bf16.mxu0 %v1666
  %9530 = vmatmul.mubr.bf16.gmra.mrb[0].mxu0 %v1665
  %v9531 = vpop.f32.mrb[0].mxu0
  %v9532 = vadd.f32 %v9419, %v9531
  %v9533 = vpop.f32.mrb[0].mxu0
  %v9534 = vadd.f32 %v9421, %v9533
  %v9535 = vpop.f32.mrb[0].mxu0
  %v9536 = vadd.f32 %v9423, %v9535
  %v9537 = vpop.f32.mrb[0].mxu0
  %v9538 = vadd.f32 %v9425, %v9537
  %9539 = vmatprep.mubr.bf16.mxu0 %v1682
  %9540 = vmatmul.mubr.bf16.gmra.mrb[0].mxu0 %v1681
  %v9541 = vpop.f32.mrb[0].mxu0
  %v9542 = vadd.f32 %v9429, %v9541
  %v9543 = vpop.f32.mrb[0].mxu0
  %v9544 = vadd.f32 %v9431, %v9543
  %v9545 = vpop.f32.mrb[0].mxu0
  %v9546 = vadd.f32 %v9433, %v9545
  %v9547 = vpop.f32.mrb[0].mxu0
  %v9548 = vadd.f32 %v9435, %v9547
  %9549 = vmatprep.mubr.bf16.mxu0 %v1698
  %9550 = vmatmul.mubr.bf16.gmra.mrb[0].mxu0 %v1697
  %v9551 = vpop.f32.mrb[0].mxu0
  %v9552 = vadd.f32 %v9439, %v9551
  %v9553 = vpop.f32.mrb[0].mxu0
  %v9554 = vadd.f32 %v9441, %v9553
  %v9555 = vpop.f32.mrb[0].mxu0
  %v9556 = vadd.f32 %v9443, %v9555
  %v9557 = vpop.f32.mrb[0].mxu0
  %v9558 = vadd.f32 %v9445, %v9557
  %9559 = vmatprep.mubr.bf16.mxu0 %v1714
  %9560 = vmatmul.mubr.bf16.gmra.mrb[0].mxu0 %v1713
  %v9561 = vpop.f32.mrb[0].mxu0
  %v9562 = vadd.f32 %v9449, %v9561
  %v9563 = vpop.f32.mrb[0].mxu0
  %v9564 = vadd.f32 %v9451, %v9563
  %v9565 = vpop.f32.mrb[0].mxu0
  %v9566 = vadd.f32 %v9453, %v9565
  %v9567 = vpop.f32.mrb[0].mxu0
  %v9568 = vadd.f32 %v9455, %v9567
  %9569 = vmatprep.mubr.bf16.mxu0 %v1730
  %9570 = vmatmul.mubr.bf16.gmra.mrb[0].mxu0 %v1729
  %v9571 = vpop.f32.mrb[0].mxu0
  %v9572 = vadd.f32 %v9459, %v9571
  %v9573 = vpop.f32.mrb[0].mxu0
  %v9574 = vadd.f32 %v9461, %v9573
  %v9575 = vpop.f32.mrb[0].mxu0
  %v9576 = vadd.f32 %v9463, %v9575
  %v9577 = vpop.f32.mrb[0].mxu0
  %v9578 = vadd.f32 %v9465, %v9577
  %9579 = vdwg.mxu0
  %9580 = vmatprep.subr.bf16.mxu0 %v5834
  %9581 = vmatpush1.bf16.msra.mxu0 %v5833
  %9582 = vmatprep.subr.bf16.mxu0 %v5842
  %9583 = vmatpush1.bf16.msra.mxu0 %v5841
  %9584 = vmatprep.subr.bf16.mxu0 %v5850
  %9585 = vmatpush1.bf16.msra.mxu0 %v5849
  %9586 = vmatprep.subr.bf16.mxu0 %v5858
  %9587 = vmatpush1.bf16.msra.mxu0 %v5857
  %9588 = vmatprep.subr.bf16.mxu0 %v5866
  %9589 = vmatpush1.bf16.msra.mxu0 %v5865
  %9590 = vmatprep.subr.bf16.mxu0 %v5874
  %9591 = vmatpush1.bf16.msra.mxu0 %v5873
  %9592 = vmatprep.subr.bf16.mxu0 %v5882
  %9593 = vmatpush1.bf16.msra.mxu0 %v5881
  %9594 = vmatprep.subr.bf16.mxu0 %v5890
  %9595 = vmatpush1.bf16.msra.mxu0 %v5889
  %9596 = vmatprep.subr.bf16.mxu0 %v5898
  %9597 = vmatpush1.bf16.msra.mxu0 %v5897
  %9598 = vmatprep.subr.bf16.mxu0 %v5906
  %9599 = vmatpush1.bf16.msra.mxu0 %v5905
  %9600 = vmatprep.subr.bf16.mxu0 %v5914
  %9601 = vmatpush1.bf16.msra.mxu0 %v5913
  %9602 = vmatprep.subr.bf16.mxu0 %v5922
  %9603 = vmatpush1.bf16.msra.mxu0 %v5921
  %9604 = vmatprep.subr.bf16.mxu0 %v5930
  %9605 = vmatpush1.bf16.msra.mxu0 %v5929
  %9606 = vmatprep.subr.bf16.mxu0 %v5938
  %9607 = vmatpush1.bf16.msra.mxu0 %v5937
  %9608 = vmatprep.subr.bf16.mxu0 %v5946
  %9609 = vmatpush1.bf16.msra.mxu0 %v5945
  %9610 = vmatprep.subr.bf16.mxu0 %v5954
  %9611 = vmatpush1.bf16.msra.mxu0 %v5953
  %9612 = vmatprep.mubr.bf16.mxu0 %v1620
  %9613 = vmatmul.mubr.bf16.gmra.mrb[0].mxu0 %v1619
  %v9614 = vpop.f32.mrb[0].mxu0
  %v9615 = vadd.f32 %v9502, %v9614
  %v9616 = vpop.f32.mrb[0].mxu0
  %v9617 = vadd.f32 %v9504, %v9616
  %v9618 = vpop.f32.mrb[0].mxu0
  %v9619 = vadd.f32 %v9506, %v9618
  %v9620 = vpop.f32.mrb[0].mxu0
  %v9621 = vadd.f32 %v9508, %v9620
  %9622 = vmatprep.mubr.bf16.mxu0 %v1636
  %9623 = vmatmul.mubr.bf16.gmra.mrb[0].mxu0 %v1635
  %v9624 = vpop.f32.mrb[0].mxu0
  %v9625 = vadd.f32 %v9512, %v9624
  %v9626 = vpop.f32.mrb[0].mxu0
  %v9627 = vadd.f32 %v9514, %v9626
  %v9628 = vpop.f32.mrb[0].mxu0
  %v9629 = vadd.f32 %v9516, %v9628
  %v9630 = vpop.f32.mrb[0].mxu0
  %v9631 = vadd.f32 %v9518, %v9630
  %9632 = vmatprep.mubr.bf16.mxu0 %v1652
  %9633 = vmatmul.mubr.bf16.gmra.mrb[0].mxu0 %v1651
  %v9634 = vpop.f32.mrb[0].mxu0
  %v9635 = vadd.f32 %v9522, %v9634
  %v9636 = vpop.f32.mrb[0].mxu0
  %v9637 = vadd.f32 %v9524, %v9636
  %v9638 = vpop.f32.mrb[0].mxu0
  %v9639 = vadd.f32 %v9526, %v9638
  %v9640 = vpop.f32.mrb[0].mxu0
  %v9641 = vadd.f32 %v9528, %v9640
  %9642 = vmatprep.mubr.bf16.mxu0 %v1668
  %9643 = vmatmul.mubr.bf16.gmra.mrb[0].mxu0 %v1667
  %v9644 = vpop.f32.mrb[0].mxu0
  %v9645 = vadd.f32 %v9532, %v9644
  %v9646 = vpop.f32.mrb[0].mxu0
  %v9647 = vadd.f32 %v9534, %v9646
  %v9648 = vpop.f32.mrb[0].mxu0
  %v9649 = vadd.f32 %v9536, %v9648
  %v9650 = vpop.f32.mrb[0].mxu0
  %v9651 = vadd.f32 %v9538, %v9650
  %9652 = vmatprep.mubr.bf16.mxu0 %v1684
  %9653 = vmatmul.mubr.bf16.gmra.mrb[0].mxu0 %v1683
  %v9654 = vpop.f32.mrb[0].mxu0
  %v9655 = vadd.f32 %v9542, %v9654
  %v9656 = vpop.f32.mrb[0].mxu0
  %v9657 = vadd.f32 %v9544, %v9656
  %v9658 = vpop.f32.mrb[0].mxu0
  %v9659 = vadd.f32 %v9546, %v9658
  %v9660 = vpop.f32.mrb[0].mxu0
  %v9661 = vadd.f32 %v9548, %v9660
  %9662 = vmatprep.mubr.bf16.mxu0 %v1700
  %9663 = vmatmul.mubr.bf16.gmra.mrb[0].mxu0 %v1699
  %v9664 = vpop.f32.mrb[0].mxu0
  %v9665 = vadd.f32 %v9552, %v9664
  %v9666 = vpop.f32.mrb[0].mxu0
  %v9667 = vadd.f32 %v9554, %v9666
  %v9668 = vpop.f32.mrb[0].mxu0
  %v9669 = vadd.f32 %v9556, %v9668
  %v9670 = vpop.f32.mrb[0].mxu0
  %v9671 = vadd.f32 %v9558, %v9670
  %9672 = vmatprep.mubr.bf16.mxu0 %v1716
  %9673 = vmatmul.mubr.bf16.gmra.mrb[0].mxu0 %v1715
  %v9674 = vpop.f32.mrb[0].mxu0
  %v9675 = vadd.f32 %v9562, %v9674
  %v9676 = vpop.f32.mrb[0].mxu0
  %v9677 = vadd.f32 %v9564, %v9676
  %v9678 = vpop.f32.mrb[0].mxu0
  %v9679 = vadd.f32 %v9566, %v9678
  %v9680 = vpop.f32.mrb[0].mxu0
  %v9681 = vadd.f32 %v9568, %v9680
  %9682 = vmatprep.mubr.bf16.mxu0 %v1732
  %9683 = vmatmul.mubr.bf16.gmra.mrb[0].mxu0 %v1731
  %v9684 = vpop.f32.mrb[0].mxu0
  %v9685 = vadd.f32 %v9572, %v9684
  %v9686 = vpop.f32.mrb[0].mxu0
  %v9687 = vadd.f32 %v9574, %v9686
  %v9688 = vpop.f32.mrb[0].mxu0
  %v9689 = vadd.f32 %v9576, %v9688
  %v9690 = vpop.f32.mrb[0].mxu0
  %v9691 = vadd.f32 %v9578, %v9690
  %9692 = vdwg.mxu0
  %9693 = vmatprep.subr.bf16.mxu0 %v4940
  %9694 = vmatpush1.bf16.msra.mxu0 %v4939
  %9695 = vmatprep.subr.bf16.mxu0 %v4948
  %9696 = vmatpush1.bf16.msra.mxu0 %v4947
  %9697 = vmatprep.subr.bf16.mxu0 %v4956
  %9698 = vmatpush1.bf16.msra.mxu0 %v4955
  %9699 = vmatprep.subr.bf16.mxu0 %v4964
  %9700 = vmatpush1.bf16.msra.mxu0 %v4963
  %9701 = vmatprep.subr.bf16.mxu0 %v4972
  %9702 = vmatpush1.bf16.msra.mxu0 %v4971
  %9703 = vmatprep.subr.bf16.mxu0 %v4980
  %9704 = vmatpush1.bf16.msra.mxu0 %v4979
  %9705 = vmatprep.subr.bf16.mxu0 %v4988
  %9706 = vmatpush1.bf16.msra.mxu0 %v4987
  %9707 = vmatprep.subr.bf16.mxu0 %v4996
  %9708 = vmatpush1.bf16.msra.mxu0 %v4995
  %9709 = vmatprep.subr.bf16.mxu0 %v5004
  %9710 = vmatpush1.bf16.msra.mxu0 %v5003
  %9711 = vmatprep.subr.bf16.mxu0 %v5012
  %9712 = vmatpush1.bf16.msra.mxu0 %v5011
  %9713 = vmatprep.subr.bf16.mxu0 %v5020
  %9714 = vmatpush1.bf16.msra.mxu0 %v5019
  %9715 = vmatprep.subr.bf16.mxu0 %v5028
  %9716 = vmatpush1.bf16.msra.mxu0 %v5027
  %9717 = vmatprep.subr.bf16.mxu0 %v5036
  %9718 = vmatpush1.bf16.msra.mxu0 %v5035
  %9719 = vmatprep.subr.bf16.mxu0 %v5044
  %9720 = vmatpush1.bf16.msra.mxu0 %v5043
  %9721 = vmatprep.subr.bf16.mxu0 %v5052
  %9722 = vmatpush1.bf16.msra.mxu0 %v5051
  %9723 = vmatprep.subr.bf16.mxu0 %v5060
  %9724 = vmatpush1.bf16.msra.mxu0 %v5059
  %9725 = vmatprep.mubr.bf16.mxu0 %v1606
  %9726 = vmatmul.mubr.bf16.gmra.mrb[0].mxu0 %v1605
  %v9727 = vpop.f32.mrb[0].mxu0
  %v9728 = vadd.f32 %v1208, %v9727
  %v9729 = vpop.f32.mrb[0].mxu0
  %v9730 = vadd.f32 %v1212, %v9729
  %v9731 = vpop.f32.mrb[0].mxu0
  %v9732 = vadd.f32 %v1208, %v9731
  %v9733 = vpop.f32.mrb[0].mxu0
  %v9734 = vadd.f32 %v1212, %v9733
  %9735 = vmatprep.mubr.bf16.mxu0 %v1622
  %9736 = vmatmul.mubr.bf16.gmra.mrb[0].mxu0 %v1621
  %v9737 = vpop.f32.mrb[0].mxu0
  %v9738 = vadd.f32 %v1208, %v9737
  %v9739 = vpop.f32.mrb[0].mxu0
  %v9740 = vadd.f32 %v1212, %v9739
  %v9741 = vpop.f32.mrb[0].mxu0
  %v9742 = vadd.f32 %v1208, %v9741
  %v9743 = vpop.f32.mrb[0].mxu0
  %v9744 = vadd.f32 %v1212, %v9743
  %9745 = vmatprep.mubr.bf16.mxu0 %v1638
  %9746 = vmatmul.mubr.bf16.gmra.mrb[0].mxu0 %v1637
  %v9747 = vpop.f32.mrb[0].mxu0
  %v9748 = vadd.f32 %v1208, %v9747
  %v9749 = vpop.f32.mrb[0].mxu0
  %v9750 = vadd.f32 %v1212, %v9749
  %v9751 = vpop.f32.mrb[0].mxu0
  %v9752 = vadd.f32 %v1208, %v9751
  %v9753 = vpop.f32.mrb[0].mxu0
  %v9754 = vadd.f32 %v1212, %v9753
  %9755 = vmatprep.mubr.bf16.mxu0 %v1654
  %9756 = vmatmul.mubr.bf16.gmra.mrb[0].mxu0 %v1653
  %v9757 = vpop.f32.mrb[0].mxu0
  %v9758 = vadd.f32 %v1208, %v9757
  %v9759 = vpop.f32.mrb[0].mxu0
  %v9760 = vadd.f32 %v1212, %v9759
  %v9761 = vpop.f32.mrb[0].mxu0
  %v9762 = vadd.f32 %v1208, %v9761
  %v9763 = vpop.f32.mrb[0].mxu0
  %v9764 = vadd.f32 %v1212, %v9763
  %9765 = vmatprep.mubr.bf16.mxu0 %v1670
  %9766 = vmatmul.mubr.bf16.gmra.mrb[0].mxu0 %v1669
  %v9767 = vpop.f32.mrb[0].mxu0
  %v9768 = vadd.f32 %v1208, %v9767
  %v9769 = vpop.f32.mrb[0].mxu0
  %v9770 = vadd.f32 %v1212, %v9769
  %v9771 = vpop.f32.mrb[0].mxu0
  %v9772 = vadd.f32 %v1208, %v9771
  %v9773 = vpop.f32.mrb[0].mxu0
  %v9774 = vadd.f32 %v1212, %v9773
  %9775 = vmatprep.mubr.bf16.mxu0 %v1686
  %9776 = vmatmul.mubr.bf16.gmra.mrb[0].mxu0 %v1685
  %v9777 = vpop.f32.mrb[0].mxu0
  %v9778 = vadd.f32 %v1208, %v9777
  %v9779 = vpop.f32.mrb[0].mxu0
  %v9780 = vadd.f32 %v1212, %v9779
  %v9781 = vpop.f32.mrb[0].mxu0
  %v9782 = vadd.f32 %v1208, %v9781
  %v9783 = vpop.f32.mrb[0].mxu0
  %v9784 = vadd.f32 %v1212, %v9783
  %9785 = vmatprep.mubr.bf16.mxu0 %v1702
  %9786 = vmatmul.mubr.bf16.gmra.mrb[0].mxu0 %v1701
  %v9787 = vpop.f32.mrb[0].mxu0
  %v9788 = vadd.f32 %v1208, %v9787
  %v9789 = vpop.f32.mrb[0].mxu0
  %v9790 = vadd.f32 %v1212, %v9789
  %v9791 = vpop.f32.mrb[0].mxu0
  %v9792 = vadd.f32 %v1208, %v9791
  %v9793 = vpop.f32.mrb[0].mxu0
  %v9794 = vadd.f32 %v1212, %v9793
  %9795 = vmatprep.mubr.bf16.mxu0 %v1718
  %9796 = vmatmul.mubr.bf16.gmra.mrb[0].mxu0 %v1717
  %v9797 = vpop.f32.mrb[0].mxu0
  %v9798 = vadd.f32 %v1208, %v9797
  %v9799 = vpop.f32.mrb[0].mxu0
  %v9800 = vadd.f32 %v1212, %v9799
  %v9801 = vpop.f32.mrb[0].mxu0
  %v9802 = vadd.f32 %v1208, %v9801
  %v9803 = vpop.f32.mrb[0].mxu0
  %v9804 = vadd.f32 %v1212, %v9803
  %9805 = vdwg.mxu0
  %9806 = vmatprep.subr.bf16.mxu0 %v5068
  %9807 = vmatpush1.bf16.msra.mxu0 %v5067
  %9808 = vmatprep.subr.bf16.mxu0 %v5076
  %9809 = vmatpush1.bf16.msra.mxu0 %v5075
  %9810 = vmatprep.subr.bf16.mxu0 %v5084
  %9811 = vmatpush1.bf16.msra.mxu0 %v5083
  %9812 = vmatprep.subr.bf16.mxu0 %v5092
  %9813 = vmatpush1.bf16.msra.mxu0 %v5091
  %9814 = vmatprep.subr.bf16.mxu0 %v5100
  %9815 = vmatpush1.bf16.msra.mxu0 %v5099
  %9816 = vmatprep.subr.bf16.mxu0 %v5108
  %9817 = vmatpush1.bf16.msra.mxu0 %v5107
  %9818 = vmatprep.subr.bf16.mxu0 %v5116
  %9819 = vmatpush1.bf16.msra.mxu0 %v5115
  %9820 = vmatprep.subr.bf16.mxu0 %v5124
  %9821 = vmatpush1.bf16.msra.mxu0 %v5123
  %9822 = vmatprep.subr.bf16.mxu0 %v5132
  %9823 = vmatpush1.bf16.msra.mxu0 %v5131
  %9824 = vmatprep.subr.bf16.mxu0 %v5140
  %9825 = vmatpush1.bf16.msra.mxu0 %v5139
  %9826 = vmatprep.subr.bf16.mxu0 %v5148
  %9827 = vmatpush1.bf16.msra.mxu0 %v5147
  %9828 = vmatprep.subr.bf16.mxu0 %v5156
  %9829 = vmatpush1.bf16.msra.mxu0 %v5155
  %9830 = vmatprep.subr.bf16.mxu0 %v5164
  %9831 = vmatpush1.bf16.msra.mxu0 %v5163
  %9832 = vmatprep.subr.bf16.mxu0 %v5172
  %9833 = vmatpush1.bf16.msra.mxu0 %v5171
  %9834 = vmatprep.subr.bf16.mxu0 %v5180
  %9835 = vmatpush1.bf16.msra.mxu0 %v5179
  %9836 = vmatprep.subr.bf16.mxu0 %v5188
  %9837 = vmatpush1.bf16.msra.mxu0 %v5187
  %9838 = vmatprep.mubr.bf16.mxu0 %v1608
  %9839 = vmatmul.mubr.bf16.gmra.mrb[0].mxu0 %v1607
  %v9840 = vpop.f32.mrb[0].mxu0
  %v9841 = vadd.f32 %v9728, %v9840
  %v9842 = vpop.f32.mrb[0].mxu0
  %v9843 = vadd.f32 %v9730, %v9842
  %v9844 = vpop.f32.mrb[0].mxu0
  %v9845 = vadd.f32 %v9732, %v9844
  %v9846 = vpop.f32.mrb[0].mxu0
  %v9847 = vadd.f32 %v9734, %v9846
  %9848 = vmatprep.mubr.bf16.mxu0 %v1624
  %9849 = vmatmul.mubr.bf16.gmra.mrb[0].mxu0 %v1623
  %v9850 = vpop.f32.mrb[0].mxu0
  %v9851 = vadd.f32 %v9738, %v9850
  %v9852 = vpop.f32.mrb[0].mxu0
  %v9853 = vadd.f32 %v9740, %v9852
  %v9854 = vpop.f32.mrb[0].mxu0
  %v9855 = vadd.f32 %v9742, %v9854
  %v9856 = vpop.f32.mrb[0].mxu0
  %v9857 = vadd.f32 %v9744, %v9856
  %9858 = vmatprep.mubr.bf16.mxu0 %v1640
  %9859 = vmatmul.mubr.bf16.gmra.mrb[0].mxu0 %v1639
  %v9860 = vpop.f32.mrb[0].mxu0
  %v9861 = vadd.f32 %v9748, %v9860
  %v9862 = vpop.f32.mrb[0].mxu0
  %v9863 = vadd.f32 %v9750, %v9862
  %v9864 = vpop.f32.mrb[0].mxu0
  %v9865 = vadd.f32 %v9752, %v9864
  %v9866 = vpop.f32.mrb[0].mxu0
  %v9867 = vadd.f32 %v9754, %v9866
  %9868 = vmatprep.mubr.bf16.mxu0 %v1656
  %9869 = vmatmul.mubr.bf16.gmra.mrb[0].mxu0 %v1655
  %v9870 = vpop.f32.mrb[0].mxu0
  %v9871 = vadd.f32 %v9758, %v9870
  %v9872 = vpop.f32.mrb[0].mxu0
  %v9873 = vadd.f32 %v9760, %v9872
  %v9874 = vpop.f32.mrb[0].mxu0
  %v9875 = vadd.f32 %v9762, %v9874
  %v9876 = vpop.f32.mrb[0].mxu0
  %v9877 = vadd.f32 %v9764, %v9876
  %9878 = vmatprep.mubr.bf16.mxu0 %v1672
  %9879 = vmatmul.mubr.bf16.gmra.mrb[0].mxu0 %v1671
  %v9880 = vpop.f32.mrb[0].mxu0
  %v9881 = vadd.f32 %v9768, %v9880
  %v9882 = vpop.f32.mrb[0].mxu0
  %v9883 = vadd.f32 %v9770, %v9882
  %v9884 = vpop.f32.mrb[0].mxu0
  %v9885 = vadd.f32 %v9772, %v9884
  %v9886 = vpop.f32.mrb[0].mxu0
  %v9887 = vadd.f32 %v9774, %v9886
  %9888 = vmatprep.mubr.bf16.mxu0 %v1688
  %9889 = vmatmul.mubr.bf16.gmra.mrb[0].mxu0 %v1687
  %v9890 = vpop.f32.mrb[0].mxu0
  %v9891 = vadd.f32 %v9778, %v9890
  %v9892 = vpop.f32.mrb[0].mxu0
  %v9893 = vadd.f32 %v9780, %v9892
  %v9894 = vpop.f32.mrb[0].mxu0
  %v9895 = vadd.f32 %v9782, %v9894
  %v9896 = vpop.f32.mrb[0].mxu0
  %v9897 = vadd.f32 %v9784, %v9896
  %9898 = vmatprep.mubr.bf16.mxu0 %v1704
  %9899 = vmatmul.mubr.bf16.gmra.mrb[0].mxu0 %v1703
  %v9900 = vpop.f32.mrb[0].mxu0
  %v9901 = vadd.f32 %v9788, %v9900
  %v9902 = vpop.f32.mrb[0].mxu0
  %v9903 = vadd.f32 %v9790, %v9902
  %v9904 = vpop.f32.mrb[0].mxu0
  %v9905 = vadd.f32 %v9792, %v9904
  %v9906 = vpop.f32.mrb[0].mxu0
  %v9907 = vadd.f32 %v9794, %v9906
  %9908 = vmatprep.mubr.bf16.mxu0 %v1720
  %9909 = vmatmul.mubr.bf16.gmra.mrb[0].mxu0 %v1719
  %v9910 = vpop.f32.mrb[0].mxu0
  %v9911 = vadd.f32 %v9798, %v9910
  %v9912 = vpop.f32.mrb[0].mxu0
  %v9913 = vadd.f32 %v9800, %v9912
  %v9914 = vpop.f32.mrb[0].mxu0
  %v9915 = vadd.f32 %v9802, %v9914
  %v9916 = vpop.f32.mrb[0].mxu0
  %v9917 = vadd.f32 %v9804, %v9916
  %9918 = vdwg.mxu0
  %9919 = vmatprep.subr.bf16.mxu0 %v5196
  %9920 = vmatpush1.bf16.msra.mxu0 %v5195
  %9921 = vmatprep.subr.bf16.mxu0 %v5204
  %9922 = vmatpush1.bf16.msra.mxu0 %v5203
  %9923 = vmatprep.subr.bf16.mxu0 %v5212
  %9924 = vmatpush1.bf16.msra.mxu0 %v5211
  %9925 = vmatprep.subr.bf16.mxu0 %v5220
  %9926 = vmatpush1.bf16.msra.mxu0 %v5219
  %9927 = vmatprep.subr.bf16.mxu0 %v5228
  %9928 = vmatpush1.bf16.msra.mxu0 %v5227
  %9929 = vmatprep.subr.bf16.mxu0 %v5236
  %9930 = vmatpush1.bf16.msra.mxu0 %v5235
  %9931 = vmatprep.subr.bf16.mxu0 %v5244
  %9932 = vmatpush1.bf16.msra.mxu0 %v5243
  %9933 = vmatprep.subr.bf16.mxu0 %v5252
  %9934 = vmatpush1.bf16.msra.mxu0 %v5251
  %9935 = vmatprep.subr.bf16.mxu0 %v5260
  %9936 = vmatpush1.bf16.msra.mxu0 %v5259
  %9937 = vmatprep.subr.bf16.mxu0 %v5268
  %9938 = vmatpush1.bf16.msra.mxu0 %v5267
  %9939 = vmatprep.subr.bf16.mxu0 %v5276
  %9940 = vmatpush1.bf16.msra.mxu0 %v5275
  %9941 = vmatprep.subr.bf16.mxu0 %v5284
  %9942 = vmatpush1.bf16.msra.mxu0 %v5283
  %9943 = vmatprep.subr.bf16.mxu0 %v5292
  %9944 = vmatpush1.bf16.msra.mxu0 %v5291
  %9945 = vmatprep.subr.bf16.mxu0 %v5300
  %9946 = vmatpush1.bf16.msra.mxu0 %v5299
  %9947 = vmatprep.subr.bf16.mxu0 %v5308
  %9948 = vmatpush1.bf16.msra.mxu0 %v5307
  %9949 = vmatprep.subr.bf16.mxu0 %v5316
  %9950 = vmatpush1.bf16.msra.mxu0 %v5315
  %9951 = vmatprep.mubr.bf16.mxu0 %v1610
  %9952 = vmatmul.mubr.bf16.gmra.mrb[0].mxu0 %v1609
  %v9953 = vpop.f32.mrb[0].mxu0
  %v9954 = vadd.f32 %v9841, %v9953
  %v9955 = vpop.f32.mrb[0].mxu0
  %v9956 = vadd.f32 %v9843, %v9955
  %v9957 = vpop.f32.mrb[0].mxu0
  %v9958 = vadd.f32 %v9845, %v9957
  %v9959 = vpop.f32.mrb[0].mxu0
  %v9960 = vadd.f32 %v9847, %v9959
  %9961 = vmatprep.mubr.bf16.mxu0 %v1626
  %9962 = vmatmul.mubr.bf16.gmra.mrb[0].mxu0 %v1625
  %v9963 = vpop.f32.mrb[0].mxu0
  %v9964 = vadd.f32 %v9851, %v9963
  %v9965 = vpop.f32.mrb[0].mxu0
  %v9966 = vadd.f32 %v9853, %v9965
  %v9967 = vpop.f32.mrb[0].mxu0
  %v9968 = vadd.f32 %v9855, %v9967
  %v9969 = vpop.f32.mrb[0].mxu0
  %v9970 = vadd.f32 %v9857, %v9969
  %9971 = vmatprep.mubr.bf16.mxu0 %v1642
  %9972 = vmatmul.mubr.bf16.gmra.mrb[0].mxu0 %v1641
  %v9973 = vpop.f32.mrb[0].mxu0
  %v9974 = vadd.f32 %v9861, %v9973
  %v9975 = vpop.f32.mrb[0].mxu0
  %v9976 = vadd.f32 %v9863, %v9975
  %v9977 = vpop.f32.mrb[0].mxu0
  %v9978 = vadd.f32 %v9865, %v9977
  %v9979 = vpop.f32.mrb[0].mxu0
  %v9980 = vadd.f32 %v9867, %v9979
  %9981 = vmatprep.mubr.bf16.mxu0 %v1658
  %9982 = vmatmul.mubr.bf16.gmra.mrb[0].mxu0 %v1657
  %v9983 = vpop.f32.mrb[0].mxu0
  %v9984 = vadd.f32 %v9871, %v9983
  %v9985 = vpop.f32.mrb[0].mxu0
  %v9986 = vadd.f32 %v9873, %v9985
  %v9987 = vpop.f32.mrb[0].mxu0
  %v9988 = vadd.f32 %v9875, %v9987
  %v9989 = vpop.f32.mrb[0].mxu0
  %v9990 = vadd.f32 %v9877, %v9989
  %9991 = vmatprep.mubr.bf16.mxu0 %v1674
  %9992 = vmatmul.mubr.bf16.gmra.mrb[0].mxu0 %v1673
  %v9993 = vpop.f32.mrb[0].mxu0
  %v9994 = vadd.f32 %v9881, %v9993
  %v9995 = vpop.f32.mrb[0].mxu0
  %v9996 = vadd.f32 %v9883, %v9995
  %v9997 = vpop.f32.mrb[0].mxu0
  %v9998 = vadd.f32 %v9885, %v9997
  %v9999 = vpop.f32.mrb[0].mxu0
  %v10000 = vadd.f32 %v9887, %v9999
  %10001 = vmatprep.mubr.bf16.mxu0 %v1690
  %10002 = vmatmul.mubr.bf16.gmra.mrb[0].mxu0 %v1689
  %v10003 = vpop.f32.mrb[0].mxu0
  %v10004 = vadd.f32 %v9891, %v10003
  %v10005 = vpop.f32.mrb[0].mxu0
  %v10006 = vadd.f32 %v9893, %v10005
  %v10007 = vpop.f32.mrb[0].mxu0
  %v10008 = vadd.f32 %v9895, %v10007
  %v10009 = vpop.f32.mrb[0].mxu0
  %v10010 = vadd.f32 %v9897, %v10009
  %10011 = vmatprep.mubr.bf16.mxu0 %v1706
  %10012 = vmatmul.mubr.bf16.gmra.mrb[0].mxu0 %v1705
  %v10013 = vpop.f32.mrb[0].mxu0
  %v10014 = vadd.f32 %v9901, %v10013
  %v10015 = vpop.f32.mrb[0].mxu0
  %v10016 = vadd.f32 %v9903, %v10015
  %v10017 = vpop.f32.mrb[0].mxu0
  %v10018 = vadd.f32 %v9905, %v10017
  %v10019 = vpop.f32.mrb[0].mxu0
  %v10020 = vadd.f32 %v9907, %v10019
  %10021 = vmatprep.mubr.bf16.mxu0 %v1722
  %10022 = vmatmul.mubr.bf16.gmra.mrb[0].mxu0 %v1721
  %v10023 = vpop.f32.mrb[0].mxu0
  %v10024 = vadd.f32 %v9911, %v10023
  %v10025 = vpop.f32.mrb[0].mxu0
  %v10026 = vadd.f32 %v9913, %v10025
  %v10027 = vpop.f32.mrb[0].mxu0
  %v10028 = vadd.f32 %v9915, %v10027
  %v10029 = vpop.f32.mrb[0].mxu0
  %v10030 = vadd.f32 %v9917, %v10029
  %10031 = vdwg.mxu0
  %10032 = vmatprep.subr.bf16.mxu0 %v5324
  %10033 = vmatpush1.bf16.msra.mxu0 %v5323
  %10034 = vmatprep.subr.bf16.mxu0 %v5332
  %10035 = vmatpush1.bf16.msra.mxu0 %v5331
  %10036 = vmatprep.subr.bf16.mxu0 %v5340
  %10037 = vmatpush1.bf16.msra.mxu0 %v5339
  %10038 = vmatprep.subr.bf16.mxu0 %v5348
  %10039 = vmatpush1.bf16.msra.mxu0 %v5347
  %10040 = vmatprep.subr.bf16.mxu0 %v5356
  %10041 = vmatpush1.bf16.msra.mxu0 %v5355
  %10042 = vmatprep.subr.bf16.mxu0 %v5364
  %10043 = vmatpush1.bf16.msra.mxu0 %v5363
  %10044 = vmatprep.subr.bf16.mxu0 %v5372
  %10045 = vmatpush1.bf16.msra.mxu0 %v5371
  %10046 = vmatprep.subr.bf16.mxu0 %v5380
  %10047 = vmatpush1.bf16.msra.mxu0 %v5379
  %10048 = vmatprep.subr.bf16.mxu0 %v5388
  %10049 = vmatpush1.bf16.msra.mxu0 %v5387
  %10050 = vmatprep.subr.bf16.mxu0 %v5396
  %10051 = vmatpush1.bf16.msra.mxu0 %v5395
  %10052 = vmatprep.subr.bf16.mxu0 %v5404
  %10053 = vmatpush1.bf16.msra.mxu0 %v5403
  %10054 = vmatprep.subr.bf16.mxu0 %v5412
  %10055 = vmatpush1.bf16.msra.mxu0 %v5411
  %10056 = vmatprep.subr.bf16.mxu0 %v5420
  %10057 = vmatpush1.bf16.msra.mxu0 %v5419
  %10058 = vmatprep.subr.bf16.mxu0 %v5428
  %10059 = vmatpush1.bf16.msra.mxu0 %v5427
  %10060 = vmatprep.subr.bf16.mxu0 %v5436
  %10061 = vmatpush1.bf16.msra.mxu0 %v5435
  %10062 = vmatprep.subr.bf16.mxu0 %v5444
  %10063 = vmatpush1.bf16.msra.mxu0 %v5443
  %10064 = vmatprep.mubr.bf16.mxu0 %v1612
  %10065 = vmatmul.mubr.bf16.gmra.mrb[0].mxu0 %v1611
  %v10066 = vpop.f32.mrb[0].mxu0
  %v10067 = vadd.f32 %v9954, %v10066
  %v10068 = vpop.f32.mrb[0].mxu0
  %v10069 = vadd.f32 %v9956, %v10068
  %v10070 = vpop.f32.mrb[0].mxu0
  %v10071 = vadd.f32 %v9958, %v10070
  %v10072 = vpop.f32.mrb[0].mxu0
  %v10073 = vadd.f32 %v9960, %v10072
  %10074 = vmatprep.mubr.bf16.mxu0 %v1628
  %10075 = vmatmul.mubr.bf16.gmra.mrb[0].mxu0 %v1627
  %v10076 = vpop.f32.mrb[0].mxu0
  %v10077 = vadd.f32 %v9964, %v10076
  %v10078 = vpop.f32.mrb[0].mxu0
  %v10079 = vadd.f32 %v9966, %v10078
  %v10080 = vpop.f32.mrb[0].mxu0
  %v10081 = vadd.f32 %v9968, %v10080
  %v10082 = vpop.f32.mrb[0].mxu0
  %v10083 = vadd.f32 %v9970, %v10082
  %10084 = vmatprep.mubr.bf16.mxu0 %v1644
  %10085 = vmatmul.mubr.bf16.gmra.mrb[0].mxu0 %v1643
  %v10086 = vpop.f32.mrb[0].mxu0
  %v10087 = vadd.f32 %v9974, %v10086
  %v10088 = vpop.f32.mrb[0].mxu0
  %v10089 = vadd.f32 %v9976, %v10088
  %v10090 = vpop.f32.mrb[0].mxu0
  %v10091 = vadd.f32 %v9978, %v10090
  %v10092 = vpop.f32.mrb[0].mxu0
  %v10093 = vadd.f32 %v9980, %v10092
  %10094 = vmatprep.mubr.bf16.mxu0 %v1660
  %10095 = vmatmul.mubr.bf16.gmra.mrb[0].mxu0 %v1659
  %v10096 = vpop.f32.mrb[0].mxu0
  %v10097 = vadd.f32 %v9984, %v10096
  %v10098 = vpop.f32.mrb[0].mxu0
  %v10099 = vadd.f32 %v9986, %v10098
  %v10100 = vpop.f32.mrb[0].mxu0
  %v10101 = vadd.f32 %v9988, %v10100
  %v10102 = vpop.f32.mrb[0].mxu0
  %v10103 = vadd.f32 %v9990, %v10102
  %10104 = vmatprep.mubr.bf16.mxu0 %v1676
  %10105 = vmatmul.mubr.bf16.gmra.mrb[0].mxu0 %v1675
  %v10106 = vpop.f32.mrb[0].mxu0
  %v10107 = vadd.f32 %v9994, %v10106
  %v10108 = vpop.f32.mrb[0].mxu0
  %v10109 = vadd.f32 %v9996, %v10108
  %v10110 = vpop.f32.mrb[0].mxu0
  %v10111 = vadd.f32 %v9998, %v10110
  %v10112 = vpop.f32.mrb[0].mxu0
  %v10113 = vadd.f32 %v10000, %v10112
  %10114 = vmatprep.mubr.bf16.mxu0 %v1692
  %10115 = vmatmul.mubr.bf16.gmra.mrb[0].mxu0 %v1691
  %v10116 = vpop.f32.mrb[0].mxu0
  %v10117 = vadd.f32 %v10004, %v10116
  %v10118 = vpop.f32.mrb[0].mxu0
  %v10119 = vadd.f32 %v10006, %v10118
  %v10120 = vpop.f32.mrb[0].mxu0
  %v10121 = vadd.f32 %v10008, %v10120
  %v10122 = vpop.f32.mrb[0].mxu0
  %v10123 = vadd.f32 %v10010, %v10122
  %10124 = vmatprep.mubr.bf16.mxu0 %v1708
  %10125 = vmatmul.mubr.bf16.gmra.mrb[0].mxu0 %v1707
  %v10126 = vpop.f32.mrb[0].mxu0
  %v10127 = vadd.f32 %v10014, %v10126
  %v10128 = vpop.f32.mrb[0].mxu0
  %v10129 = vadd.f32 %v10016, %v10128
  %v10130 = vpop.f32.mrb[0].mxu0
  %v10131 = vadd.f32 %v10018, %v10130
  %v10132 = vpop.f32.mrb[0].mxu0
  %v10133 = vadd.f32 %v10020, %v10132
  %10134 = vmatprep.mubr.bf16.mxu0 %v1724
  %10135 = vmatmul.mubr.bf16.gmra.mrb[0].mxu0 %v1723
  %v10136 = vpop.f32.mrb[0].mxu0
  %v10137 = vadd.f32 %v10024, %v10136
  %v10138 = vpop.f32.mrb[0].mxu0
  %v10139 = vadd.f32 %v10026, %v10138
  %v10140 = vpop.f32.mrb[0].mxu0
  %v10141 = vadd.f32 %v10028, %v10140
  %v10142 = vpop.f32.mrb[0].mxu0
  %v10143 = vadd.f32 %v10030, %v10142
  %10144 = vdwg.mxu0
  %10145 = vmatprep.subr.bf16.mxu0 %v5452
  %10146 = vmatpush1.bf16.msra.mxu0 %v5451
  %10147 = vmatprep.subr.bf16.mxu0 %v5460
  %10148 = vmatpush1.bf16.msra.mxu0 %v5459
  %10149 = vmatprep.subr.bf16.mxu0 %v5468
  %10150 = vmatpush1.bf16.msra.mxu0 %v5467
  %10151 = vmatprep.subr.bf16.mxu0 %v5476
  %10152 = vmatpush1.bf16.msra.mxu0 %v5475
  %10153 = vmatprep.subr.bf16.mxu0 %v5484
  %10154 = vmatpush1.bf16.msra.mxu0 %v5483
  %10155 = vmatprep.subr.bf16.mxu0 %v5492
  %10156 = vmatpush1.bf16.msra.mxu0 %v5491
  %10157 = vmatprep.subr.bf16.mxu0 %v5500
  %10158 = vmatpush1.bf16.msra.mxu0 %v5499
  %10159 = vmatprep.subr.bf16.mxu0 %v5508
  %10160 = vmatpush1.bf16.msra.mxu0 %v5507
  %10161 = vmatprep.subr.bf16.mxu0 %v5516
  %10162 = vmatpush1.bf16.msra.mxu0 %v5515
  %10163 = vmatprep.subr.bf16.mxu0 %v5524
  %10164 = vmatpush1.bf16.msra.mxu0 %v5523
  %10165 = vmatprep.subr.bf16.mxu0 %v5532
  %10166 = vmatpush1.bf16.msra.mxu0 %v5531
  %10167 = vmatprep.subr.bf16.mxu0 %v5540
  %10168 = vmatpush1.bf16.msra.mxu0 %v5539
  %10169 = vmatprep.subr.bf16.mxu0 %v5548
  %10170 = vmatpush1.bf16.msra.mxu0 %v5547
  %10171 = vmatprep.subr.bf16.mxu0 %v5556
  %10172 = vmatpush1.bf16.msra.mxu0 %v5555
  %10173 = vmatprep.subr.bf16.mxu0 %v5564
  %10174 = vmatpush1.bf16.msra.mxu0 %v5563
  %10175 = vmatprep.subr.bf16.mxu0 %v5572
  %10176 = vmatpush1.bf16.msra.mxu0 %v5571
  %10177 = vmatprep.mubr.bf16.mxu0 %v1614
  %10178 = vmatmul.mubr.bf16.gmra.mrb[0].mxu0 %v1613
  %v10179 = vpop.f32.mrb[0].mxu0
  %v10180 = vadd.f32 %v10067, %v10179
  %v10181 = vpop.f32.mrb[0].mxu0
  %v10182 = vadd.f32 %v10069, %v10181
  %v10183 = vpop.f32.mrb[0].mxu0
  %v10184 = vadd.f32 %v10071, %v10183
  %v10185 = vpop.f32.mrb[0].mxu0
  %v10186 = vadd.f32 %v10073, %v10185
  %10187 = vmatprep.mubr.bf16.mxu0 %v1630
  %10188 = vmatmul.mubr.bf16.gmra.mrb[0].mxu0 %v1629
  %v10189 = vpop.f32.mrb[0].mxu0
  %v10190 = vadd.f32 %v10077, %v10189
  %v10191 = vpop.f32.mrb[0].mxu0
  %v10192 = vadd.f32 %v10079, %v10191
  %v10193 = vpop.f32.mrb[0].mxu0
  %v10194 = vadd.f32 %v10081, %v10193
  %v10195 = vpop.f32.mrb[0].mxu0
  %v10196 = vadd.f32 %v10083, %v10195
  %10197 = vmatprep.mubr.bf16.mxu0 %v1646
  %10198 = vmatmul.mubr.bf16.gmra.mrb[0].mxu0 %v1645
  %v10199 = vpop.f32.mrb[0].mxu0
  %v10200 = vadd.f32 %v10087, %v10199
  %v10201 = vpop.f32.mrb[0].mxu0
  %v10202 = vadd.f32 %v10089, %v10201
  %v10203 = vpop.f32.mrb[0].mxu0
  %v10204 = vadd.f32 %v10091, %v10203
  %v10205 = vpop.f32.mrb[0].mxu0
  %v10206 = vadd.f32 %v10093, %v10205
  %10207 = vmatprep.mubr.bf16.mxu0 %v1662
  %10208 = vmatmul.mubr.bf16.gmra.mrb[0].mxu0 %v1661
  %v10209 = vpop.f32.mrb[0].mxu0
  %v10210 = vadd.f32 %v10097, %v10209
  %v10211 = vpop.f32.mrb[0].mxu0
  %v10212 = vadd.f32 %v10099, %v10211
  %v10213 = vpop.f32.mrb[0].mxu0
  %v10214 = vadd.f32 %v10101, %v10213
  %v10215 = vpop.f32.mrb[0].mxu0
  %v10216 = vadd.f32 %v10103, %v10215
  %10217 = vmatprep.mubr.bf16.mxu0 %v1678
  %10218 = vmatmul.mubr.bf16.gmra.mrb[0].mxu0 %v1677
  %v10219 = vpop.f32.mrb[0].mxu0
  %v10220 = vadd.f32 %v10107, %v10219
  %v10221 = vpop.f32.mrb[0].mxu0
  %v10222 = vadd.f32 %v10109, %v10221
  %v10223 = vpop.f32.mrb[0].mxu0
  %v10224 = vadd.f32 %v10111, %v10223
  %v10225 = vpop.f32.mrb[0].mxu0
  %v10226 = vadd.f32 %v10113, %v10225
  %10227 = vmatprep.mubr.bf16.mxu0 %v1694
  %10228 = vmatmul.mubr.bf16.gmra.mrb[0].mxu0 %v1693
  %v10229 = vpop.f32.mrb[0].mxu0
  %v10230 = vadd.f32 %v10117, %v10229
  %v10231 = vpop.f32.mrb[0].mxu0
  %v10232 = vadd.f32 %v10119, %v10231
  %v10233 = vpop.f32.mrb[0].mxu0
  %v10234 = vadd.f32 %v10121, %v10233
  %v10235 = vpop.f32.mrb[0].mxu0
  %v10236 = vadd.f32 %v10123, %v10235
  %10237 = vmatprep.mubr.bf16.mxu0 %v1710
  %10238 = vmatmul.mubr.bf16.gmra.mrb[0].mxu0 %v1709
  %v10239 = vpop.f32.mrb[0].mxu0
  %v10240 = vadd.f32 %v10127, %v10239
  %v10241 = vpop.f32.mrb[0].mxu0
  %v10242 = vadd.f32 %v10129, %v10241
  %v10243 = vpop.f32.mrb[0].mxu0
  %v10244 = vadd.f32 %v10131, %v10243
  %v10245 = vpop.f32.mrb[0].mxu0
  %v10246 = vadd.f32 %v10133, %v10245
  %10247 = vmatprep.mubr.bf16.mxu0 %v1726
  %10248 = vmatmul.mubr.bf16.gmra.mrb[0].mxu0 %v1725
  %v10249 = vpop.f32.mrb[0].mxu0
  %v10250 = vadd.f32 %v10137, %v10249
  %v10251 = vpop.f32.mrb[0].mxu0
  %v10252 = vadd.f32 %v10139, %v10251
  %v10253 = vpop.f32.mrb[0].mxu0
  %v10254 = vadd.f32 %v10141, %v10253
  %v10255 = vpop.f32.mrb[0].mxu0
  %v10256 = vadd.f32 %v10143, %v10255
  %10257 = vdwg.mxu0
  %10258 = vmatprep.subr.bf16.mxu0 %v5580
  %10259 = vmatpush1.bf16.msra.mxu0 %v5579
  %10260 = vmatprep.subr.bf16.mxu0 %v5588
  %10261 = vmatpush1.bf16.msra.mxu0 %v5587
  %10262 = vmatprep.subr.bf16.mxu0 %v5596
  %10263 = vmatpush1.bf16.msra.mxu0 %v5595
  %10264 = vmatprep.subr.bf16.mxu0 %v5604
  %10265 = vmatpush1.bf16.msra.mxu0 %v5603
  %10266 = vmatprep.subr.bf16.mxu0 %v5612
  %10267 = vmatpush1.bf16.msra.mxu0 %v5611
  %10268 = vmatprep.subr.bf16.mxu0 %v5620
  %10269 = vmatpush1.bf16.msra.mxu0 %v5619
  %10270 = vmatprep.subr.bf16.mxu0 %v5628
  %10271 = vmatpush1.bf16.msra.mxu0 %v5627
  %10272 = vmatprep.subr.bf16.mxu0 %v5636
  %10273 = vmatpush1.bf16.msra.mxu0 %v5635
  %10274 = vmatprep.subr.bf16.mxu0 %v5644
  %10275 = vmatpush1.bf16.msra.mxu0 %v5643
  %10276 = vmatprep.subr.bf16.mxu0 %v5652
  %10277 = vmatpush1.bf16.msra.mxu0 %v5651
  %10278 = vmatprep.subr.bf16.mxu0 %v5660
  %10279 = vmatpush1.bf16.msra.mxu0 %v5659
  %10280 = vmatprep.subr.bf16.mxu0 %v5668
  %10281 = vmatpush1.bf16.msra.mxu0 %v5667
  %10282 = vmatprep.subr.bf16.mxu0 %v5676
  %10283 = vmatpush1.bf16.msra.mxu0 %v5675
  %10284 = vmatprep.subr.bf16.mxu0 %v5684
  %10285 = vmatpush1.bf16.msra.mxu0 %v5683
  %10286 = vmatprep.subr.bf16.mxu0 %v5692
  %10287 = vmatpush1.bf16.msra.mxu0 %v5691
  %10288 = vmatprep.subr.bf16.mxu0 %v5700
  %10289 = vmatpush1.bf16.msra.mxu0 %v5699
  %10290 = vmatprep.mubr.bf16.mxu0 %v1616
  %10291 = vmatmul.mubr.bf16.gmra.mrb[0].mxu0 %v1615
  %v10292 = vpop.f32.mrb[0].mxu0
  %v10293 = vadd.f32 %v10180, %v10292
  %v10294 = vpop.f32.mrb[0].mxu0
  %v10295 = vadd.f32 %v10182, %v10294
  %v10296 = vpop.f32.mrb[0].mxu0
  %v10297 = vadd.f32 %v10184, %v10296
  %v10298 = vpop.f32.mrb[0].mxu0
  %v10299 = vadd.f32 %v10186, %v10298
  %10300 = vmatprep.mubr.bf16.mxu0 %v1632
  %10301 = vmatmul.mubr.bf16.gmra.mrb[0].mxu0 %v1631
  %v10302 = vpop.f32.mrb[0].mxu0
  %v10303 = vadd.f32 %v10190, %v10302
  %v10304 = vpop.f32.mrb[0].mxu0
  %v10305 = vadd.f32 %v10192, %v10304
  %v10306 = vpop.f32.mrb[0].mxu0
  %v10307 = vadd.f32 %v10194, %v10306
  %v10308 = vpop.f32.mrb[0].mxu0
  %v10309 = vadd.f32 %v10196, %v10308
  %10310 = vmatprep.mubr.bf16.mxu0 %v1648
  %10311 = vmatmul.mubr.bf16.gmra.mrb[0].mxu0 %v1647
  %v10312 = vpop.f32.mrb[0].mxu0
  %v10313 = vadd.f32 %v10200, %v10312
  %v10314 = vpop.f32.mrb[0].mxu0
  %v10315 = vadd.f32 %v10202, %v10314
  %v10316 = vpop.f32.mrb[0].mxu0
  %v10317 = vadd.f32 %v10204, %v10316
  %v10318 = vpop.f32.mrb[0].mxu0
  %v10319 = vadd.f32 %v10206, %v10318
  %10320 = vmatprep.mubr.bf16.mxu0 %v1664
  %10321 = vmatmul.mubr.bf16.gmra.mrb[0].mxu0 %v1663
  %v10322 = vpop.f32.mrb[0].mxu0
  %v10323 = vadd.f32 %v10210, %v10322
  %v10324 = vpop.f32.mrb[0].mxu0
  %v10325 = vadd.f32 %v10212, %v10324
  %v10326 = vpop.f32.mrb[0].mxu0
  %v10327 = vadd.f32 %v10214, %v10326
  %v10328 = vpop.f32.mrb[0].mxu0
  %v10329 = vadd.f32 %v10216, %v10328
  %10330 = vmatprep.mubr.bf16.mxu0 %v1680
  %10331 = vmatmul.mubr.bf16.gmra.mrb[0].mxu0 %v1679
  %v10332 = vpop.f32.mrb[0].mxu0
  %v10333 = vadd.f32 %v10220, %v10332
  %v10334 = vpop.f32.mrb[0].mxu0
  %v10335 = vadd.f32 %v10222, %v10334
  %v10336 = vpop.f32.mrb[0].mxu0
  %v10337 = vadd.f32 %v10224, %v10336
  %v10338 = vpop.f32.mrb[0].mxu0
  %v10339 = vadd.f32 %v10226, %v10338
  %10340 = vmatprep.mubr.bf16.mxu0 %v1696
  %10341 = vmatmul.mubr.bf16.gmra.mrb[0].mxu0 %v1695
  %v10342 = vpop.f32.mrb[0].mxu0
  %v10343 = vadd.f32 %v10230, %v10342
  %v10344 = vpop.f32.mrb[0].mxu0
  %v10345 = vadd.f32 %v10232, %v10344
  %v10346 = vpop.f32.mrb[0].mxu0
  %v10347 = vadd.f32 %v10234, %v10346
  %v10348 = vpop.f32.mrb[0].mxu0
  %v10349 = vadd.f32 %v10236, %v10348
  %10350 = vmatprep.mubr.bf16.mxu0 %v1712
  %10351 = vmatmul.mubr.bf16.gmra.mrb[0].mxu0 %v1711
  %v10352 = vpop.f32.mrb[0].mxu0
  %v10353 = vadd.f32 %v10240, %v10352
  %v10354 = vpop.f32.mrb[0].mxu0
  %v10355 = vadd.f32 %v10242, %v10354
  %v10356 = vpop.f32.mrb[0].mxu0
  %v10357 = vadd.f32 %v10244, %v10356
  %v10358 = vpop.f32.mrb[0].mxu0
  %v10359 = vadd.f32 %v10246, %v10358
  %10360 = vmatprep.mubr.bf16.mxu0 %v1728
  %10361 = vmatmul.mubr.bf16.gmra.mrb[0].mxu0 %v1727
  %v10362 = vpop.f32.mrb[0].mxu0
  %v10363 = vadd.f32 %v10250, %v10362
  %v10364 = vpop.f32.mrb[0].mxu0
  %v10365 = vadd.f32 %v10252, %v10364
  %v10366 = vpop.f32.mrb[0].mxu0
  %v10367 = vadd.f32 %v10254, %v10366
  %v10368 = vpop.f32.mrb[0].mxu0
  %v10369 = vadd.f32 %v10256, %v10368
  %10370 = vdwg.mxu0
  %10371 = vmatprep.subr.bf16.mxu0 %v5708
  %10372 = vmatpush1.bf16.msra.mxu0 %v5707
  %10373 = vmatprep.subr.bf16.mxu0 %v5716
  %10374 = vmatpush1.bf16.msra.mxu0 %v5715
  %10375 = vmatprep.subr.bf16.mxu0 %v5724
  %10376 = vmatpush1.bf16.msra.mxu0 %v5723
  %10377 = vmatprep.subr.bf16.mxu0 %v5732
  %10378 = vmatpush1.bf16.msra.mxu0 %v5731
  %10379 = vmatprep.subr.bf16.mxu0 %v5740
  %10380 = vmatpush1.bf16.msra.mxu0 %v5739
  %10381 = vmatprep.subr.bf16.mxu0 %v5748
  %10382 = vmatpush1.bf16.msra.mxu0 %v5747
  %10383 = vmatprep.subr.bf16.mxu0 %v5756
  %10384 = vmatpush1.bf16.msra.mxu0 %v5755
  %10385 = vmatprep.subr.bf16.mxu0 %v5764
  %10386 = vmatpush1.bf16.msra.mxu0 %v5763
  %10387 = vmatprep.subr.bf16.mxu0 %v5772
  %10388 = vmatpush1.bf16.msra.mxu0 %v5771
  %10389 = vmatprep.subr.bf16.mxu0 %v5780
  %10390 = vmatpush1.bf16.msra.mxu0 %v5779
  %10391 = vmatprep.subr.bf16.mxu0 %v5788
  %10392 = vmatpush1.bf16.msra.mxu0 %v5787
  %10393 = vmatprep.subr.bf16.mxu0 %v5796
  %10394 = vmatpush1.bf16.msra.mxu0 %v5795
  %10395 = vmatprep.subr.bf16.mxu0 %v5804
  %10396 = vmatpush1.bf16.msra.mxu0 %v5803
  %10397 = vmatprep.subr.bf16.mxu0 %v5812
  %10398 = vmatpush1.bf16.msra.mxu0 %v5811
  %10399 = vmatprep.subr.bf16.mxu0 %v5820
  %10400 = vmatpush1.bf16.msra.mxu0 %v5819
  %10401 = vmatprep.subr.bf16.mxu0 %v5828
  %10402 = vmatpush1.bf16.msra.mxu0 %v5827
  %10403 = vmatprep.mubr.bf16.mxu0 %v1618
  %10404 = vmatmul.mubr.bf16.gmra.mrb[0].mxu0 %v1617
  %v10405 = vpop.f32.mrb[0].mxu0
  %v10406 = vadd.f32 %v10293, %v10405
  %v10407 = vpop.f32.mrb[0].mxu0
  %v10408 = vadd.f32 %v10295, %v10407
  %v10409 = vpop.f32.mrb[0].mxu0
  %v10410 = vadd.f32 %v10297, %v10409
  %v10411 = vpop.f32.mrb[0].mxu0
  %v10412 = vadd.f32 %v10299, %v10411
  %10413 = vmatprep.mubr.bf16.mxu0 %v1634
  %10414 = vmatmul.mubr.bf16.gmra.mrb[0].mxu0 %v1633
  %v10415 = vpop.f32.mrb[0].mxu0
  %v10416 = vadd.f32 %v10303, %v10415
  %v10417 = vpop.f32.mrb[0].mxu0
  %v10418 = vadd.f32 %v10305, %v10417
  %v10419 = vpop.f32.mrb[0].mxu0
  %v10420 = vadd.f32 %v10307, %v10419
  %v10421 = vpop.f32.mrb[0].mxu0
  %v10422 = vadd.f32 %v10309, %v10421
  %10423 = vmatprep.mubr.bf16.mxu0 %v1650
  %10424 = vmatmul.mubr.bf16.gmra.mrb[0].mxu0 %v1649
  %v10425 = vpop.f32.mrb[0].mxu0
  %v10426 = vadd.f32 %v10313, %v10425
  %v10427 = vpop.f32.mrb[0].mxu0
  %v10428 = vadd.f32 %v10315, %v10427
  %v10429 = vpop.f32.mrb[0].mxu0
  %v10430 = vadd.f32 %v10317, %v10429
  %v10431 = vpop.f32.mrb[0].mxu0
  %v10432 = vadd.f32 %v10319, %v10431
  %10433 = vmatprep.mubr.bf16.mxu0 %v1666
  %10434 = vmatmul.mubr.bf16.gmra.mrb[0].mxu0 %v1665
  %v10435 = vpop.f32.mrb[0].mxu0
  %v10436 = vadd.f32 %v10323, %v10435
  %v10437 = vpop.f32.mrb[0].mxu0
  %v10438 = vadd.f32 %v10325, %v10437
  %v10439 = vpop.f32.mrb[0].mxu0
  %v10440 = vadd.f32 %v10327, %v10439
  %v10441 = vpop.f32.mrb[0].mxu0
  %v10442 = vadd.f32 %v10329, %v10441
  %10443 = vmatprep.mubr.bf16.mxu0 %v1682
  %10444 = vmatmul.mubr.bf16.gmra.mrb[0].mxu0 %v1681
  %v10445 = vpop.f32.mrb[0].mxu0
  %v10446 = vadd.f32 %v10333, %v10445
  %v10447 = vpop.f32.mrb[0].mxu0
  %v10448 = vadd.f32 %v10335, %v10447
  %v10449 = vpop.f32.mrb[0].mxu0
  %v10450 = vadd.f32 %v10337, %v10449
  %v10451 = vpop.f32.mrb[0].mxu0
  %v10452 = vadd.f32 %v10339, %v10451
  %10453 = vmatprep.mubr.bf16.mxu0 %v1698
  %10454 = vmatmul.mubr.bf16.gmra.mrb[0].mxu0 %v1697
  %v10455 = vpop.f32.mrb[0].mxu0
  %v10456 = vadd.f32 %v10343, %v10455
  %v10457 = vpop.f32.mrb[0].mxu0
  %v10458 = vadd.f32 %v10345, %v10457
  %v10459 = vpop.f32.mrb[0].mxu0
  %v10460 = vadd.f32 %v10347, %v10459
  %v10461 = vpop.f32.mrb[0].mxu0
  %v10462 = vadd.f32 %v10349, %v10461
  %10463 = vmatprep.mubr.bf16.mxu0 %v1714
  %10464 = vmatmul.mubr.bf16.gmra.mrb[0].mxu0 %v1713
  %v10465 = vpop.f32.mrb[0].mxu0
  %v10466 = vadd.f32 %v10353, %v10465
  %v10467 = vpop.f32.mrb[0].mxu0
  %v10468 = vadd.f32 %v10355, %v10467
  %v10469 = vpop.f32.mrb[0].mxu0
  %v10470 = vadd.f32 %v10357, %v10469
  %v10471 = vpop.f32.mrb[0].mxu0
  %v10472 = vadd.f32 %v10359, %v10471
  %10473 = vmatprep.mubr.bf16.mxu0 %v1730
  %10474 = vmatmul.mubr.bf16.gmra.mrb[0].mxu0 %v1729
  %v10475 = vpop.f32.mrb[0].mxu0
  %v10476 = vadd.f32 %v10363, %v10475
  %v10477 = vpop.f32.mrb[0].mxu0
  %v10478 = vadd.f32 %v10365, %v10477
  %v10479 = vpop.f32.mrb[0].mxu0
  %v10480 = vadd.f32 %v10367, %v10479
  %v10481 = vpop.f32.mrb[0].mxu0
  %v10482 = vadd.f32 %v10369, %v10481
  %10483 = vdwg.mxu0
  %10484 = vmatprep.subr.bf16.mxu0 %v5836
  %10485 = vmatpush1.bf16.msra.mxu0 %v5835
  %10486 = vmatprep.subr.bf16.mxu0 %v5844
  %10487 = vmatpush1.bf16.msra.mxu0 %v5843
  %10488 = vmatprep.subr.bf16.mxu0 %v5852
  %10489 = vmatpush1.bf16.msra.mxu0 %v5851
  %10490 = vmatprep.subr.bf16.mxu0 %v5860
  %10491 = vmatpush1.bf16.msra.mxu0 %v5859
  %10492 = vmatprep.subr.bf16.mxu0 %v5868
  %10493 = vmatpush1.bf16.msra.mxu0 %v5867
  %10494 = vmatprep.subr.bf16.mxu0 %v5876
  %10495 = vmatpush1.bf16.msra.mxu0 %v5875
  %10496 = vmatprep.subr.bf16.mxu0 %v5884
  %10497 = vmatpush1.bf16.msra.mxu0 %v5883
  %10498 = vmatprep.subr.bf16.mxu0 %v5892
  %10499 = vmatpush1.bf16.msra.mxu0 %v5891
  %10500 = vmatprep.subr.bf16.mxu0 %v5900
  %10501 = vmatpush1.bf16.msra.mxu0 %v5899
  %10502 = vmatprep.subr.bf16.mxu0 %v5908
  %10503 = vmatpush1.bf16.msra.mxu0 %v5907
  %10504 = vmatprep.subr.bf16.mxu0 %v5916
  %10505 = vmatpush1.bf16.msra.mxu0 %v5915
  %10506 = vmatprep.subr.bf16.mxu0 %v5924
  %10507 = vmatpush1.bf16.msra.mxu0 %v5923
  %10508 = vmatprep.subr.bf16.mxu0 %v5932
  %10509 = vmatpush1.bf16.msra.mxu0 %v5931
  %10510 = vmatprep.subr.bf16.mxu0 %v5940
  %10511 = vmatpush1.bf16.msra.mxu0 %v5939
  %10512 = vmatprep.subr.bf16.mxu0 %v5948
  %10513 = vmatpush1.bf16.msra.mxu0 %v5947
  %10514 = vmatprep.subr.bf16.mxu0 %v5956
  %10515 = vmatpush1.bf16.msra.mxu0 %v5955
  %10516 = vmatprep.mubr.bf16.mxu0 %v1620
  %10517 = vmatmul.mubr.bf16.gmra.mrb[0].mxu0 %v1619
  %v10518 = vpop.f32.mrb[0].mxu0
  %v10519 = vadd.f32 %v10406, %v10518
  %v10520 = vpop.f32.mrb[0].mxu0
  %v10521 = vadd.f32 %v10408, %v10520
  %v10522 = vpop.f32.mrb[0].mxu0
  %v10523 = vadd.f32 %v10410, %v10522
  %v10524 = vpop.f32.mrb[0].mxu0
  %v10525 = vadd.f32 %v10412, %v10524
  %10526 = vmatprep.mubr.bf16.mxu0 %v1636
  %10527 = vmatmul.mubr.bf16.gmra.mrb[0].mxu0 %v1635
  %v10528 = vpop.f32.mrb[0].mxu0
  %v10529 = vadd.f32 %v10416, %v10528
  %v10530 = vpop.f32.mrb[0].mxu0
  %v10531 = vadd.f32 %v10418, %v10530
  %v10532 = vpop.f32.mrb[0].mxu0
  %v10533 = vadd.f32 %v10420, %v10532
  %v10534 = vpop.f32.mrb[0].mxu0
  %v10535 = vadd.f32 %v10422, %v10534
  %10536 = vmatprep.mubr.bf16.mxu0 %v1652
  %10537 = vmatmul.mubr.bf16.gmra.mrb[0].mxu0 %v1651
  %v10538 = vpop.f32.mrb[0].mxu0
  %v10539 = vadd.f32 %v10426, %v10538
  %v10540 = vpop.f32.mrb[0].mxu0
  %v10541 = vadd.f32 %v10428, %v10540
  %v10542 = vpop.f32.mrb[0].mxu0
  %v10543 = vadd.f32 %v10430, %v10542
  %v10544 = vpop.f32.mrb[0].mxu0
  %v10545 = vadd.f32 %v10432, %v10544
  %10546 = vmatprep.mubr.bf16.mxu0 %v1668
  %10547 = vmatmul.mubr.bf16.gmra.mrb[0].mxu0 %v1667
  %v10548 = vpop.f32.mrb[0].mxu0
  %v10549 = vadd.f32 %v10436, %v10548
  %v10550 = vpop.f32.mrb[0].mxu0
  %v10551 = vadd.f32 %v10438, %v10550
  %v10552 = vpop.f32.mrb[0].mxu0
  %v10553 = vadd.f32 %v10440, %v10552
  %v10554 = vpop.f32.mrb[0].mxu0
  %v10555 = vadd.f32 %v10442, %v10554
  %10556 = vmatprep.mubr.bf16.mxu0 %v1684
  %10557 = vmatmul.mubr.bf16.gmra.mrb[0].mxu0 %v1683
  %v10558 = vpop.f32.mrb[0].mxu0
  %v10559 = vadd.f32 %v10446, %v10558
  %v10560 = vpop.f32.mrb[0].mxu0
  %v10561 = vadd.f32 %v10448, %v10560
  %v10562 = vpop.f32.mrb[0].mxu0
  %v10563 = vadd.f32 %v10450, %v10562
  %v10564 = vpop.f32.mrb[0].mxu0
  %v10565 = vadd.f32 %v10452, %v10564
  %10566 = vmatprep.mubr.bf16.mxu0 %v1700
  %10567 = vmatmul.mubr.bf16.gmra.mrb[0].mxu0 %v1699
  %v10568 = vpop.f32.mrb[0].mxu0
  %v10569 = vadd.f32 %v10456, %v10568
  %v10570 = vpop.f32.mrb[0].mxu0
  %v10571 = vadd.f32 %v10458, %v10570
  %v10572 = vpop.f32.mrb[0].mxu0
  %v10573 = vadd.f32 %v10460, %v10572
  %v10574 = vpop.f32.mrb[0].mxu0
  %v10575 = vadd.f32 %v10462, %v10574
  %10576 = vmatprep.mubr.bf16.mxu0 %v1716
  %10577 = vmatmul.mubr.bf16.gmra.mrb[0].mxu0 %v1715
  %v10578 = vpop.f32.mrb[0].mxu0
  %v10579 = vadd.f32 %v10466, %v10578
  %v10580 = vpop.f32.mrb[0].mxu0
  %v10581 = vadd.f32 %v10468, %v10580
  %v10582 = vpop.f32.mrb[0].mxu0
  %v10583 = vadd.f32 %v10470, %v10582
  %v10584 = vpop.f32.mrb[0].mxu0
  %v10585 = vadd.f32 %v10472, %v10584
  %10586 = vmatprep.mubr.bf16.mxu0 %v1732
  %10587 = vmatmul.mubr.bf16.gmra.mrb[0].mxu0 %v1731
  %v10588 = vpop.f32.mrb[0].mxu0
  %v10589 = vadd.f32 %v10476, %v10588
  %v10590 = vpop.f32.mrb[0].mxu0
  %v10591 = vadd.f32 %v10478, %v10590
  %v10592 = vpop.f32.mrb[0].mxu0
  %v10593 = vadd.f32 %v10480, %v10592
  %v10594 = vpop.f32.mrb[0].mxu0
  %v10595 = vadd.f32 %v10482, %v10594
  %10596 = vdwg.mxu0
  %v10597 = vmax.f32 %v7807, 0.0
  %v10598 = vmax.f32 %v7809, 0.0
  %v10599 = vmax.f32 %v8711, 0.0
  %v10600 = vmax.f32 %v8713, 0.0
  %v10601 = vmax.f32 %v9615, 0.0
  %v10602 = vmax.f32 %v9617, 0.0
  %v10603 = vmax.f32 %v10519, 0.0
  %v10604 = vmax.f32 %v10521, 0.0
  %v10605 = vmax.f32 %v7811, 0.0
  %v10606 = vmax.f32 %v7813, 0.0
  %v10607 = vmax.f32 %v8715, 0.0
  %v10608 = vmax.f32 %v8717, 0.0
  %v10609 = vmax.f32 %v9619, 0.0
  %v10610 = vmax.f32 %v9621, 0.0
  %v10611 = vmax.f32 %v10523, 0.0
  %v10612 = vmax.f32 %v10525, 0.0
  %v10613 = vmax.f32 %v7817, 0.0
  %v10614 = vmax.f32 %v7819, 0.0
  %v10615 = vmax.f32 %v8721, 0.0
  %v10616 = vmax.f32 %v8723, 0.0
  %v10617 = vmax.f32 %v9625, 0.0
  %v10618 = vmax.f32 %v9627, 0.0
  %v10619 = vmax.f32 %v10529, 0.0
  %v10620 = vmax.f32 %v10531, 0.0
  %v10621 = vmax.f32 %v7821, 0.0
  %v10622 = vmax.f32 %v7823, 0.0
  %v10623 = vmax.f32 %v8725, 0.0
  %v10624 = vmax.f32 %v8727, 0.0
  %v10625 = vmax.f32 %v9629, 0.0
  %v10626 = vmax.f32 %v9631, 0.0
  %v10627 = vmax.f32 %v10533, 0.0
  %v10628 = vmax.f32 %v10535, 0.0
  %v10629 = vmax.f32 %v7827, 0.0
  %v10630 = vmax.f32 %v7829, 0.0
  %v10631 = vmax.f32 %v8731, 0.0
  %v10632 = vmax.f32 %v8733, 0.0
  %v10633 = vmax.f32 %v9635, 0.0
  %v10634 = vmax.f32 %v9637, 0.0
  %v10635 = vmax.f32 %v10539, 0.0
  %v10636 = vmax.f32 %v10541, 0.0
  %v10637 = vmax.f32 %v7831, 0.0
  %v10638 = vmax.f32 %v7833, 0.0
  %v10639 = vmax.f32 %v8735, 0.0
  %v10640 = vmax.f32 %v8737, 0.0
  %v10641 = vmax.f32 %v9639, 0.0
  %v10642 = vmax.f32 %v9641, 0.0
  %v10643 = vmax.f32 %v10543, 0.0
  %v10644 = vmax.f32 %v10545, 0.0
  %v10645 = vmax.f32 %v7837, 0.0
  %v10646 = vmax.f32 %v7839, 0.0
  %v10647 = vmax.f32 %v8741, 0.0
  %v10648 = vmax.f32 %v8743, 0.0
  %v10649 = vmax.f32 %v9645, 0.0
  %v10650 = vmax.f32 %v9647, 0.0
  %v10651 = vmax.f32 %v10549, 0.0
  %v10652 = vmax.f32 %v10551, 0.0
  %v10653 = vmax.f32 %v7841, 0.0
  %v10654 = vmax.f32 %v7843, 0.0
  %v10655 = vmax.f32 %v8745, 0.0
  %v10656 = vmax.f32 %v8747, 0.0
  %v10657 = vmax.f32 %v9649, 0.0
  %v10658 = vmax.f32 %v9651, 0.0
  %v10659 = vmax.f32 %v10553, 0.0
  %v10660 = vmax.f32 %v10555, 0.0
  %v10661 = vmax.f32 %v7847, 0.0
  %v10662 = vmax.f32 %v7849, 0.0
  %v10663 = vmax.f32 %v8751, 0.0
  %v10664 = vmax.f32 %v8753, 0.0
  %v10665 = vmax.f32 %v9655, 0.0
  %v10666 = vmax.f32 %v9657, 0.0
  %v10667 = vmax.f32 %v10559, 0.0
  %v10668 = vmax.f32 %v10561, 0.0
  %v10669 = vmax.f32 %v7851, 0.0
  %v10670 = vmax.f32 %v7853, 0.0
  %v10671 = vmax.f32 %v8755, 0.0
  %v10672 = vmax.f32 %v8757, 0.0
  %v10673 = vmax.f32 %v9659, 0.0
  %v10674 = vmax.f32 %v9661, 0.0
  %v10675 = vmax.f32 %v10563, 0.0
  %v10676 = vmax.f32 %v10565, 0.0
  %v10677 = vmax.f32 %v7857, 0.0
  %v10678 = vmax.f32 %v7859, 0.0
  %v10679 = vmax.f32 %v8761, 0.0
  %v10680 = vmax.f32 %v8763, 0.0
  %v10681 = vmax.f32 %v9665, 0.0
  %v10682 = vmax.f32 %v9667, 0.0
  %v10683 = vmax.f32 %v10569, 0.0
  %v10684 = vmax.f32 %v10571, 0.0
  %v10685 = vmax.f32 %v7861, 0.0
  %v10686 = vmax.f32 %v7863, 0.0
  %v10687 = vmax.f32 %v8765, 0.0
  %v10688 = vmax.f32 %v8767, 0.0
  %v10689 = vmax.f32 %v9669, 0.0
  %v10690 = vmax.f32 %v9671, 0.0
  %v10691 = vmax.f32 %v10573, 0.0
  %v10692 = vmax.f32 %v10575, 0.0
  %v10693 = vmax.f32 %v7867, 0.0
  %v10694 = vmax.f32 %v7869, 0.0
  %v10695 = vmax.f32 %v8771, 0.0
  %v10696 = vmax.f32 %v8773, 0.0
  %v10697 = vmax.f32 %v9675, 0.0
  %v10698 = vmax.f32 %v9677, 0.0
  %v10699 = vmax.f32 %v10579, 0.0
  %v10700 = vmax.f32 %v10581, 0.0
  %v10701 = vmax.f32 %v7871, 0.0
  %v10702 = vmax.f32 %v7873, 0.0
  %v10703 = vmax.f32 %v8775, 0.0
  %v10704 = vmax.f32 %v8777, 0.0
  %v10705 = vmax.f32 %v9679, 0.0
  %v10706 = vmax.f32 %v9681, 0.0
  %v10707 = vmax.f32 %v10583, 0.0
  %v10708 = vmax.f32 %v10585, 0.0
  %v10709 = vmax.f32 %v7877, 0.0
  %v10710 = vmax.f32 %v7879, 0.0
  %v10711 = vmax.f32 %v8781, 0.0
  %v10712 = vmax.f32 %v8783, 0.0
  %v10713 = vmax.f32 %v9685, 0.0
  %v10714 = vmax.f32 %v9687, 0.0
  %v10715 = vmax.f32 %v10589, 0.0
  %v10716 = vmax.f32 %v10591, 0.0
  %v10717 = vmax.f32 %v7881, 0.0
  %v10718 = vmax.f32 %v7883, 0.0
  %v10719 = vmax.f32 %v8785, 0.0
  %v10720 = vmax.f32 %v8787, 0.0
  %v10721 = vmax.f32 %v9689, 0.0
  %v10722 = vmax.f32 %v9691, 0.0
  %v10723 = vmax.f32 %v10593, 0.0
  %v10724 = vmax.f32 %v10595, 0.0
  %v10725 = vpack.c.bf16 %v10605, %v10597
  %v10726 = vpack.c.bf16 %v10606, %v10598
  %v10727 = vpack.c.bf16 %v10607, %v10599
  %v10728 = vpack.c.bf16 %v10608, %v10600
  %v10729 = vpack.c.bf16 %v10609, %v10601
  %v10730 = vpack.c.bf16 %v10610, %v10602
  %v10731 = vpack.c.bf16 %v10611, %v10603
  %v10732 = vpack.c.bf16 %v10612, %v10604
  %v10733 = vpack.c.bf16 %v10621, %v10613
  %v10734 = vpack.c.bf16 %v10622, %v10614
  %v10735 = vpack.c.bf16 %v10623, %v10615
  %v10736 = vpack.c.bf16 %v10624, %v10616
  %v10737 = vpack.c.bf16 %v10625, %v10617
  %v10738 = vpack.c.bf16 %v10626, %v10618
  %v10739 = vpack.c.bf16 %v10627, %v10619
  %v10740 = vpack.c.bf16 %v10628, %v10620
  %v10741 = vpack.c.bf16 %v10637, %v10629
  %v10742 = vpack.c.bf16 %v10638, %v10630
  %v10743 = vpack.c.bf16 %v10639, %v10631
  %v10744 = vpack.c.bf16 %v10640, %v10632
  %v10745 = vpack.c.bf16 %v10641, %v10633
  %v10746 = vpack.c.bf16 %v10642, %v10634
  %v10747 = vpack.c.bf16 %v10643, %v10635
  %v10748 = vpack.c.bf16 %v10644, %v10636
  %v10749 = vpack.c.bf16 %v10653, %v10645
  %v10750 = vpack.c.bf16 %v10654, %v10646
  %v10751 = vpack.c.bf16 %v10655, %v10647
  %v10752 = vpack.c.bf16 %v10656, %v10648
  %v10753 = vpack.c.bf16 %v10657, %v10649
  %v10754 = vpack.c.bf16 %v10658, %v10650
  %v10755 = vpack.c.bf16 %v10659, %v10651
  %v10756 = vpack.c.bf16 %v10660, %v10652
  %v10757 = vpack.c.bf16 %v10669, %v10661
  %v10758 = vpack.c.bf16 %v10670, %v10662
  %v10759 = vpack.c.bf16 %v10671, %v10663
  %v10760 = vpack.c.bf16 %v10672, %v10664
  %v10761 = vpack.c.bf16 %v10673, %v10665
  %v10762 = vpack.c.bf16 %v10674, %v10666
  %v10763 = vpack.c.bf16 %v10675, %v10667
  %v10764 = vpack.c.bf16 %v10676, %v10668
  %v10765 = vpack.c.bf16 %v10685, %v10677
  %v10766 = vpack.c.bf16 %v10686, %v10678
  %v10767 = vpack.c.bf16 %v10687, %v10679
  %v10768 = vpack.c.bf16 %v10688, %v10680
  %v10769 = vpack.c.bf16 %v10689, %v10681
  %v10770 = vpack.c.bf16 %v10690, %v10682
  %v10771 = vpack.c.bf16 %v10691, %v10683
  %v10772 = vpack.c.bf16 %v10692, %v10684
  %v10773 = vpack.c.bf16 %v10701, %v10693
  %v10774 = vpack.c.bf16 %v10702, %v10694
  %v10775 = vpack.c.bf16 %v10703, %v10695
  %v10776 = vpack.c.bf16 %v10704, %v10696
  %v10777 = vpack.c.bf16 %v10705, %v10697
  %v10778 = vpack.c.bf16 %v10706, %v10698
  %v10779 = vpack.c.bf16 %v10707, %v10699
  %v10780 = vpack.c.bf16 %v10708, %v10700
  %v10781 = vpack.c.bf16 %v10717, %v10709
  %v10782 = vpack.c.bf16 %v10718, %v10710
  %v10783 = vpack.c.bf16 %v10719, %v10711
  %v10784 = vpack.c.bf16 %v10720, %v10712
  %v10785 = vpack.c.bf16 %v10721, %v10713
  %v10786 = vpack.c.bf16 %v10722, %v10714
  %v10787 = vpack.c.bf16 %v10723, %v10715
  %v10788 = vpack.c.bf16 %v10724, %v10716
  %v10789 = vld [vmem:[%s3] sm:$0xff]
  %v10790 = vld [vmem:[%s3 + $0x8] sm:$0xff]
  %v10791 = vld [vmem:[%s3 + $0x10] sm:$0xff]
  %v10792 = vld [vmem:[%s3 + $0x18] sm:$0xff]
  %v10793 = vld [vmem:[%s3 + $0x20] sm:$0xff]
  %v10794 = vld [vmem:[%s3 + $0x28] sm:$0xff]
  %v10795 = vld [vmem:[%s3 + $0x30] sm:$0xff]
  %v10796 = vld [vmem:[%s3 + $0x38] sm:$0xff]
  %v10797 = vld [vmem:[%s3 + $0x40] sm:$0xff]
  %v10798 = vld [vmem:[%s3 + $0x48] sm:$0xff]
  %v10799 = vld [vmem:[%s3 + $0x50] sm:$0xff]
  %v10800 = vld [vmem:[%s3 + $0x58] sm:$0xff]
  %v10801 = vld [vmem:[%s3 + $0x60] sm:$0xff]
  %v10802 = vld [vmem:[%s3 + $0x68] sm:$0xff]
  %v10803 = vld [vmem:[%s3 + $0x70] sm:$0xff]
  %v10804 = vld [vmem:[%s3 + $0x78] sm:$0xff]
  %v10805 = vld [vmem:[%s3 + $0x80] sm:$0xff]
  %v10806 = vld [vmem:[%s3 + $0x88] sm:$0xff]
  %v10807 = vld [vmem:[%s3 + $0x90] sm:$0xff]
  %v10808 = vld [vmem:[%s3 + $0x98] sm:$0xff]
  %v10809 = vld [vmem:[%s3 + $0xa0] sm:$0xff]
  %v10810 = vld [vmem:[%s3 + $0xa8] sm:$0xff]
  %v10811 = vld [vmem:[%s3 + $0xb0] sm:$0xff]
  %v10812 = vld [vmem:[%s3 + $0xb8] sm:$0xff]
  %v10813 = vld [vmem:[%s3 + $0xc0] sm:$0xff]
  %v10814 = vld [vmem:[%s3 + $0xc8] sm:$0xff]
  %v10815 = vld [vmem:[%s3 + $0xd0] sm:$0xff]
  %v10816 = vld [vmem:[%s3 + $0xd8] sm:$0xff]
  %v10817 = vld [vmem:[%s3 + $0xe0] sm:$0xff]
  %v10818 = vld [vmem:[%s3 + $0xe8] sm:$0xff]
  %v10819 = vld [vmem:[%s3 + $0xf0] sm:$0xff]
  %v10820 = vld [vmem:[%s3 + $0xf8] sm:$0xff]
  %v10821 = vld [vmem:[%s3 + $0x100] sm:$0xff]
  %v10822 = vld [vmem:[%s3 + $0x108] sm:$0xff]
  %v10823 = vld [vmem:[%s3 + $0x110] sm:$0xff]
  %v10824 = vld [vmem:[%s3 + $0x118] sm:$0xff]
  %v10825 = vld [vmem:[%s3 + $0x120] sm:$0xff]
  %v10826 = vld [vmem:[%s3 + $0x128] sm:$0xff]
  %v10827 = vld [vmem:[%s3 + $0x130] sm:$0xff]
  %v10828 = vld [vmem:[%s3 + $0x138] sm:$0xff]
  %v10829 = vld [vmem:[%s3 + $0x140] sm:$0xff]
  %v10830 = vld [vmem:[%s3 + $0x148] sm:$0xff]
  %v10831 = vld [vmem:[%s3 + $0x150] sm:$0xff]
  %v10832 = vld [vmem:[%s3 + $0x158] sm:$0xff]
  %v10833 = vld [vmem:[%s3 + $0x160] sm:$0xff]
  %v10834 = vld [vmem:[%s3 + $0x168] sm:$0xff]
  %v10835 = vld [vmem:[%s3 + $0x170] sm:$0xff]
  %v10836 = vld [vmem:[%s3 + $0x178] sm:$0xff]
  %v10837 = vld [vmem:[%s3 + $0x180] sm:$0xff]
  %v10838 = vld [vmem:[%s3 + $0x188] sm:$0xff]
  %v10839 = vld [vmem:[%s3 + $0x190] sm:$0xff]
  %v10840 = vld [vmem:[%s3 + $0x198] sm:$0xff]
  %v10841 = vld [vmem:[%s3 + $0x1a0] sm:$0xff]
  %v10842 = vld [vmem:[%s3 + $0x1a8] sm:$0xff]
  %v10843 = vld [vmem:[%s3 + $0x1b0] sm:$0xff]
  %v10844 = vld [vmem:[%s3 + $0x1b8] sm:$0xff]
  %v10845 = vld [vmem:[%s3 + $0x1c0] sm:$0xff]
  %v10846 = vld [vmem:[%s3 + $0x1c8] sm:$0xff]
  %v10847 = vld [vmem:[%s3 + $0x1d0] sm:$0xff]
  %v10848 = vld [vmem:[%s3 + $0x1d8] sm:$0xff]
  %v10849 = vld [vmem:[%s3 + $0x1e0] sm:$0xff]
  %v10850 = vld [vmem:[%s3 + $0x1e8] sm:$0xff]
  %v10851 = vld [vmem:[%s3 + $0x1f0] sm:$0xff]
  %v10852 = vld [vmem:[%s3 + $0x1f8] sm:$0xff]
  %v10853 = vld [vmem:[%s3 + $0x200] sm:$0xff]
  %v10854 = vld [vmem:[%s3 + $0x208] sm:$0xff]
  %v10855 = vld [vmem:[%s3 + $0x210] sm:$0xff]
  %v10856 = vld [vmem:[%s3 + $0x218] sm:$0xff]
  %v10857 = vld [vmem:[%s3 + $0x220] sm:$0xff]
  %v10858 = vld [vmem:[%s3 + $0x228] sm:$0xff]
  %v10859 = vld [vmem:[%s3 + $0x230] sm:$0xff]
  %v10860 = vld [vmem:[%s3 + $0x238] sm:$0xff]
  %v10861 = vld [vmem:[%s3 + $0x240] sm:$0xff]
  %v10862 = vld [vmem:[%s3 + $0x248] sm:$0xff]
  %v10863 = vld [vmem:[%s3 + $0x250] sm:$0xff]
  %v10864 = vld [vmem:[%s3 + $0x258] sm:$0xff]
  %v10865 = vld [vmem:[%s3 + $0x260] sm:$0xff]
  %v10866 = vld [vmem:[%s3 + $0x268] sm:$0xff]
  %v10867 = vld [vmem:[%s3 + $0x270] sm:$0xff]
  %v10868 = vld [vmem:[%s3 + $0x278] sm:$0xff]
  %v10869 = vld [vmem:[%s3 + $0x280] sm:$0xff]
  %v10870 = vld [vmem:[%s3 + $0x288] sm:$0xff]
  %v10871 = vld [vmem:[%s3 + $0x290] sm:$0xff]
  %v10872 = vld [vmem:[%s3 + $0x298] sm:$0xff]
  %v10873 = vld [vmem:[%s3 + $0x2a0] sm:$0xff]
  %v10874 = vld [vmem:[%s3 + $0x2a8] sm:$0xff]
  %v10875 = vld [vmem:[%s3 + $0x2b0] sm:$0xff]
  %v10876 = vld [vmem:[%s3 + $0x2b8] sm:$0xff]
  %v10877 = vld [vmem:[%s3 + $0x2c0] sm:$0xff]
  %v10878 = vld [vmem:[%s3 + $0x2c8] sm:$0xff]
  %v10879 = vld [vmem:[%s3 + $0x2d0] sm:$0xff]
  %v10880 = vld [vmem:[%s3 + $0x2d8] sm:$0xff]
  %v10881 = vld [vmem:[%s3 + $0x2e0] sm:$0xff]
  %v10882 = vld [vmem:[%s3 + $0x2e8] sm:$0xff]
  %v10883 = vld [vmem:[%s3 + $0x2f0] sm:$0xff]
  %v10884 = vld [vmem:[%s3 + $0x2f8] sm:$0xff]
  %v10885 = vld [vmem:[%s3 + $0x300] sm:$0xff]
  %v10886 = vld [vmem:[%s3 + $0x308] sm:$0xff]
  %v10887 = vld [vmem:[%s3 + $0x310] sm:$0xff]
  %v10888 = vld [vmem:[%s3 + $0x318] sm:$0xff]
  %v10889 = vld [vmem:[%s3 + $0x320] sm:$0xff]
  %v10890 = vld [vmem:[%s3 + $0x328] sm:$0xff]
  %v10891 = vld [vmem:[%s3 + $0x330] sm:$0xff]
  %v10892 = vld [vmem:[%s3 + $0x338] sm:$0xff]
  %v10893 = vld [vmem:[%s3 + $0x340] sm:$0xff]
  %v10894 = vld [vmem:[%s3 + $0x348] sm:$0xff]
  %v10895 = vld [vmem:[%s3 + $0x350] sm:$0xff]
  %v10896 = vld [vmem:[%s3 + $0x358] sm:$0xff]
  %v10897 = vld [vmem:[%s3 + $0x360] sm:$0xff]
  %v10898 = vld [vmem:[%s3 + $0x368] sm:$0xff]
  %v10899 = vld [vmem:[%s3 + $0x370] sm:$0xff]
  %v10900 = vld [vmem:[%s3 + $0x378] sm:$0xff]
  %v10901 = vld [vmem:[%s3 + $0x380] sm:$0xff]
  %v10902 = vld [vmem:[%s3 + $0x388] sm:$0xff]
  %v10903 = vld [vmem:[%s3 + $0x390] sm:$0xff]
  %v10904 = vld [vmem:[%s3 + $0x398] sm:$0xff]
  %v10905 = vld [vmem:[%s3 + $0x3a0] sm:$0xff]
  %v10906 = vld [vmem:[%s3 + $0x3a8] sm:$0xff]
  %v10907 = vld [vmem:[%s3 + $0x3b0] sm:$0xff]
  %v10908 = vld [vmem:[%s3 + $0x3b8] sm:$0xff]
  %v10909 = vld [vmem:[%s3 + $0x3c0] sm:$0xff]
  %v10910 = vld [vmem:[%s3 + $0x3c8] sm:$0xff]
  %v10911 = vld [vmem:[%s3 + $0x3d0] sm:$0xff]
  %v10912 = vld [vmem:[%s3 + $0x3d8] sm:$0xff]
  %v10913 = vld [vmem:[%s3 + $0x3e0] sm:$0xff]
  %v10914 = vld [vmem:[%s3 + $0x3e8] sm:$0xff]
  %v10915 = vld [vmem:[%s3 + $0x3f0] sm:$0xff]
  %v10916 = vld [vmem:[%s3 + $0x3f8] sm:$0xff]
  %v10917 = vld [vmem:[%s4] sm:$0x3]
  %v10919 = vlaneseq
  %v10920 = vshrl.u32 %v10919, 7
  %v10921 = vsub.s32 0, %v10920
  %v10922 = vrot.slane %v10917, %v10921
  %v10923 = vlaneseq
  %v10924 = vshrl.u32 %v10923, 7
  %v10925 = vsub.s32 1, %v10924
  %v10926 = vrot.slane %v10917, %v10925
  %v11057 = vunpack.c.l.b16 %v10789
  %v11058 = vunpack.c.h.b16 %v10789
  %v11059 = vunpack.c.l.b16 %v10790
  %v11060 = vunpack.c.h.b16 %v10790
  %v11061 = vunpack.c.l.b16 %v10791
  %v11062 = vunpack.c.h.b16 %v10791
  %v11063 = vunpack.c.l.b16 %v10792
  %v11064 = vunpack.c.h.b16 %v10792
  %v11065 = vunpack.c.l.b16 %v10793
  %v11066 = vunpack.c.h.b16 %v10793
  %v11067 = vunpack.c.l.b16 %v10794
  %v11068 = vunpack.c.h.b16 %v10794
  %v11069 = vunpack.c.l.b16 %v10795
  %v11070 = vunpack.c.h.b16 %v10795
  %v11071 = vunpack.c.l.b16 %v10796
  %v11072 = vunpack.c.h.b16 %v10796
  %v11073 = vunpack.c.l.b16 %v10797
  %v11074 = vunpack.c.h.b16 %v10797
  %v11075 = vunpack.c.l.b16 %v10798
  %v11076 = vunpack.c.h.b16 %v10798
  %v11077 = vunpack.c.l.b16 %v10799
  %v11078 = vunpack.c.h.b16 %v10799
  %v11079 = vunpack.c.l.b16 %v10800
  %v11080 = vunpack.c.h.b16 %v10800
  %v11081 = vunpack.c.l.b16 %v10801
  %v11082 = vunpack.c.h.b16 %v10801
  %v11083 = vunpack.c.l.b16 %v10802
  %v11084 = vunpack.c.h.b16 %v10802
  %v11085 = vunpack.c.l.b16 %v10803
  %v11086 = vunpack.c.h.b16 %v10803
  %v11087 = vunpack.c.l.b16 %v10804
  %v11088 = vunpack.c.h.b16 %v10804
  %v11089 = vunpack.c.l.b16 %v10805
  %v11090 = vunpack.c.h.b16 %v10805
  %v11091 = vunpack.c.l.b16 %v10806
  %v11092 = vunpack.c.h.b16 %v10806
  %v11093 = vunpack.c.l.b16 %v10807
  %v11094 = vunpack.c.h.b16 %v10807
  %v11095 = vunpack.c.l.b16 %v10808
  %v11096 = vunpack.c.h.b16 %v10808
  %v11097 = vunpack.c.l.b16 %v10809
  %v11098 = vunpack.c.h.b16 %v10809
  %v11099 = vunpack.c.l.b16 %v10810
  %v11100 = vunpack.c.h.b16 %v10810
  %v11101 = vunpack.c.l.b16 %v10811
  %v11102 = vunpack.c.h.b16 %v10811
  %v11103 = vunpack.c.l.b16 %v10812
  %v11104 = vunpack.c.h.b16 %v10812
  %v11105 = vunpack.c.l.b16 %v10813
  %v11106 = vunpack.c.h.b16 %v10813
  %v11107 = vunpack.c.l.b16 %v10814
  %v11108 = vunpack.c.h.b16 %v10814
  %v11109 = vunpack.c.l.b16 %v10815
  %v11110 = vunpack.c.h.b16 %v10815
  %v11111 = vunpack.c.l.b16 %v10816
  %v11112 = vunpack.c.h.b16 %v10816
  %v11113 = vunpack.c.l.b16 %v10817
  %v11114 = vunpack.c.h.b16 %v10817
  %v11115 = vunpack.c.l.b16 %v10818
  %v11116 = vunpack.c.h.b16 %v10818
  %v11117 = vunpack.c.l.b16 %v10819
  %v11118 = vunpack.c.h.b16 %v10819
  %v11119 = vunpack.c.l.b16 %v10820
  %v11120 = vunpack.c.h.b16 %v10820
  %v11121 = vunpack.c.l.b16 %v10821
  %v11122 = vunpack.c.h.b16 %v10821
  %v11123 = vunpack.c.l.b16 %v10822
  %v11124 = vunpack.c.h.b16 %v10822
  %v11125 = vunpack.c.l.b16 %v10823
  %v11126 = vunpack.c.h.b16 %v10823
  %v11127 = vunpack.c.l.b16 %v10824
  %v11128 = vunpack.c.h.b16 %v10824
  %v11129 = vunpack.c.l.b16 %v10825
  %v11130 = vunpack.c.h.b16 %v10825
  %v11131 = vunpack.c.l.b16 %v10826
  %v11132 = vunpack.c.h.b16 %v10826
  %v11133 = vunpack.c.l.b16 %v10827
  %v11134 = vunpack.c.h.b16 %v10827
  %v11135 = vunpack.c.l.b16 %v10828
  %v11136 = vunpack.c.h.b16 %v10828
  %v11137 = vunpack.c.l.b16 %v10829
  %v11138 = vunpack.c.h.b16 %v10829
  %v11139 = vunpack.c.l.b16 %v10830
  %v11140 = vunpack.c.h.b16 %v10830
  %v11141 = vunpack.c.l.b16 %v10831
  %v11142 = vunpack.c.h.b16 %v10831
  %v11143 = vunpack.c.l.b16 %v10832
  %v11144 = vunpack.c.h.b16 %v10832
  %v11145 = vunpack.c.l.b16 %v10833
  %v11146 = vunpack.c.h.b16 %v10833
  %v11147 = vunpack.c.l.b16 %v10834
  %v11148 = vunpack.c.h.b16 %v10834
  %v11149 = vunpack.c.l.b16 %v10835
  %v11150 = vunpack.c.h.b16 %v10835
  %v11151 = vunpack.c.l.b16 %v10836
  %v11152 = vunpack.c.h.b16 %v10836
  %v11153 = vunpack.c.l.b16 %v10837
  %v11154 = vunpack.c.h.b16 %v10837
  %v11155 = vunpack.c.l.b16 %v10838
  %v11156 = vunpack.c.h.b16 %v10838
  %v11157 = vunpack.c.l.b16 %v10839
  %v11158 = vunpack.c.h.b16 %v10839
  %v11159 = vunpack.c.l.b16 %v10840
  %v11160 = vunpack.c.h.b16 %v10840
  %v11161 = vunpack.c.l.b16 %v10841
  %v11162 = vunpack.c.h.b16 %v10841
  %v11163 = vunpack.c.l.b16 %v10842
  %v11164 = vunpack.c.h.b16 %v10842
  %v11165 = vunpack.c.l.b16 %v10843
  %v11166 = vunpack.c.h.b16 %v10843
  %v11167 = vunpack.c.l.b16 %v10844
  %v11168 = vunpack.c.h.b16 %v10844
  %v11169 = vunpack.c.l.b16 %v10845
  %v11170 = vunpack.c.h.b16 %v10845
  %v11171 = vunpack.c.l.b16 %v10846
  %v11172 = vunpack.c.h.b16 %v10846
  %v11173 = vunpack.c.l.b16 %v10847
  %v11174 = vunpack.c.h.b16 %v10847
  %v11175 = vunpack.c.l.b16 %v10848
  %v11176 = vunpack.c.h.b16 %v10848
  %v11177 = vunpack.c.l.b16 %v10849
  %v11178 = vunpack.c.h.b16 %v10849
  %v11179 = vunpack.c.l.b16 %v10850
  %v11180 = vunpack.c.h.b16 %v10850
  %v11181 = vunpack.c.l.b16 %v10851
  %v11182 = vunpack.c.h.b16 %v10851
  %v11183 = vunpack.c.l.b16 %v10852
  %v11184 = vunpack.c.h.b16 %v10852
  %v11185 = vunpack.c.l.b16 %v10853
  %v11186 = vunpack.c.h.b16 %v10853
  %v11187 = vunpack.c.l.b16 %v10854
  %v11188 = vunpack.c.h.b16 %v10854
  %v11189 = vunpack.c.l.b16 %v10855
  %v11190 = vunpack.c.h.b16 %v10855
  %v11191 = vunpack.c.l.b16 %v10856
  %v11192 = vunpack.c.h.b16 %v10856
  %v11193 = vunpack.c.l.b16 %v10857
  %v11194 = vunpack.c.h.b16 %v10857
  %v11195 = vunpack.c.l.b16 %v10858
  %v11196 = vunpack.c.h.b16 %v10858
  %v11197 = vunpack.c.l.b16 %v10859
  %v11198 = vunpack.c.h.b16 %v10859
  %v11199 = vunpack.c.l.b16 %v10860
  %v11200 = vunpack.c.h.b16 %v10860
  %v11201 = vunpack.c.l.b16 %v10861
  %v11202 = vunpack.c.h.b16 %v10861
  %v11203 = vunpack.c.l.b16 %v10862
  %v11204 = vunpack.c.h.b16 %v10862
  %v11205 = vunpack.c.l.b16 %v10863
  %v11206 = vunpack.c.h.b16 %v10863
  %v11207 = vunpack.c.l.b16 %v10864
  %v11208 = vunpack.c.h.b16 %v10864
  %v11209 = vunpack.c.l.b16 %v10865
  %v11210 = vunpack.c.h.b16 %v10865
  %v11211 = vunpack.c.l.b16 %v10866
  %v11212 = vunpack.c.h.b16 %v10866
  %v11213 = vunpack.c.l.b16 %v10867
  %v11214 = vunpack.c.h.b16 %v10867
  %v11215 = vunpack.c.l.b16 %v10868
  %v11216 = vunpack.c.h.b16 %v10868
  %v11217 = vunpack.c.l.b16 %v10869
  %v11218 = vunpack.c.h.b16 %v10869
  %v11219 = vunpack.c.l.b16 %v10870
  %v11220 = vunpack.c.h.b16 %v10870
  %v11221 = vunpack.c.l.b16 %v10871
  %v11222 = vunpack.c.h.b16 %v10871
  %v11223 = vunpack.c.l.b16 %v10872
  %v11224 = vunpack.c.h.b16 %v10872
  %v11225 = vunpack.c.l.b16 %v10873
  %v11226 = vunpack.c.h.b16 %v10873
  %v11227 = vunpack.c.l.b16 %v10874
  %v11228 = vunpack.c.h.b16 %v10874
  %v11229 = vunpack.c.l.b16 %v10875
  %v11230 = vunpack.c.h.b16 %v10875
  %v11231 = vunpack.c.l.b16 %v10876
  %v11232 = vunpack.c.h.b16 %v10876
  %v11233 = vunpack.c.l.b16 %v10877
  %v11234 = vunpack.c.h.b16 %v10877
  %v11235 = vunpack.c.l.b16 %v10878
  %v11236 = vunpack.c.h.b16 %v10878
  %v11237 = vunpack.c.l.b16 %v10879
  %v11238 = vunpack.c.h.b16 %v10879
  %v11239 = vunpack.c.l.b16 %v10880
  %v11240 = vunpack.c.h.b16 %v10880
  %v11241 = vunpack.c.l.b16 %v10881
  %v11242 = vunpack.c.h.b16 %v10881
  %v11243 = vunpack.c.l.b16 %v10882
  %v11244 = vunpack.c.h.b16 %v10882
  %v11245 = vunpack.c.l.b16 %v10883
  %v11246 = vunpack.c.h.b16 %v10883
  %v11247 = vunpack.c.l.b16 %v10884
  %v11248 = vunpack.c.h.b16 %v10884
  %v11249 = vunpack.c.l.b16 %v10885
  %v11250 = vunpack.c.h.b16 %v10885
  %v11251 = vunpack.c.l.b16 %v10886
  %v11252 = vunpack.c.h.b16 %v10886
  %v11253 = vunpack.c.l.b16 %v10887
  %v11254 = vunpack.c.h.b16 %v10887
  %v11255 = vunpack.c.l.b16 %v10888
  %v11256 = vunpack.c.h.b16 %v10888
  %v11257 = vunpack.c.l.b16 %v10889
  %v11258 = vunpack.c.h.b16 %v10889
  %v11259 = vunpack.c.l.b16 %v10890
  %v11260 = vunpack.c.h.b16 %v10890
  %v11261 = vunpack.c.l.b16 %v10891
  %v11262 = vunpack.c.h.b16 %v10891
  %v11263 = vunpack.c.l.b16 %v10892
  %v11264 = vunpack.c.h.b16 %v10892
  %v11265 = vunpack.c.l.b16 %v10893
  %v11266 = vunpack.c.h.b16 %v10893
  %v11267 = vunpack.c.l.b16 %v10894
  %v11268 = vunpack.c.h.b16 %v10894
  %v11269 = vunpack.c.l.b16 %v10895
  %v11270 = vunpack.c.h.b16 %v10895
  %v11271 = vunpack.c.l.b16 %v10896
  %v11272 = vunpack.c.h.b16 %v10896
  %v11273 = vunpack.c.l.b16 %v10897
  %v11274 = vunpack.c.h.b16 %v10897
  %v11275 = vunpack.c.l.b16 %v10898
  %v11276 = vunpack.c.h.b16 %v10898
  %v11277 = vunpack.c.l.b16 %v10899
  %v11278 = vunpack.c.h.b16 %v10899
  %v11279 = vunpack.c.l.b16 %v10900
  %v11280 = vunpack.c.h.b16 %v10900
  %v11281 = vunpack.c.l.b16 %v10901
  %v11282 = vunpack.c.h.b16 %v10901
  %v11283 = vunpack.c.l.b16 %v10902
  %v11284 = vunpack.c.h.b16 %v10902
  %v11285 = vunpack.c.l.b16 %v10903
  %v11286 = vunpack.c.h.b16 %v10903
  %v11287 = vunpack.c.l.b16 %v10904
  %v11288 = vunpack.c.h.b16 %v10904
  %v11289 = vunpack.c.l.b16 %v10905
  %v11290 = vunpack.c.h.b16 %v10905
  %v11291 = vunpack.c.l.b16 %v10906
  %v11292 = vunpack.c.h.b16 %v10906
  %v11293 = vunpack.c.l.b16 %v10907
  %v11294 = vunpack.c.h.b16 %v10907
  %v11295 = vunpack.c.l.b16 %v10908
  %v11296 = vunpack.c.h.b16 %v10908
  %v11297 = vunpack.c.l.b16 %v10909
  %v11298 = vunpack.c.h.b16 %v10909
  %v11299 = vunpack.c.l.b16 %v10910
  %v11300 = vunpack.c.h.b16 %v10910
  %v11301 = vunpack.c.l.b16 %v10911
  %v11302 = vunpack.c.h.b16 %v10911
  %v11303 = vunpack.c.l.b16 %v10912
  %v11304 = vunpack.c.h.b16 %v10912
  %v11305 = vunpack.c.l.b16 %v10913
  %v11306 = vunpack.c.h.b16 %v10913
  %v11307 = vunpack.c.l.b16 %v10914
  %v11308 = vunpack.c.h.b16 %v10914
  %v11309 = vunpack.c.l.b16 %v10915
  %v11310 = vunpack.c.h.b16 %v10915
  %v11311 = vunpack.c.l.b16 %v10916
  %v11312 = vunpack.c.h.b16 %v10916
  %v11313 = vpack.c.b16 %v11059, %v11057
  %v11314 = vpack.c.b16 %v11060, %v11058
  %v11315 = vpack.c.b16 %v11063, %v11061
  %v11316 = vpack.c.b16 %v11064, %v11062
  %v11317 = vpack.c.b16 %v11067, %v11065
  %v11318 = vpack.c.b16 %v11068, %v11066
  %v11319 = vpack.c.b16 %v11071, %v11069
  %v11320 = vpack.c.b16 %v11072, %v11070
  %v11321 = vpack.c.b16 %v11075, %v11073
  %v11322 = vpack.c.b16 %v11076, %v11074
  %v11323 = vpack.c.b16 %v11079, %v11077
  %v11324 = vpack.c.b16 %v11080, %v11078
  %v11325 = vpack.c.b16 %v11083, %v11081
  %v11326 = vpack.c.b16 %v11084, %v11082
  %v11327 = vpack.c.b16 %v11087, %v11085
  %v11328 = vpack.c.b16 %v11088, %v11086
  %v11329 = vpack.c.b16 %v11091, %v11089
  %v11330 = vpack.c.b16 %v11092, %v11090
  %v11331 = vpack.c.b16 %v11095, %v11093
  %v11332 = vpack.c.b16 %v11096, %v11094
  %v11333 = vpack.c.b16 %v11099, %v11097
  %v11334 = vpack.c.b16 %v11100, %v11098
  %v11335 = vpack.c.b16 %v11103, %v11101
  %v11336 = vpack.c.b16 %v11104, %v11102
  %v11337 = vpack.c.b16 %v11107, %v11105
  %v11338 = vpack.c.b16 %v11108, %v11106
  %v11339 = vpack.c.b16 %v11111, %v11109
  %v11340 = vpack.c.b16 %v11112, %v11110
  %v11341 = vpack.c.b16 %v11115, %v11113
  %v11342 = vpack.c.b16 %v11116, %v11114
  %v11343 = vpack.c.b16 %v11119, %v11117
  %v11344 = vpack.c.b16 %v11120, %v11118
  %v11345 = vpack.c.b16 %v11123, %v11121
  %v11346 = vpack.c.b16 %v11124, %v11122
  %v11347 = vpack.c.b16 %v11127, %v11125
  %v11348 = vpack.c.b16 %v11128, %v11126
  %v11349 = vpack.c.b16 %v11131, %v11129
  %v11350 = vpack.c.b16 %v11132, %v11130
  %v11351 = vpack.c.b16 %v11135, %v11133
  %v11352 = vpack.c.b16 %v11136, %v11134
  %v11353 = vpack.c.b16 %v11139, %v11137
  %v11354 = vpack.c.b16 %v11140, %v11138
  %v11355 = vpack.c.b16 %v11143, %v11141
  %v11356 = vpack.c.b16 %v11144, %v11142
  %v11357 = vpack.c.b16 %v11147, %v11145
  %v11358 = vpack.c.b16 %v11148, %v11146
  %v11359 = vpack.c.b16 %v11151, %v11149
  %v11360 = vpack.c.b16 %v11152, %v11150
  %v11361 = vpack.c.b16 %v11155, %v11153
  %v11362 = vpack.c.b16 %v11156, %v11154
  %v11363 = vpack.c.b16 %v11159, %v11157
  %v11364 = vpack.c.b16 %v11160, %v11158
  %v11365 = vpack.c.b16 %v11163, %v11161
  %v11366 = vpack.c.b16 %v11164, %v11162
  %v11367 = vpack.c.b16 %v11167, %v11165
  %v11368 = vpack.c.b16 %v11168, %v11166
  %v11369 = vpack.c.b16 %v11171, %v11169
  %v11370 = vpack.c.b16 %v11172, %v11170
  %v11371 = vpack.c.b16 %v11175, %v11173
  %v11372 = vpack.c.b16 %v11176, %v11174
  %v11373 = vpack.c.b16 %v11179, %v11177
  %v11374 = vpack.c.b16 %v11180, %v11178
  %v11375 = vpack.c.b16 %v11183, %v11181
  %v11376 = vpack.c.b16 %v11184, %v11182
  %v11377 = vpack.c.b16 %v11187, %v11185
  %v11378 = vpack.c.b16 %v11188, %v11186
  %v11379 = vpack.c.b16 %v11191, %v11189
  %v11380 = vpack.c.b16 %v11192, %v11190
  %v11381 = vpack.c.b16 %v11195, %v11193
  %v11382 = vpack.c.b16 %v11196, %v11194
  %v11383 = vpack.c.b16 %v11199, %v11197
  %v11384 = vpack.c.b16 %v11200, %v11198
  %v11385 = vpack.c.b16 %v11203, %v11201
  %v11386 = vpack.c.b16 %v11204, %v11202
  %v11387 = vpack.c.b16 %v11207, %v11205
  %v11388 = vpack.c.b16 %v11208, %v11206
  %v11389 = vpack.c.b16 %v11211, %v11209
  %v11390 = vpack.c.b16 %v11212, %v11210
  %v11391 = vpack.c.b16 %v11215, %v11213
  %v11392 = vpack.c.b16 %v11216, %v11214
  %v11393 = vpack.c.b16 %v11219, %v11217
  %v11394 = vpack.c.b16 %v11220, %v11218
  %v11395 = vpack.c.b16 %v11223, %v11221
  %v11396 = vpack.c.b16 %v11224, %v11222
  %v11397 = vpack.c.b16 %v11227, %v11225
  %v11398 = vpack.c.b16 %v11228, %v11226
  %v11399 = vpack.c.b16 %v11231, %v11229
  %v11400 = vpack.c.b16 %v11232, %v11230
  %v11401 = vpack.c.b16 %v11235, %v11233
  %v11402 = vpack.c.b16 %v11236, %v11234
  %v11403 = vpack.c.b16 %v11239, %v11237
  %v11404 = vpack.c.b16 %v11240, %v11238
  %v11405 = vpack.c.b16 %v11243, %v11241
  %v11406 = vpack.c.b16 %v11244, %v11242
  %v11407 = vpack.c.b16 %v11247, %v11245
  %v11408 = vpack.c.b16 %v11248, %v11246
  %v11409 = vpack.c.b16 %v11251, %v11249
  %v11410 = vpack.c.b16 %v11252, %v11250
  %v11411 = vpack.c.b16 %v11255, %v11253
  %v11412 = vpack.c.b16 %v11256, %v11254
  %v11413 = vpack.c.b16 %v11259, %v11257
  %v11414 = vpack.c.b16 %v11260, %v11258
  %v11415 = vpack.c.b16 %v11263, %v11261
  %v11416 = vpack.c.b16 %v11264, %v11262
  %v11417 = vpack.c.b16 %v11267, %v11265
  %v11418 = vpack.c.b16 %v11268, %v11266
  %v11419 = vpack.c.b16 %v11271, %v11269
  %v11420 = vpack.c.b16 %v11272, %v11270
  %v11421 = vpack.c.b16 %v11275, %v11273
  %v11422 = vpack.c.b16 %v11276, %v11274
  %v11423 = vpack.c.b16 %v11279, %v11277
  %v11424 = vpack.c.b16 %v11280, %v11278
  %v11425 = vpack.c.b16 %v11283, %v11281
  %v11426 = vpack.c.b16 %v11284, %v11282
  %v11427 = vpack.c.b16 %v11287, %v11285
  %v11428 = vpack.c.b16 %v11288, %v11286
  %v11429 = vpack.c.b16 %v11291, %v11289
  %v11430 = vpack.c.b16 %v11292, %v11290
  %v11431 = vpack.c.b16 %v11295, %v11293
  %v11432 = vpack.c.b16 %v11296, %v11294
  %v11433 = vpack.c.b16 %v11299, %v11297
  %v11434 = vpack.c.b16 %v11300, %v11298
  %v11435 = vpack.c.b16 %v11303, %v11301
  %v11436 = vpack.c.b16 %v11304, %v11302
  %v11437 = vpack.c.b16 %v11307, %v11305
  %v11438 = vpack.c.b16 %v11308, %v11306
  %v11439 = vpack.c.b16 %v11311, %v11309
  %v11440 = vpack.c.b16 %v11312, %v11310
  %11569 = vmatprep.subr.bf16.mxu0 %v11314
  %11570 = vmatpush1.bf16.msra.mxu0 %v11313
  %11571 = vmatprep.subr.bf16.mxu0 %v11316
  %11572 = vmatpush1.bf16.msra.mxu0 %v11315
  %11573 = vmatprep.subr.bf16.mxu0 %v11318
  %11574 = vmatpush1.bf16.msra.mxu0 %v11317
  %11575 = vmatprep.subr.bf16.mxu0 %v11320
  %11576 = vmatpush1.bf16.msra.mxu0 %v11319
  %11577 = vmatprep.subr.bf16.mxu0 %v11322
  %11578 = vmatpush1.bf16.msra.mxu0 %v11321
  %11579 = vmatprep.subr.bf16.mxu0 %v11324
  %11580 = vmatpush1.bf16.msra.mxu0 %v11323
  %11581 = vmatprep.subr.bf16.mxu0 %v11326
  %11582 = vmatpush1.bf16.msra.mxu0 %v11325
  %11583 = vmatprep.subr.bf16.mxu0 %v11328
  %11584 = vmatpush1.bf16.msra.mxu0 %v11327
  %11585 = vmatprep.subr.bf16.mxu0 %v11330
  %11586 = vmatpush1.bf16.msra.mxu0 %v11329
  %11587 = vmatprep.subr.bf16.mxu0 %v11332
  %11588 = vmatpush1.bf16.msra.mxu0 %v11331
  %11589 = vmatprep.subr.bf16.mxu0 %v11334
  %11590 = vmatpush1.bf16.msra.mxu0 %v11333
  %11591 = vmatprep.subr.bf16.mxu0 %v11336
  %11592 = vmatpush1.bf16.msra.mxu0 %v11335
  %11593 = vmatprep.subr.bf16.mxu0 %v11338
  %11594 = vmatpush1.bf16.msra.mxu0 %v11337
  %11595 = vmatprep.subr.bf16.mxu0 %v11340
  %11596 = vmatpush1.bf16.msra.mxu0 %v11339
  %11597 = vmatprep.subr.bf16.mxu0 %v11342
  %11598 = vmatpush1.bf16.msra.mxu0 %v11341
  %11599 = vmatprep.subr.bf16.mxu0 %v11344
  %11600 = vmatpush1.bf16.msra.mxu0 %v11343
  %11601 = vmatprep.mubr.bf16.mxu0 %v10726
  %11602 = vmatmul.mubr.bf16.gmra.mrb[0].mxu0 %v10725
  %v11603 = vpop.f32.mrb[0].mxu0
  %v11604 = vadd.f32 %v10922, %v11603
  %v11605 = vpop.f32.mrb[0].mxu0
  %v11606 = vadd.f32 %v10926, %v11605
  %v11607 = vpop.f32.mrb[0].mxu0
  %v11608 = vadd.f32 %v10922, %v11607
  %v11609 = vpop.f32.mrb[0].mxu0
  %v11610 = vadd.f32 %v10926, %v11609
  %11611 = vmatprep.mubr.bf16.mxu0 %v10734
  %11612 = vmatmul.mubr.bf16.gmra.mrb[0].mxu0 %v10733
  %v11613 = vpop.f32.mrb[0].mxu0
  %v11614 = vadd.f32 %v10922, %v11613
  %v11615 = vpop.f32.mrb[0].mxu0
  %v11616 = vadd.f32 %v10926, %v11615
  %v11617 = vpop.f32.mrb[0].mxu0
  %v11618 = vadd.f32 %v10922, %v11617
  %v11619 = vpop.f32.mrb[0].mxu0
  %v11620 = vadd.f32 %v10926, %v11619
  %11621 = vmatprep.mubr.bf16.mxu0 %v10742
  %11622 = vmatmul.mubr.bf16.gmra.mrb[0].mxu0 %v10741
  %v11623 = vpop.f32.mrb[0].mxu0
  %v11624 = vadd.f32 %v10922, %v11623
  %v11625 = vpop.f32.mrb[0].mxu0
  %v11626 = vadd.f32 %v10926, %v11625
  %v11627 = vpop.f32.mrb[0].mxu0
  %v11628 = vadd.f32 %v10922, %v11627
  %v11629 = vpop.f32.mrb[0].mxu0
  %v11630 = vadd.f32 %v10926, %v11629
  %11631 = vmatprep.mubr.bf16.mxu0 %v10750
  %11632 = vmatmul.mubr.bf16.gmra.mrb[0].mxu0 %v10749
  %v11633 = vpop.f32.mrb[0].mxu0
  %v11634 = vadd.f32 %v10922, %v11633
  %v11635 = vpop.f32.mrb[0].mxu0
  %v11636 = vadd.f32 %v10926, %v11635
  %v11637 = vpop.f32.mrb[0].mxu0
  %v11638 = vadd.f32 %v10922, %v11637
  %v11639 = vpop.f32.mrb[0].mxu0
  %v11640 = vadd.f32 %v10926, %v11639
  %11641 = vmatprep.mubr.bf16.mxu0 %v10758
  %11642 = vmatmul.mubr.bf16.gmra.mrb[0].mxu0 %v10757
  %v11643 = vpop.f32.mrb[0].mxu0
  %v11644 = vadd.f32 %v10922, %v11643
  %v11645 = vpop.f32.mrb[0].mxu0
  %v11646 = vadd.f32 %v10926, %v11645
  %v11647 = vpop.f32.mrb[0].mxu0
  %v11648 = vadd.f32 %v10922, %v11647
  %v11649 = vpop.f32.mrb[0].mxu0
  %v11650 = vadd.f32 %v10926, %v11649
  %11651 = vmatprep.mubr.bf16.mxu0 %v10766
  %11652 = vmatmul.mubr.bf16.gmra.mrb[0].mxu0 %v10765
  %v11653 = vpop.f32.mrb[0].mxu0
  %v11654 = vadd.f32 %v10922, %v11653
  %v11655 = vpop.f32.mrb[0].mxu0
  %v11656 = vadd.f32 %v10926, %v11655
  %v11657 = vpop.f32.mrb[0].mxu0
  %v11658 = vadd.f32 %v10922, %v11657
  %v11659 = vpop.f32.mrb[0].mxu0
  %v11660 = vadd.f32 %v10926, %v11659
  %11661 = vmatprep.mubr.bf16.mxu0 %v10774
  %11662 = vmatmul.mubr.bf16.gmra.mrb[0].mxu0 %v10773
  %v11663 = vpop.f32.mrb[0].mxu0
  %v11664 = vadd.f32 %v10922, %v11663
  %v11665 = vpop.f32.mrb[0].mxu0
  %v11666 = vadd.f32 %v10926, %v11665
  %v11667 = vpop.f32.mrb[0].mxu0
  %v11668 = vadd.f32 %v10922, %v11667
  %v11669 = vpop.f32.mrb[0].mxu0
  %v11670 = vadd.f32 %v10926, %v11669
  %11671 = vmatprep.mubr.bf16.mxu0 %v10782
  %11672 = vmatmul.mubr.bf16.gmra.mrb[0].mxu0 %v10781
  %v11673 = vpop.f32.mrb[0].mxu0
  %v11674 = vadd.f32 %v10922, %v11673
  %v11675 = vpop.f32.mrb[0].mxu0
  %v11676 = vadd.f32 %v10926, %v11675
  %v11677 = vpop.f32.mrb[0].mxu0
  %v11678 = vadd.f32 %v10922, %v11677
  %v11679 = vpop.f32.mrb[0].mxu0
  %v11680 = vadd.f32 %v10926, %v11679
  %11681 = vdwg.mxu0
  %11682 = vmatprep.subr.bf16.mxu0 %v11346
  %11683 = vmatpush1.bf16.msra.mxu0 %v11345
  %11684 = vmatprep.subr.bf16.mxu0 %v11348
  %11685 = vmatpush1.bf16.msra.mxu0 %v11347
  %11686 = vmatprep.subr.bf16.mxu0 %v11350
  %11687 = vmatpush1.bf16.msra.mxu0 %v11349
  %11688 = vmatprep.subr.bf16.mxu0 %v11352
  %11689 = vmatpush1.bf16.msra.mxu0 %v11351
  %11690 = vmatprep.subr.bf16.mxu0 %v11354
  %11691 = vmatpush1.bf16.msra.mxu0 %v11353
  %11692 = vmatprep.subr.bf16.mxu0 %v11356
  %11693 = vmatpush1.bf16.msra.mxu0 %v11355
  %11694 = vmatprep.subr.bf16.mxu0 %v11358
  %11695 = vmatpush1.bf16.msra.mxu0 %v11357
  %11696 = vmatprep.subr.bf16.mxu0 %v11360
  %11697 = vmatpush1.bf16.msra.mxu0 %v11359
  %11698 = vmatprep.subr.bf16.mxu0 %v11362
  %11699 = vmatpush1.bf16.msra.mxu0 %v11361
  %11700 = vmatprep.subr.bf16.mxu0 %v11364
  %11701 = vmatpush1.bf16.msra.mxu0 %v11363
  %11702 = vmatprep.subr.bf16.mxu0 %v11366
  %11703 = vmatpush1.bf16.msra.mxu0 %v11365
  %11704 = vmatprep.subr.bf16.mxu0 %v11368
  %11705 = vmatpush1.bf16.msra.mxu0 %v11367
  %11706 = vmatprep.subr.bf16.mxu0 %v11370
  %11707 = vmatpush1.bf16.msra.mxu0 %v11369
  %11708 = vmatprep.subr.bf16.mxu0 %v11372
  %11709 = vmatpush1.bf16.msra.mxu0 %v11371
  %11710 = vmatprep.subr.bf16.mxu0 %v11374
  %11711 = vmatpush1.bf16.msra.mxu0 %v11373
  %11712 = vmatprep.subr.bf16.mxu0 %v11376
  %11713 = vmatpush1.bf16.msra.mxu0 %v11375
  %11714 = vmatprep.mubr.bf16.mxu0 %v10728
  %11715 = vmatmul.mubr.bf16.gmra.mrb[0].mxu0 %v10727
  %v11716 = vpop.f32.mrb[0].mxu0
  %v11717 = vadd.f32 %v11604, %v11716
  %v11718 = vpop.f32.mrb[0].mxu0
  %v11719 = vadd.f32 %v11606, %v11718
  %v11720 = vpop.f32.mrb[0].mxu0
  %v11721 = vadd.f32 %v11608, %v11720
  %v11722 = vpop.f32.mrb[0].mxu0
  %v11723 = vadd.f32 %v11610, %v11722
  %11724 = vmatprep.mubr.bf16.mxu0 %v10736
  %11725 = vmatmul.mubr.bf16.gmra.mrb[0].mxu0 %v10735
  %v11726 = vpop.f32.mrb[0].mxu0
  %v11727 = vadd.f32 %v11614, %v11726
  %v11728 = vpop.f32.mrb[0].mxu0
  %v11729 = vadd.f32 %v11616, %v11728
  %v11730 = vpop.f32.mrb[0].mxu0
  %v11731 = vadd.f32 %v11618, %v11730
  %v11732 = vpop.f32.mrb[0].mxu0
  %v11733 = vadd.f32 %v11620, %v11732
  %11734 = vmatprep.mubr.bf16.mxu0 %v10744
  %11735 = vmatmul.mubr.bf16.gmra.mrb[0].mxu0 %v10743
  %v11736 = vpop.f32.mrb[0].mxu0
  %v11737 = vadd.f32 %v11624, %v11736
  %v11738 = vpop.f32.mrb[0].mxu0
  %v11739 = vadd.f32 %v11626, %v11738
  %v11740 = vpop.f32.mrb[0].mxu0
  %v11741 = vadd.f32 %v11628, %v11740
  %v11742 = vpop.f32.mrb[0].mxu0
  %v11743 = vadd.f32 %v11630, %v11742
  %11744 = vmatprep.mubr.bf16.mxu0 %v10752
  %11745 = vmatmul.mubr.bf16.gmra.mrb[0].mxu0 %v10751
  %v11746 = vpop.f32.mrb[0].mxu0
  %v11747 = vadd.f32 %v11634, %v11746
  %v11748 = vpop.f32.mrb[0].mxu0
  %v11749 = vadd.f32 %v11636, %v11748
  %v11750 = vpop.f32.mrb[0].mxu0
  %v11751 = vadd.f32 %v11638, %v11750
  %v11752 = vpop.f32.mrb[0].mxu0
  %v11753 = vadd.f32 %v11640, %v11752
  %11754 = vmatprep.mubr.bf16.mxu0 %v10760
  %11755 = vmatmul.mubr.bf16.gmra.mrb[0].mxu0 %v10759
  %v11756 = vpop.f32.mrb[0].mxu0
  %v11757 = vadd.f32 %v11644, %v11756
  %v11758 = vpop.f32.mrb[0].mxu0
  %v11759 = vadd.f32 %v11646, %v11758
  %v11760 = vpop.f32.mrb[0].mxu0
  %v11761 = vadd.f32 %v11648, %v11760
  %v11762 = vpop.f32.mrb[0].mxu0
  %v11763 = vadd.f32 %v11650, %v11762
  %11764 = vmatprep.mubr.bf16.mxu0 %v10768
  %11765 = vmatmul.mubr.bf16.gmra.mrb[0].mxu0 %v10767
  %v11766 = vpop.f32.mrb[0].mxu0
  %v11767 = vadd.f32 %v11654, %v11766
  %v11768 = vpop.f32.mrb[0].mxu0
  %v11769 = vadd.f32 %v11656, %v11768
  %v11770 = vpop.f32.mrb[0].mxu0
  %v11771 = vadd.f32 %v11658, %v11770
  %v11772 = vpop.f32.mrb[0].mxu0
  %v11773 = vadd.f32 %v11660, %v11772
  %11774 = vmatprep.mubr.bf16.mxu0 %v10776
  %11775 = vmatmul.mubr.bf16.gmra.mrb[0].mxu0 %v10775
  %v11776 = vpop.f32.mrb[0].mxu0
  %v11777 = vadd.f32 %v11664, %v11776
  %v11778 = vpop.f32.mrb[0].mxu0
  %v11779 = vadd.f32 %v11666, %v11778
  %v11780 = vpop.f32.mrb[0].mxu0
  %v11781 = vadd.f32 %v11668, %v11780
  %v11782 = vpop.f32.mrb[0].mxu0
  %v11783 = vadd.f32 %v11670, %v11782
  %11784 = vmatprep.mubr.bf16.mxu0 %v10784
  %11785 = vmatmul.mubr.bf16.gmra.mrb[0].mxu0 %v10783
  %v11786 = vpop.f32.mrb[0].mxu0
  %v11787 = vadd.f32 %v11674, %v11786
  %v11788 = vpop.f32.mrb[0].mxu0
  %v11789 = vadd.f32 %v11676, %v11788
  %v11790 = vpop.f32.mrb[0].mxu0
  %v11791 = vadd.f32 %v11678, %v11790
  %v11792 = vpop.f32.mrb[0].mxu0
  %v11793 = vadd.f32 %v11680, %v11792
  %11794 = vdwg.mxu0
  %11795 = vmatprep.subr.bf16.mxu0 %v11378
  %11796 = vmatpush1.bf16.msra.mxu0 %v11377
  %11797 = vmatprep.subr.bf16.mxu0 %v11380
  %11798 = vmatpush1.bf16.msra.mxu0 %v11379
  %11799 = vmatprep.subr.bf16.mxu0 %v11382
  %11800 = vmatpush1.bf16.msra.mxu0 %v11381
  %11801 = vmatprep.subr.bf16.mxu0 %v11384
  %11802 = vmatpush1.bf16.msra.mxu0 %v11383
  %11803 = vmatprep.subr.bf16.mxu0 %v11386
  %11804 = vmatpush1.bf16.msra.mxu0 %v11385
  %11805 = vmatprep.subr.bf16.mxu0 %v11388
  %11806 = vmatpush1.bf16.msra.mxu0 %v11387
  %11807 = vmatprep.subr.bf16.mxu0 %v11390
  %11808 = vmatpush1.bf16.msra.mxu0 %v11389
  %11809 = vmatprep.subr.bf16.mxu0 %v11392
  %11810 = vmatpush1.bf16.msra.mxu0 %v11391
  %11811 = vmatprep.subr.bf16.mxu0 %v11394
  %11812 = vmatpush1.bf16.msra.mxu0 %v11393
  %11813 = vmatprep.subr.bf16.mxu0 %v11396
  %11814 = vmatpush1.bf16.msra.mxu0 %v11395
  %11815 = vmatprep.subr.bf16.mxu0 %v11398
  %11816 = vmatpush1.bf16.msra.mxu0 %v11397
  %11817 = vmatprep.subr.bf16.mxu0 %v11400
  %11818 = vmatpush1.bf16.msra.mxu0 %v11399
  %11819 = vmatprep.subr.bf16.mxu0 %v11402
  %11820 = vmatpush1.bf16.msra.mxu0 %v11401
  %11821 = vmatprep.subr.bf16.mxu0 %v11404
  %11822 = vmatpush1.bf16.msra.mxu0 %v11403
  %11823 = vmatprep.subr.bf16.mxu0 %v11406
  %11824 = vmatpush1.bf16.msra.mxu0 %v11405
  %11825 = vmatprep.subr.bf16.mxu0 %v11408
  %11826 = vmatpush1.bf16.msra.mxu0 %v11407
  %11827 = vmatprep.mubr.bf16.mxu0 %v10730
  %11828 = vmatmul.mubr.bf16.gmra.mrb[0].mxu0 %v10729
  %v11829 = vpop.f32.mrb[0].mxu0
  %v11830 = vadd.f32 %v11717, %v11829
  %v11831 = vpop.f32.mrb[0].mxu0
  %v11832 = vadd.f32 %v11719, %v11831
  %v11833 = vpop.f32.mrb[0].mxu0
  %v11834 = vadd.f32 %v11721, %v11833
  %v11835 = vpop.f32.mrb[0].mxu0
  %v11836 = vadd.f32 %v11723, %v11835
  %11837 = vmatprep.mubr.bf16.mxu0 %v10738
  %11838 = vmatmul.mubr.bf16.gmra.mrb[0].mxu0 %v10737
  %v11839 = vpop.f32.mrb[0].mxu0
  %v11840 = vadd.f32 %v11727, %v11839
  %v11841 = vpop.f32.mrb[0].mxu0
  %v11842 = vadd.f32 %v11729, %v11841
  %v11843 = vpop.f32.mrb[0].mxu0
  %v11844 = vadd.f32 %v11731, %v11843
  %v11845 = vpop.f32.mrb[0].mxu0
  %v11846 = vadd.f32 %v11733, %v11845
  %11847 = vmatprep.mubr.bf16.mxu0 %v10746
  %11848 = vmatmul.mubr.bf16.gmra.mrb[0].mxu0 %v10745
  %v11849 = vpop.f32.mrb[0].mxu0
  %v11850 = vadd.f32 %v11737, %v11849
  %v11851 = vpop.f32.mrb[0].mxu0
  %v11852 = vadd.f32 %v11739, %v11851
  %v11853 = vpop.f32.mrb[0].mxu0
  %v11854 = vadd.f32 %v11741, %v11853
  %v11855 = vpop.f32.mrb[0].mxu0
  %v11856 = vadd.f32 %v11743, %v11855
  %11857 = vmatprep.mubr.bf16.mxu0 %v10754
  %11858 = vmatmul.mubr.bf16.gmra.mrb[0].mxu0 %v10753
  %v11859 = vpop.f32.mrb[0].mxu0
  %v11860 = vadd.f32 %v11747, %v11859
  %v11861 = vpop.f32.mrb[0].mxu0
  %v11862 = vadd.f32 %v11749, %v11861
  %v11863 = vpop.f32.mrb[0].mxu0
  %v11864 = vadd.f32 %v11751, %v11863
  %v11865 = vpop.f32.mrb[0].mxu0
  %v11866 = vadd.f32 %v11753, %v11865
  %11867 = vmatprep.mubr.bf16.mxu0 %v10762
  %11868 = vmatmul.mubr.bf16.gmra.mrb[0].mxu0 %v10761
  %v11869 = vpop.f32.mrb[0].mxu0
  %v11870 = vadd.f32 %v11757, %v11869
  %v11871 = vpop.f32.mrb[0].mxu0
  %v11872 = vadd.f32 %v11759, %v11871
  %v11873 = vpop.f32.mrb[0].mxu0
  %v11874 = vadd.f32 %v11761, %v11873
  %v11875 = vpop.f32.mrb[0].mxu0
  %v11876 = vadd.f32 %v11763, %v11875
  %11877 = vmatprep.mubr.bf16.mxu0 %v10770
  %11878 = vmatmul.mubr.bf16.gmra.mrb[0].mxu0 %v10769
  %v11879 = vpop.f32.mrb[0].mxu0
  %v11880 = vadd.f32 %v11767, %v11879
  %v11881 = vpop.f32.mrb[0].mxu0
  %v11882 = vadd.f32 %v11769, %v11881
  %v11883 = vpop.f32.mrb[0].mxu0
  %v11884 = vadd.f32 %v11771, %v11883
  %v11885 = vpop.f32.mrb[0].mxu0
  %v11886 = vadd.f32 %v11773, %v11885
  %11887 = vmatprep.mubr.bf16.mxu0 %v10778
  %11888 = vmatmul.mubr.bf16.gmra.mrb[0].mxu0 %v10777
  %v11889 = vpop.f32.mrb[0].mxu0
  %v11890 = vadd.f32 %v11777, %v11889
  %v11891 = vpop.f32.mrb[0].mxu0
  %v11892 = vadd.f32 %v11779, %v11891
  %v11893 = vpop.f32.mrb[0].mxu0
  %v11894 = vadd.f32 %v11781, %v11893
  %v11895 = vpop.f32.mrb[0].mxu0
  %v11896 = vadd.f32 %v11783, %v11895
  %11897 = vmatprep.mubr.bf16.mxu0 %v10786
  %11898 = vmatmul.mubr.bf16.gmra.mrb[0].mxu0 %v10785
  %v11899 = vpop.f32.mrb[0].mxu0
  %v11900 = vadd.f32 %v11787, %v11899
  %v11901 = vpop.f32.mrb[0].mxu0
  %v11902 = vadd.f32 %v11789, %v11901
  %v11903 = vpop.f32.mrb[0].mxu0
  %v11904 = vadd.f32 %v11791, %v11903
  %v11905 = vpop.f32.mrb[0].mxu0
  %v11906 = vadd.f32 %v11793, %v11905
  %11907 = vdwg.mxu0
  %11908 = vmatprep.subr.bf16.mxu0 %v11410
  %11909 = vmatpush1.bf16.msra.mxu0 %v11409
  %11910 = vmatprep.subr.bf16.mxu0 %v11412
  %11911 = vmatpush1.bf16.msra.mxu0 %v11411
  %11912 = vmatprep.subr.bf16.mxu0 %v11414
  %11913 = vmatpush1.bf16.msra.mxu0 %v11413
  %11914 = vmatprep.subr.bf16.mxu0 %v11416
  %11915 = vmatpush1.bf16.msra.mxu0 %v11415
  %11916 = vmatprep.subr.bf16.mxu0 %v11418
  %11917 = vmatpush1.bf16.msra.mxu0 %v11417
  %11918 = vmatprep.subr.bf16.mxu0 %v11420
  %11919 = vmatpush1.bf16.msra.mxu0 %v11419
  %11920 = vmatprep.subr.bf16.mxu0 %v11422
  %11921 = vmatpush1.bf16.msra.mxu0 %v11421
  %11922 = vmatprep.subr.bf16.mxu0 %v11424
  %11923 = vmatpush1.bf16.msra.mxu0 %v11423
  %11924 = vmatprep.subr.bf16.mxu0 %v11426
  %11925 = vmatpush1.bf16.msra.mxu0 %v11425
  %11926 = vmatprep.subr.bf16.mxu0 %v11428
  %11927 = vmatpush1.bf16.msra.mxu0 %v11427
  %11928 = vmatprep.subr.bf16.mxu0 %v11430
  %11929 = vmatpush1.bf16.msra.mxu0 %v11429
  %11930 = vmatprep.subr.bf16.mxu0 %v11432
  %11931 = vmatpush1.bf16.msra.mxu0 %v11431
  %11932 = vmatprep.subr.bf16.mxu0 %v11434
  %11933 = vmatpush1.bf16.msra.mxu0 %v11433
  %11934 = vmatprep.subr.bf16.mxu0 %v11436
  %11935 = vmatpush1.bf16.msra.mxu0 %v11435
  %11936 = vmatprep.subr.bf16.mxu0 %v11438
  %11937 = vmatpush1.bf16.msra.mxu0 %v11437
  %11938 = vmatprep.subr.bf16.mxu0 %v11440
  %11939 = vmatpush1.bf16.msra.mxu0 %v11439
  %11940 = vmatprep.mubr.bf16.mxu0 %v10732
  %11941 = vmatmul.mubr.bf16.gmra.mrb[0].mxu0 %v10731
  %v11942 = vpop.f32.mrb[0].mxu0
  %v11943 = vadd.f32 %v11830, %v11942
  %v11944 = vpop.f32.mrb[0].mxu0
  %v11945 = vadd.f32 %v11832, %v11944
  %v11946 = vpop.f32.mrb[0].mxu0
  %v11947 = vadd.f32 %v11834, %v11946
  %v11948 = vpop.f32.mrb[0].mxu0
  %v11949 = vadd.f32 %v11836, %v11948
  %11950 = vmatprep.mubr.bf16.mxu0 %v10740
  %11951 = vmatmul.mubr.bf16.gmra.mrb[0].mxu0 %v10739
  %v11952 = vpop.f32.mrb[0].mxu0
  %v11953 = vadd.f32 %v11840, %v11952
  %v11954 = vpop.f32.mrb[0].mxu0
  %v11955 = vadd.f32 %v11842, %v11954
  %v11956 = vpop.f32.mrb[0].mxu0
  %v11957 = vadd.f32 %v11844, %v11956
  %v11958 = vpop.f32.mrb[0].mxu0
  %v11959 = vadd.f32 %v11846, %v11958
  %11960 = vmatprep.mubr.bf16.mxu0 %v10748
  %11961 = vmatmul.mubr.bf16.gmra.mrb[0].mxu0 %v10747
  %v11962 = vpop.f32.mrb[0].mxu0
  %v11963 = vadd.f32 %v11850, %v11962
  %v11964 = vpop.f32.mrb[0].mxu0
  %v11965 = vadd.f32 %v11852, %v11964
  %v11966 = vpop.f32.mrb[0].mxu0
  %v11967 = vadd.f32 %v11854, %v11966
  %v11968 = vpop.f32.mrb[0].mxu0
  %v11969 = vadd.f32 %v11856, %v11968
  %11970 = vmatprep.mubr.bf16.mxu0 %v10756
  %11971 = vmatmul.mubr.bf16.gmra.mrb[0].mxu0 %v10755
  %v11972 = vpop.f32.mrb[0].mxu0
  %v11973 = vadd.f32 %v11860, %v11972
  %v11974 = vpop.f32.mrb[0].mxu0
  %v11975 = vadd.f32 %v11862, %v11974
  %v11976 = vpop.f32.mrb[0].mxu0
  %v11977 = vadd.f32 %v11864, %v11976
  %v11978 = vpop.f32.mrb[0].mxu0
  %v11979 = vadd.f32 %v11866, %v11978
  %11980 = vmatprep.mubr.bf16.mxu0 %v10764
  %11981 = vmatmul.mubr.bf16.gmra.mrb[0].mxu0 %v10763
  %v11982 = vpop.f32.mrb[0].mxu0
  %v11983 = vadd.f32 %v11870, %v11982
  %v11984 = vpop.f32.mrb[0].mxu0
  %v11985 = vadd.f32 %v11872, %v11984
  %v11986 = vpop.f32.mrb[0].mxu0
  %v11987 = vadd.f32 %v11874, %v11986
  %v11988 = vpop.f32.mrb[0].mxu0
  %v11989 = vadd.f32 %v11876, %v11988
  %11990 = vmatprep.mubr.bf16.mxu0 %v10772
  %11991 = vmatmul.mubr.bf16.gmra.mrb[0].mxu0 %v10771
  %v11992 = vpop.f32.mrb[0].mxu0
  %v11993 = vadd.f32 %v11880, %v11992
  %v11994 = vpop.f32.mrb[0].mxu0
  %v11995 = vadd.f32 %v11882, %v11994
  %v11996 = vpop.f32.mrb[0].mxu0
  %v11997 = vadd.f32 %v11884, %v11996
  %v11998 = vpop.f32.mrb[0].mxu0
  %v11999 = vadd.f32 %v11886, %v11998
  %12000 = vmatprep.mubr.bf16.mxu0 %v10780
  %12001 = vmatmul.mubr.bf16.gmra.mrb[0].mxu0 %v10779
  %v12002 = vpop.f32.mrb[0].mxu0
  %v12003 = vadd.f32 %v11890, %v12002
  %v12004 = vpop.f32.mrb[0].mxu0
  %v12005 = vadd.f32 %v11892, %v12004
  %v12006 = vpop.f32.mrb[0].mxu0
  %v12007 = vadd.f32 %v11894, %v12006
  %v12008 = vpop.f32.mrb[0].mxu0
  %v12009 = vadd.f32 %v11896, %v12008
  %12010 = vmatprep.mubr.bf16.mxu0 %v10788
  %12011 = vmatmul.mubr.bf16.gmra.mrb[0].mxu0 %v10787
  %v12012 = vpop.f32.mrb[0].mxu0
  %v12013 = vadd.f32 %v11900, %v12012
  %v12014 = vpop.f32.mrb[0].mxu0
  %v12015 = vadd.f32 %v11902, %v12014
  %v12016 = vpop.f32.mrb[0].mxu0
  %v12017 = vadd.f32 %v11904, %v12016
  %v12018 = vpop.f32.mrb[0].mxu0
  %v12019 = vadd.f32 %v11906, %v12018
  %12020 = vdwg.mxu0
  %v12021 = vmax.f32 %v11943, 0.0
  %v12022 = vmax.f32 %v11945, 0.0
  %v12023 = vmax.f32 %v11947, 0.0
  %v12024 = vmax.f32 %v11949, 0.0
  %v12025 = vmax.f32 %v11953, 0.0
  %v12026 = vmax.f32 %v11955, 0.0
  %v12027 = vmax.f32 %v11957, 0.0
  %v12028 = vmax.f32 %v11959, 0.0
  %v12029 = vmax.f32 %v11963, 0.0
  %v12030 = vmax.f32 %v11965, 0.0
  %v12031 = vmax.f32 %v11967, 0.0
  %v12032 = vmax.f32 %v11969, 0.0
  %v12033 = vmax.f32 %v11973, 0.0
  %v12034 = vmax.f32 %v11975, 0.0
  %v12035 = vmax.f32 %v11977, 0.0
  %v12036 = vmax.f32 %v11979, 0.0
  %v12037 = vmax.f32 %v11983, 0.0
  %v12038 = vmax.f32 %v11985, 0.0
  %v12039 = vmax.f32 %v11987, 0.0
  %v12040 = vmax.f32 %v11989, 0.0
  %v12041 = vmax.f32 %v11993, 0.0
  %v12042 = vmax.f32 %v11995, 0.0
  %v12043 = vmax.f32 %v11997, 0.0
  %v12044 = vmax.f32 %v11999, 0.0
  %v12045 = vmax.f32 %v12003, 0.0
  %v12046 = vmax.f32 %v12005, 0.0
  %v12047 = vmax.f32 %v12007, 0.0
  %v12048 = vmax.f32 %v12009, 0.0
  %v12049 = vmax.f32 %v12013, 0.0
  %v12050 = vmax.f32 %v12015, 0.0
  %v12051 = vmax.f32 %v12017, 0.0
  %v12052 = vmax.f32 %v12019, 0.0
  %v12053 = vpack.c.bf16 %v12023, %v12021
  %v12054 = vpack.c.bf16 %v12024, %v12022
  %v12055 = vpack.c.bf16 %v12027, %v12025
  %v12056 = vpack.c.bf16 %v12028, %v12026
  %v12057 = vpack.c.bf16 %v12031, %v12029
  %v12058 = vpack.c.bf16 %v12032, %v12030
  %v12059 = vpack.c.bf16 %v12035, %v12033
  %v12060 = vpack.c.bf16 %v12036, %v12034
  %v12061 = vpack.c.bf16 %v12039, %v12037
  %v12062 = vpack.c.bf16 %v12040, %v12038
  %v12063 = vpack.c.bf16 %v12043, %v12041
  %v12064 = vpack.c.bf16 %v12044, %v12042
  %v12065 = vpack.c.bf16 %v12047, %v12045
  %v12066 = vpack.c.bf16 %v12048, %v12046
  %v12067 = vpack.c.bf16 %v12051, %v12049
  %v12068 = vpack.c.bf16 %v12052, %v12050
  %v12069 = vld [vmem:[%s5] sm:$0xf]
  %v12070 = vld [vmem:[%s5 + $0x4] sm:$0xf]
  %v12071 = vld [vmem:[%s5 + $0x8] sm:$0xf]
  %v12072 = vld [vmem:[%s5 + $0xc] sm:$0xf]
  %v12073 = vld [vmem:[%s5 + $0x10] sm:$0xf]
  %v12074 = vld [vmem:[%s5 + $0x14] sm:$0xf]
  %v12075 = vld [vmem:[%s5 + $0x18] sm:$0xf]
  %v12076 = vld [vmem:[%s5 + $0x1c] sm:$0xf]
  %v12077 = vld [vmem:[%s5 + $0x20] sm:$0xf]
  %v12078 = vld [vmem:[%s5 + $0x24] sm:$0xf]
  %v12079 = vld [vmem:[%s5 + $0x28] sm:$0xf]
  %v12080 = vld [vmem:[%s5 + $0x2c] sm:$0xf]
  %v12081 = vld [vmem:[%s5 + $0x30] sm:$0xf]
  %v12082 = vld [vmem:[%s5 + $0x34] sm:$0xf]
  %v12083 = vld [vmem:[%s5 + $0x38] sm:$0xf]
  %v12084 = vld [vmem:[%s5 + $0x3c] sm:$0xf]
  %v12085 = vld [vmem:[%s5 + $0x40] sm:$0xf]
  %v12086 = vld [vmem:[%s5 + $0x44] sm:$0xf]
  %v12087 = vld [vmem:[%s5 + $0x48] sm:$0xf]
  %v12088 = vld [vmem:[%s5 + $0x4c] sm:$0xf]
  %v12089 = vld [vmem:[%s5 + $0x50] sm:$0xf]
  %v12090 = vld [vmem:[%s5 + $0x54] sm:$0xf]
  %v12091 = vld [vmem:[%s5 + $0x58] sm:$0xf]
  %v12092 = vld [vmem:[%s5 + $0x5c] sm:$0xf]
  %v12093 = vld [vmem:[%s5 + $0x60] sm:$0xf]
  %v12094 = vld [vmem:[%s5 + $0x64] sm:$0xf]
  %v12095 = vld [vmem:[%s5 + $0x68] sm:$0xf]
  %v12096 = vld [vmem:[%s5 + $0x6c] sm:$0xf]
  %v12097 = vld [vmem:[%s5 + $0x70] sm:$0xf]
  %v12098 = vld [vmem:[%s5 + $0x74] sm:$0xf]
  %v12099 = vld [vmem:[%s5 + $0x78] sm:$0xf]
  %v12100 = vld [vmem:[%s5 + $0x7c] sm:$0xf]
  %v12101 = vld [vmem:[%s6] sm:$0x1]
  %v12103 = vlaneseq
  %v12104 = vshrl.u32 %v12103, 7
  %v12105 = vsub.s32 0, %v12104
  %v12106 = vrot.slane %v12101, %v12105
  %v12140 = vunpack.c.l.b16 %v12069
  %v12141 = vunpack.c.l.b16 %v12070
  %v12142 = vunpack.c.l.b16 %v12071
  %v12143 = vunpack.c.l.b16 %v12072
  %v12144 = vunpack.c.l.b16 %v12073
  %v12145 = vunpack.c.l.b16 %v12074
  %v12146 = vunpack.c.l.b16 %v12075
  %v12147 = vunpack.c.l.b16 %v12076
  %v12148 = vunpack.c.l.b16 %v12077
  %v12149 = vunpack.c.l.b16 %v12078
  %v12150 = vunpack.c.l.b16 %v12079
  %v12151 = vunpack.c.l.b16 %v12080
  %v12152 = vunpack.c.l.b16 %v12081
  %v12153 = vunpack.c.l.b16 %v12082
  %v12154 = vunpack.c.l.b16 %v12083
  %v12155 = vunpack.c.l.b16 %v12084
  %v12156 = vunpack.c.l.b16 %v12085
  %v12157 = vunpack.c.l.b16 %v12086
  %v12158 = vunpack.c.l.b16 %v12087
  %v12159 = vunpack.c.l.b16 %v12088
  %v12160 = vunpack.c.l.b16 %v12089
  %v12161 = vunpack.c.l.b16 %v12090
  %v12162 = vunpack.c.l.b16 %v12091
  %v12163 = vunpack.c.l.b16 %v12092
  %v12164 = vunpack.c.l.b16 %v12093
  %v12165 = vunpack.c.l.b16 %v12094
  %v12166 = vunpack.c.l.b16 %v12095
  %v12167 = vunpack.c.l.b16 %v12096
  %v12168 = vunpack.c.l.b16 %v12097
  %v12169 = vunpack.c.l.b16 %v12098
  %v12170 = vunpack.c.l.b16 %v12099
  %v12171 = vunpack.c.l.b16 %v12100
  %v12172 = vpack.c.b16 %v12141, %v12140
  %v12173 = vpack.c.b16 %v12143, %v12142
  %v12174 = vpack.c.b16 %v12145, %v12144
  %v12175 = vpack.c.b16 %v12147, %v12146
  %v12176 = vpack.c.b16 %v12149, %v12148
  %v12177 = vpack.c.b16 %v12151, %v12150
  %v12178 = vpack.c.b16 %v12153, %v12152
  %v12179 = vpack.c.b16 %v12155, %v12154
  %v12180 = vpack.c.b16 %v12157, %v12156
  %v12181 = vpack.c.b16 %v12159, %v12158
  %v12182 = vpack.c.b16 %v12161, %v12160
  %v12183 = vpack.c.b16 %v12163, %v12162
  %v12184 = vpack.c.b16 %v12165, %v12164
  %v12185 = vpack.c.b16 %v12167, %v12166
  %v12186 = vpack.c.b16 %v12169, %v12168
  %v12187 = vpack.c.b16 %v12171, %v12170
  %12204 = vmatprep.subr.bf16.mxu0 0
  %12205 = vmatpush1.bf16.msra.mxu0 %v12172
  %12206 = vmatprep.subr.bf16.mxu0 0
  %12207 = vmatpush1.bf16.msra.mxu0 %v12173
  %12208 = vmatprep.subr.bf16.mxu0 0
  %12209 = vmatpush1.bf16.msra.mxu0 %v12174
  %12210 = vmatprep.subr.bf16.mxu0 0
  %12211 = vmatpush1.bf16.msra.mxu0 %v12175
  %12212 = vmatprep.subr.bf16.mxu0 0
  %12213 = vmatpush1.bf16.msra.mxu0 %v12176
  %12214 = vmatprep.subr.bf16.mxu0 0
  %12215 = vmatpush1.bf16.msra.mxu0 %v12177
  %12216 = vmatprep.subr.bf16.mxu0 0
  %12217 = vmatpush1.bf16.msra.mxu0 %v12178
  %12218 = vmatprep.subr.bf16.mxu0 0
  %12219 = vmatpush1.bf16.msra.mxu0 %v12179
  %12220 = vmatprep.subr.bf16.mxu0 0
  %12221 = vmatpush1.bf16.msra.mxu0 %v12180
  %12222 = vmatprep.subr.bf16.mxu0 0
  %12223 = vmatpush1.bf16.msra.mxu0 %v12181
  %12224 = vmatprep.subr.bf16.mxu0 0
  %12225 = vmatpush1.bf16.msra.mxu0 %v12182
  %12226 = vmatprep.subr.bf16.mxu0 0
  %12227 = vmatpush1.bf16.msra.mxu0 %v12183
  %12228 = vmatprep.subr.bf16.mxu0 0
  %12229 = vmatpush1.bf16.msra.mxu0 %v12184
  %12230 = vmatprep.subr.bf16.mxu0 0
  %12231 = vmatpush1.bf16.msra.mxu0 %v12185
  %12232 = vmatprep.subr.bf16.mxu0 0
  %12233 = vmatpush1.bf16.msra.mxu0 %v12186
  %12234 = vmatprep.subr.bf16.mxu0 0
  %12235 = vmatpush1.bf16.msra.mxu0 %v12187
  %12236 = vmatprep.mubr.bf16.mxu0 %v12054
  %12237 = vmatmul.mubr.bf16.gmra.mrb[0].mxu0 %v12053
  %v12238 = vpop.f32.mrb[0].mxu0
  %v12239 = vadd.f32 %v12106, %v12238
  %v12240 = vpop.f32.mrb[0].mxu0
  %v12241 = vpop.f32.mrb[0].mxu0
  %v12242 = vadd.f32 %v12106, %v12241
  %v12243 = vpop.f32.mrb[0].mxu0
  %12244 = vmatprep.mubr.bf16.mxu0 %v12056
  %12245 = vmatmul.mubr.bf16.gmra.mrb[0].mxu0 %v12055
  %v12246 = vpop.f32.mrb[0].mxu0
  %v12247 = vadd.f32 %v12106, %v12246
  %v12248 = vpop.f32.mrb[0].mxu0
  %v12249 = vpop.f32.mrb[0].mxu0
  %v12250 = vadd.f32 %v12106, %v12249
  %v12251 = vpop.f32.mrb[0].mxu0
  %12252 = vmatprep.mubr.bf16.mxu0 %v12058
  %12253 = vmatmul.mubr.bf16.gmra.mrb[0].mxu0 %v12057
  %v12254 = vpop.f32.mrb[0].mxu0
  %v12255 = vadd.f32 %v12106, %v12254
  %v12256 = vpop.f32.mrb[0].mxu0
  %v12257 = vpop.f32.mrb[0].mxu0
  %v12258 = vadd.f32 %v12106, %v12257
  %v12259 = vpop.f32.mrb[0].mxu0
  %12260 = vmatprep.mubr.bf16.mxu0 %v12060
  %12261 = vmatmul.mubr.bf16.gmra.mrb[0].mxu0 %v12059
  %v12262 = vpop.f32.mrb[0].mxu0
  %v12263 = vadd.f32 %v12106, %v12262
  %v12264 = vpop.f32.mrb[0].mxu0
  %v12265 = vpop.f32.mrb[0].mxu0
  %v12266 = vadd.f32 %v12106, %v12265
  %v12267 = vpop.f32.mrb[0].mxu0
  %12268 = vmatprep.mubr.bf16.mxu0 %v12062
  %12269 = vmatmul.mubr.bf16.gmra.mrb[0].mxu0 %v12061
  %v12270 = vpop.f32.mrb[0].mxu0
  %v12271 = vadd.f32 %v12106, %v12270
  %v12272 = vpop.f32.mrb[0].mxu0
  %v12273 = vpop.f32.mrb[0].mxu0
  %v12274 = vadd.f32 %v12106, %v12273
  %v12275 = vpop.f32.mrb[0].mxu0
  %12276 = vmatprep.mubr.bf16.mxu0 %v12064
  %12277 = vmatmul.mubr.bf16.gmra.mrb[0].mxu0 %v12063
  %v12278 = vpop.f32.mrb[0].mxu0
  %v12279 = vadd.f32 %v12106, %v12278
  %v12280 = vpop.f32.mrb[0].mxu0
  %v12281 = vpop.f32.mrb[0].mxu0
  %v12282 = vadd.f32 %v12106, %v12281
  %v12283 = vpop.f32.mrb[0].mxu0
  %12284 = vmatprep.mubr.bf16.mxu0 %v12066
  %12285 = vmatmul.mubr.bf16.gmra.mrb[0].mxu0 %v12065
  %v12286 = vpop.f32.mrb[0].mxu0
  %v12287 = vadd.f32 %v12106, %v12286
  %v12288 = vpop.f32.mrb[0].mxu0
  %v12289 = vpop.f32.mrb[0].mxu0
  %v12290 = vadd.f32 %v12106, %v12289
  %v12291 = vpop.f32.mrb[0].mxu0
  %12292 = vmatprep.mubr.bf16.mxu0 %v12068
  %12293 = vmatmul.mubr.bf16.gmra.mrb[0].mxu0 %v12067
  %v12294 = vpop.f32.mrb[0].mxu0
  %v12295 = vadd.f32 %v12106, %v12294
  %v12296 = vpop.f32.mrb[0].mxu0
  %v12297 = vpop.f32.mrb[0].mxu0
  %v12298 = vadd.f32 %v12106, %v12297
  %v12299 = vpop.f32.mrb[0].mxu0
  %12300 = vdwg.mxu0
  %v12301 = vsub.f32 0.0, %v12239
  %v12302 = vsub.f32 0.0, %v12242
  %v12303 = vsub.f32 0.0, %v12247
  %v12304 = vsub.f32 0.0, %v12250
  %v12305 = vsub.f32 0.0, %v12255
  %v12306 = vsub.f32 0.0, %v12258
  %v12307 = vsub.f32 0.0, %v12263
  %v12308 = vsub.f32 0.0, %v12266
  %v12309 = vsub.f32 0.0, %v12271
  %v12310 = vsub.f32 0.0, %v12274
  %v12311 = vsub.f32 0.0, %v12279
  %v12312 = vsub.f32 0.0, %v12282
  %v12313 = vsub.f32 0.0, %v12287
  %v12314 = vsub.f32 0.0, %v12290
  %v12315 = vsub.f32 0.0, %v12295
  %v12316 = vsub.f32 0.0, %v12298
  %v12317 = vmul.f32 %v12301, 1.442695
  %v12318 = vpow.pop %v12317
  %v12319 = vmul.f32 %v12302, 1.442695
  %v12320 = vpow.pop %v12319
  %v12321 = vmul.f32 %v12303, 1.442695
  %v12322 = vpow.pop %v12321
  %v12323 = vmul.f32 %v12304, 1.442695
  %v12324 = vpow.pop %v12323
  %v12325 = vmul.f32 %v12305, 1.442695
  %v12326 = vpow.pop %v12325
  %v12327 = vmul.f32 %v12306, 1.442695
  %v12328 = vpow.pop %v12327
  %v12329 = vmul.f32 %v12307, 1.442695
  %v12330 = vpow.pop %v12329
  %v12331 = vmul.f32 %v12308, 1.442695
  %v12332 = vpow.pop %v12331
  %v12333 = vmul.f32 %v12309, 1.442695
  %v12334 = vpow.pop %v12333
  %v12335 = vmul.f32 %v12310, 1.442695
  %v12336 = vpow.pop %v12335
  %v12337 = vmul.f32 %v12311, 1.442695
  %v12338 = vpow.pop %v12337
  %v12339 = vmul.f32 %v12312, 1.442695
  %v12340 = vpow.pop %v12339
  %v12341 = vmul.f32 %v12313, 1.442695
  %v12342 = vpow.pop %v12341
  %v12343 = vmul.f32 %v12314, 1.442695
  %v12344 = vpow.pop %v12343
  %v12345 = vmul.f32 %v12315, 1.442695
  %v12346 = vpow.pop %v12345
  %v12347 = vmul.f32 %v12316, 1.442695
  %v12348 = vpow.pop %v12347
  %v12349 = vadd.f32 %v12318, 1.0
  %v12350 = vadd.f32 %v12320, 1.0
  %v12351 = vadd.f32 %v12322, 1.0
  %v12352 = vadd.f32 %v12324, 1.0
  %v12353 = vadd.f32 %v12326, 1.0
  %v12354 = vadd.f32 %v12328, 1.0
  %v12355 = vadd.f32 %v12330, 1.0
  %v12356 = vadd.f32 %v12332, 1.0
  %v12357 = vadd.f32 %v12334, 1.0
  %v12358 = vadd.f32 %v12336, 1.0
  %v12359 = vadd.f32 %v12338, 1.0
  %v12360 = vadd.f32 %v12340, 1.0
  %v12361 = vadd.f32 %v12342, 1.0
  %v12362 = vadd.f32 %v12344, 1.0
  %v12363 = vadd.f32 %v12346, 1.0
  %v12364 = vadd.f32 %v12348, 1.0
  %v12365 = vrcp.pop %v12349
  %v12366 = vrcp.pop %v12350
  %v12367 = vrcp.pop %v12351
  %v12368 = vrcp.pop %v12352
  %v12369 = vrcp.pop %v12353
  %v12370 = vrcp.pop %v12354
  %v12371 = vrcp.pop %v12355
  %v12372 = vrcp.pop %v12356
  %v12373 = vrcp.pop %v12357
  %v12374 = vrcp.pop %v12358
  %v12375 = vrcp.pop %v12359
  %v12376 = vrcp.pop %v12360
  %v12377 = vrcp.pop %v12361
  %v12378 = vrcp.pop %v12362
  %v12379 = vrcp.pop %v12363
  %v12380 = vrcp.pop %v12364
  %12381 = vst [vmem:[%s7] sm:$0xff] %v12365
  %12382 = vst [vmem:[%s7 + $0x8] sm:$0xff] %v12366
  %12383 = vst [vmem:[%s7 + $0x10] sm:$0xff] %v12367
  %12384 = vst [vmem:[%s7 + $0x18] sm:$0xff] %v12368
  %12385 = vst [vmem:[%s7 + $0x20] sm:$0xff] %v12369
  %12386 = vst [vmem:[%s7 + $0x28] sm:$0xff] %v12370
  %12387 = vst [vmem:[%s7 + $0x30] sm:$0xff] %v12371
  %12388 = vst [vmem:[%s7 + $0x38] sm:$0xff] %v12372
  %12389 = vst [vmem:[%s7 + $0x40] sm:$0xff] %v12373
  %12390 = vst [vmem:[%s7 + $0x48] sm:$0xff] %v12374
  %12391 = vst [vmem:[%s7 + $0x50] sm:$0xff] %v12375
  %12392 = vst [vmem:[%s7 + $0x58] sm:$0xff] %v12376
  %12393 = vst [vmem:[%s7 + $0x60] sm:$0xff] %v12377
  %12394 = vst [vmem:[%s7 + $0x68] sm:$0xff] %v12378
  %12395 = vst [vmem:[%s7 + $0x70] sm:$0xff] %v12379
  %12396 = vst [vmem:[%s7 + $0x78] sm:$0xff] %v12380
  // Predicated region
  $region30: #{global_align_forward.1} parent=0 // pred_check
    _
  $region31: #{global_align_forward.1} parent=0 // pred_check_branch
    %12398 = sbr.rel (0) target = $region33
  $region32: #{global_align_forward.1} parent=0 // pred_region
    _
  $region33: #{global_align_forward.1} parent=0 // pred_fallthru
    _
  // Predicated region
  $region34: #{global_align_forward.1} parent=0 // pred_check
    _
  $region35: #{global_align_forward.1} parent=0 // pred_check_branch
    %12400 = sbr.rel (0) target = $region37
  $region36: #{global_align_forward.1} parent=0 // pred_region
    _
  $region37: #{global_align_forward.1} parent=0 // pred_fallthru
    _

</llo_original>
